<compile_context>
chip_gen: v6e
topology: v6e:2x2x1
jax: 0.10.0
libtpu: 0.0.40
codegen_flags: <defaults>
</compile_context>

<pallas_src>
import functools

import jax
import jax.numpy as jnp
from jax import lax
from jax.experimental import pallas as pl
from jax.experimental.pallas import tpu as pltpu

ALIGN_CORNERS = False  # PyTorch >=1.3 default for affine_grid / grid_sample


def _roi_kernel(rois_ref, fm_ref, out_ref, *, R, pool, pre_pool, max_pooling,
                align_corners):
    """One grid step == one image.

    rois_ref: (R*pool, 4) f32 -- per-ROI [x1,y1,x2,y2] (feature-map coords),
              each ROI's row repeated `pool` times (row rho = r*pool + p).
    fm_ref:   (C, H, W) feature map.
    out_ref:  (C, pool, R*pool): out[c, p, r*pool + q] = result[r, c, p, q].
    """
    C, H, W = fm_ref.shape
    RP = R * pool

    rois = rois_ref[...].astype(jnp.float32)            # (RP, 4)
    x1 = rois[:, 0:1]
    y1 = rois[:, 1:2]
    x2 = rois[:, 2:3]
    y2 = rois[:, 3:4]

    # theta (same formulas as the PyTorch module).  NOTE: degenerate 1-pixel
    # feature-map dims (H==1 or W==1) would divide by zero, as in the module.
    sx = (x2 - x1) / (W - 1.0)                           # (RP, 1)
    ox = (x1 + x2 - W + 1.0) / (W - 1.0)
    sy = (y2 - y1) / (H - 1.0)
    oy = (y1 + y2 - H + 1.0) / (H - 1.0)

    # per-row output index inside the ROI's pre-pool grid: p = rho mod pool
    rows = lax.broadcasted_iota(jnp.int32, (RP, 1), 0).astype(jnp.float32)
    p_in_roi = rows - pool * jnp.floor(rows / pool)      # (RP, 1), exact for small ints

    step = 2.0 if max_pooling else 1.0

    def weights(scale, off, n_in, parity):
        """(RP, n_in) stacked bilinear weights; row rho samples the ROI's
        pre-pool grid index j = step * (rho mod pool) + parity."""
        src = lax.broadcasted_iota(jnp.int32, (RP, n_in), 1).astype(jnp.float32)
        j = step * p_in_roi + parity                     # (RP, 1)
        if align_corners:
            u = -1.0 + 2.0 * j / (pre_pool - 1.0)        # affine_grid base coord
        else:
            u = -1.0 + (2.0 * j + 1.0) / pre_pool
        g = scale * u + off                              # normalized grid coord
        if align_corners:
            pix = (g + 1.0) * (n_in - 1.0) * 0.5         # grid_sample unnormalize
        else:
            pix = (g + 1.0) * n_in * 0.5 - 0.5
        p0 = jnp.floor(pix)                              # (RP, 1)
        frac = pix - p0
        # zero padding: out-of-range corners never match `src` -> weight 0.
        # (float equality is exact here: p0/src are small integer-valued f32.)
        return (jnp.where(src == p0, 1.0 - frac, 0.0)
                + jnp.where(src == p0 + 1.0, frac, 0.0))  # (RP, n_in)

    fm = fm_ref[...].astype(jnp.float32)                 # (C, H, W)
    # TODO(synk): for bf16 feature maps, feed bf16 straight to the MXU
    # (keep preferred_element_type=f32) instead of upcasting here.

    parities = (0.0, 1.0) if max_pooling else (0.0,)
    wy = [weights(sy, oy, H, par) for par in parities]   # each (RP, H)
    wx = [weights(sx, ox, W, par) for par in parities]   # each (RP, W)

    # Stage 1 (y contraction), shared across x parities:
    #   t[c, rho, w] = sum_h wy[rho, h] * fm[c, h, w]
    def stage1(w):
        wb = jnp.broadcast_to(w[None], (C, RP, H))       # one hoisted C-copy / image
        return jnp.einsum('cph,chw->cpw', wb, fm,
                          preferred_element_type=jnp.float32)   # (C, RP, W)

    ts = [stage1(w) for w in wy]                         # 1 or 2 einsums per image
    wxb = [jnp.broadcast_to(w[None], (C, RP, W)) for w in wx]

    # Stage 2 (x contraction) + exact 2x2 max pool, per ROI (static slices only).
    for r in range(R):
        lo = r * pool

        def crop(t, wxc):
            # (C, pool, pool): crop[c, p, q] = sum_w t[c, lo+p, w] * wx[lo+q, w]
            return jnp.einsum('cpw,cqw->cpq',
                              t[:, lo:lo + pool, :], wxc[:, lo:lo + pool, :],
                              preferred_element_type=jnp.float32)

        if max_pooling:
            pooled = jnp.maximum(
                jnp.maximum(crop(ts[0], wxb[0]), crop(ts[0], wxb[1])),
                jnp.maximum(crop(ts[1], wxb[0]), crop(ts[1], wxb[1])))
        else:
            pooled = crop(ts[0], wxb[0])

        out_ref[:, :, lo:lo + pool] = pooled.astype(out_ref.dtype)


def roi_pallas(feature_maps, proposals, original_size, *, pooling_size=4,
               max_pooling=True):
    """feature_maps: (B, C, H, W); proposals: (B, R, 4) f32 [x1,y1,x2,y2] in
    original-image coords; original_size: (orig_h, orig_w).

    Returns a stacked (B, R, C, pooling_size, pooling_size) array (the PyTorch
    module's list return is simply `[out[b] for b in range(B)]`)."""
    B, C, H, W = feature_maps.shape
    _, R, _ = proposals.shape
    orig_h, orig_w = original_size
    pool = pooling_size
    pre_pool = pool * 2 if max_pooling else pool

    # glue: scale boxes from original-image coords to feature-map coords, and
    # repeat each ROI's row `pool` times so the kernel's stacked (R*pool, .)
    # weight matrices can read their parameters row-wise (no in-kernel gathers).
    scales = jnp.array([W / orig_w, H / orig_h, W / orig_w, H / orig_h],
                       dtype=jnp.float32)
    rois = proposals.astype(jnp.float32) * scales              # (B, R, 4)
    rois_rows = jnp.repeat(rois, pool, axis=1)                 # (B, R*pool, 4)

    kernel = functools.partial(
        _roi_kernel, R=R, pool=pool, pre_pool=pre_pool,
        max_pooling=max_pooling, align_corners=ALIGN_CORNERS)

    out = pl.pallas_call(
        kernel,
        out_shape=jax.ShapeDtypeStruct((B, C, pool, R * pool),
                                       feature_maps.dtype),
        grid_spec=pltpu.PrefetchScalarGridSpec(
            num_scalar_prefetch=0,
            grid=(B,),
            in_specs=[
                pl.BlockSpec((None, R * pool, 4), lambda b: (b, 0, 0)),
                pl.BlockSpec((None, C, H, W), lambda b: (b, 0, 0, 0)),
            ],
            out_specs=pl.BlockSpec((None, C, pool, R * pool),
                                   lambda b: (b, 0, 0, 0)),
        ),
        compiler_params=pltpu.CompilerParams(
            dimension_semantics=("parallel",),
            vmem_limit_bytes=32 * 1024 * 1024),
    )(rois_rows, feature_maps)

    # layout plumbing back to (B, R, C, pool, pool):
    # out[b, c, p, r*pool + q] == result[b, r, c, p, q]
    out = out.reshape(B, C, pool, R, pool)
    return jnp.transpose(out, (0, 3, 1, 2, 4))


def roi_reference(feature_maps, proposals, original_size, *, pooling_size,
                  max_pooling, align_corners):
    """Pure-JAX reference (direct gather formulation of grid_sample)."""
    B, C, H, W = feature_maps.shape
    orig_h, orig_w = original_size
    pre = pooling_size * 2 if max_pooling else pooling_size
    scales = jnp.array([W / orig_w, H / orig_h, W / orig_w, H / orig_h],
                       jnp.float32)
    props = proposals.astype(jnp.float32) * scales
    outs = []
    for b in range(B):
        fm = feature_maps[b]
        crops = []
        for r in range(props.shape[1]):
            x1, y1, x2, y2 = [props[b, r, k] for k in range(4)]
            sx = (x2 - x1) / (W - 1.0)
            ox = (x1 + x2 - W + 1.0) / (W - 1.0)
            sy = (y2 - y1) / (H - 1.0)
            oy = (y1 + y2 - H + 1.0) / (H - 1.0)
            idx = jnp.arange(pre, dtype=jnp.float32)
            if align_corners:
                u = -1.0 + 2.0 * idx / (pre - 1.0)
            else:
                u = -1.0 + (2.0 * idx + 1.0) / pre
            gx = sx * u + ox
            gy = sy * u + oy
            if align_corners:
                ix = (gx + 1.0) * (W - 1.0) * 0.5
                iy = (gy + 1.0) * (H - 1.0) * 0.5
            else:
                ix = (gx + 1.0) * W * 0.5 - 0.5
                iy = (gy + 1.0) * H * 0.5 - 0.5
            x0 = jnp.floor(ix); fx = ix - x0
            y0 = jnp.floor(iy); fy = iy - y0
            x0i = x0.astype(jnp.int32); x1i = x0i + 1
            y0i = y0.astype(jnp.int32); y1i = y0i + 1
            wx0 = (1.0 - fx) * ((x0i >= 0) & (x0i < W)).astype(jnp.float32)
            wx1 = fx * ((x1i >= 0) & (x1i < W)).astype(jnp.float32)
            wy0 = (1.0 - fy) * ((y0i >= 0) & (y0i < H)).astype(jnp.float32)
            wy1 = fy * ((y1i >= 0) & (y1i < H)).astype(jnp.float32)
            x0c = jnp.clip(x0i, 0, W - 1); x1c = jnp.clip(x1i, 0, W - 1)
            y0c = jnp.clip(y0i, 0, H - 1); y1c = jnp.clip(y1i, 0, H - 1)

            def g(yc, xc):
                return fm[:, yc[:, None], xc[None, :]]

            crop = (wy0[:, None] * wx0[None, :] * g(y0c, x0c)
                    + wy0[:, None] * wx1[None, :] * g(y0c, x1c)
                    + wy1[:, None] * wx0[None, :] * g(y1c, x0c)
                    + wy1[:, None] * wx1[None, :] * g(y1c, x1c))
            if max_pooling:
                crop = crop.reshape(C, pooling_size, 2, pooling_size, 2).max(
                    axis=(2, 4))
            crops.append(crop)
        outs.append(jnp.stack(crops))
    return outs


if __name__ == "__main__":
    key = jax.random.PRNGKey(0)
    k_fm, k_x1, k_y1, k_w, k_h = jax.random.split(key, 5)

    B, C, H, W = 2, 4, 16, 16          # feature map (small, NCHW)
    R = 5                              # proposals per image
    ORIG = (64, 64)                    # (orig_height, orig_width)
    POOL = 4                           # pooling_size (module default 21; small here)

    feature_maps = jax.random.normal(k_fm, (B, C, H, W), dtype=jnp.float32)

    # deterministic boxes [x1, y1, x2, y2] in original-image coordinates
    x1 = jax.random.uniform(k_x1, (B, R), minval=0.0, maxval=40.0)
    y1 = jax.random.uniform(k_y1, (B, R), minval=0.0, maxval=40.0)
    bw = jax.random.uniform(k_w, (B, R), minval=8.0, maxval=22.0)
    bh = jax.random.uniform(k_h, (B, R), minval=8.0, maxval=22.0)
    proposals = jnp.stack([x1, y1, x1 + bw, y1 + bh], axis=-1).astype(jnp.float32)

    out = roi_pallas(feature_maps, proposals, ORIG,
                     pooling_size=POOL, max_pooling=True)
    out = jax.block_until_ready(out)

    refs = roi_reference(feature_maps, proposals, ORIG,
                         pooling_size=POOL, max_pooling=True,
                         align_corners=ALIGN_CORNERS)

    assert out.shape == (B, R, C, POOL, POOL), out.shape
    for b in range(B):
        ref = refs[b]
        assert jnp.allclose(out[b], ref, atol=1e-4, rtol=1e-4), \
            float(jnp.max(jnp.abs(out[b] - ref)))

    print("KERNEL_OK")
</pallas_src>

<mosaic_0001>
module attributes {stable_mosaic.version = 11 : i64} {
  func.func @_roi_kernel(%arg0: i32, %arg1: memref<1x20x4xf32, #tpu.memory_space<vmem>>, %arg2: memref<1x4x16x16xf32, #tpu.memory_space<vmem>>, %arg3: memref<1x4x4x20xf32, #tpu.memory_space<vmem>>) attributes {dimension_semantics = [#tpu.dimension_semantics<parallel>], iteration_bounds = array<i64: 2>, scalar_prefetch = 0 : i64, scratch_operands = 0 : i64, tpu.core_type = #tpu.core_type<tc>, window_params = [{transform_indices = @transform_0, window_bounds = array<i64: 1, 20, 4>}, {transform_indices = @transform_1, window_bounds = array<i64: 1, 4, 16, 16>}, {transform_indices = @transform_2, window_bounds = array<i64: 1, 4, 4, 20>}]} {
    %c0 = arith.constant 0 : index
    %c0_0 = arith.constant 0 : index
    %c0_1 = arith.constant 0 : index
    %0 = vector.load %arg1[%c0, %c0_0, %c0_1] : memref<1x20x4xf32, #tpu.memory_space<vmem>>, vector<1x20x4xf32>
    %1 = vector.shape_cast %0 : vector<1x20x4xf32> to vector<20x4xf32>
    %2 = vector.extract_strided_slice %1 {offsets = [0, 0], sizes = [20, 1], strides = [1, 1]} : vector<20x4xf32> to vector<20x1xf32>
    %3 = vector.extract_strided_slice %1 {offsets = [0, 1], sizes = [20, 1], strides = [1, 1]} : vector<20x4xf32> to vector<20x1xf32>
    %4 = vector.extract_strided_slice %1 {offsets = [0, 2], sizes = [20, 1], strides = [1, 1]} : vector<20x4xf32> to vector<20x1xf32>
    %5 = vector.extract_strided_slice %1 {offsets = [0, 3], sizes = [20, 1], strides = [1, 1]} : vector<20x4xf32> to vector<20x1xf32>
    %6 = arith.subf %4, %2 : vector<20x1xf32>
    %cst = arith.constant 1.500000e+01 : f32
    %7 = vector.broadcast %cst : f32 to vector<20x1xf32>
    %8 = arith.divf %6, %7 : vector<20x1xf32>
    %9 = arith.addf %2, %4 : vector<20x1xf32>
    %cst_2 = arith.constant 1.600000e+01 : f32
    %10 = vector.broadcast %cst_2 : f32 to vector<20x1xf32>
    %11 = arith.subf %9, %10 : vector<20x1xf32>
    %cst_3 = arith.constant 1.000000e+00 : f32
    %12 = vector.broadcast %cst_3 : f32 to vector<20x1xf32>
    %13 = arith.addf %11, %12 : vector<20x1xf32>
    %cst_4 = arith.constant 1.500000e+01 : f32
    %14 = vector.broadcast %cst_4 : f32 to vector<20x1xf32>
    %15 = arith.divf %13, %14 : vector<20x1xf32>
    %16 = arith.subf %5, %3 : vector<20x1xf32>
    %cst_5 = arith.constant 1.500000e+01 : f32
    %17 = vector.broadcast %cst_5 : f32 to vector<20x1xf32>
    %18 = arith.divf %16, %17 : vector<20x1xf32>
    %19 = arith.addf %3, %5 : vector<20x1xf32>
    %cst_6 = arith.constant 1.600000e+01 : f32
    %20 = vector.broadcast %cst_6 : f32 to vector<20x1xf32>
    %21 = arith.subf %19, %20 : vector<20x1xf32>
    %cst_7 = arith.constant 1.000000e+00 : f32
    %22 = vector.broadcast %cst_7 : f32 to vector<20x1xf32>
    %23 = arith.addf %21, %22 : vector<20x1xf32>
    %cst_8 = arith.constant 1.500000e+01 : f32
    %24 = vector.broadcast %cst_8 : f32 to vector<20x1xf32>
    %25 = arith.divf %23, %24 : vector<20x1xf32>
    %26 = tpu.iota {dimensions = array<i32: 0>} : vector<20x1xi32>
    %27 = arith.sitofp %26 : vector<20x1xi32> to vector<20x1xf32>
    %cst_9 = arith.constant 4.000000e+00 : f32
    %28 = vector.broadcast %cst_9 : f32 to vector<20x1xf32>
    %29 = arith.divf %27, %28 : vector<20x1xf32>
    %30 = math.floor %29 : vector<20x1xf32>
    %cst_10 = arith.constant 4.000000e+00 : f32
    %31 = vector.broadcast %cst_10 : f32 to vector<20x1xf32>
    %32 = arith.mulf %31, %30 : vector<20x1xf32>
    %33 = arith.subf %27, %32 : vector<20x1xf32>
    %c0_11 = arith.constant 0 : index
    %c0_12 = arith.constant 0 : index
    %c0_13 = arith.constant 0 : index
    %c0_14 = arith.constant 0 : index
    %34 = vector.load %arg2[%c0_11, %c0_12, %c0_13, %c0_14] : memref<1x4x16x16xf32, #tpu.memory_space<vmem>>, vector<1x4x16x16xf32>
    %35 = vector.shape_cast %34 : vector<1x4x16x16xf32> to vector<4x16x16xf32>
    %36 = tpu.iota {dimensions = array<i32: 1>} : vector<20x16xi32>
    %37 = arith.sitofp %36 : vector<20x16xi32> to vector<20x16xf32>
    %cst_15 = arith.constant 2.000000e+00 : f32
    %38 = vector.broadcast %cst_15 : f32 to vector<20x1xf32>
    %39 = arith.mulf %38, %33 : vector<20x1xf32>
    %cst_16 = arith.constant 0.000000e+00 : f32
    %40 = vector.broadcast %cst_16 : f32 to vector<20x1xf32>
    %41 = arith.addf %39, %40 : vector<20x1xf32>
    %cst_17 = arith.constant 2.000000e+00 : f32
    %42 = vector.broadcast %cst_17 : f32 to vector<20x1xf32>
    %43 = arith.mulf %42, %41 : vector<20x1xf32>
    %cst_18 = arith.constant 1.000000e+00 : f32
    %44 = vector.broadcast %cst_18 : f32 to vector<20x1xf32>
    %45 = arith.addf %43, %44 : vector<20x1xf32>
    %cst_19 = arith.constant 8.000000e+00 : f32
    %46 = vector.broadcast %cst_19 : f32 to vector<20x1xf32>
    %47 = arith.divf %45, %46 : vector<20x1xf32>
    %cst_20 = arith.constant -1.000000e+00 : f32
    %48 = vector.broadcast %cst_20 : f32 to vector<20x1xf32>
    %49 = arith.addf %48, %47 : vector<20x1xf32>
    %50 = arith.mulf %18, %49 : vector<20x1xf32>
    %51 = arith.addf %50, %25 : vector<20x1xf32>
    %cst_21 = arith.constant 1.000000e+00 : f32
    %52 = vector.broadcast %cst_21 : f32 to vector<20x1xf32>
    %53 = arith.addf %51, %52 : vector<20x1xf32>
    %cst_22 = arith.constant 1.600000e+01 : f32
    %54 = vector.broadcast %cst_22 : f32 to vector<20x1xf32>
    %55 = arith.mulf %53, %54 : vector<20x1xf32>
    %cst_23 = arith.constant 5.000000e-01 : f32
    %56 = vector.broadcast %cst_23 : f32 to vector<20x1xf32>
    %57 = arith.mulf %55, %56 : vector<20x1xf32>
    %cst_24 = arith.constant 5.000000e-01 : f32
    %58 = vector.broadcast %cst_24 : f32 to vector<20x1xf32>
    %59 = arith.subf %57, %58 : vector<20x1xf32>
    %60 = math.floor %59 : vector<20x1xf32>
    %61 = arith.subf %59, %60 : vector<20x1xf32>
    %62 = vector.broadcast %60 : vector<20x1xf32> to vector<20x16xf32>
    %63 = arith.cmpf oeq, %37, %62 : vector<20x16xf32>
    %cst_25 = arith.constant 1.000000e+00 : f32
    %64 = vector.broadcast %cst_25 : f32 to vector<20x1xf32>
    %65 = arith.subf %64, %61 : vector<20x1xf32>
    %cst_26 = arith.constant 0.000000e+00 : f32
    %66 = vector.shape_cast %65 : vector<20x1xf32> to vector<20x1xf32>
    %67 = vector.broadcast %66 : vector<20x1xf32> to vector<20x16xf32>
    %68 = vector.broadcast %cst_26 : f32 to vector<20x16xf32>
    %69 = arith.select %63, %67, %68 : vector<20x16xi1>, vector<20x16xf32>
    %cst_27 = arith.constant 1.000000e+00 : f32
    %70 = vector.broadcast %cst_27 : f32 to vector<20x1xf32>
    %71 = arith.addf %60, %70 : vector<20x1xf32>
    %72 = vector.broadcast %71 : vector<20x1xf32> to vector<20x16xf32>
    %73 = arith.cmpf oeq, %37, %72 : vector<20x16xf32>
    %cst_28 = arith.constant 0.000000e+00 : f32
    %74 = vector.shape_cast %61 : vector<20x1xf32> to vector<20x1xf32>
    %75 = vector.broadcast %74 : vector<20x1xf32> to vector<20x16xf32>
    %76 = vector.broadcast %cst_28 : f32 to vector<20x16xf32>
    %77 = arith.select %73, %75, %76 : vector<20x16xi1>, vector<20x16xf32>
    %78 = arith.addf %69, %77 : vector<20x16xf32>
    %79 = tpu.iota {dimensions = array<i32: 1>} : vector<20x16xi32>
    %80 = arith.sitofp %79 : vector<20x16xi32> to vector<20x16xf32>
    %cst_29 = arith.constant 2.000000e+00 : f32
    %81 = vector.broadcast %cst_29 : f32 to vector<20x1xf32>
    %82 = arith.mulf %81, %33 : vector<20x1xf32>
    %cst_30 = arith.constant 1.000000e+00 : f32
    %83 = vector.broadcast %cst_30 : f32 to vector<20x1xf32>
    %84 = arith.addf %82, %83 : vector<20x1xf32>
    %cst_31 = arith.constant 2.000000e+00 : f32
    %85 = vector.broadcast %cst_31 : f32 to vector<20x1xf32>
    %86 = arith.mulf %85, %84 : vector<20x1xf32>
    %cst_32 = arith.constant 1.000000e+00 : f32
    %87 = vector.broadcast %cst_32 : f32 to vector<20x1xf32>
    %88 = arith.addf %86, %87 : vector<20x1xf32>
    %cst_33 = arith.constant 8.000000e+00 : f32
    %89 = vector.broadcast %cst_33 : f32 to vector<20x1xf32>
    %90 = arith.divf %88, %89 : vector<20x1xf32>
    %cst_34 = arith.constant -1.000000e+00 : f32
    %91 = vector.broadcast %cst_34 : f32 to vector<20x1xf32>
    %92 = arith.addf %91, %90 : vector<20x1xf32>
    %93 = arith.mulf %18, %92 : vector<20x1xf32>
    %94 = arith.addf %93, %25 : vector<20x1xf32>
    %cst_35 = arith.constant 1.000000e+00 : f32
    %95 = vector.broadcast %cst_35 : f32 to vector<20x1xf32>
    %96 = arith.addf %94, %95 : vector<20x1xf32>
    %cst_36 = arith.constant 1.600000e+01 : f32
    %97 = vector.broadcast %cst_36 : f32 to vector<20x1xf32>
    %98 = arith.mulf %96, %97 : vector<20x1xf32>
    %cst_37 = arith.constant 5.000000e-01 : f32
    %99 = vector.broadcast %cst_37 : f32 to vector<20x1xf32>
    %100 = arith.mulf %98, %99 : vector<20x1xf32>
    %cst_38 = arith.constant 5.000000e-01 : f32
    %101 = vector.broadcast %cst_38 : f32 to vector<20x1xf32>
    %102 = arith.subf %100, %101 : vector<20x1xf32>
    %103 = math.floor %102 : vector<20x1xf32>
    %104 = arith.subf %102, %103 : vector<20x1xf32>
    %105 = vector.broadcast %103 : vector<20x1xf32> to vector<20x16xf32>
    %106 = arith.cmpf oeq, %80, %105 : vector<20x16xf32>
    %cst_39 = arith.constant 1.000000e+00 : f32
    %107 = vector.broadcast %cst_39 : f32 to vector<20x1xf32>
    %108 = arith.subf %107, %104 : vector<20x1xf32>
    %cst_40 = arith.constant 0.000000e+00 : f32
    %109 = vector.shape_cast %108 : vector<20x1xf32> to vector<20x1xf32>
    %110 = vector.broadcast %109 : vector<20x1xf32> to vector<20x16xf32>
    %111 = vector.broadcast %cst_40 : f32 to vector<20x16xf32>
    %112 = arith.select %106, %110, %111 : vector<20x16xi1>, vector<20x16xf32>
    %cst_41 = arith.constant 1.000000e+00 : f32
    %113 = vector.broadcast %cst_41 : f32 to vector<20x1xf32>
    %114 = arith.addf %103, %113 : vector<20x1xf32>
    %115 = vector.broadcast %114 : vector<20x1xf32> to vector<20x16xf32>
    %116 = arith.cmpf oeq, %80, %115 : vector<20x16xf32>
    %cst_42 = arith.constant 0.000000e+00 : f32
    %117 = vector.shape_cast %104 : vector<20x1xf32> to vector<20x1xf32>
    %118 = vector.broadcast %117 : vector<20x1xf32> to vector<20x16xf32>
    %119 = vector.broadcast %cst_42 : f32 to vector<20x16xf32>
    %120 = arith.select %116, %118, %119 : vector<20x16xi1>, vector<20x16xf32>
    %121 = arith.addf %112, %120 : vector<20x16xf32>
    %122 = tpu.iota {dimensions = array<i32: 1>} : vector<20x16xi32>
    %123 = arith.sitofp %122 : vector<20x16xi32> to vector<20x16xf32>
    %cst_43 = arith.constant 2.000000e+00 : f32
    %124 = vector.broadcast %cst_43 : f32 to vector<20x1xf32>
    %125 = arith.mulf %124, %33 : vector<20x1xf32>
    %cst_44 = arith.constant 0.000000e+00 : f32
    %126 = vector.broadcast %cst_44 : f32 to vector<20x1xf32>
    %127 = arith.addf %125, %126 : vector<20x1xf32>
    %cst_45 = arith.constant 2.000000e+00 : f32
    %128 = vector.broadcast %cst_45 : f32 to vector<20x1xf32>
    %129 = arith.mulf %128, %127 : vector<20x1xf32>
    %cst_46 = arith.constant 1.000000e+00 : f32
    %130 = vector.broadcast %cst_46 : f32 to vector<20x1xf32>
    %131 = arith.addf %129, %130 : vector<20x1xf32>
    %cst_47 = arith.constant 8.000000e+00 : f32
    %132 = vector.broadcast %cst_47 : f32 to vector<20x1xf32>
    %133 = arith.divf %131, %132 : vector<20x1xf32>
    %cst_48 = arith.constant -1.000000e+00 : f32
    %134 = vector.broadcast %cst_48 : f32 to vector<20x1xf32>
    %135 = arith.addf %134, %133 : vector<20x1xf32>
    %136 = arith.mulf %8, %135 : vector<20x1xf32>
    %137 = arith.addf %136, %15 : vector<20x1xf32>
    %cst_49 = arith.constant 1.000000e+00 : f32
    %138 = vector.broadcast %cst_49 : f32 to vector<20x1xf32>
    %139 = arith.addf %137, %138 : vector<20x1xf32>
    %cst_50 = arith.constant 1.600000e+01 : f32
    %140 = vector.broadcast %cst_50 : f32 to vector<20x1xf32>
    %141 = arith.mulf %139, %140 : vector<20x1xf32>
    %cst_51 = arith.constant 5.000000e-01 : f32
    %142 = vector.broadcast %cst_51 : f32 to vector<20x1xf32>
    %143 = arith.mulf %141, %142 : vector<20x1xf32>
    %cst_52 = arith.constant 5.000000e-01 : f32
    %144 = vector.broadcast %cst_52 : f32 to vector<20x1xf32>
    %145 = arith.subf %143, %144 : vector<20x1xf32>
    %146 = math.floor %145 : vector<20x1xf32>
    %147 = arith.subf %145, %146 : vector<20x1xf32>
    %148 = vector.broadcast %146 : vector<20x1xf32> to vector<20x16xf32>
    %149 = arith.cmpf oeq, %123, %148 : vector<20x16xf32>
    %cst_53 = arith.constant 1.000000e+00 : f32
    %150 = vector.broadcast %cst_53 : f32 to vector<20x1xf32>
    %151 = arith.subf %150, %147 : vector<20x1xf32>
    %cst_54 = arith.constant 0.000000e+00 : f32
    %152 = vector.shape_cast %151 : vector<20x1xf32> to vector<20x1xf32>
    %153 = vector.broadcast %152 : vector<20x1xf32> to vector<20x16xf32>
    %154 = vector.broadcast %cst_54 : f32 to vector<20x16xf32>
    %155 = arith.select %149, %153, %154 : vector<20x16xi1>, vector<20x16xf32>
    %cst_55 = arith.constant 1.000000e+00 : f32
    %156 = vector.broadcast %cst_55 : f32 to vector<20x1xf32>
    %157 = arith.addf %146, %156 : vector<20x1xf32>
    %158 = vector.broadcast %157 : vector<20x1xf32> to vector<20x16xf32>
    %159 = arith.cmpf oeq, %123, %158 : vector<20x16xf32>
    %cst_56 = arith.constant 0.000000e+00 : f32
    %160 = vector.shape_cast %147 : vector<20x1xf32> to vector<20x1xf32>
    %161 = vector.broadcast %160 : vector<20x1xf32> to vector<20x16xf32>
    %162 = vector.broadcast %cst_56 : f32 to vector<20x16xf32>
    %163 = arith.select %159, %161, %162 : vector<20x16xi1>, vector<20x16xf32>
    %164 = arith.addf %155, %163 : vector<20x16xf32>
    %165 = tpu.iota {dimensions = array<i32: 1>} : vector<20x16xi32>
    %166 = arith.sitofp %165 : vector<20x16xi32> to vector<20x16xf32>
    %cst_57 = arith.constant 2.000000e+00 : f32
    %167 = vector.broadcast %cst_57 : f32 to vector<20x1xf32>
    %168 = arith.mulf %167, %33 : vector<20x1xf32>
    %cst_58 = arith.constant 1.000000e+00 : f32
    %169 = vector.broadcast %cst_58 : f32 to vector<20x1xf32>
    %170 = arith.addf %168, %169 : vector<20x1xf32>
    %cst_59 = arith.constant 2.000000e+00 : f32
    %171 = vector.broadcast %cst_59 : f32 to vector<20x1xf32>
    %172 = arith.mulf %171, %170 : vector<20x1xf32>
    %cst_60 = arith.constant 1.000000e+00 : f32
    %173 = vector.broadcast %cst_60 : f32 to vector<20x1xf32>
    %174 = arith.addf %172, %173 : vector<20x1xf32>
    %cst_61 = arith.constant 8.000000e+00 : f32
    %175 = vector.broadcast %cst_61 : f32 to vector<20x1xf32>
    %176 = arith.divf %174, %175 : vector<20x1xf32>
    %cst_62 = arith.constant -1.000000e+00 : f32
    %177 = vector.broadcast %cst_62 : f32 to vector<20x1xf32>
    %178 = arith.addf %177, %176 : vector<20x1xf32>
    %179 = arith.mulf %8, %178 : vector<20x1xf32>
    %180 = arith.addf %179, %15 : vector<20x1xf32>
    %cst_63 = arith.constant 1.000000e+00 : f32
    %181 = vector.broadcast %cst_63 : f32 to vector<20x1xf32>
    %182 = arith.addf %180, %181 : vector<20x1xf32>
    %cst_64 = arith.constant 1.600000e+01 : f32
    %183 = vector.broadcast %cst_64 : f32 to vector<20x1xf32>
    %184 = arith.mulf %182, %183 : vector<20x1xf32>
    %cst_65 = arith.constant 5.000000e-01 : f32
    %185 = vector.broadcast %cst_65 : f32 to vector<20x1xf32>
    %186 = arith.mulf %184, %185 : vector<20x1xf32>
    %cst_66 = arith.constant 5.000000e-01 : f32
    %187 = vector.broadcast %cst_66 : f32 to vector<20x1xf32>
    %188 = arith.subf %186, %187 : vector<20x1xf32>
    %189 = math.floor %188 : vector<20x1xf32>
    %190 = arith.subf %188, %189 : vector<20x1xf32>
    %191 = vector.broadcast %189 : vector<20x1xf32> to vector<20x16xf32>
    %192 = arith.cmpf oeq, %166, %191 : vector<20x16xf32>
    %cst_67 = arith.constant 1.000000e+00 : f32
    %193 = vector.broadcast %cst_67 : f32 to vector<20x1xf32>
    %194 = arith.subf %193, %190 : vector<20x1xf32>
    %cst_68 = arith.constant 0.000000e+00 : f32
    %195 = vector.shape_cast %194 : vector<20x1xf32> to vector<20x1xf32>
    %196 = vector.broadcast %195 : vector<20x1xf32> to vector<20x16xf32>
    %197 = vector.broadcast %cst_68 : f32 to vector<20x16xf32>
    %198 = arith.select %192, %196, %197 : vector<20x16xi1>, vector<20x16xf32>
    %cst_69 = arith.constant 1.000000e+00 : f32
    %199 = vector.broadcast %cst_69 : f32 to vector<20x1xf32>
    %200 = arith.addf %189, %199 : vector<20x1xf32>
    %201 = vector.broadcast %200 : vector<20x1xf32> to vector<20x16xf32>
    %202 = arith.cmpf oeq, %166, %201 : vector<20x16xf32>
    %cst_70 = arith.constant 0.000000e+00 : f32
    %203 = vector.shape_cast %190 : vector<20x1xf32> to vector<20x1xf32>
    %204 = vector.broadcast %203 : vector<20x1xf32> to vector<20x16xf32>
    %205 = vector.broadcast %cst_70 : f32 to vector<20x16xf32>
    %206 = arith.select %202, %204, %205 : vector<20x16xi1>, vector<20x16xf32>
    %207 = arith.addf %198, %206 : vector<20x16xf32>
    %208 = vector.shape_cast %78 : vector<20x16xf32> to vector<1x20x16xf32>
    %209 = vector.shape_cast %208 : vector<1x20x16xf32> to vector<1x20x16xf32>
    %210 = vector.broadcast %209 : vector<1x20x16xf32> to vector<4x20x16xf32>
    "tpu.trace_start"() <{level = 10 : i32, message = "cph,chw->cpw"}> : () -> ()
    %cst_71 = arith.constant dense<0.000000e+00> : vector<4x20x16xf32>
    %211 = tpu.matmul %210, %35, %cst_71 {dimension_numbers = #tpu.dot_dimension_numbers<[2], [1], [1], [2], [0, 0, 0, 1, 1, 2], [0], [0]>} : vector<4x20x16xf32>, vector<4x16x16xf32>, vector<4x20x16xf32> -> vector<4x20x16xf32>
    "tpu.trace_stop"() : () -> ()
    %212 = vector.shape_cast %121 : vector<20x16xf32> to vector<1x20x16xf32>
    %213 = vector.shape_cast %212 : vector<1x20x16xf32> to vector<1x20x16xf32>
    %214 = vector.broadcast %213 : vector<1x20x16xf32> to vector<4x20x16xf32>
    "tpu.trace_start"() <{level = 10 : i32, message = "cph,chw->cpw"}> : () -> ()
    %cst_72 = arith.constant dense<0.000000e+00> : vector<4x20x16xf32>
    %215 = tpu.matmul %214, %35, %cst_72 {dimension_numbers = #tpu.dot_dimension_numbers<[2], [1], [1], [2], [0, 0, 0, 1, 1, 2], [0], [0]>} : vector<4x20x16xf32>, vector<4x16x16xf32>, vector<4x20x16xf32> -> vector<4x20x16xf32>
    "tpu.trace_stop"() : () -> ()
    %216 = vector.shape_cast %164 : vector<20x16xf32> to vector<1x20x16xf32>
    %217 = vector.shape_cast %216 : vector<1x20x16xf32> to vector<1x20x16xf32>
    %218 = vector.broadcast %217 : vector<1x20x16xf32> to vector<4x20x16xf32>
    %219 = vector.shape_cast %207 : vector<20x16xf32> to vector<1x20x16xf32>
    %220 = vector.shape_cast %219 : vector<1x20x16xf32> to vector<1x20x16xf32>
    %221 = vector.broadcast %220 : vector<1x20x16xf32> to vector<4x20x16xf32>
    %222 = vector.extract_strided_slice %211 {offsets = [0, 0, 0], sizes = [4, 4, 16], strides = [1, 1, 1]} : vector<4x20x16xf32> to vector<4x4x16xf32>
    %223 = vector.extract_strided_slice %218 {offsets = [0, 0, 0], sizes = [4, 4, 16], strides = [1, 1, 1]} : vector<4x20x16xf32> to vector<4x4x16xf32>
    "tpu.trace_start"() <{level = 10 : i32, message = "cpw,cqw->cpq"}> : () -> ()
    %cst_73 = arith.constant dense<0.000000e+00> : vector<4x4x4xf32>
    %224 = tpu.matmul %222, %223, %cst_73 {dimension_numbers = #tpu.dot_dimension_numbers<[2], [2], [1], [1], [0, 0, 0, 1, 1, 1], [0], [0]>} : vector<4x4x16xf32>, vector<4x4x16xf32>, vector<4x4x4xf32> -> vector<4x4x4xf32>
    "tpu.trace_stop"() : () -> ()
    %225 = vector.extract_strided_slice %211 {offsets = [0, 0, 0], sizes = [4, 4, 16], strides = [1, 1, 1]} : vector<4x20x16xf32> to vector<4x4x16xf32>
    %226 = vector.extract_strided_slice %221 {offsets = [0, 0, 0], sizes = [4, 4, 16], strides = [1, 1, 1]} : vector<4x20x16xf32> to vector<4x4x16xf32>
    "tpu.trace_start"() <{level = 10 : i32, message = "cpw,cqw->cpq"}> : () -> ()
    %cst_74 = arith.constant dense<0.000000e+00> : vector<4x4x4xf32>
    %227 = tpu.matmul %225, %226, %cst_74 {dimension_numbers = #tpu.dot_dimension_numbers<[2], [2], [1], [1], [0, 0, 0, 1, 1, 1], [0], [0]>} : vector<4x4x16xf32>, vector<4x4x16xf32>, vector<4x4x4xf32> -> vector<4x4x4xf32>
    "tpu.trace_stop"() : () -> ()
    %228 = arith.maximumf %224, %227 : vector<4x4x4xf32>
    %229 = vector.extract_strided_slice %215 {offsets = [0, 0, 0], sizes = [4, 4, 16], strides = [1, 1, 1]} : vector<4x20x16xf32> to vector<4x4x16xf32>
    %230 = vector.extract_strided_slice %218 {offsets = [0, 0, 0], sizes = [4, 4, 16], strides = [1, 1, 1]} : vector<4x20x16xf32> to vector<4x4x16xf32>
    "tpu.trace_start"() <{level = 10 : i32, message = "cpw,cqw->cpq"}> : () -> ()
    %cst_75 = arith.constant dense<0.000000e+00> : vector<4x4x4xf32>
    %231 = tpu.matmul %229, %230, %cst_75 {dimension_numbers = #tpu.dot_dimension_numbers<[2], [2], [1], [1], [0, 0, 0, 1, 1, 1], [0], [0]>} : vector<4x4x16xf32>, vector<4x4x16xf32>, vector<4x4x4xf32> -> vector<4x4x4xf32>
    "tpu.trace_stop"() : () -> ()
    %232 = vector.extract_strided_slice %215 {offsets = [0, 0, 0], sizes = [4, 4, 16], strides = [1, 1, 1]} : vector<4x20x16xf32> to vector<4x4x16xf32>
    %233 = vector.extract_strided_slice %221 {offsets = [0, 0, 0], sizes = [4, 4, 16], strides = [1, 1, 1]} : vector<4x20x16xf32> to vector<4x4x16xf32>
    "tpu.trace_start"() <{level = 10 : i32, message = "cpw,cqw->cpq"}> : () -> ()
    %cst_76 = arith.constant dense<0.000000e+00> : vector<4x4x4xf32>
    %234 = tpu.matmul %232, %233, %cst_76 {dimension_numbers = #tpu.dot_dimension_numbers<[2], [2], [1], [1], [0, 0, 0, 1, 1, 1], [0], [0]>} : vector<4x4x16xf32>, vector<4x4x16xf32>, vector<4x4x4xf32> -> vector<4x4x4xf32>
    "tpu.trace_stop"() : () -> ()
    %235 = arith.maximumf %231, %234 : vector<4x4x4xf32>
    %236 = arith.maximumf %228, %235 : vector<4x4x4xf32>
    %c0_77 = arith.constant 0 : index
    %c0_78 = arith.constant 0 : index
    %c0_79 = arith.constant 0 : index
    %c0_80 = arith.constant 0 : index
    %237 = vector.load %arg3[%c0_77, %c0_78, %c0_79, %c0_80] : memref<1x4x4x20xf32, #tpu.memory_space<vmem>>, vector<1x4x4x4xf32>
    %238 = vector.shape_cast %237 : vector<1x4x4x4xf32> to vector<4x4x4xf32>
    %239 = vector.shape_cast %236 : vector<4x4x4xf32> to vector<1x4x4x4xf32>
    tpu.vector_store %arg3[%c0_77, %c0_78, %c0_79, %c0_80], %239 {strides = array<i32>} : memref<1x4x4x20xf32, #tpu.memory_space<vmem>>, vector<1x4x4x4xf32>,
    %240 = vector.extract_strided_slice %211 {offsets = [0, 4, 0], sizes = [4, 4, 16], strides = [1, 1, 1]} : vector<4x20x16xf32> to vector<4x4x16xf32>
    %241 = vector.extract_strided_slice %218 {offsets = [0, 4, 0], sizes = [4, 4, 16], strides = [1, 1, 1]} : vector<4x20x16xf32> to vector<4x4x16xf32>
    "tpu.trace_start"() <{level = 10 : i32, message = "cpw,cqw->cpq"}> : () -> ()
    %cst_81 = arith.constant dense<0.000000e+00> : vector<4x4x4xf32>
    %242 = tpu.matmul %240, %241, %cst_81 {dimension_numbers = #tpu.dot_dimension_numbers<[2], [2], [1], [1], [0, 0, 0, 1, 1, 1], [0], [0]>} : vector<4x4x16xf32>, vector<4x4x16xf32>, vector<4x4x4xf32> -> vector<4x4x4xf32>
    "tpu.trace_stop"() : () -> ()
    %243 = vector.extract_strided_slice %211 {offsets = [0, 4, 0], sizes = [4, 4, 16], strides = [1, 1, 1]} : vector<4x20x16xf32> to vector<4x4x16xf32>
    %244 = vector.extract_strided_slice %221 {offsets = [0, 4, 0], sizes = [4, 4, 16], strides = [1, 1, 1]} : vector<4x20x16xf32> to vector<4x4x16xf32>
    "tpu.trace_start"() <{level = 10 : i32, message = "cpw,cqw->cpq"}> : () -> ()
    %cst_82 = arith.constant dense<0.000000e+00> : vector<4x4x4xf32>
    %245 = tpu.matmul %243, %244, %cst_82 {dimension_numbers = #tpu.dot_dimension_numbers<[2], [2], [1], [1], [0, 0, 0, 1, 1, 1], [0], [0]>} : vector<4x4x16xf32>, vector<4x4x16xf32>, vector<4x4x4xf32> -> vector<4x4x4xf32>
    "tpu.trace_stop"() : () -> ()
    %246 = arith.maximumf %242, %245 : vector<4x4x4xf32>
    %247 = vector.extract_strided_slice %215 {offsets = [0, 4, 0], sizes = [4, 4, 16], strides = [1, 1, 1]} : vector<4x20x16xf32> to vector<4x4x16xf32>
    %248 = vector.extract_strided_slice %218 {offsets = [0, 4, 0], sizes = [4, 4, 16], strides = [1, 1, 1]} : vector<4x20x16xf32> to vector<4x4x16xf32>
    "tpu.trace_start"() <{level = 10 : i32, message = "cpw,cqw->cpq"}> : () -> ()
    %cst_83 = arith.constant dense<0.000000e+00> : vector<4x4x4xf32>
    %249 = tpu.matmul %247, %248, %cst_83 {dimension_numbers = #tpu.dot_dimension_numbers<[2], [2], [1], [1], [0, 0, 0, 1, 1, 1], [0], [0]>} : vector<4x4x16xf32>, vector<4x4x16xf32>, vector<4x4x4xf32> -> vector<4x4x4xf32>
    "tpu.trace_stop"() : () -> ()
    %250 = vector.extract_strided_slice %215 {offsets = [0, 4, 0], sizes = [4, 4, 16], strides = [1, 1, 1]} : vector<4x20x16xf32> to vector<4x4x16xf32>
    %251 = vector.extract_strided_slice %221 {offsets = [0, 4, 0], sizes = [4, 4, 16], strides = [1, 1, 1]} : vector<4x20x16xf32> to vector<4x4x16xf32>
    "tpu.trace_start"() <{level = 10 : i32, message = "cpw,cqw->cpq"}> : () -> ()
    %cst_84 = arith.constant dense<0.000000e+00> : vector<4x4x4xf32>
    %252 = tpu.matmul %250, %251, %cst_84 {dimension_numbers = #tpu.dot_dimension_numbers<[2], [2], [1], [1], [0, 0, 0, 1, 1, 1], [0], [0]>} : vector<4x4x16xf32>, vector<4x4x16xf32>, vector<4x4x4xf32> -> vector<4x4x4xf32>
    "tpu.trace_stop"() : () -> ()
    %253 = arith.maximumf %249, %252 : vector<4x4x4xf32>
    %254 = arith.maximumf %246, %253 : vector<4x4x4xf32>
    %c0_85 = arith.constant 0 : index
    %c0_86 = arith.constant 0 : index
    %c0_87 = arith.constant 0 : index
    %c4 = arith.constant 4 : index
    %255 = vector.load %arg3[%c0_85, %c0_86, %c0_87, %c4] : memref<1x4x4x20xf32, #tpu.memory_space<vmem>>, vector<1x4x4x4xf32>
    %256 = vector.shape_cast %255 : vector<1x4x4x4xf32> to vector<4x4x4xf32>
    %257 = vector.shape_cast %254 : vector<4x4x4xf32> to vector<1x4x4x4xf32>
    tpu.vector_store %arg3[%c0_85, %c0_86, %c0_87, %c4], %257 {strides = array<i32>} : memref<1x4x4x20xf32, #tpu.memory_space<vmem>>, vector<1x4x4x4xf32>,
    %258 = vector.extract_strided_slice %211 {offsets = [0, 8, 0], sizes = [4, 4, 16], strides = [1, 1, 1]} : vector<4x20x16xf32> to vector<4x4x16xf32>
    %259 = vector.extract_strided_slice %218 {offsets = [0, 8, 0], sizes = [4, 4, 16], strides = [1, 1, 1]} : vector<4x20x16xf32> to vector<4x4x16xf32>
    "tpu.trace_start"() <{level = 10 : i32, message = "cpw,cqw->cpq"}> : () -> ()
    %cst_88 = arith.constant dense<0.000000e+00> : vector<4x4x4xf32>
    %260 = tpu.matmul %258, %259, %cst_88 {dimension_numbers = #tpu.dot_dimension_numbers<[2], [2], [1], [1], [0, 0, 0, 1, 1, 1], [0], [0]>} : vector<4x4x16xf32>, vector<4x4x16xf32>, vector<4x4x4xf32> -> vector<4x4x4xf32>
    "tpu.trace_stop"() : () -> ()
    %261 = vector.extract_strided_slice %211 {offsets = [0, 8, 0], sizes = [4, 4, 16], strides = [1, 1, 1]} : vector<4x20x16xf32> to vector<4x4x16xf32>
    %262 = vector.extract_strided_slice %221 {offsets = [0, 8, 0], sizes = [4, 4, 16], strides = [1, 1, 1]} : vector<4x20x16xf32> to vector<4x4x16xf32>
    "tpu.trace_start"() <{level = 10 : i32, message = "cpw,cqw->cpq"}> : () -> ()
    %cst_89 = arith.constant dense<0.000000e+00> : vector<4x4x4xf32>
    %263 = tpu.matmul %261, %262, %cst_89 {dimension_numbers = #tpu.dot_dimension_numbers<[2], [2], [1], [1], [0, 0, 0, 1, 1, 1], [0], [0]>} : vector<4x4x16xf32>, vector<4x4x16xf32>, vector<4x4x4xf32> -> vector<4x4x4xf32>
    "tpu.trace_stop"() : () -> ()
    %264 = arith.maximumf %260, %263 : vector<4x4x4xf32>
    %265 = vector.extract_strided_slice %215 {offsets = [0, 8, 0], sizes = [4, 4, 16], strides = [1, 1, 1]} : vector<4x20x16xf32> to vector<4x4x16xf32>
    %266 = vector.extract_strided_slice %218 {offsets = [0, 8, 0], sizes = [4, 4, 16], strides = [1, 1, 1]} : vector<4x20x16xf32> to vector<4x4x16xf32>
    "tpu.trace_start"() <{level = 10 : i32, message = "cpw,cqw->cpq"}> : () -> ()
    %cst_90 = arith.constant dense<0.000000e+00> : vector<4x4x4xf32>
    %267 = tpu.matmul %265, %266, %cst_90 {dimension_numbers = #tpu.dot_dimension_numbers<[2], [2], [1], [1], [0, 0, 0, 1, 1, 1], [0], [0]>} : vector<4x4x16xf32>, vector<4x4x16xf32>, vector<4x4x4xf32> -> vector<4x4x4xf32>
    "tpu.trace_stop"() : () -> ()
    %268 = vector.extract_strided_slice %215 {offsets = [0, 8, 0], sizes = [4, 4, 16], strides = [1, 1, 1]} : vector<4x20x16xf32> to vector<4x4x16xf32>
    %269 = vector.extract_strided_slice %221 {offsets = [0, 8, 0], sizes = [4, 4, 16], strides = [1, 1, 1]} : vector<4x20x16xf32> to vector<4x4x16xf32>
    "tpu.trace_start"() <{level = 10 : i32, message = "cpw,cqw->cpq"}> : () -> ()
    %cst_91 = arith.constant dense<0.000000e+00> : vector<4x4x4xf32>
    %270 = tpu.matmul %268, %269, %cst_91 {dimension_numbers = #tpu.dot_dimension_numbers<[2], [2], [1], [1], [0, 0, 0, 1, 1, 1], [0], [0]>} : vector<4x4x16xf32>, vector<4x4x16xf32>, vector<4x4x4xf32> -> vector<4x4x4xf32>
    "tpu.trace_stop"() : () -> ()
    %271 = arith.maximumf %267, %270 : vector<4x4x4xf32>
    %272 = arith.maximumf %264, %271 : vector<4x4x4xf32>
    %c0_92 = arith.constant 0 : index
    %c0_93 = arith.constant 0 : index
    %c0_94 = arith.constant 0 : index
    %c8 = arith.constant 8 : index
    %273 = vector.load %arg3[%c0_92, %c0_93, %c0_94, %c8] : memref<1x4x4x20xf32, #tpu.memory_space<vmem>>, vector<1x4x4x4xf32>
    %274 = vector.shape_cast %273 : vector<1x4x4x4xf32> to vector<4x4x4xf32>
    %275 = vector.shape_cast %272 : vector<4x4x4xf32> to vector<1x4x4x4xf32>
    tpu.vector_store %arg3[%c0_92, %c0_93, %c0_94, %c8], %275 {strides = array<i32>} : memref<1x4x4x20xf32, #tpu.memory_space<vmem>>, vector<1x4x4x4xf32>,
    %276 = vector.extract_strided_slice %211 {offsets = [0, 12, 0], sizes = [4, 4, 16], strides = [1, 1, 1]} : vector<4x20x16xf32> to vector<4x4x16xf32>
    %277 = vector.extract_strided_slice %218 {offsets = [0, 12, 0], sizes = [4, 4, 16], strides = [1, 1, 1]} : vector<4x20x16xf32> to vector<4x4x16xf32>
    "tpu.trace_start"() <{level = 10 : i32, message = "cpw,cqw->cpq"}> : () -> ()
    %cst_95 = arith.constant dense<0.000000e+00> : vector<4x4x4xf32>
    %278 = tpu.matmul %276, %277, %cst_95 {dimension_numbers = #tpu.dot_dimension_numbers<[2], [2], [1], [1], [0, 0, 0, 1, 1, 1], [0], [0]>} : vector<4x4x16xf32>, vector<4x4x16xf32>, vector<4x4x4xf32> -> vector<4x4x4xf32>
    "tpu.trace_stop"() : () -> ()
    %279 = vector.extract_strided_slice %211 {offsets = [0, 12, 0], sizes = [4, 4, 16], strides = [1, 1, 1]} : vector<4x20x16xf32> to vector<4x4x16xf32>
    %280 = vector.extract_strided_slice %221 {offsets = [0, 12, 0], sizes = [4, 4, 16], strides = [1, 1, 1]} : vector<4x20x16xf32> to vector<4x4x16xf32>
    "tpu.trace_start"() <{level = 10 : i32, message = "cpw,cqw->cpq"}> : () -> ()
    %cst_96 = arith.constant dense<0.000000e+00> : vector<4x4x4xf32>
    %281 = tpu.matmul %279, %280, %cst_96 {dimension_numbers = #tpu.dot_dimension_numbers<[2], [2], [1], [1], [0, 0, 0, 1, 1, 1], [0], [0]>} : vector<4x4x16xf32>, vector<4x4x16xf32>, vector<4x4x4xf32> -> vector<4x4x4xf32>
    "tpu.trace_stop"() : () -> ()
    %282 = arith.maximumf %278, %281 : vector<4x4x4xf32>
    %283 = vector.extract_strided_slice %215 {offsets = [0, 12, 0], sizes = [4, 4, 16], strides = [1, 1, 1]} : vector<4x20x16xf32> to vector<4x4x16xf32>
    %284 = vector.extract_strided_slice %218 {offsets = [0, 12, 0], sizes = [4, 4, 16], strides = [1, 1, 1]} : vector<4x20x16xf32> to vector<4x4x16xf32>
    "tpu.trace_start"() <{level = 10 : i32, message = "cpw,cqw->cpq"}> : () -> ()
    %cst_97 = arith.constant dense<0.000000e+00> : vector<4x4x4xf32>
    %285 = tpu.matmul %283, %284, %cst_97 {dimension_numbers = #tpu.dot_dimension_numbers<[2], [2], [1], [1], [0, 0, 0, 1, 1, 1], [0], [0]>} : vector<4x4x16xf32>, vector<4x4x16xf32>, vector<4x4x4xf32> -> vector<4x4x4xf32>
    "tpu.trace_stop"() : () -> ()
    %286 = vector.extract_strided_slice %215 {offsets = [0, 12, 0], sizes = [4, 4, 16], strides = [1, 1, 1]} : vector<4x20x16xf32> to vector<4x4x16xf32>
    %287 = vector.extract_strided_slice %221 {offsets = [0, 12, 0], sizes = [4, 4, 16], strides = [1, 1, 1]} : vector<4x20x16xf32> to vector<4x4x16xf32>
    "tpu.trace_start"() <{level = 10 : i32, message = "cpw,cqw->cpq"}> : () -> ()
    %cst_98 = arith.constant dense<0.000000e+00> : vector<4x4x4xf32>
    %288 = tpu.matmul %286, %287, %cst_98 {dimension_numbers = #tpu.dot_dimension_numbers<[2], [2], [1], [1], [0, 0, 0, 1, 1, 1], [0], [0]>} : vector<4x4x16xf32>, vector<4x4x16xf32>, vector<4x4x4xf32> -> vector<4x4x4xf32>
    "tpu.trace_stop"() : () -> ()
    %289 = arith.maximumf %285, %288 : vector<4x4x4xf32>
    %290 = arith.maximumf %282, %289 : vector<4x4x4xf32>
    %c0_99 = arith.constant 0 : index
    %c0_100 = arith.constant 0 : index
    %c0_101 = arith.constant 0 : index
    %c12 = arith.constant 12 : index
    %291 = vector.load %arg3[%c0_99, %c0_100, %c0_101, %c12] : memref<1x4x4x20xf32, #tpu.memory_space<vmem>>, vector<1x4x4x4xf32>
    %292 = vector.shape_cast %291 : vector<1x4x4x4xf32> to vector<4x4x4xf32>
    %293 = vector.shape_cast %290 : vector<4x4x4xf32> to vector<1x4x4x4xf32>
    tpu.vector_store %arg3[%c0_99, %c0_100, %c0_101, %c12], %293 {strides = array<i32>} : memref<1x4x4x20xf32, #tpu.memory_space<vmem>>, vector<1x4x4x4xf32>,
    %294 = vector.extract_strided_slice %211 {offsets = [0, 16, 0], sizes = [4, 4, 16], strides = [1, 1, 1]} : vector<4x20x16xf32> to vector<4x4x16xf32>
    %295 = vector.extract_strided_slice %218 {offsets = [0, 16, 0], sizes = [4, 4, 16], strides = [1, 1, 1]} : vector<4x20x16xf32> to vector<4x4x16xf32>
    "tpu.trace_start"() <{level = 10 : i32, message = "cpw,cqw->cpq"}> : () -> ()
    %cst_102 = arith.constant dense<0.000000e+00> : vector<4x4x4xf32>
    %296 = tpu.matmul %294, %295, %cst_102 {dimension_numbers = #tpu.dot_dimension_numbers<[2], [2], [1], [1], [0, 0, 0, 1, 1, 1], [0], [0]>} : vector<4x4x16xf32>, vector<4x4x16xf32>, vector<4x4x4xf32> -> vector<4x4x4xf32>
    "tpu.trace_stop"() : () -> ()
    %297 = vector.extract_strided_slice %211 {offsets = [0, 16, 0], sizes = [4, 4, 16], strides = [1, 1, 1]} : vector<4x20x16xf32> to vector<4x4x16xf32>
    %298 = vector.extract_strided_slice %221 {offsets = [0, 16, 0], sizes = [4, 4, 16], strides = [1, 1, 1]} : vector<4x20x16xf32> to vector<4x4x16xf32>
    "tpu.trace_start"() <{level = 10 : i32, message = "cpw,cqw->cpq"}> : () -> ()
    %cst_103 = arith.constant dense<0.000000e+00> : vector<4x4x4xf32>
    %299 = tpu.matmul %297, %298, %cst_103 {dimension_numbers = #tpu.dot_dimension_numbers<[2], [2], [1], [1], [0, 0, 0, 1, 1, 1], [0], [0]>} : vector<4x4x16xf32>, vector<4x4x16xf32>, vector<4x4x4xf32> -> vector<4x4x4xf32>
    "tpu.trace_stop"() : () -> ()
    %300 = arith.maximumf %296, %299 : vector<4x4x4xf32>
    %301 = vector.extract_strided_slice %215 {offsets = [0, 16, 0], sizes = [4, 4, 16], strides = [1, 1, 1]} : vector<4x20x16xf32> to vector<4x4x16xf32>
    %302 = vector.extract_strided_slice %218 {offsets = [0, 16, 0], sizes = [4, 4, 16], strides = [1, 1, 1]} : vector<4x20x16xf32> to vector<4x4x16xf32>
    "tpu.trace_start"() <{level = 10 : i32, message = "cpw,cqw->cpq"}> : () -> ()
    %cst_104 = arith.constant dense<0.000000e+00> : vector<4x4x4xf32>
    %303 = tpu.matmul %301, %302, %cst_104 {dimension_numbers = #tpu.dot_dimension_numbers<[2], [2], [1], [1], [0, 0, 0, 1, 1, 1], [0], [0]>} : vector<4x4x16xf32>, vector<4x4x16xf32>, vector<4x4x4xf32> -> vector<4x4x4xf32>
    "tpu.trace_stop"() : () -> ()
    %304 = vector.extract_strided_slice %215 {offsets = [0, 16, 0], sizes = [4, 4, 16], strides = [1, 1, 1]} : vector<4x20x16xf32> to vector<4x4x16xf32>
    %305 = vector.extract_strided_slice %221 {offsets = [0, 16, 0], sizes = [4, 4, 16], strides = [1, 1, 1]} : vector<4x20x16xf32> to vector<4x4x16xf32>
    "tpu.trace_start"() <{level = 10 : i32, message = "cpw,cqw->cpq"}> : () -> ()
    %cst_105 = arith.constant dense<0.000000e+00> : vector<4x4x4xf32>
    %306 = tpu.matmul %304, %305, %cst_105 {dimension_numbers = #tpu.dot_dimension_numbers<[2], [2], [1], [1], [0, 0, 0, 1, 1, 1], [0], [0]>} : vector<4x4x16xf32>, vector<4x4x16xf32>, vector<4x4x4xf32> -> vector<4x4x4xf32>
    "tpu.trace_stop"() : () -> ()
    %307 = arith.maximumf %303, %306 : vector<4x4x4xf32>
    %308 = arith.maximumf %300, %307 : vector<4x4x4xf32>
    %c0_106 = arith.constant 0 : index
    %c0_107 = arith.constant 0 : index
    %c0_108 = arith.constant 0 : index
    %c16 = arith.constant 16 : index
    %309 = vector.load %arg3[%c0_106, %c0_107, %c0_108, %c16] : memref<1x4x4x20xf32, #tpu.memory_space<vmem>>, vector<1x4x4x4xf32>
    %310 = vector.shape_cast %309 : vector<1x4x4x4xf32> to vector<4x4x4xf32>
    %311 = vector.shape_cast %308 : vector<4x4x4xf32> to vector<1x4x4x4xf32>
    tpu.vector_store %arg3[%c0_106, %c0_107, %c0_108, %c16], %311 {strides = array<i32>} : memref<1x4x4x20xf32, #tpu.memory_space<vmem>>, vector<1x4x4x4xf32>,
    return
  }
  func.func @transform_0(%arg0: i32) -> (i32, i32, i32) {
    %c0_i32 = arith.constant 0 : i32
    %c0_i32_0 = arith.constant 0 : i32
    %c0_i32_1 = arith.constant 0 : i32
    return %arg0, %c0_i32, %c0_i32_0 : i32, i32, i32
  }
  func.func @transform_1(%arg0: i32) -> (i32, i32, i32, i32) {
    %c0_i32 = arith.constant 0 : i32
    %c0_i32_0 = arith.constant 0 : i32
    %c0_i32_1 = arith.constant 0 : i32
    %c0_i32_2 = arith.constant 0 : i32
    return %arg0, %c0_i32, %c0_i32_0, %c0_i32_1 : i32, i32, i32, i32
  }
  func.func @transform_2(%arg0: i32) -> (i32, i32, i32, i32) {
    %c0_i32 = arith.constant 0 : i32
    %c0_i32_0 = arith.constant 0 : i32
    %c0_i32_1 = arith.constant 0 : i32
    %c0_i32_2 = arith.constant 0 : i32
    return %arg0, %c0_i32, %c0_i32_0, %c0_i32_1 : i32, i32, i32, i32
  }
}

</mosaic_0001>

<llo_original>
// kernel: tpu_custom_call.1
$region0: #{tpu_custom_call.1}
  #allocation0 [shape = 'u32[]', space=smem, size = 0x4, offset = 0x4, fixed_abs, tag = 'smem constant byte address 0x4 - core index']
  #allocation1 [shape = 'u32[144,128]{1,0:T(1,128)}', space=vmem, size = 0x12000, scoped, tag = 'internal scratch']
  %s0 = inlined_call_operand.vmem [shape: f32[2,20,4], index: 0, kind: input, shape index: {}]
  %s1 = inlined_call_operand.hbm [shape: f32[2,4,16,16], index: 1, kind: input, shape index: {}]
  %s2 = inlined_call_operand.hbm [shape: f32[2,4,4,20], index: 2, kind: output, shape index: {}]
  %s3 = sld [smem:[#allocation0]]
  $region45: #{tpu_custom_call.1} parent=0
    _
  %s5 = ssub.s32 1, %s3
  %s6 = scalar_select 0, %s5, %s3
  $region1: #{tpu_custom_call.1} parent=0
    #allocation2 [shape = 'u8[65536]{0}', space=vmem, size = 0x10000, scoped, tag = 'input window, operand 1']
    #allocation3 [shape = 's32[2]{0}', space=sflag, size = 0x8, scoped, tag = 'scoped memory for tpu_custom_call.1']
    #allocation4 [shape = 's32[2]{0}', space=sflag, size = 0x8, scoped, tag = 'scoped memory for tpu_custom_call.1']
    #allocation5 [shape = 'u8[16384]{0}', space=vmem, size = 0x4000, scoped, tag = 'output window, operand 0']
    %7 = vsyncpa [#allocation3], 0
    %s8 = scalar_lea.sflag [#allocation3], 1
    %9 = vsyncpa %s8, 0
    %10 = vsyncpa [#allocation4], 0
    %s11 = scalar_lea.sflag [#allocation4], 1
    %12 = vsyncpa %s11, 0
    loop: start=0, step=1, limit=4
    $region2: #{tpu_custom_call.1} parent=1 // loop_pre_header
      _
    $region3: #{tpu_custom_call.1} parent=1 // loop_header
      %s14 = sphi 0, %s18
      %p15 = scmp.ge.s32.totalorder %s14, 4
      %s24 = sphi 0, %s26
      %s27 = sphi 0, %s24
      %s28 = sphi 0, %s27
      %s44 = sphi 0, %s28
      %s50 = sphi 0, %s52
      %s53 = sphi 0, %s50
      %s54 = sphi 0, %s53
      %s70 = sphi 0, %s54
      %s76 = sphi 0, %s78
      %s79 = sphi 0, %s76
      %s80 = sphi 0, %s79
      %s96 = sphi 0, %s80
    $region4: #{tpu_custom_call.1} parent=1 // loop_header_branch
      %17 = sbr.rel (%p15) target = $region8
    $region5: #{tpu_custom_call.1} parent=1 // loop_body
      %s19 = ssub.s32 %s14, 1
      %s20 = ssub.s32 %s14, 2
      %s21 = sadd.s32 %s14, 1
      %s22 = ssub.s32 %s14, %s21
      %p23 = scmp.eq.s32.totalorder %s22, 0
      %s25 = sadd.s32 %s24, 1
      %s26 = scalar_select %p23, %s24, %s25
      %p29 = pneg %p23
      %p30 = scmp.eq.s32.totalorder %s14, 1
      %p31 = por %p29, %p30
      %p32 = scmp.ne.s32.totalorder %s24, %s27
      %p33 = scmp.eq.s32.totalorder %s14, 0
      %p34 = por %p32, %p33
      %p35 = scmp.ne.s32.totalorder %s24, %s27
      %p36 = scmp.eq.s32.totalorder %s19, 1
      %p37 = por %p35, %p36
      %p38 = scmp.ne.s32.totalorder %s27, %s28
      %p39 = scmp.eq.s32.totalorder %s19, 0
      %p40 = por %p38, %p39
      %p41 = scmp.ne.s32.totalorder %s27, %s28
      %p42 = scmp.eq.s32.totalorder %s20, 1
      %p43 = por %p41, %p42
      %p45 = scmp.ne.s32.totalorder %s28, %s44
      %p46 = scmp.eq.s32.totalorder %s20, 0
      %p47 = por %p45, %p46
      %s48 = ssub.s32 %s14, %s21
      %p49 = scmp.eq.s32.totalorder %s48, 0
      %s51 = sadd.s32 %s50, 1
      %s52 = scalar_select %p49, %s50, %s51
      %p55 = pneg %p49
      %p56 = scmp.eq.s32.totalorder %s14, 1
      %p57 = por %p55, %p56
      %p58 = scmp.ne.s32.totalorder %s50, %s53
      %p59 = scmp.eq.s32.totalorder %s14, 0
      %p60 = por %p58, %p59
      %p61 = scmp.ne.s32.totalorder %s50, %s53
      %p62 = scmp.eq.s32.totalorder %s19, 1
      %p63 = por %p61, %p62
      %p64 = scmp.ne.s32.totalorder %s53, %s54
      %p65 = scmp.eq.s32.totalorder %s19, 0
      %p66 = por %p64, %p65
      %p67 = scmp.ne.s32.totalorder %s53, %s54
      %p68 = scmp.eq.s32.totalorder %s20, 1
      %p69 = por %p67, %p68
      %p71 = scmp.ne.s32.totalorder %s54, %s70
      %p72 = scmp.eq.s32.totalorder %s20, 0
      %p73 = por %p71, %p72
      %s74 = ssub.s32 %s14, %s21
      %p75 = scmp.eq.s32.totalorder %s74, 0
      %s77 = sadd.s32 %s76, 1
      %s78 = scalar_select %p75, %s76, %s77
      %p81 = pneg %p75
      %p82 = scmp.eq.s32.totalorder %s14, 1
      %p83 = por %p81, %p82
      %p84 = scmp.ne.s32.totalorder %s76, %s79
      %p85 = scmp.eq.s32.totalorder %s14, 0
      %p86 = por %p84, %p85
      %p87 = scmp.ne.s32.totalorder %s76, %s79
      %p88 = scmp.eq.s32.totalorder %s19, 1
      %p89 = por %p87, %p88
      %p90 = scmp.ne.s32.totalorder %s79, %s80
      %p91 = scmp.eq.s32.totalorder %s19, 0
      %p92 = por %p90, %p91
      %p93 = scmp.ne.s32.totalorder %s79, %s80
      %p94 = scmp.eq.s32.totalorder %s20, 1
      %p95 = por %p93, %p94
      %p97 = scmp.ne.s32.totalorder %s80, %s96
      %p98 = scmp.eq.s32.totalorder %s20, 0
      %p99 = por %p97, %p98
      %p100 = scmp.le.s32.totalorder 1, %s14
      %p101 = scmp.lt.s32.totalorder %s14, 3
      %p102 = pnand %p100, %p101
      %p103 = pneg %p102
      // Predicated region
      $region9: #{tpu_custom_call.1} parent=5 // pred_check
        _
      $region10: #{tpu_custom_call.1} parent=5 // pred_check_branch
        %105 = sbr.rel (%p102) target = $region12
      $region11: #{tpu_custom_call.1} parent=5 // pred_region
        %s106 = ssub.s32 %s14, 1
      $region12: #{tpu_custom_call.1} parent=5 // pred_fallthru
        _
      %p107 = scmp.lt.s32.totalorder %s14, 2
      // Predicated region
      $region13: #{tpu_custom_call.1} parent=5 // pred_check
        %p108 = pneg %p107
      $region14: #{tpu_custom_call.1} parent=5 // pred_check_branch
        %110 = sbr.rel (%p108) target = $region16
      $region15: #{tpu_custom_call.1} parent=5 // pred_region
        // Predicated region
        $region17: #{tpu_custom_call.1} parent=15 // pred_check
          %p111 = pneg %p34
        $region18: #{tpu_custom_call.1} parent=15 // pred_check_branch
          %113 = sbr.rel (%p111) target = $region20
        $region19: #{tpu_custom_call.1} parent=15 // pred_region
          %p114 = scmp.lt.s32.totalorder %s14, 1
          %s115 = scalar_select %p114, %s14, 1
          %s116 = smul.addr %s115, 3
          %s117 = smul.addr %s116, 8
          %s118 = scalar_lea.vmem %s0, %s117
        $region20: #{tpu_custom_call.1} parent=15 // pred_fallthru
          _
        // Predicated region
        $region21: #{tpu_custom_call.1} parent=15 // pred_check
          %p119 = pneg %p60
        $region22: #{tpu_custom_call.1} parent=15 // pred_check_branch
          %121 = sbr.rel (%p119) target = $region24
        $region23: #{tpu_custom_call.1} parent=15 // pred_region
          %s122 = sand.u32 %s50, 1
          %s123 = scalar_lea.sflag [#allocation3], %s122
          %s124 = sand.u32 %s50, 1
          %s125 = smul.addr %s124, 64
          %s126 = scalar_lea.vmem [#allocation2], %s125
          %s128 = ssub.s32 1024, 1024
          %129 = vsyncadd %s123, %s128
          %s130 = smul.addr %s14, 8
          %s131 = smul.addr %s130, 128
          %s132 = scalar_lea.hbm %s1, %s131
          %s133 = sshll.u32 %s126, 4
          %s134 = int_to_ptr.vmem [resolvable:$true] %s133
          %139 = dma.hbm_to_vmem [thread:$0]  %s132, 1024, %s134, %s123, 128, 128, 8
        $region24: #{tpu_custom_call.1} parent=15 // pred_fallthru
          _
      $region16: #{tpu_custom_call.1} parent=5 // pred_fallthru
        _
      %p140 = scmp.le.s32.totalorder 1, %s14
      %p141 = scmp.lt.s32.totalorder %s14, 3
      %p142 = pnand %p140, %p141
      %p143 = pneg %p142
      // Predicated region
      $region25: #{tpu_custom_call.1} parent=5 // pred_check
        _
      $region26: #{tpu_custom_call.1} parent=5 // pred_check_branch
        %145 = sbr.rel (%p142) target = $region28
      $region27: #{tpu_custom_call.1} parent=5 // pred_region
        %s146 = ssub.s32 %s14, 1
        %s147 = sand.u32 %s53, 1
        %s148 = scalar_lea.sflag [#allocation3], %s147
        %s149 = sand.u32 %s53, 1
        %s150 = smul.addr %s149, 64
        %s151 = scalar_lea.vmem [#allocation2], %s150
        // Predicated region
        $region29: #{tpu_custom_call.1} parent=27 // pred_check
          %p152 = pneg %p66
        $region30: #{tpu_custom_call.1} parent=27 // pred_check_branch
          %154 = sbr.rel (%p152) target = $region32
        $region31: #{tpu_custom_call.1} parent=27 // pred_region
          %155 = dma.done %s148, 1024
        $region32: #{tpu_custom_call.1} parent=27 // pred_fallthru
          _
        %p156 = scmp.lt.s32.totalorder %s19, 1
        %s157 = scalar_select %p156, %s19, 1
        %s158 = smul.addr %s157, 3
        %s159 = smul.addr %s158, 8
        %s160 = scalar_lea.vmem %s0, %s159
        %p161 = pneg %p40
        %p162 = pneg %p37
        %s163 = sand.u32 %s53, 1
        %s164 = scalar_lea.sflag [#allocation3], %s163
        %s165 = sand.u32 %s53, 1
        %s166 = smul.addr %s165, 64
        %s167 = scalar_lea.vmem [#allocation2], %s166
        %p168 = pneg %p66
        %p169 = pneg %p63
        %p170 = pneg %p92
        %p171 = pneg %p89
        %s172 = sand.u32 %s79, 1
        %s173 = scalar_lea.sflag [#allocation4], %s172
        %s174 = sand.u32 %s79, 1
        %s175 = smul.addr %s174, 16
        %s176 = scalar_lea.vmem [#allocation5], %s175
        %p177 = scmp.lt.s32.totalorder %s19, 1
        %s178 = scalar_select %p177, %s19, 1
        %s179 = smul.addr %s178, 3
        %s180 = smul.addr %s179, 8
        %s181 = scalar_lea.vmem %s0, %s180
        %v182 = vld [vmem:[%s181] sm:$0xff]
        %v183 = vld [vmem:[%s181 + $0x8] sm:$0xff]
        %v184 = vld [vmem:[%s181 + $0x10] sm:$0xf]
        %188 = vrot.lane.b32.xlu0 %v182, 2
        %v189 = vpop.permute.xlu0 %188
        %190 = vrot.lane.b32.xlu0 %v183, 2
        %v191 = vpop.permute.xlu0 %190
        %192 = vrot.lane.b32.xlu0 %v184, 2
        %v193 = vpop.permute.xlu0 %192
        %v197 = vsub.f32 %v182, %v189
        %v198 = vsub.f32 %v183, %v191
        %v199 = vsub.f32 %v184, %v193
        %v200 = vrcp.pop 15.0
        %v201 = vmul.f32 %v197, %v200
        %v202 = vmul.f32 %v198, %v200
        %v203 = vmul.f32 %v199, %v200
        %204 = vrot.lane.b32.xlu0 %v182, 126
        %v205 = vpop.permute.xlu0 %204
        %206 = vrot.lane.b32.xlu0 %v183, 126
        %v207 = vpop.permute.xlu0 %206
        %208 = vrot.lane.b32.xlu0 %v184, 126
        %v209 = vpop.permute.xlu0 %208
        %v213 = vadd.f32 %v182, %v205
        %v214 = vadd.f32 %v183, %v207
        %v215 = vadd.f32 %v184, %v209
        %v216 = vsub.f32 %v213, 16.0
        %v217 = vsub.f32 %v214, 16.0
        %v218 = vsub.f32 %v215, 16.0
        %v219 = vadd.f32 %v216, 1.0
        %v220 = vadd.f32 %v217, 1.0
        %v221 = vadd.f32 %v218, 1.0
        %v222 = vmul.f32 %v219, %v200
        %v223 = vmul.f32 %v220, %v200
        %v224 = vmul.f32 %v221, %v200
        %v225 = vlaneseq
        %v226 = vshrl.u32 %v225, 7
        %v227 = vadd.s32 %v226, 8
        %v228 = vadd.s32 %v226, 16
        %v229 = vcvt.s32.f32 %v226
        %v230 = vcvt.s32.f32 %v227
        %v231 = vcvt.s32.f32 %v228
        %v232 = vrcp.pop 4.0
        %v233 = vmul.f32 %v229, %v232
        %v234 = vmul.f32 %v230, %v232
        %v235 = vmul.f32 %v231, %v232
        %v236 = vfloor.f32 %v233
        %v237 = vfloor.f32 %v234
        %v238 = vfloor.f32 %v235
        %v239 = vmul.f32 %v236, 4.0
        %v240 = vmul.f32 %v237, 4.0
        %v241 = vmul.f32 %v238, 4.0
        %v242 = vsub.f32 %v229, %v239
        %v243 = vsub.f32 %v230, %v240
        %v244 = vsub.f32 %v231, %v241
        %v245 = vld [vmem:[%s151] sm:$0xff]
        %v246 = vld [vmem:[%s151 + $0x8] sm:$0xff]
        %v247 = vld [vmem:[%s151 + $0x10] sm:$0xff]
        %v248 = vld [vmem:[%s151 + $0x18] sm:$0xff]
        %v249 = vld [vmem:[%s151 + $0x20] sm:$0xff]
        %v250 = vld [vmem:[%s151 + $0x28] sm:$0xff]
        %v251 = vld [vmem:[%s151 + $0x30] sm:$0xff]
        %v252 = vld [vmem:[%s151 + $0x38] sm:$0xff]
        %v253 = vlaneseq
        %v254 = vand.u32 %v253, 127
        %v255 = vcvt.s32.f32 %v254
        %v256 = vmul.f32 %v242, 2.0
        %v257 = vmul.f32 %v243, 2.0
        %v258 = vmul.f32 %v244, 2.0
        %v259 = vadd.f32 %v256, 0.0
        %v260 = vadd.f32 %v257, 0.0
        %v261 = vadd.f32 %v258, 0.0
        %v262 = vmul.f32 %v259, 2.0
        %v263 = vmul.f32 %v260, 2.0
        %v264 = vmul.f32 %v261, 2.0
        %v265 = vadd.f32 %v262, 1.0
        %v266 = vadd.f32 %v263, 1.0
        %v267 = vadd.f32 %v264, 1.0
        %v268 = vrcp.pop 8.0
        %v269 = vmul.f32 %v265, %v268
        %v270 = vmul.f32 %v266, %v268
        %v271 = vmul.f32 %v267, %v268
        %v272 = vadd.f32 %v269, -1.0
        %v273 = vadd.f32 %v270, -1.0
        %v274 = vadd.f32 %v271, -1.0
        %v275 = vmul.f32 %v201, %v272
        %v276 = vmul.f32 %v202, %v273
        %v277 = vmul.f32 %v203, %v274
        %281 = vrot.lane.b32.xlu0 %v222, 2
        %v282 = vpop.permute.xlu0 %281
        %283 = vrot.lane.b32.xlu0 %v223, 2
        %v284 = vpop.permute.xlu0 %283
        %285 = vrot.lane.b32.xlu0 %v224, 2
        %v286 = vpop.permute.xlu0 %285
        %v290 = vadd.f32 %v275, %v282
        %v291 = vadd.f32 %v276, %v284
        %v292 = vadd.f32 %v277, %v286
        %v293 = vadd.f32 %v290, 1.0
        %v294 = vadd.f32 %v291, 1.0
        %v295 = vadd.f32 %v292, 1.0
        %v296 = vmul.f32 %v293, 16.0
        %v297 = vmul.f32 %v294, 16.0
        %v298 = vmul.f32 %v295, 16.0
        %v299 = vmul.f32 %v296, 0.5
        %v300 = vmul.f32 %v297, 0.5
        %v301 = vmul.f32 %v298, 0.5
        %v302 = vsub.f32 %v299, 0.5
        %v303 = vsub.f32 %v300, 0.5
        %v304 = vsub.f32 %v301, 0.5
        %v305 = vfloor.f32 %v302
        %v306 = vfloor.f32 %v303
        %v307 = vfloor.f32 %v304
        %v308 = vsub.f32 %v302, %v305
        %v309 = vsub.f32 %v303, %v306
        %v310 = vsub.f32 %v304, %v307
        %312 = vset.pattern.permute.xlu0 3
        %313 = vperm.xlu0 %312, %v305
        %v314 = vpop.permute.xlu0 %313
        %317 = vset.pattern.permute.xlu0 3
        %318 = vperm.xlu0 %317, %v306
        %v319 = vpop.permute.xlu0 %318
        %322 = vset.pattern.permute.xlu0 3
        %323 = vperm.xlu0 %322, %v307
        %v324 = vpop.permute.xlu0 %323
        %vm326 = vcmp.eq.f32.partialorder %v255, %v314
        %vm327 = vcmp.eq.f32.partialorder %v255, %v319
        %vm328 = vcmp.eq.f32.partialorder %v255, %v324
        %v329 = vsub.f32 1.0, %v308
        %v330 = vsub.f32 1.0, %v309
        %v331 = vsub.f32 1.0, %v310
        %333 = vset.pattern.permute.xlu0 3
        %334 = vperm.xlu0 %333, %v329
        %v335 = vpop.permute.xlu0 %334
        %338 = vset.pattern.permute.xlu0 3
        %339 = vperm.xlu0 %338, %v330
        %v340 = vpop.permute.xlu0 %339
        %343 = vset.pattern.permute.xlu0 3
        %344 = vperm.xlu0 %343, %v331
        %v345 = vpop.permute.xlu0 %344
        %v347 = vsel %vm326, %v335, 0.0
        %v348 = vsel %vm327, %v340, 0.0
        %v349 = vsel %vm328, %v345, 0.0
        %v350 = vadd.f32 %v305, 1.0
        %v351 = vadd.f32 %v306, 1.0
        %v352 = vadd.f32 %v307, 1.0
        %354 = vset.pattern.permute.xlu0 3
        %355 = vperm.xlu0 %354, %v350
        %v356 = vpop.permute.xlu0 %355
        %359 = vset.pattern.permute.xlu0 3
        %360 = vperm.xlu0 %359, %v351
        %v361 = vpop.permute.xlu0 %360
        %364 = vset.pattern.permute.xlu0 3
        %365 = vperm.xlu0 %364, %v352
        %v366 = vpop.permute.xlu0 %365
        %vm368 = vcmp.eq.f32.partialorder %v255, %v356
        %vm369 = vcmp.eq.f32.partialorder %v255, %v361
        %vm370 = vcmp.eq.f32.partialorder %v255, %v366
        %372 = vset.pattern.permute.xlu0 3
        %373 = vperm.xlu0 %372, %v308
        %v374 = vpop.permute.xlu0 %373
        %377 = vset.pattern.permute.xlu0 3
        %378 = vperm.xlu0 %377, %v309
        %v379 = vpop.permute.xlu0 %378
        %382 = vset.pattern.permute.xlu0 3
        %383 = vperm.xlu0 %382, %v310
        %v384 = vpop.permute.xlu0 %383
        %v386 = vsel %vm368, %v374, 0.0
        %v387 = vsel %vm369, %v379, 0.0
        %v388 = vsel %vm370, %v384, 0.0
        %v389 = vadd.f32 %v347, %v386
        %v390 = vadd.f32 %v348, %v387
        %v391 = vadd.f32 %v349, %v388
        %v392 = vadd.f32 %v256, 1.0
        %v393 = vadd.f32 %v257, 1.0
        %v394 = vadd.f32 %v258, 1.0
        %v395 = vmul.f32 %v392, 2.0
        %v396 = vmul.f32 %v393, 2.0
        %v397 = vmul.f32 %v394, 2.0
        %v398 = vadd.f32 %v395, 1.0
        %v399 = vadd.f32 %v396, 1.0
        %v400 = vadd.f32 %v397, 1.0
        %v401 = vmul.f32 %v398, %v268
        %v402 = vmul.f32 %v399, %v268
        %v403 = vmul.f32 %v400, %v268
        %v404 = vadd.f32 %v401, -1.0
        %v405 = vadd.f32 %v402, -1.0
        %v406 = vadd.f32 %v403, -1.0
        %v407 = vmul.f32 %v201, %v404
        %v408 = vmul.f32 %v202, %v405
        %v409 = vmul.f32 %v203, %v406
        %v410 = vadd.f32 %v407, %v282
        %v411 = vadd.f32 %v408, %v284
        %v412 = vadd.f32 %v409, %v286
        %v413 = vadd.f32 %v410, 1.0
        %v414 = vadd.f32 %v411, 1.0
        %v415 = vadd.f32 %v412, 1.0
        %v416 = vmul.f32 %v413, 16.0
        %v417 = vmul.f32 %v414, 16.0
        %v418 = vmul.f32 %v415, 16.0
        %v419 = vmul.f32 %v416, 0.5
        %v420 = vmul.f32 %v417, 0.5
        %v421 = vmul.f32 %v418, 0.5
        %v422 = vsub.f32 %v419, 0.5
        %v423 = vsub.f32 %v420, 0.5
        %v424 = vsub.f32 %v421, 0.5
        %v425 = vfloor.f32 %v422
        %v426 = vfloor.f32 %v423
        %v427 = vfloor.f32 %v424
        %v428 = vsub.f32 %v422, %v425
        %v429 = vsub.f32 %v423, %v426
        %v430 = vsub.f32 %v424, %v427
        %432 = vset.pattern.permute.xlu0 3
        %433 = vperm.xlu0 %432, %v425
        %v434 = vpop.permute.xlu0 %433
        %437 = vset.pattern.permute.xlu0 3
        %438 = vperm.xlu0 %437, %v426
        %v439 = vpop.permute.xlu0 %438
        %442 = vset.pattern.permute.xlu0 3
        %443 = vperm.xlu0 %442, %v427
        %v444 = vpop.permute.xlu0 %443
        %vm446 = vcmp.eq.f32.partialorder %v255, %v434
        %vm447 = vcmp.eq.f32.partialorder %v255, %v439
        %vm448 = vcmp.eq.f32.partialorder %v255, %v444
        %v449 = vsub.f32 1.0, %v428
        %v450 = vsub.f32 1.0, %v429
        %v451 = vsub.f32 1.0, %v430
        %453 = vset.pattern.permute.xlu0 3
        %454 = vperm.xlu0 %453, %v449
        %v455 = vpop.permute.xlu0 %454
        %458 = vset.pattern.permute.xlu0 3
        %459 = vperm.xlu0 %458, %v450
        %v460 = vpop.permute.xlu0 %459
        %463 = vset.pattern.permute.xlu0 3
        %464 = vperm.xlu0 %463, %v451
        %v465 = vpop.permute.xlu0 %464
        %v467 = vsel %vm446, %v455, 0.0
        %v468 = vsel %vm447, %v460, 0.0
        %v469 = vsel %vm448, %v465, 0.0
        %v470 = vadd.f32 %v425, 1.0
        %v471 = vadd.f32 %v426, 1.0
        %v472 = vadd.f32 %v427, 1.0
        %474 = vset.pattern.permute.xlu0 3
        %475 = vperm.xlu0 %474, %v470
        %v476 = vpop.permute.xlu0 %475
        %479 = vset.pattern.permute.xlu0 3
        %480 = vperm.xlu0 %479, %v471
        %v481 = vpop.permute.xlu0 %480
        %484 = vset.pattern.permute.xlu0 3
        %485 = vperm.xlu0 %484, %v472
        %v486 = vpop.permute.xlu0 %485
        %vm488 = vcmp.eq.f32.partialorder %v255, %v476
        %vm489 = vcmp.eq.f32.partialorder %v255, %v481
        %vm490 = vcmp.eq.f32.partialorder %v255, %v486
        %492 = vset.pattern.permute.xlu0 3
        %493 = vperm.xlu0 %492, %v428
        %v494 = vpop.permute.xlu0 %493
        %497 = vset.pattern.permute.xlu0 3
        %498 = vperm.xlu0 %497, %v429
        %v499 = vpop.permute.xlu0 %498
        %502 = vset.pattern.permute.xlu0 3
        %503 = vperm.xlu0 %502, %v430
        %v504 = vpop.permute.xlu0 %503
        %v506 = vsel %vm488, %v494, 0.0
        %v507 = vsel %vm489, %v499, 0.0
        %v508 = vsel %vm490, %v504, 0.0
        %v509 = vadd.f32 %v467, %v506
        %v510 = vadd.f32 %v468, %v507
        %v511 = vadd.f32 %v469, %v508
        %512 = vset.pattern.permute.xlu0 2
        %513 = vperm.xlu0 %512, %v305
        %v514 = vpop.permute.xlu0 %513
        %516 = vset.pattern.permute.xlu0 2
        %517 = vperm.xlu0 %516, %v306
        %v518 = vpop.permute.xlu0 %517
        %520 = vset.pattern.permute.xlu0 2
        %521 = vperm.xlu0 %520, %v307
        %v522 = vpop.permute.xlu0 %521
        %vm524 = vcmp.eq.f32.partialorder %v255, %v514
        %vm525 = vcmp.eq.f32.partialorder %v255, %v518
        %vm526 = vcmp.eq.f32.partialorder %v255, %v522
        %527 = vset.pattern.permute.xlu0 2
        %528 = vperm.xlu0 %527, %v329
        %v529 = vpop.permute.xlu0 %528
        %531 = vset.pattern.permute.xlu0 2
        %532 = vperm.xlu0 %531, %v330
        %v533 = vpop.permute.xlu0 %532
        %535 = vset.pattern.permute.xlu0 2
        %536 = vperm.xlu0 %535, %v331
        %v537 = vpop.permute.xlu0 %536
        %v539 = vsel %vm524, %v529, 0.0
        %v540 = vsel %vm525, %v533, 0.0
        %v541 = vsel %vm526, %v537, 0.0
        %542 = vset.pattern.permute.xlu0 2
        %543 = vperm.xlu0 %542, %v350
        %v544 = vpop.permute.xlu0 %543
        %546 = vset.pattern.permute.xlu0 2
        %547 = vperm.xlu0 %546, %v351
        %v548 = vpop.permute.xlu0 %547
        %550 = vset.pattern.permute.xlu0 2
        %551 = vperm.xlu0 %550, %v352
        %v552 = vpop.permute.xlu0 %551
        %vm554 = vcmp.eq.f32.partialorder %v255, %v544
        %vm555 = vcmp.eq.f32.partialorder %v255, %v548
        %vm556 = vcmp.eq.f32.partialorder %v255, %v552
        %557 = vset.pattern.permute.xlu0 2
        %558 = vperm.xlu0 %557, %v308
        %v559 = vpop.permute.xlu0 %558
        %561 = vset.pattern.permute.xlu0 2
        %562 = vperm.xlu0 %561, %v309
        %v563 = vpop.permute.xlu0 %562
        %565 = vset.pattern.permute.xlu0 2
        %566 = vperm.xlu0 %565, %v310
        %v567 = vpop.permute.xlu0 %566
        %v569 = vsel %vm554, %v559, 0.0
        %v570 = vsel %vm555, %v563, 0.0
        %v571 = vsel %vm556, %v567, 0.0
        %v572 = vadd.f32 %v539, %v569
        %v573 = vadd.f32 %v540, %v570
        %v574 = vadd.f32 %v541, %v571
        %575 = vset.pattern.permute.xlu0 2
        %576 = vperm.xlu0 %575, %v425
        %v577 = vpop.permute.xlu0 %576
        %579 = vset.pattern.permute.xlu0 2
        %580 = vperm.xlu0 %579, %v426
        %v581 = vpop.permute.xlu0 %580
        %583 = vset.pattern.permute.xlu0 2
        %584 = vperm.xlu0 %583, %v427
        %v585 = vpop.permute.xlu0 %584
        %vm587 = vcmp.eq.f32.partialorder %v255, %v577
        %vm588 = vcmp.eq.f32.partialorder %v255, %v581
        %vm589 = vcmp.eq.f32.partialorder %v255, %v585
        %590 = vset.pattern.permute.xlu0 2
        %591 = vperm.xlu0 %590, %v449
        %v592 = vpop.permute.xlu0 %591
        %594 = vset.pattern.permute.xlu0 2
        %595 = vperm.xlu0 %594, %v450
        %v596 = vpop.permute.xlu0 %595
        %598 = vset.pattern.permute.xlu0 2
        %599 = vperm.xlu0 %598, %v451
        %v600 = vpop.permute.xlu0 %599
        %v602 = vsel %vm587, %v592, 0.0
        %v603 = vsel %vm588, %v596, 0.0
        %v604 = vsel %vm589, %v600, 0.0
        %605 = vset.pattern.permute.xlu0 2
        %606 = vperm.xlu0 %605, %v470
        %v607 = vpop.permute.xlu0 %606
        %609 = vset.pattern.permute.xlu0 2
        %610 = vperm.xlu0 %609, %v471
        %v611 = vpop.permute.xlu0 %610
        %613 = vset.pattern.permute.xlu0 2
        %614 = vperm.xlu0 %613, %v472
        %v615 = vpop.permute.xlu0 %614
        %vm617 = vcmp.eq.f32.partialorder %v255, %v607
        %vm618 = vcmp.eq.f32.partialorder %v255, %v611
        %vm619 = vcmp.eq.f32.partialorder %v255, %v615
        %620 = vset.pattern.permute.xlu0 2
        %621 = vperm.xlu0 %620, %v428
        %v622 = vpop.permute.xlu0 %621
        %624 = vset.pattern.permute.xlu0 2
        %625 = vperm.xlu0 %624, %v429
        %v626 = vpop.permute.xlu0 %625
        %628 = vset.pattern.permute.xlu0 2
        %629 = vperm.xlu0 %628, %v430
        %v630 = vpop.permute.xlu0 %629
        %v632 = vsel %vm617, %v622, 0.0
        %v633 = vsel %vm618, %v626, 0.0
        %v634 = vsel %vm619, %v630, 0.0
        %v635 = vadd.f32 %v602, %v632
        %v636 = vadd.f32 %v603, %v633
        %v637 = vadd.f32 %v604, %v634
        %vm638 = vcmask 130048
        %v640 = vsel %vm638, %v389, 0
        %v643 = vsel %vm638, %v390, 0
        %v646 = vsel %vm638, %v391, 0
        %648 = vmatprep.subr.mxu0 0.0
        %649 = vmatpush1.msra.mxu0 0.0
        %650 = vmatprep.subr.mxu0 0.0
        %651 = vmatpush1.msra.mxu0 0.0
        %652 = vmatprep.subr.mxu0 0.0
        %653 = vmatpush1.msra.mxu0 0.0
        %654 = vmatprep.subr.mxu0 0.0
        %655 = vmatpush1.msra.mxu0 0.0
        %656 = vmatprep.subr.mxu0 0.0
        %657 = vmatpush1.msra.mxu0 0.0
        %658 = vmatprep.subr.mxu0 0.0
        %659 = vmatpush1.msra.mxu0 0.0
        %660 = vmatprep.subr.mxu0 0.0
        %661 = vmatpush1.msra.mxu0 0.0
        %662 = vmatprep.subr.mxu0 0.0
        %663 = vmatpush1.msra.mxu0 0.0
        %664 = vmatprep.subr.mxu0 0.0
        %665 = vmatpush1.msra.mxu0 0.0
        %666 = vmatprep.subr.mxu0 0.0
        %667 = vmatpush1.msra.mxu0 0.0
        %668 = vmatprep.subr.mxu0 0.0
        %669 = vmatpush1.msra.mxu0 0.0
        %670 = vmatprep.subr.mxu0 0.0
        %671 = vmatpush1.msra.mxu0 0.0
        %672 = vmatprep.subr.mxu0 0.0
        %673 = vmatpush1.msra.mxu0 0.0
        %674 = vmatprep.subr.mxu0 0.0
        %675 = vmatpush1.msra.mxu0 0.0
        %676 = vmatprep.subr.mxu0 0.0
        %677 = vmatpush1.msra.mxu0 %v246
        %678 = vmatprep.subr.mxu0 0.0
        %679 = vmatpush1.msra.mxu0 %v245
        %680 = vmatprep.subr.mxu0 0.0
        %681 = vmatpush2.msra.mxu0 0.0
        %682 = vmatprep.subr.mxu0 0.0
        %683 = vmatpush2.msra.mxu0 0.0
        %684 = vmatprep.subr.mxu0 0.0
        %685 = vmatpush2.msra.mxu0 0.0
        %686 = vmatprep.subr.mxu0 0.0
        %687 = vmatpush2.msra.mxu0 0.0
        %688 = vmatprep.subr.mxu0 0.0
        %689 = vmatpush2.msra.mxu0 0.0
        %690 = vmatprep.subr.mxu0 0.0
        %691 = vmatpush2.msra.mxu0 0.0
        %692 = vmatprep.subr.mxu0 0.0
        %693 = vmatpush2.msra.mxu0 0.0
        %694 = vmatprep.subr.mxu0 0.0
        %695 = vmatpush2.msra.mxu0 0.0
        %696 = vmatprep.subr.mxu0 0.0
        %697 = vmatpush2.msra.mxu0 0.0
        %698 = vmatprep.subr.mxu0 0.0
        %699 = vmatpush2.msra.mxu0 0.0
        %700 = vmatprep.subr.mxu0 0.0
        %701 = vmatpush2.msra.mxu0 0.0
        %702 = vmatprep.subr.mxu0 0.0
        %703 = vmatpush2.msra.mxu0 0.0
        %704 = vmatprep.subr.mxu0 0.0
        %705 = vmatpush2.msra.mxu0 0.0
        %706 = vmatprep.subr.mxu0 0.0
        %707 = vmatpush2.msra.mxu0 0.0
        %708 = vmatprep.subr.mxu0 0.0
        %709 = vmatpush2.msra.mxu0 0.0
        %710 = vmatprep.subr.mxu0 0.0
        %711 = vmatpush2.msra.mxu0 0.0
        %712 = vmatprep.mubr.f32.mxu0 0.0
        %713 = vmatmul.mubr.f32.gmra.mxu0 %v640
        %v714 = vpop.f32.mrf.mxu0
        %v715 = vadd.f32 0.0, %v714
        %v716 = vpop.f32.mrf.mxu0
        %717 = vmatprep.mubr.f32.mxu0 0.0
        %718 = vmatmul.mubr.f32.gmra.mxu0 %v643
        %v719 = vpop.f32.mrf.mxu0
        %v720 = vadd.f32 0.0, %v719
        %v721 = vpop.f32.mrf.mxu0
        %722 = vmatprep.mubr.f32.mxu0 0.0
        %723 = vmatmul.mubr.f32.gmra.mxu0 %v646
        %v724 = vpop.f32.mrf.mxu0
        %v725 = vadd.f32 0.0, %v724
        %v726 = vpop.f32.mrf.mxu0
        %727 = vdwg.mxu0
        %728 = vmatprep.subr.mxu0 0.0
        %729 = vmatpush1.msra.mxu0 0.0
        %730 = vmatprep.subr.mxu0 0.0
        %731 = vmatpush1.msra.mxu0 0.0
        %732 = vmatprep.subr.mxu0 0.0
        %733 = vmatpush1.msra.mxu0 0.0
        %734 = vmatprep.subr.mxu0 0.0
        %735 = vmatpush1.msra.mxu0 0.0
        %736 = vmatprep.subr.mxu0 0.0
        %737 = vmatpush1.msra.mxu0 0.0
        %738 = vmatprep.subr.mxu0 0.0
        %739 = vmatpush1.msra.mxu0 0.0
        %740 = vmatprep.subr.mxu0 0.0
        %741 = vmatpush1.msra.mxu0 0.0
        %742 = vmatprep.subr.mxu0 0.0
        %743 = vmatpush1.msra.mxu0 0.0
        %744 = vmatprep.subr.mxu0 0.0
        %745 = vmatpush1.msra.mxu0 0.0
        %746 = vmatprep.subr.mxu0 0.0
        %747 = vmatpush1.msra.mxu0 0.0
        %748 = vmatprep.subr.mxu0 0.0
        %749 = vmatpush1.msra.mxu0 0.0
        %750 = vmatprep.subr.mxu0 0.0
        %751 = vmatpush1.msra.mxu0 0.0
        %752 = vmatprep.subr.mxu0 0.0
        %753 = vmatpush1.msra.mxu0 0.0
        %754 = vmatprep.subr.mxu0 0.0
        %755 = vmatpush1.msra.mxu0 0.0
        %756 = vmatprep.subr.mxu0 0.0
        %757 = vmatpush1.msra.mxu0 %v248
        %758 = vmatprep.subr.mxu0 0.0
        %759 = vmatpush1.msra.mxu0 %v247
        %760 = vmatprep.subr.mxu0 0.0
        %761 = vmatpush2.msra.mxu0 0.0
        %762 = vmatprep.subr.mxu0 0.0
        %763 = vmatpush2.msra.mxu0 0.0
        %764 = vmatprep.subr.mxu0 0.0
        %765 = vmatpush2.msra.mxu0 0.0
        %766 = vmatprep.subr.mxu0 0.0
        %767 = vmatpush2.msra.mxu0 0.0
        %768 = vmatprep.subr.mxu0 0.0
        %769 = vmatpush2.msra.mxu0 0.0
        %770 = vmatprep.subr.mxu0 0.0
        %771 = vmatpush2.msra.mxu0 0.0
        %772 = vmatprep.subr.mxu0 0.0
        %773 = vmatpush2.msra.mxu0 0.0
        %774 = vmatprep.subr.mxu0 0.0
        %775 = vmatpush2.msra.mxu0 0.0
        %776 = vmatprep.subr.mxu0 0.0
        %777 = vmatpush2.msra.mxu0 0.0
        %778 = vmatprep.subr.mxu0 0.0
        %779 = vmatpush2.msra.mxu0 0.0
        %780 = vmatprep.subr.mxu0 0.0
        %781 = vmatpush2.msra.mxu0 0.0
        %782 = vmatprep.subr.mxu0 0.0
        %783 = vmatpush2.msra.mxu0 0.0
        %784 = vmatprep.subr.mxu0 0.0
        %785 = vmatpush2.msra.mxu0 0.0
        %786 = vmatprep.subr.mxu0 0.0
        %787 = vmatpush2.msra.mxu0 0.0
        %788 = vmatprep.subr.mxu0 0.0
        %789 = vmatpush2.msra.mxu0 0.0
        %790 = vmatprep.subr.mxu0 0.0
        %791 = vmatpush2.msra.mxu0 0.0
        %792 = vmatprep.mubr.f32.mxu0 0.0
        %793 = vmatmul.mubr.f32.gmra.mxu0 %v640
        %v794 = vpop.f32.mrf.mxu0
        %v795 = vadd.f32 0.0, %v794
        %v796 = vpop.f32.mrf.mxu0
        %797 = vmatprep.mubr.f32.mxu0 0.0
        %798 = vmatmul.mubr.f32.gmra.mxu0 %v643
        %v799 = vpop.f32.mrf.mxu0
        %v800 = vadd.f32 0.0, %v799
        %v801 = vpop.f32.mrf.mxu0
        %802 = vmatprep.mubr.f32.mxu0 0.0
        %803 = vmatmul.mubr.f32.gmra.mxu0 %v646
        %v804 = vpop.f32.mrf.mxu0
        %v805 = vadd.f32 0.0, %v804
        %v806 = vpop.f32.mrf.mxu0
        %807 = vdwg.mxu0
        %808 = vmatprep.subr.mxu0 0.0
        %809 = vmatpush1.msra.mxu0 0.0
        %810 = vmatprep.subr.mxu0 0.0
        %811 = vmatpush1.msra.mxu0 0.0
        %812 = vmatprep.subr.mxu0 0.0
        %813 = vmatpush1.msra.mxu0 0.0
        %814 = vmatprep.subr.mxu0 0.0
        %815 = vmatpush1.msra.mxu0 0.0
        %816 = vmatprep.subr.mxu0 0.0
        %817 = vmatpush1.msra.mxu0 0.0
        %818 = vmatprep.subr.mxu0 0.0
        %819 = vmatpush1.msra.mxu0 0.0
        %820 = vmatprep.subr.mxu0 0.0
        %821 = vmatpush1.msra.mxu0 0.0
        %822 = vmatprep.subr.mxu0 0.0
        %823 = vmatpush1.msra.mxu0 0.0
        %824 = vmatprep.subr.mxu0 0.0
        %825 = vmatpush1.msra.mxu0 0.0
        %826 = vmatprep.subr.mxu0 0.0
        %827 = vmatpush1.msra.mxu0 0.0
        %828 = vmatprep.subr.mxu0 0.0
        %829 = vmatpush1.msra.mxu0 0.0
        %830 = vmatprep.subr.mxu0 0.0
        %831 = vmatpush1.msra.mxu0 0.0
        %832 = vmatprep.subr.mxu0 0.0
        %833 = vmatpush1.msra.mxu0 0.0
        %834 = vmatprep.subr.mxu0 0.0
        %835 = vmatpush1.msra.mxu0 0.0
        %836 = vmatprep.subr.mxu0 0.0
        %837 = vmatpush1.msra.mxu0 %v250
        %838 = vmatprep.subr.mxu0 0.0
        %839 = vmatpush1.msra.mxu0 %v249
        %840 = vmatprep.subr.mxu0 0.0
        %841 = vmatpush2.msra.mxu0 0.0
        %842 = vmatprep.subr.mxu0 0.0
        %843 = vmatpush2.msra.mxu0 0.0
        %844 = vmatprep.subr.mxu0 0.0
        %845 = vmatpush2.msra.mxu0 0.0
        %846 = vmatprep.subr.mxu0 0.0
        %847 = vmatpush2.msra.mxu0 0.0
        %848 = vmatprep.subr.mxu0 0.0
        %849 = vmatpush2.msra.mxu0 0.0
        %850 = vmatprep.subr.mxu0 0.0
        %851 = vmatpush2.msra.mxu0 0.0
        %852 = vmatprep.subr.mxu0 0.0
        %853 = vmatpush2.msra.mxu0 0.0
        %854 = vmatprep.subr.mxu0 0.0
        %855 = vmatpush2.msra.mxu0 0.0
        %856 = vmatprep.subr.mxu0 0.0
        %857 = vmatpush2.msra.mxu0 0.0
        %858 = vmatprep.subr.mxu0 0.0
        %859 = vmatpush2.msra.mxu0 0.0
        %860 = vmatprep.subr.mxu0 0.0
        %861 = vmatpush2.msra.mxu0 0.0
        %862 = vmatprep.subr.mxu0 0.0
        %863 = vmatpush2.msra.mxu0 0.0
        %864 = vmatprep.subr.mxu0 0.0
        %865 = vmatpush2.msra.mxu0 0.0
        %866 = vmatprep.subr.mxu0 0.0
        %867 = vmatpush2.msra.mxu0 0.0
        %868 = vmatprep.subr.mxu0 0.0
        %869 = vmatpush2.msra.mxu0 0.0
        %870 = vmatprep.subr.mxu0 0.0
        %871 = vmatpush2.msra.mxu0 0.0
        %872 = vmatprep.mubr.f32.mxu0 0.0
        %873 = vmatmul.mubr.f32.gmra.mxu0 %v640
        %v874 = vpop.f32.mrf.mxu0
        %v875 = vadd.f32 0.0, %v874
        %v876 = vpop.f32.mrf.mxu0
        %877 = vmatprep.mubr.f32.mxu0 0.0
        %878 = vmatmul.mubr.f32.gmra.mxu0 %v643
        %v879 = vpop.f32.mrf.mxu0
        %v880 = vadd.f32 0.0, %v879
        %v881 = vpop.f32.mrf.mxu0
        %882 = vmatprep.mubr.f32.mxu0 0.0
        %883 = vmatmul.mubr.f32.gmra.mxu0 %v646
        %v884 = vpop.f32.mrf.mxu0
        %v885 = vadd.f32 0.0, %v884
        %v886 = vpop.f32.mrf.mxu0
        %887 = vdwg.mxu0
        %888 = vmatprep.subr.mxu0 0.0
        %889 = vmatpush1.msra.mxu0 0.0
        %890 = vmatprep.subr.mxu0 0.0
        %891 = vmatpush1.msra.mxu0 0.0
        %892 = vmatprep.subr.mxu0 0.0
        %893 = vmatpush1.msra.mxu0 0.0
        %894 = vmatprep.subr.mxu0 0.0
        %895 = vmatpush1.msra.mxu0 0.0
        %896 = vmatprep.subr.mxu0 0.0
        %897 = vmatpush1.msra.mxu0 0.0
        %898 = vmatprep.subr.mxu0 0.0
        %899 = vmatpush1.msra.mxu0 0.0
        %900 = vmatprep.subr.mxu0 0.0
        %901 = vmatpush1.msra.mxu0 0.0
        %902 = vmatprep.subr.mxu0 0.0
        %903 = vmatpush1.msra.mxu0 0.0
        %904 = vmatprep.subr.mxu0 0.0
        %905 = vmatpush1.msra.mxu0 0.0
        %906 = vmatprep.subr.mxu0 0.0
        %907 = vmatpush1.msra.mxu0 0.0
        %908 = vmatprep.subr.mxu0 0.0
        %909 = vmatpush1.msra.mxu0 0.0
        %910 = vmatprep.subr.mxu0 0.0
        %911 = vmatpush1.msra.mxu0 0.0
        %912 = vmatprep.subr.mxu0 0.0
        %913 = vmatpush1.msra.mxu0 0.0
        %914 = vmatprep.subr.mxu0 0.0
        %915 = vmatpush1.msra.mxu0 0.0
        %916 = vmatprep.subr.mxu0 0.0
        %917 = vmatpush1.msra.mxu0 %v252
        %918 = vmatprep.subr.mxu0 0.0
        %919 = vmatpush1.msra.mxu0 %v251
        %920 = vmatprep.subr.mxu0 0.0
        %921 = vmatpush2.msra.mxu0 0.0
        %922 = vmatprep.subr.mxu0 0.0
        %923 = vmatpush2.msra.mxu0 0.0
        %924 = vmatprep.subr.mxu0 0.0
        %925 = vmatpush2.msra.mxu0 0.0
        %926 = vmatprep.subr.mxu0 0.0
        %927 = vmatpush2.msra.mxu0 0.0
        %928 = vmatprep.subr.mxu0 0.0
        %929 = vmatpush2.msra.mxu0 0.0
        %930 = vmatprep.subr.mxu0 0.0
        %931 = vmatpush2.msra.mxu0 0.0
        %932 = vmatprep.subr.mxu0 0.0
        %933 = vmatpush2.msra.mxu0 0.0
        %934 = vmatprep.subr.mxu0 0.0
        %935 = vmatpush2.msra.mxu0 0.0
        %936 = vmatprep.subr.mxu0 0.0
        %937 = vmatpush2.msra.mxu0 0.0
        %938 = vmatprep.subr.mxu0 0.0
        %939 = vmatpush2.msra.mxu0 0.0
        %940 = vmatprep.subr.mxu0 0.0
        %941 = vmatpush2.msra.mxu0 0.0
        %942 = vmatprep.subr.mxu0 0.0
        %943 = vmatpush2.msra.mxu0 0.0
        %944 = vmatprep.subr.mxu0 0.0
        %945 = vmatpush2.msra.mxu0 0.0
        %946 = vmatprep.subr.mxu0 0.0
        %947 = vmatpush2.msra.mxu0 0.0
        %948 = vmatprep.subr.mxu0 0.0
        %949 = vmatpush2.msra.mxu0 0.0
        %950 = vmatprep.subr.mxu0 0.0
        %951 = vmatpush2.msra.mxu0 0.0
        %952 = vmatprep.mubr.f32.mxu0 0.0
        %953 = vmatmul.mubr.f32.gmra.mxu0 %v640
        %v954 = vpop.f32.mrf.mxu0
        %v955 = vadd.f32 0.0, %v954
        %v956 = vpop.f32.mrf.mxu0
        %957 = vmatprep.mubr.f32.mxu0 0.0
        %958 = vmatmul.mubr.f32.gmra.mxu0 %v643
        %v959 = vpop.f32.mrf.mxu0
        %v960 = vadd.f32 0.0, %v959
        %v961 = vpop.f32.mrf.mxu0
        %962 = vmatprep.mubr.f32.mxu0 0.0
        %963 = vmatmul.mubr.f32.gmra.mxu0 %v646
        %v964 = vpop.f32.mrf.mxu0
        %v965 = vadd.f32 0.0, %v964
        %v966 = vpop.f32.mrf.mxu0
        %967 = vdwg.mxu0
        %v969 = vsel %vm638, %v509, 0
        %v972 = vsel %vm638, %v510, 0
        %v975 = vsel %vm638, %v511, 0
        %977 = vmatprep.subr.mxu0 0.0
        %978 = vmatpush1.msra.mxu0 0.0
        %979 = vmatprep.subr.mxu0 0.0
        %980 = vmatpush1.msra.mxu0 0.0
        %981 = vmatprep.subr.mxu0 0.0
        %982 = vmatpush1.msra.mxu0 0.0
        %983 = vmatprep.subr.mxu0 0.0
        %984 = vmatpush1.msra.mxu0 0.0
        %985 = vmatprep.subr.mxu0 0.0
        %986 = vmatpush1.msra.mxu0 0.0
        %987 = vmatprep.subr.mxu0 0.0
        %988 = vmatpush1.msra.mxu0 0.0
        %989 = vmatprep.subr.mxu0 0.0
        %990 = vmatpush1.msra.mxu0 0.0
        %991 = vmatprep.subr.mxu0 0.0
        %992 = vmatpush1.msra.mxu0 0.0
        %993 = vmatprep.subr.mxu0 0.0
        %994 = vmatpush1.msra.mxu0 0.0
        %995 = vmatprep.subr.mxu0 0.0
        %996 = vmatpush1.msra.mxu0 0.0
        %997 = vmatprep.subr.mxu0 0.0
        %998 = vmatpush1.msra.mxu0 0.0
        %999 = vmatprep.subr.mxu0 0.0
        %1000 = vmatpush1.msra.mxu0 0.0
        %1001 = vmatprep.subr.mxu0 0.0
        %1002 = vmatpush1.msra.mxu0 0.0
        %1003 = vmatprep.subr.mxu0 0.0
        %1004 = vmatpush1.msra.mxu0 0.0
        %1005 = vmatprep.subr.mxu0 0.0
        %1006 = vmatpush1.msra.mxu0 %v246
        %1007 = vmatprep.subr.mxu0 0.0
        %1008 = vmatpush1.msra.mxu0 %v245
        %1009 = vmatprep.subr.mxu0 0.0
        %1010 = vmatpush2.msra.mxu0 0.0
        %1011 = vmatprep.subr.mxu0 0.0
        %1012 = vmatpush2.msra.mxu0 0.0
        %1013 = vmatprep.subr.mxu0 0.0
        %1014 = vmatpush2.msra.mxu0 0.0
        %1015 = vmatprep.subr.mxu0 0.0
        %1016 = vmatpush2.msra.mxu0 0.0
        %1017 = vmatprep.subr.mxu0 0.0
        %1018 = vmatpush2.msra.mxu0 0.0
        %1019 = vmatprep.subr.mxu0 0.0
        %1020 = vmatpush2.msra.mxu0 0.0
        %1021 = vmatprep.subr.mxu0 0.0
        %1022 = vmatpush2.msra.mxu0 0.0
        %1023 = vmatprep.subr.mxu0 0.0
        %1024 = vmatpush2.msra.mxu0 0.0
        %1025 = vmatprep.subr.mxu0 0.0
        %1026 = vmatpush2.msra.mxu0 0.0
        %1027 = vmatprep.subr.mxu0 0.0
        %1028 = vmatpush2.msra.mxu0 0.0
        %1029 = vmatprep.subr.mxu0 0.0
        %1030 = vmatpush2.msra.mxu0 0.0
        %1031 = vmatprep.subr.mxu0 0.0
        %1032 = vmatpush2.msra.mxu0 0.0
        %1033 = vmatprep.subr.mxu0 0.0
        %1034 = vmatpush2.msra.mxu0 0.0
        %1035 = vmatprep.subr.mxu0 0.0
        %1036 = vmatpush2.msra.mxu0 0.0
        %1037 = vmatprep.subr.mxu0 0.0
        %1038 = vmatpush2.msra.mxu0 0.0
        %1039 = vmatprep.subr.mxu0 0.0
        %1040 = vmatpush2.msra.mxu0 0.0
        %1041 = vmatprep.mubr.f32.mxu0 0.0
        %1042 = vmatmul.mubr.f32.gmra.mxu0 %v969
        %v1043 = vpop.f32.mrf.mxu0
        %v1044 = vadd.f32 0.0, %v1043
        %v1045 = vpop.f32.mrf.mxu0
        %1046 = vmatprep.mubr.f32.mxu0 0.0
        %1047 = vmatmul.mubr.f32.gmra.mxu0 %v972
        %v1048 = vpop.f32.mrf.mxu0
        %v1049 = vadd.f32 0.0, %v1048
        %v1050 = vpop.f32.mrf.mxu0
        %1051 = vmatprep.mubr.f32.mxu0 0.0
        %1052 = vmatmul.mubr.f32.gmra.mxu0 %v975
        %v1053 = vpop.f32.mrf.mxu0
        %v1054 = vadd.f32 0.0, %v1053
        %v1055 = vpop.f32.mrf.mxu0
        %1056 = vdwg.mxu0
        %1057 = vmatprep.subr.mxu0 0.0
        %1058 = vmatpush1.msra.mxu0 0.0
        %1059 = vmatprep.subr.mxu0 0.0
        %1060 = vmatpush1.msra.mxu0 0.0
        %1061 = vmatprep.subr.mxu0 0.0
        %1062 = vmatpush1.msra.mxu0 0.0
        %1063 = vmatprep.subr.mxu0 0.0
        %1064 = vmatpush1.msra.mxu0 0.0
        %1065 = vmatprep.subr.mxu0 0.0
        %1066 = vmatpush1.msra.mxu0 0.0
        %1067 = vmatprep.subr.mxu0 0.0
        %1068 = vmatpush1.msra.mxu0 0.0
        %1069 = vmatprep.subr.mxu0 0.0
        %1070 = vmatpush1.msra.mxu0 0.0
        %1071 = vmatprep.subr.mxu0 0.0
        %1072 = vmatpush1.msra.mxu0 0.0
        %1073 = vmatprep.subr.mxu0 0.0
        %1074 = vmatpush1.msra.mxu0 0.0
        %1075 = vmatprep.subr.mxu0 0.0
        %1076 = vmatpush1.msra.mxu0 0.0
        %1077 = vmatprep.subr.mxu0 0.0
        %1078 = vmatpush1.msra.mxu0 0.0
        %1079 = vmatprep.subr.mxu0 0.0
        %1080 = vmatpush1.msra.mxu0 0.0
        %1081 = vmatprep.subr.mxu0 0.0
        %1082 = vmatpush1.msra.mxu0 0.0
        %1083 = vmatprep.subr.mxu0 0.0
        %1084 = vmatpush1.msra.mxu0 0.0
        %1085 = vmatprep.subr.mxu0 0.0
        %1086 = vmatpush1.msra.mxu0 %v248
        %1087 = vmatprep.subr.mxu0 0.0
        %1088 = vmatpush1.msra.mxu0 %v247
        %1089 = vmatprep.subr.mxu0 0.0
        %1090 = vmatpush2.msra.mxu0 0.0
        %1091 = vmatprep.subr.mxu0 0.0
        %1092 = vmatpush2.msra.mxu0 0.0
        %1093 = vmatprep.subr.mxu0 0.0
        %1094 = vmatpush2.msra.mxu0 0.0
        %1095 = vmatprep.subr.mxu0 0.0
        %1096 = vmatpush2.msra.mxu0 0.0
        %1097 = vmatprep.subr.mxu0 0.0
        %1098 = vmatpush2.msra.mxu0 0.0
        %1099 = vmatprep.subr.mxu0 0.0
        %1100 = vmatpush2.msra.mxu0 0.0
        %1101 = vmatprep.subr.mxu0 0.0
        %1102 = vmatpush2.msra.mxu0 0.0
        %1103 = vmatprep.subr.mxu0 0.0
        %1104 = vmatpush2.msra.mxu0 0.0
        %1105 = vmatprep.subr.mxu0 0.0
        %1106 = vmatpush2.msra.mxu0 0.0
        %1107 = vmatprep.subr.mxu0 0.0
        %1108 = vmatpush2.msra.mxu0 0.0
        %1109 = vmatprep.subr.mxu0 0.0
        %1110 = vmatpush2.msra.mxu0 0.0
        %1111 = vmatprep.subr.mxu0 0.0
        %1112 = vmatpush2.msra.mxu0 0.0
        %1113 = vmatprep.subr.mxu0 0.0
        %1114 = vmatpush2.msra.mxu0 0.0
        %1115 = vmatprep.subr.mxu0 0.0
        %1116 = vmatpush2.msra.mxu0 0.0
        %1117 = vmatprep.subr.mxu0 0.0
        %1118 = vmatpush2.msra.mxu0 0.0
        %1119 = vmatprep.subr.mxu0 0.0
        %1120 = vmatpush2.msra.mxu0 0.0
        %1121 = vmatprep.mubr.f32.mxu0 0.0
        %1122 = vmatmul.mubr.f32.gmra.mxu0 %v969
        %v1123 = vpop.f32.mrf.mxu0
        %v1124 = vadd.f32 0.0, %v1123
        %v1125 = vpop.f32.mrf.mxu0
        %1126 = vmatprep.mubr.f32.mxu0 0.0
        %1127 = vmatmul.mubr.f32.gmra.mxu0 %v972
        %v1128 = vpop.f32.mrf.mxu0
        %v1129 = vadd.f32 0.0, %v1128
        %v1130 = vpop.f32.mrf.mxu0
        %1131 = vmatprep.mubr.f32.mxu0 0.0
        %1132 = vmatmul.mubr.f32.gmra.mxu0 %v975
        %v1133 = vpop.f32.mrf.mxu0
        %v1134 = vadd.f32 0.0, %v1133
        %v1135 = vpop.f32.mrf.mxu0
        %1136 = vdwg.mxu0
        %1137 = vmatprep.subr.mxu0 0.0
        %1138 = vmatpush1.msra.mxu0 0.0
        %1139 = vmatprep.subr.mxu0 0.0
        %1140 = vmatpush1.msra.mxu0 0.0
        %1141 = vmatprep.subr.mxu0 0.0
        %1142 = vmatpush1.msra.mxu0 0.0
        %1143 = vmatprep.subr.mxu0 0.0
        %1144 = vmatpush1.msra.mxu0 0.0
        %1145 = vmatprep.subr.mxu0 0.0
        %1146 = vmatpush1.msra.mxu0 0.0
        %1147 = vmatprep.subr.mxu0 0.0
        %1148 = vmatpush1.msra.mxu0 0.0
        %1149 = vmatprep.subr.mxu0 0.0
        %1150 = vmatpush1.msra.mxu0 0.0
        %1151 = vmatprep.subr.mxu0 0.0
        %1152 = vmatpush1.msra.mxu0 0.0
        %1153 = vmatprep.subr.mxu0 0.0
        %1154 = vmatpush1.msra.mxu0 0.0
        %1155 = vmatprep.subr.mxu0 0.0
        %1156 = vmatpush1.msra.mxu0 0.0
        %1157 = vmatprep.subr.mxu0 0.0
        %1158 = vmatpush1.msra.mxu0 0.0
        %1159 = vmatprep.subr.mxu0 0.0
        %1160 = vmatpush1.msra.mxu0 0.0
        %1161 = vmatprep.subr.mxu0 0.0
        %1162 = vmatpush1.msra.mxu0 0.0
        %1163 = vmatprep.subr.mxu0 0.0
        %1164 = vmatpush1.msra.mxu0 0.0
        %1165 = vmatprep.subr.mxu0 0.0
        %1166 = vmatpush1.msra.mxu0 %v250
        %1167 = vmatprep.subr.mxu0 0.0
        %1168 = vmatpush1.msra.mxu0 %v249
        %1169 = vmatprep.subr.mxu0 0.0
        %1170 = vmatpush2.msra.mxu0 0.0
        %1171 = vmatprep.subr.mxu0 0.0
        %1172 = vmatpush2.msra.mxu0 0.0
        %1173 = vmatprep.subr.mxu0 0.0
        %1174 = vmatpush2.msra.mxu0 0.0
        %1175 = vmatprep.subr.mxu0 0.0
        %1176 = vmatpush2.msra.mxu0 0.0
        %1177 = vmatprep.subr.mxu0 0.0
        %1178 = vmatpush2.msra.mxu0 0.0
        %1179 = vmatprep.subr.mxu0 0.0
        %1180 = vmatpush2.msra.mxu0 0.0
        %1181 = vmatprep.subr.mxu0 0.0
        %1182 = vmatpush2.msra.mxu0 0.0
        %1183 = vmatprep.subr.mxu0 0.0
        %1184 = vmatpush2.msra.mxu0 0.0
        %1185 = vmatprep.subr.mxu0 0.0
        %1186 = vmatpush2.msra.mxu0 0.0
        %1187 = vmatprep.subr.mxu0 0.0
        %1188 = vmatpush2.msra.mxu0 0.0
        %1189 = vmatprep.subr.mxu0 0.0
        %1190 = vmatpush2.msra.mxu0 0.0
        %1191 = vmatprep.subr.mxu0 0.0
        %1192 = vmatpush2.msra.mxu0 0.0
        %1193 = vmatprep.subr.mxu0 0.0
        %1194 = vmatpush2.msra.mxu0 0.0
        %1195 = vmatprep.subr.mxu0 0.0
        %1196 = vmatpush2.msra.mxu0 0.0
        %1197 = vmatprep.subr.mxu0 0.0
        %1198 = vmatpush2.msra.mxu0 0.0
        %1199 = vmatprep.subr.mxu0 0.0
        %1200 = vmatpush2.msra.mxu0 0.0
        %1201 = vmatprep.mubr.f32.mxu0 0.0
        %1202 = vmatmul.mubr.f32.gmra.mxu0 %v969
        %v1203 = vpop.f32.mrf.mxu0
        %v1204 = vadd.f32 0.0, %v1203
        %v1205 = vpop.f32.mrf.mxu0
        %1206 = vmatprep.mubr.f32.mxu0 0.0
        %1207 = vmatmul.mubr.f32.gmra.mxu0 %v972
        %v1208 = vpop.f32.mrf.mxu0
        %v1209 = vadd.f32 0.0, %v1208
        %v1210 = vpop.f32.mrf.mxu0
        %1211 = vmatprep.mubr.f32.mxu0 0.0
        %1212 = vmatmul.mubr.f32.gmra.mxu0 %v975
        %v1213 = vpop.f32.mrf.mxu0
        %v1214 = vadd.f32 0.0, %v1213
        %v1215 = vpop.f32.mrf.mxu0
        %1216 = vdwg.mxu0
        %1217 = vmatprep.subr.mxu0 0.0
        %1218 = vmatpush1.msra.mxu0 0.0
        %1219 = vmatprep.subr.mxu0 0.0
        %1220 = vmatpush1.msra.mxu0 0.0
        %1221 = vmatprep.subr.mxu0 0.0
        %1222 = vmatpush1.msra.mxu0 0.0
        %1223 = vmatprep.subr.mxu0 0.0
        %1224 = vmatpush1.msra.mxu0 0.0
        %1225 = vmatprep.subr.mxu0 0.0
        %1226 = vmatpush1.msra.mxu0 0.0
        %1227 = vmatprep.subr.mxu0 0.0
        %1228 = vmatpush1.msra.mxu0 0.0
        %1229 = vmatprep.subr.mxu0 0.0
        %1230 = vmatpush1.msra.mxu0 0.0
        %1231 = vmatprep.subr.mxu0 0.0
        %1232 = vmatpush1.msra.mxu0 0.0
        %1233 = vmatprep.subr.mxu0 0.0
        %1234 = vmatpush1.msra.mxu0 0.0
        %1235 = vmatprep.subr.mxu0 0.0
        %1236 = vmatpush1.msra.mxu0 0.0
        %1237 = vmatprep.subr.mxu0 0.0
        %1238 = vmatpush1.msra.mxu0 0.0
        %1239 = vmatprep.subr.mxu0 0.0
        %1240 = vmatpush1.msra.mxu0 0.0
        %1241 = vmatprep.subr.mxu0 0.0
        %1242 = vmatpush1.msra.mxu0 0.0
        %1243 = vmatprep.subr.mxu0 0.0
        %1244 = vmatpush1.msra.mxu0 0.0
        %1245 = vmatprep.subr.mxu0 0.0
        %1246 = vmatpush1.msra.mxu0 %v252
        %1247 = vmatprep.subr.mxu0 0.0
        %1248 = vmatpush1.msra.mxu0 %v251
        %1249 = vmatprep.subr.mxu0 0.0
        %1250 = vmatpush2.msra.mxu0 0.0
        %1251 = vmatprep.subr.mxu0 0.0
        %1252 = vmatpush2.msra.mxu0 0.0
        %1253 = vmatprep.subr.mxu0 0.0
        %1254 = vmatpush2.msra.mxu0 0.0
        %1255 = vmatprep.subr.mxu0 0.0
        %1256 = vmatpush2.msra.mxu0 0.0
        %1257 = vmatprep.subr.mxu0 0.0
        %1258 = vmatpush2.msra.mxu0 0.0
        %1259 = vmatprep.subr.mxu0 0.0
        %1260 = vmatpush2.msra.mxu0 0.0
        %1261 = vmatprep.subr.mxu0 0.0
        %1262 = vmatpush2.msra.mxu0 0.0
        %1263 = vmatprep.subr.mxu0 0.0
        %1264 = vmatpush2.msra.mxu0 0.0
        %1265 = vmatprep.subr.mxu0 0.0
        %1266 = vmatpush2.msra.mxu0 0.0
        %1267 = vmatprep.subr.mxu0 0.0
        %1268 = vmatpush2.msra.mxu0 0.0
        %1269 = vmatprep.subr.mxu0 0.0
        %1270 = vmatpush2.msra.mxu0 0.0
        %1271 = vmatprep.subr.mxu0 0.0
        %1272 = vmatpush2.msra.mxu0 0.0
        %1273 = vmatprep.subr.mxu0 0.0
        %1274 = vmatpush2.msra.mxu0 0.0
        %1275 = vmatprep.subr.mxu0 0.0
        %1276 = vmatpush2.msra.mxu0 0.0
        %1277 = vmatprep.subr.mxu0 0.0
        %1278 = vmatpush2.msra.mxu0 0.0
        %1279 = vmatprep.subr.mxu0 0.0
        %1280 = vmatpush2.msra.mxu0 0.0
        %1281 = vmatprep.mubr.f32.mxu0 0.0
        %1282 = vmatmul.mubr.f32.gmra.mxu0 %v969
        %v1283 = vpop.f32.mrf.mxu0
        %v1284 = vadd.f32 0.0, %v1283
        %v1285 = vpop.f32.mrf.mxu0
        %1286 = vmatprep.mubr.f32.mxu0 0.0
        %1287 = vmatmul.mubr.f32.gmra.mxu0 %v972
        %v1288 = vpop.f32.mrf.mxu0
        %v1289 = vadd.f32 0.0, %v1288
        %v1290 = vpop.f32.mrf.mxu0
        %1291 = vmatprep.mubr.f32.mxu0 0.0
        %1292 = vmatmul.mubr.f32.gmra.mxu0 %v975
        %v1293 = vpop.f32.mrf.mxu0
        %v1294 = vadd.f32 0.0, %v1293
        %v1295 = vpop.f32.mrf.mxu0
        %1296 = vdwg.mxu0
        %v1298 = vsel %vm638, %v715, 0
        %v1301 = vsel %vm638, %v572, 0
        %1303 = vmatprep.subr.mxu0 0.0
        %1304 = vmatpush1.xpose.msra.mxu0 0.0
        %1305 = vmatprep.subr.mxu0 0.0
        %1306 = vmatpush1.xpose.msra.mxu0 0.0
        %1307 = vmatprep.subr.mxu0 0.0
        %1308 = vmatpush1.xpose.msra.mxu0 0.0
        %1309 = vmatprep.subr.mxu0 0.0
        %1310 = vmatpush1.xpose.msra.mxu0 0.0
        %1311 = vmatprep.subr.mxu0 0.0
        %1312 = vmatpush1.xpose.msra.mxu0 0.0
        %1313 = vmatprep.subr.mxu0 0.0
        %1314 = vmatpush1.xpose.msra.mxu0 0.0
        %1315 = vmatprep.subr.mxu0 0.0
        %1316 = vmatpush1.xpose.msra.mxu0 0.0
        %1317 = vmatprep.subr.mxu0 0.0
        %1318 = vmatpush1.xpose.msra.mxu0 0.0
        %1319 = vmatprep.subr.mxu0 0.0
        %1320 = vmatpush1.xpose.msra.mxu0 0.0
        %1321 = vmatprep.subr.mxu0 0.0
        %1322 = vmatpush1.xpose.msra.mxu0 0.0
        %1323 = vmatprep.subr.mxu0 0.0
        %1324 = vmatpush1.xpose.msra.mxu0 0.0
        %1325 = vmatprep.subr.mxu0 0.0
        %1326 = vmatpush1.xpose.msra.mxu0 0.0
        %1327 = vmatprep.subr.mxu0 0.0
        %1328 = vmatpush1.xpose.msra.mxu0 0.0
        %1329 = vmatprep.subr.mxu0 0.0
        %1330 = vmatpush1.xpose.msra.mxu0 0.0
        %1331 = vmatprep.subr.mxu0 0.0
        %1332 = vmatpush1.xpose.msra.mxu0 0.0
        %1333 = vmatprep.subr.mxu0 0.0
        %1334 = vmatpush1.xpose.msra.mxu0 %v1301
        %1335 = vmatprep.subr.mxu0 0.0
        %1336 = vmatpush2.xpose.msra.mxu0 0.0
        %1337 = vmatprep.subr.mxu0 0.0
        %1338 = vmatpush2.xpose.msra.mxu0 0.0
        %1339 = vmatprep.subr.mxu0 0.0
        %1340 = vmatpush2.xpose.msra.mxu0 0.0
        %1341 = vmatprep.subr.mxu0 0.0
        %1342 = vmatpush2.xpose.msra.mxu0 0.0
        %1343 = vmatprep.subr.mxu0 0.0
        %1344 = vmatpush2.xpose.msra.mxu0 0.0
        %1345 = vmatprep.subr.mxu0 0.0
        %1346 = vmatpush2.xpose.msra.mxu0 0.0
        %1347 = vmatprep.subr.mxu0 0.0
        %1348 = vmatpush2.xpose.msra.mxu0 0.0
        %1349 = vmatprep.subr.mxu0 0.0
        %1350 = vmatpush2.xpose.msra.mxu0 0.0
        %1351 = vmatprep.subr.mxu0 0.0
        %1352 = vmatpush2.xpose.msra.mxu0 0.0
        %1353 = vmatprep.subr.mxu0 0.0
        %1354 = vmatpush2.xpose.msra.mxu0 0.0
        %1355 = vmatprep.subr.mxu0 0.0
        %1356 = vmatpush2.xpose.msra.mxu0 0.0
        %1357 = vmatprep.subr.mxu0 0.0
        %1358 = vmatpush2.xpose.msra.mxu0 0.0
        %1359 = vmatprep.subr.mxu0 0.0
        %1360 = vmatpush2.xpose.msra.mxu0 0.0
        %1361 = vmatprep.subr.mxu0 0.0
        %1362 = vmatpush2.xpose.msra.mxu0 0.0
        %1363 = vmatprep.subr.mxu0 0.0
        %1364 = vmatpush2.xpose.msra.mxu0 0.0
        %1365 = vmatprep.subr.mxu0 0.0
        %1366 = vmatpush2.xpose.msra.mxu0 0.0
        %1367 = vmatprep.mubr.f32.mxu0 0.0
        %1368 = vmatmul.mubr.f32.gmra.mxu0 %v1298
        %v1369 = vpop.f32.mrf.mxu0
        %v1370 = vadd.f32 0.0, %v1369
        %v1371 = vpop.f32.mrf.mxu0
        %1372 = vdwg.mxu0
        %v1374 = vsel %vm638, %v795, 0
        %1376 = vmatprep.subr.mxu0 0.0
        %1377 = vmatpush1.xpose.msra.mxu0 0.0
        %1378 = vmatprep.subr.mxu0 0.0
        %1379 = vmatpush1.xpose.msra.mxu0 0.0
        %1380 = vmatprep.subr.mxu0 0.0
        %1381 = vmatpush1.xpose.msra.mxu0 0.0
        %1382 = vmatprep.subr.mxu0 0.0
        %1383 = vmatpush1.xpose.msra.mxu0 0.0
        %1384 = vmatprep.subr.mxu0 0.0
        %1385 = vmatpush1.xpose.msra.mxu0 0.0
        %1386 = vmatprep.subr.mxu0 0.0
        %1387 = vmatpush1.xpose.msra.mxu0 0.0
        %1388 = vmatprep.subr.mxu0 0.0
        %1389 = vmatpush1.xpose.msra.mxu0 0.0
        %1390 = vmatprep.subr.mxu0 0.0
        %1391 = vmatpush1.xpose.msra.mxu0 0.0
        %1392 = vmatprep.subr.mxu0 0.0
        %1393 = vmatpush1.xpose.msra.mxu0 0.0
        %1394 = vmatprep.subr.mxu0 0.0
        %1395 = vmatpush1.xpose.msra.mxu0 0.0
        %1396 = vmatprep.subr.mxu0 0.0
        %1397 = vmatpush1.xpose.msra.mxu0 0.0
        %1398 = vmatprep.subr.mxu0 0.0
        %1399 = vmatpush1.xpose.msra.mxu0 0.0
        %1400 = vmatprep.subr.mxu0 0.0
        %1401 = vmatpush1.xpose.msra.mxu0 0.0
        %1402 = vmatprep.subr.mxu0 0.0
        %1403 = vmatpush1.xpose.msra.mxu0 0.0
        %1404 = vmatprep.subr.mxu0 0.0
        %1405 = vmatpush1.xpose.msra.mxu0 0.0
        %1406 = vmatprep.subr.mxu0 0.0
        %1407 = vmatpush1.xpose.msra.mxu0 %v1301
        %1408 = vmatprep.subr.mxu0 0.0
        %1409 = vmatpush2.xpose.msra.mxu0 0.0
        %1410 = vmatprep.subr.mxu0 0.0
        %1411 = vmatpush2.xpose.msra.mxu0 0.0
        %1412 = vmatprep.subr.mxu0 0.0
        %1413 = vmatpush2.xpose.msra.mxu0 0.0
        %1414 = vmatprep.subr.mxu0 0.0
        %1415 = vmatpush2.xpose.msra.mxu0 0.0
        %1416 = vmatprep.subr.mxu0 0.0
        %1417 = vmatpush2.xpose.msra.mxu0 0.0
        %1418 = vmatprep.subr.mxu0 0.0
        %1419 = vmatpush2.xpose.msra.mxu0 0.0
        %1420 = vmatprep.subr.mxu0 0.0
        %1421 = vmatpush2.xpose.msra.mxu0 0.0
        %1422 = vmatprep.subr.mxu0 0.0
        %1423 = vmatpush2.xpose.msra.mxu0 0.0
        %1424 = vmatprep.subr.mxu0 0.0
        %1425 = vmatpush2.xpose.msra.mxu0 0.0
        %1426 = vmatprep.subr.mxu0 0.0
        %1427 = vmatpush2.xpose.msra.mxu0 0.0
        %1428 = vmatprep.subr.mxu0 0.0
        %1429 = vmatpush2.xpose.msra.mxu0 0.0
        %1430 = vmatprep.subr.mxu0 0.0
        %1431 = vmatpush2.xpose.msra.mxu0 0.0
        %1432 = vmatprep.subr.mxu0 0.0
        %1433 = vmatpush2.xpose.msra.mxu0 0.0
        %1434 = vmatprep.subr.mxu0 0.0
        %1435 = vmatpush2.xpose.msra.mxu0 0.0
        %1436 = vmatprep.subr.mxu0 0.0
        %1437 = vmatpush2.xpose.msra.mxu0 0.0
        %1438 = vmatprep.subr.mxu0 0.0
        %1439 = vmatpush2.xpose.msra.mxu0 0.0
        %1440 = vmatprep.mubr.f32.mxu0 0.0
        %1441 = vmatmul.mubr.f32.gmra.mxu0 %v1374
        %v1442 = vpop.f32.mrf.mxu0
        %v1443 = vadd.f32 0.0, %v1442
        %v1444 = vpop.f32.mrf.mxu0
        %1445 = vdwg.mxu0
        %v1447 = vsel %vm638, %v875, 0
        %1449 = vmatprep.subr.mxu0 0.0
        %1450 = vmatpush1.xpose.msra.mxu0 0.0
        %1451 = vmatprep.subr.mxu0 0.0
        %1452 = vmatpush1.xpose.msra.mxu0 0.0
        %1453 = vmatprep.subr.mxu0 0.0
        %1454 = vmatpush1.xpose.msra.mxu0 0.0
        %1455 = vmatprep.subr.mxu0 0.0
        %1456 = vmatpush1.xpose.msra.mxu0 0.0
        %1457 = vmatprep.subr.mxu0 0.0
        %1458 = vmatpush1.xpose.msra.mxu0 0.0
        %1459 = vmatprep.subr.mxu0 0.0
        %1460 = vmatpush1.xpose.msra.mxu0 0.0
        %1461 = vmatprep.subr.mxu0 0.0
        %1462 = vmatpush1.xpose.msra.mxu0 0.0
        %1463 = vmatprep.subr.mxu0 0.0
        %1464 = vmatpush1.xpose.msra.mxu0 0.0
        %1465 = vmatprep.subr.mxu0 0.0
        %1466 = vmatpush1.xpose.msra.mxu0 0.0
        %1467 = vmatprep.subr.mxu0 0.0
        %1468 = vmatpush1.xpose.msra.mxu0 0.0
        %1469 = vmatprep.subr.mxu0 0.0
        %1470 = vmatpush1.xpose.msra.mxu0 0.0
        %1471 = vmatprep.subr.mxu0 0.0
        %1472 = vmatpush1.xpose.msra.mxu0 0.0
        %1473 = vmatprep.subr.mxu0 0.0
        %1474 = vmatpush1.xpose.msra.mxu0 0.0
        %1475 = vmatprep.subr.mxu0 0.0
        %1476 = vmatpush1.xpose.msra.mxu0 0.0
        %1477 = vmatprep.subr.mxu0 0.0
        %1478 = vmatpush1.xpose.msra.mxu0 0.0
        %1479 = vmatprep.subr.mxu0 0.0
        %1480 = vmatpush1.xpose.msra.mxu0 %v1301
        %1481 = vmatprep.subr.mxu0 0.0
        %1482 = vmatpush2.xpose.msra.mxu0 0.0
        %1483 = vmatprep.subr.mxu0 0.0
        %1484 = vmatpush2.xpose.msra.mxu0 0.0
        %1485 = vmatprep.subr.mxu0 0.0
        %1486 = vmatpush2.xpose.msra.mxu0 0.0
        %1487 = vmatprep.subr.mxu0 0.0
        %1488 = vmatpush2.xpose.msra.mxu0 0.0
        %1489 = vmatprep.subr.mxu0 0.0
        %1490 = vmatpush2.xpose.msra.mxu0 0.0
        %1491 = vmatprep.subr.mxu0 0.0
        %1492 = vmatpush2.xpose.msra.mxu0 0.0
        %1493 = vmatprep.subr.mxu0 0.0
        %1494 = vmatpush2.xpose.msra.mxu0 0.0
        %1495 = vmatprep.subr.mxu0 0.0
        %1496 = vmatpush2.xpose.msra.mxu0 0.0
        %1497 = vmatprep.subr.mxu0 0.0
        %1498 = vmatpush2.xpose.msra.mxu0 0.0
        %1499 = vmatprep.subr.mxu0 0.0
        %1500 = vmatpush2.xpose.msra.mxu0 0.0
        %1501 = vmatprep.subr.mxu0 0.0
        %1502 = vmatpush2.xpose.msra.mxu0 0.0
        %1503 = vmatprep.subr.mxu0 0.0
        %1504 = vmatpush2.xpose.msra.mxu0 0.0
        %1505 = vmatprep.subr.mxu0 0.0
        %1506 = vmatpush2.xpose.msra.mxu0 0.0
        %1507 = vmatprep.subr.mxu0 0.0
        %1508 = vmatpush2.xpose.msra.mxu0 0.0
        %1509 = vmatprep.subr.mxu0 0.0
        %1510 = vmatpush2.xpose.msra.mxu0 0.0
        %1511 = vmatprep.subr.mxu0 0.0
        %1512 = vmatpush2.xpose.msra.mxu0 0.0
        %1513 = vmatprep.mubr.f32.mxu0 0.0
        %1514 = vmatmul.mubr.f32.gmra.mxu0 %v1447
        %v1515 = vpop.f32.mrf.mxu0
        %v1516 = vadd.f32 0.0, %v1515
        %v1517 = vpop.f32.mrf.mxu0
        %1518 = vdwg.mxu0
        %v1520 = vsel %vm638, %v955, 0
        %1522 = vmatprep.subr.mxu0 0.0
        %1523 = vmatpush1.xpose.msra.mxu0 0.0
        %1524 = vmatprep.subr.mxu0 0.0
        %1525 = vmatpush1.xpose.msra.mxu0 0.0
        %1526 = vmatprep.subr.mxu0 0.0
        %1527 = vmatpush1.xpose.msra.mxu0 0.0
        %1528 = vmatprep.subr.mxu0 0.0
        %1529 = vmatpush1.xpose.msra.mxu0 0.0
        %1530 = vmatprep.subr.mxu0 0.0
        %1531 = vmatpush1.xpose.msra.mxu0 0.0
        %1532 = vmatprep.subr.mxu0 0.0
        %1533 = vmatpush1.xpose.msra.mxu0 0.0
        %1534 = vmatprep.subr.mxu0 0.0
        %1535 = vmatpush1.xpose.msra.mxu0 0.0
        %1536 = vmatprep.subr.mxu0 0.0
        %1537 = vmatpush1.xpose.msra.mxu0 0.0
        %1538 = vmatprep.subr.mxu0 0.0
        %1539 = vmatpush1.xpose.msra.mxu0 0.0
        %1540 = vmatprep.subr.mxu0 0.0
        %1541 = vmatpush1.xpose.msra.mxu0 0.0
        %1542 = vmatprep.subr.mxu0 0.0
        %1543 = vmatpush1.xpose.msra.mxu0 0.0
        %1544 = vmatprep.subr.mxu0 0.0
        %1545 = vmatpush1.xpose.msra.mxu0 0.0
        %1546 = vmatprep.subr.mxu0 0.0
        %1547 = vmatpush1.xpose.msra.mxu0 0.0
        %1548 = vmatprep.subr.mxu0 0.0
        %1549 = vmatpush1.xpose.msra.mxu0 0.0
        %1550 = vmatprep.subr.mxu0 0.0
        %1551 = vmatpush1.xpose.msra.mxu0 0.0
        %1552 = vmatprep.subr.mxu0 0.0
        %1553 = vmatpush1.xpose.msra.mxu0 %v1301
        %1554 = vmatprep.subr.mxu0 0.0
        %1555 = vmatpush2.xpose.msra.mxu0 0.0
        %1556 = vmatprep.subr.mxu0 0.0
        %1557 = vmatpush2.xpose.msra.mxu0 0.0
        %1558 = vmatprep.subr.mxu0 0.0
        %1559 = vmatpush2.xpose.msra.mxu0 0.0
        %1560 = vmatprep.subr.mxu0 0.0
        %1561 = vmatpush2.xpose.msra.mxu0 0.0
        %1562 = vmatprep.subr.mxu0 0.0
        %1563 = vmatpush2.xpose.msra.mxu0 0.0
        %1564 = vmatprep.subr.mxu0 0.0
        %1565 = vmatpush2.xpose.msra.mxu0 0.0
        %1566 = vmatprep.subr.mxu0 0.0
        %1567 = vmatpush2.xpose.msra.mxu0 0.0
        %1568 = vmatprep.subr.mxu0 0.0
        %1569 = vmatpush2.xpose.msra.mxu0 0.0
        %1570 = vmatprep.subr.mxu0 0.0
        %1571 = vmatpush2.xpose.msra.mxu0 0.0
        %1572 = vmatprep.subr.mxu0 0.0
        %1573 = vmatpush2.xpose.msra.mxu0 0.0
        %1574 = vmatprep.subr.mxu0 0.0
        %1575 = vmatpush2.xpose.msra.mxu0 0.0
        %1576 = vmatprep.subr.mxu0 0.0
        %1577 = vmatpush2.xpose.msra.mxu0 0.0
        %1578 = vmatprep.subr.mxu0 0.0
        %1579 = vmatpush2.xpose.msra.mxu0 0.0
        %1580 = vmatprep.subr.mxu0 0.0
        %1581 = vmatpush2.xpose.msra.mxu0 0.0
        %1582 = vmatprep.subr.mxu0 0.0
        %1583 = vmatpush2.xpose.msra.mxu0 0.0
        %1584 = vmatprep.subr.mxu0 0.0
        %1585 = vmatpush2.xpose.msra.mxu0 0.0
        %1586 = vmatprep.mubr.f32.mxu0 0.0
        %1587 = vmatmul.mubr.f32.gmra.mxu0 %v1520
        %v1588 = vpop.f32.mrf.mxu0
        %v1589 = vadd.f32 0.0, %v1588
        %v1590 = vpop.f32.mrf.mxu0
        %1591 = vdwg.mxu0
        %v1593 = vsel %vm638, %v635, 0
        %1595 = vmatprep.subr.mxu0 0.0
        %1596 = vmatpush1.xpose.msra.mxu0 0.0
        %1597 = vmatprep.subr.mxu0 0.0
        %1598 = vmatpush1.xpose.msra.mxu0 0.0
        %1599 = vmatprep.subr.mxu0 0.0
        %1600 = vmatpush1.xpose.msra.mxu0 0.0
        %1601 = vmatprep.subr.mxu0 0.0
        %1602 = vmatpush1.xpose.msra.mxu0 0.0
        %1603 = vmatprep.subr.mxu0 0.0
        %1604 = vmatpush1.xpose.msra.mxu0 0.0
        %1605 = vmatprep.subr.mxu0 0.0
        %1606 = vmatpush1.xpose.msra.mxu0 0.0
        %1607 = vmatprep.subr.mxu0 0.0
        %1608 = vmatpush1.xpose.msra.mxu0 0.0
        %1609 = vmatprep.subr.mxu0 0.0
        %1610 = vmatpush1.xpose.msra.mxu0 0.0
        %1611 = vmatprep.subr.mxu0 0.0
        %1612 = vmatpush1.xpose.msra.mxu0 0.0
        %1613 = vmatprep.subr.mxu0 0.0
        %1614 = vmatpush1.xpose.msra.mxu0 0.0
        %1615 = vmatprep.subr.mxu0 0.0
        %1616 = vmatpush1.xpose.msra.mxu0 0.0
        %1617 = vmatprep.subr.mxu0 0.0
        %1618 = vmatpush1.xpose.msra.mxu0 0.0
        %1619 = vmatprep.subr.mxu0 0.0
        %1620 = vmatpush1.xpose.msra.mxu0 0.0
        %1621 = vmatprep.subr.mxu0 0.0
        %1622 = vmatpush1.xpose.msra.mxu0 0.0
        %1623 = vmatprep.subr.mxu0 0.0
        %1624 = vmatpush1.xpose.msra.mxu0 0.0
        %1625 = vmatprep.subr.mxu0 0.0
        %1626 = vmatpush1.xpose.msra.mxu0 %v1593
        %1627 = vmatprep.subr.mxu0 0.0
        %1628 = vmatpush2.xpose.msra.mxu0 0.0
        %1629 = vmatprep.subr.mxu0 0.0
        %1630 = vmatpush2.xpose.msra.mxu0 0.0
        %1631 = vmatprep.subr.mxu0 0.0
        %1632 = vmatpush2.xpose.msra.mxu0 0.0
        %1633 = vmatprep.subr.mxu0 0.0
        %1634 = vmatpush2.xpose.msra.mxu0 0.0
        %1635 = vmatprep.subr.mxu0 0.0
        %1636 = vmatpush2.xpose.msra.mxu0 0.0
        %1637 = vmatprep.subr.mxu0 0.0
        %1638 = vmatpush2.xpose.msra.mxu0 0.0
        %1639 = vmatprep.subr.mxu0 0.0
        %1640 = vmatpush2.xpose.msra.mxu0 0.0
        %1641 = vmatprep.subr.mxu0 0.0
        %1642 = vmatpush2.xpose.msra.mxu0 0.0
        %1643 = vmatprep.subr.mxu0 0.0
        %1644 = vmatpush2.xpose.msra.mxu0 0.0
        %1645 = vmatprep.subr.mxu0 0.0
        %1646 = vmatpush2.xpose.msra.mxu0 0.0
        %1647 = vmatprep.subr.mxu0 0.0
        %1648 = vmatpush2.xpose.msra.mxu0 0.0
        %1649 = vmatprep.subr.mxu0 0.0
        %1650 = vmatpush2.xpose.msra.mxu0 0.0
        %1651 = vmatprep.subr.mxu0 0.0
        %1652 = vmatpush2.xpose.msra.mxu0 0.0
        %1653 = vmatprep.subr.mxu0 0.0
        %1654 = vmatpush2.xpose.msra.mxu0 0.0
        %1655 = vmatprep.subr.mxu0 0.0
        %1656 = vmatpush2.xpose.msra.mxu0 0.0
        %1657 = vmatprep.subr.mxu0 0.0
        %1658 = vmatpush2.xpose.msra.mxu0 0.0
        %1659 = vmatprep.mubr.f32.mxu0 0.0
        %1660 = vmatmul.mubr.f32.gmra.mxu0 %v1298
        %v1661 = vpop.f32.mrf.mxu0
        %v1662 = vadd.f32 0.0, %v1661
        %v1663 = vpop.f32.mrf.mxu0
        %1664 = vdwg.mxu0
        %1665 = vmatprep.subr.mxu0 0.0
        %1666 = vmatpush1.xpose.msra.mxu0 0.0
        %1667 = vmatprep.subr.mxu0 0.0
        %1668 = vmatpush1.xpose.msra.mxu0 0.0
        %1669 = vmatprep.subr.mxu0 0.0
        %1670 = vmatpush1.xpose.msra.mxu0 0.0
        %1671 = vmatprep.subr.mxu0 0.0
        %1672 = vmatpush1.xpose.msra.mxu0 0.0
        %1673 = vmatprep.subr.mxu0 0.0
        %1674 = vmatpush1.xpose.msra.mxu0 0.0
        %1675 = vmatprep.subr.mxu0 0.0
        %1676 = vmatpush1.xpose.msra.mxu0 0.0
        %1677 = vmatprep.subr.mxu0 0.0
        %1678 = vmatpush1.xpose.msra.mxu0 0.0
        %1679 = vmatprep.subr.mxu0 0.0
        %1680 = vmatpush1.xpose.msra.mxu0 0.0
        %1681 = vmatprep.subr.mxu0 0.0
        %1682 = vmatpush1.xpose.msra.mxu0 0.0
        %1683 = vmatprep.subr.mxu0 0.0
        %1684 = vmatpush1.xpose.msra.mxu0 0.0
        %1685 = vmatprep.subr.mxu0 0.0
        %1686 = vmatpush1.xpose.msra.mxu0 0.0
        %1687 = vmatprep.subr.mxu0 0.0
        %1688 = vmatpush1.xpose.msra.mxu0 0.0
        %1689 = vmatprep.subr.mxu0 0.0
        %1690 = vmatpush1.xpose.msra.mxu0 0.0
        %1691 = vmatprep.subr.mxu0 0.0
        %1692 = vmatpush1.xpose.msra.mxu0 0.0
        %1693 = vmatprep.subr.mxu0 0.0
        %1694 = vmatpush1.xpose.msra.mxu0 0.0
        %1695 = vmatprep.subr.mxu0 0.0
        %1696 = vmatpush1.xpose.msra.mxu0 %v1593
        %1697 = vmatprep.subr.mxu0 0.0
        %1698 = vmatpush2.xpose.msra.mxu0 0.0
        %1699 = vmatprep.subr.mxu0 0.0
        %1700 = vmatpush2.xpose.msra.mxu0 0.0
        %1701 = vmatprep.subr.mxu0 0.0
        %1702 = vmatpush2.xpose.msra.mxu0 0.0
        %1703 = vmatprep.subr.mxu0 0.0
        %1704 = vmatpush2.xpose.msra.mxu0 0.0
        %1705 = vmatprep.subr.mxu0 0.0
        %1706 = vmatpush2.xpose.msra.mxu0 0.0
        %1707 = vmatprep.subr.mxu0 0.0
        %1708 = vmatpush2.xpose.msra.mxu0 0.0
        %1709 = vmatprep.subr.mxu0 0.0
        %1710 = vmatpush2.xpose.msra.mxu0 0.0
        %1711 = vmatprep.subr.mxu0 0.0
        %1712 = vmatpush2.xpose.msra.mxu0 0.0
        %1713 = vmatprep.subr.mxu0 0.0
        %1714 = vmatpush2.xpose.msra.mxu0 0.0
        %1715 = vmatprep.subr.mxu0 0.0
        %1716 = vmatpush2.xpose.msra.mxu0 0.0
        %1717 = vmatprep.subr.mxu0 0.0
        %1718 = vmatpush2.xpose.msra.mxu0 0.0
        %1719 = vmatprep.subr.mxu0 0.0
        %1720 = vmatpush2.xpose.msra.mxu0 0.0
        %1721 = vmatprep.subr.mxu0 0.0
        %1722 = vmatpush2.xpose.msra.mxu0 0.0
        %1723 = vmatprep.subr.mxu0 0.0
        %1724 = vmatpush2.xpose.msra.mxu0 0.0
        %1725 = vmatprep.subr.mxu0 0.0
        %1726 = vmatpush2.xpose.msra.mxu0 0.0
        %1727 = vmatprep.subr.mxu0 0.0
        %1728 = vmatpush2.xpose.msra.mxu0 0.0
        %1729 = vmatprep.mubr.f32.mxu0 0.0
        %1730 = vmatmul.mubr.f32.gmra.mxu0 %v1374
        %v1731 = vpop.f32.mrf.mxu0
        %v1732 = vadd.f32 0.0, %v1731
        %v1733 = vpop.f32.mrf.mxu0
        %1734 = vdwg.mxu0
        %1735 = vmatprep.subr.mxu0 0.0
        %1736 = vmatpush1.xpose.msra.mxu0 0.0
        %1737 = vmatprep.subr.mxu0 0.0
        %1738 = vmatpush1.xpose.msra.mxu0 0.0
        %1739 = vmatprep.subr.mxu0 0.0
        %1740 = vmatpush1.xpose.msra.mxu0 0.0
        %1741 = vmatprep.subr.mxu0 0.0
        %1742 = vmatpush1.xpose.msra.mxu0 0.0
        %1743 = vmatprep.subr.mxu0 0.0
        %1744 = vmatpush1.xpose.msra.mxu0 0.0
        %1745 = vmatprep.subr.mxu0 0.0
        %1746 = vmatpush1.xpose.msra.mxu0 0.0
        %1747 = vmatprep.subr.mxu0 0.0
        %1748 = vmatpush1.xpose.msra.mxu0 0.0
        %1749 = vmatprep.subr.mxu0 0.0
        %1750 = vmatpush1.xpose.msra.mxu0 0.0
        %1751 = vmatprep.subr.mxu0 0.0
        %1752 = vmatpush1.xpose.msra.mxu0 0.0
        %1753 = vmatprep.subr.mxu0 0.0
        %1754 = vmatpush1.xpose.msra.mxu0 0.0
        %1755 = vmatprep.subr.mxu0 0.0
        %1756 = vmatpush1.xpose.msra.mxu0 0.0
        %1757 = vmatprep.subr.mxu0 0.0
        %1758 = vmatpush1.xpose.msra.mxu0 0.0
        %1759 = vmatprep.subr.mxu0 0.0
        %1760 = vmatpush1.xpose.msra.mxu0 0.0
        %1761 = vmatprep.subr.mxu0 0.0
        %1762 = vmatpush1.xpose.msra.mxu0 0.0
        %1763 = vmatprep.subr.mxu0 0.0
        %1764 = vmatpush1.xpose.msra.mxu0 0.0
        %1765 = vmatprep.subr.mxu0 0.0
        %1766 = vmatpush1.xpose.msra.mxu0 %v1593
        %1767 = vmatprep.subr.mxu0 0.0
        %1768 = vmatpush2.xpose.msra.mxu0 0.0
        %1769 = vmatprep.subr.mxu0 0.0
        %1770 = vmatpush2.xpose.msra.mxu0 0.0
        %1771 = vmatprep.subr.mxu0 0.0
        %1772 = vmatpush2.xpose.msra.mxu0 0.0
        %1773 = vmatprep.subr.mxu0 0.0
        %1774 = vmatpush2.xpose.msra.mxu0 0.0
        %1775 = vmatprep.subr.mxu0 0.0
        %1776 = vmatpush2.xpose.msra.mxu0 0.0
        %1777 = vmatprep.subr.mxu0 0.0
        %1778 = vmatpush2.xpose.msra.mxu0 0.0
        %1779 = vmatprep.subr.mxu0 0.0
        %1780 = vmatpush2.xpose.msra.mxu0 0.0
        %1781 = vmatprep.subr.mxu0 0.0
        %1782 = vmatpush2.xpose.msra.mxu0 0.0
        %1783 = vmatprep.subr.mxu0 0.0
        %1784 = vmatpush2.xpose.msra.mxu0 0.0
        %1785 = vmatprep.subr.mxu0 0.0
        %1786 = vmatpush2.xpose.msra.mxu0 0.0
        %1787 = vmatprep.subr.mxu0 0.0
        %1788 = vmatpush2.xpose.msra.mxu0 0.0
        %1789 = vmatprep.subr.mxu0 0.0
        %1790 = vmatpush2.xpose.msra.mxu0 0.0
        %1791 = vmatprep.subr.mxu0 0.0
        %1792 = vmatpush2.xpose.msra.mxu0 0.0
        %1793 = vmatprep.subr.mxu0 0.0
        %1794 = vmatpush2.xpose.msra.mxu0 0.0
        %1795 = vmatprep.subr.mxu0 0.0
        %1796 = vmatpush2.xpose.msra.mxu0 0.0
        %1797 = vmatprep.subr.mxu0 0.0
        %1798 = vmatpush2.xpose.msra.mxu0 0.0
        %1799 = vmatprep.mubr.f32.mxu0 0.0
        %1800 = vmatmul.mubr.f32.gmra.mxu0 %v1447
        %v1801 = vpop.f32.mrf.mxu0
        %v1802 = vadd.f32 0.0, %v1801
        %v1803 = vpop.f32.mrf.mxu0
        %1804 = vdwg.mxu0
        %1805 = vmatprep.subr.mxu0 0.0
        %1806 = vmatpush1.xpose.msra.mxu0 0.0
        %1807 = vmatprep.subr.mxu0 0.0
        %1808 = vmatpush1.xpose.msra.mxu0 0.0
        %1809 = vmatprep.subr.mxu0 0.0
        %1810 = vmatpush1.xpose.msra.mxu0 0.0
        %1811 = vmatprep.subr.mxu0 0.0
        %1812 = vmatpush1.xpose.msra.mxu0 0.0
        %1813 = vmatprep.subr.mxu0 0.0
        %1814 = vmatpush1.xpose.msra.mxu0 0.0
        %1815 = vmatprep.subr.mxu0 0.0
        %1816 = vmatpush1.xpose.msra.mxu0 0.0
        %1817 = vmatprep.subr.mxu0 0.0
        %1818 = vmatpush1.xpose.msra.mxu0 0.0
        %1819 = vmatprep.subr.mxu0 0.0
        %1820 = vmatpush1.xpose.msra.mxu0 0.0
        %1821 = vmatprep.subr.mxu0 0.0
        %1822 = vmatpush1.xpose.msra.mxu0 0.0
        %1823 = vmatprep.subr.mxu0 0.0
        %1824 = vmatpush1.xpose.msra.mxu0 0.0
        %1825 = vmatprep.subr.mxu0 0.0
        %1826 = vmatpush1.xpose.msra.mxu0 0.0
        %1827 = vmatprep.subr.mxu0 0.0
        %1828 = vmatpush1.xpose.msra.mxu0 0.0
        %1829 = vmatprep.subr.mxu0 0.0
        %1830 = vmatpush1.xpose.msra.mxu0 0.0
        %1831 = vmatprep.subr.mxu0 0.0
        %1832 = vmatpush1.xpose.msra.mxu0 0.0
        %1833 = vmatprep.subr.mxu0 0.0
        %1834 = vmatpush1.xpose.msra.mxu0 0.0
        %1835 = vmatprep.subr.mxu0 0.0
        %1836 = vmatpush1.xpose.msra.mxu0 %v1593
        %1837 = vmatprep.subr.mxu0 0.0
        %1838 = vmatpush2.xpose.msra.mxu0 0.0
        %1839 = vmatprep.subr.mxu0 0.0
        %1840 = vmatpush2.xpose.msra.mxu0 0.0
        %1841 = vmatprep.subr.mxu0 0.0
        %1842 = vmatpush2.xpose.msra.mxu0 0.0
        %1843 = vmatprep.subr.mxu0 0.0
        %1844 = vmatpush2.xpose.msra.mxu0 0.0
        %1845 = vmatprep.subr.mxu0 0.0
        %1846 = vmatpush2.xpose.msra.mxu0 0.0
        %1847 = vmatprep.subr.mxu0 0.0
        %1848 = vmatpush2.xpose.msra.mxu0 0.0
        %1849 = vmatprep.subr.mxu0 0.0
        %1850 = vmatpush2.xpose.msra.mxu0 0.0
        %1851 = vmatprep.subr.mxu0 0.0
        %1852 = vmatpush2.xpose.msra.mxu0 0.0
        %1853 = vmatprep.subr.mxu0 0.0
        %1854 = vmatpush2.xpose.msra.mxu0 0.0
        %1855 = vmatprep.subr.mxu0 0.0
        %1856 = vmatpush2.xpose.msra.mxu0 0.0
        %1857 = vmatprep.subr.mxu0 0.0
        %1858 = vmatpush2.xpose.msra.mxu0 0.0
        %1859 = vmatprep.subr.mxu0 0.0
        %1860 = vmatpush2.xpose.msra.mxu0 0.0
        %1861 = vmatprep.subr.mxu0 0.0
        %1862 = vmatpush2.xpose.msra.mxu0 0.0
        %1863 = vmatprep.subr.mxu0 0.0
        %1864 = vmatpush2.xpose.msra.mxu0 0.0
        %1865 = vmatprep.subr.mxu0 0.0
        %1866 = vmatpush2.xpose.msra.mxu0 0.0
        %1867 = vmatprep.subr.mxu0 0.0
        %1868 = vmatpush2.xpose.msra.mxu0 0.0
        %1869 = vmatprep.mubr.f32.mxu0 0.0
        %1870 = vmatmul.mubr.f32.gmra.mxu0 %v1520
        %v1871 = vpop.f32.mrf.mxu0
        %v1872 = vadd.f32 0.0, %v1871
        %v1873 = vpop.f32.mrf.mxu0
        %1874 = vdwg.mxu0
        %v1875 = vmax.f32 %v1370, %v1662
        %v1876 = vmax.f32 %v1443, %v1732
        %v1877 = vmax.f32 %v1516, %v1802
        %v1878 = vmax.f32 %v1589, %v1872
        %v1880 = vsel %vm638, %v1044, 0
        %1882 = vmatprep.subr.mxu0 0.0
        %1883 = vmatpush1.xpose.msra.mxu0 0.0
        %1884 = vmatprep.subr.mxu0 0.0
        %1885 = vmatpush1.xpose.msra.mxu0 0.0
        %1886 = vmatprep.subr.mxu0 0.0
        %1887 = vmatpush1.xpose.msra.mxu0 0.0
        %1888 = vmatprep.subr.mxu0 0.0
        %1889 = vmatpush1.xpose.msra.mxu0 0.0
        %1890 = vmatprep.subr.mxu0 0.0
        %1891 = vmatpush1.xpose.msra.mxu0 0.0
        %1892 = vmatprep.subr.mxu0 0.0
        %1893 = vmatpush1.xpose.msra.mxu0 0.0
        %1894 = vmatprep.subr.mxu0 0.0
        %1895 = vmatpush1.xpose.msra.mxu0 0.0
        %1896 = vmatprep.subr.mxu0 0.0
        %1897 = vmatpush1.xpose.msra.mxu0 0.0
        %1898 = vmatprep.subr.mxu0 0.0
        %1899 = vmatpush1.xpose.msra.mxu0 0.0
        %1900 = vmatprep.subr.mxu0 0.0
        %1901 = vmatpush1.xpose.msra.mxu0 0.0
        %1902 = vmatprep.subr.mxu0 0.0
        %1903 = vmatpush1.xpose.msra.mxu0 0.0
        %1904 = vmatprep.subr.mxu0 0.0
        %1905 = vmatpush1.xpose.msra.mxu0 0.0
        %1906 = vmatprep.subr.mxu0 0.0
        %1907 = vmatpush1.xpose.msra.mxu0 0.0
        %1908 = vmatprep.subr.mxu0 0.0
        %1909 = vmatpush1.xpose.msra.mxu0 0.0
        %1910 = vmatprep.subr.mxu0 0.0
        %1911 = vmatpush1.xpose.msra.mxu0 0.0
        %1912 = vmatprep.subr.mxu0 0.0
        %1913 = vmatpush1.xpose.msra.mxu0 %v1301
        %1914 = vmatprep.subr.mxu0 0.0
        %1915 = vmatpush2.xpose.msra.mxu0 0.0
        %1916 = vmatprep.subr.mxu0 0.0
        %1917 = vmatpush2.xpose.msra.mxu0 0.0
        %1918 = vmatprep.subr.mxu0 0.0
        %1919 = vmatpush2.xpose.msra.mxu0 0.0
        %1920 = vmatprep.subr.mxu0 0.0
        %1921 = vmatpush2.xpose.msra.mxu0 0.0
        %1922 = vmatprep.subr.mxu0 0.0
        %1923 = vmatpush2.xpose.msra.mxu0 0.0
        %1924 = vmatprep.subr.mxu0 0.0
        %1925 = vmatpush2.xpose.msra.mxu0 0.0
        %1926 = vmatprep.subr.mxu0 0.0
        %1927 = vmatpush2.xpose.msra.mxu0 0.0
        %1928 = vmatprep.subr.mxu0 0.0
        %1929 = vmatpush2.xpose.msra.mxu0 0.0
        %1930 = vmatprep.subr.mxu0 0.0
        %1931 = vmatpush2.xpose.msra.mxu0 0.0
        %1932 = vmatprep.subr.mxu0 0.0
        %1933 = vmatpush2.xpose.msra.mxu0 0.0
        %1934 = vmatprep.subr.mxu0 0.0
        %1935 = vmatpush2.xpose.msra.mxu0 0.0
        %1936 = vmatprep.subr.mxu0 0.0
        %1937 = vmatpush2.xpose.msra.mxu0 0.0
        %1938 = vmatprep.subr.mxu0 0.0
        %1939 = vmatpush2.xpose.msra.mxu0 0.0
        %1940 = vmatprep.subr.mxu0 0.0
        %1941 = vmatpush2.xpose.msra.mxu0 0.0
        %1942 = vmatprep.subr.mxu0 0.0
        %1943 = vmatpush2.xpose.msra.mxu0 0.0
        %1944 = vmatprep.subr.mxu0 0.0
        %1945 = vmatpush2.xpose.msra.mxu0 0.0
        %1946 = vmatprep.mubr.f32.mxu0 0.0
        %1947 = vmatmul.mubr.f32.gmra.mxu0 %v1880
        %v1948 = vpop.f32.mrf.mxu0
        %v1949 = vadd.f32 0.0, %v1948
        %v1950 = vpop.f32.mrf.mxu0
        %1951 = vdwg.mxu0
        %v1953 = vsel %vm638, %v1124, 0
        %1955 = vmatprep.subr.mxu0 0.0
        %1956 = vmatpush1.xpose.msra.mxu0 0.0
        %1957 = vmatprep.subr.mxu0 0.0
        %1958 = vmatpush1.xpose.msra.mxu0 0.0
        %1959 = vmatprep.subr.mxu0 0.0
        %1960 = vmatpush1.xpose.msra.mxu0 0.0
        %1961 = vmatprep.subr.mxu0 0.0
        %1962 = vmatpush1.xpose.msra.mxu0 0.0
        %1963 = vmatprep.subr.mxu0 0.0
        %1964 = vmatpush1.xpose.msra.mxu0 0.0
        %1965 = vmatprep.subr.mxu0 0.0
        %1966 = vmatpush1.xpose.msra.mxu0 0.0
        %1967 = vmatprep.subr.mxu0 0.0
        %1968 = vmatpush1.xpose.msra.mxu0 0.0
        %1969 = vmatprep.subr.mxu0 0.0
        %1970 = vmatpush1.xpose.msra.mxu0 0.0
        %1971 = vmatprep.subr.mxu0 0.0
        %1972 = vmatpush1.xpose.msra.mxu0 0.0
        %1973 = vmatprep.subr.mxu0 0.0
        %1974 = vmatpush1.xpose.msra.mxu0 0.0
        %1975 = vmatprep.subr.mxu0 0.0
        %1976 = vmatpush1.xpose.msra.mxu0 0.0
        %1977 = vmatprep.subr.mxu0 0.0
        %1978 = vmatpush1.xpose.msra.mxu0 0.0
        %1979 = vmatprep.subr.mxu0 0.0
        %1980 = vmatpush1.xpose.msra.mxu0 0.0
        %1981 = vmatprep.subr.mxu0 0.0
        %1982 = vmatpush1.xpose.msra.mxu0 0.0
        %1983 = vmatprep.subr.mxu0 0.0
        %1984 = vmatpush1.xpose.msra.mxu0 0.0
        %1985 = vmatprep.subr.mxu0 0.0
        %1986 = vmatpush1.xpose.msra.mxu0 %v1301
        %1987 = vmatprep.subr.mxu0 0.0
        %1988 = vmatpush2.xpose.msra.mxu0 0.0
        %1989 = vmatprep.subr.mxu0 0.0
        %1990 = vmatpush2.xpose.msra.mxu0 0.0
        %1991 = vmatprep.subr.mxu0 0.0
        %1992 = vmatpush2.xpose.msra.mxu0 0.0
        %1993 = vmatprep.subr.mxu0 0.0
        %1994 = vmatpush2.xpose.msra.mxu0 0.0
        %1995 = vmatprep.subr.mxu0 0.0
        %1996 = vmatpush2.xpose.msra.mxu0 0.0
        %1997 = vmatprep.subr.mxu0 0.0
        %1998 = vmatpush2.xpose.msra.mxu0 0.0
        %1999 = vmatprep.subr.mxu0 0.0
        %2000 = vmatpush2.xpose.msra.mxu0 0.0
        %2001 = vmatprep.subr.mxu0 0.0
        %2002 = vmatpush2.xpose.msra.mxu0 0.0
        %2003 = vmatprep.subr.mxu0 0.0
        %2004 = vmatpush2.xpose.msra.mxu0 0.0
        %2005 = vmatprep.subr.mxu0 0.0
        %2006 = vmatpush2.xpose.msra.mxu0 0.0
        %2007 = vmatprep.subr.mxu0 0.0
        %2008 = vmatpush2.xpose.msra.mxu0 0.0
        %2009 = vmatprep.subr.mxu0 0.0
        %2010 = vmatpush2.xpose.msra.mxu0 0.0
        %2011 = vmatprep.subr.mxu0 0.0
        %2012 = vmatpush2.xpose.msra.mxu0 0.0
        %2013 = vmatprep.subr.mxu0 0.0
        %2014 = vmatpush2.xpose.msra.mxu0 0.0
        %2015 = vmatprep.subr.mxu0 0.0
        %2016 = vmatpush2.xpose.msra.mxu0 0.0
        %2017 = vmatprep.subr.mxu0 0.0
        %2018 = vmatpush2.xpose.msra.mxu0 0.0
        %2019 = vmatprep.mubr.f32.mxu0 0.0
        %2020 = vmatmul.mubr.f32.gmra.mxu0 %v1953
        %v2021 = vpop.f32.mrf.mxu0
        %v2022 = vadd.f32 0.0, %v2021
        %v2023 = vpop.f32.mrf.mxu0
        %2024 = vdwg.mxu0
        %v2026 = vsel %vm638, %v1204, 0
        %2028 = vmatprep.subr.mxu0 0.0
        %2029 = vmatpush1.xpose.msra.mxu0 0.0
        %2030 = vmatprep.subr.mxu0 0.0
        %2031 = vmatpush1.xpose.msra.mxu0 0.0
        %2032 = vmatprep.subr.mxu0 0.0
        %2033 = vmatpush1.xpose.msra.mxu0 0.0
        %2034 = vmatprep.subr.mxu0 0.0
        %2035 = vmatpush1.xpose.msra.mxu0 0.0
        %2036 = vmatprep.subr.mxu0 0.0
        %2037 = vmatpush1.xpose.msra.mxu0 0.0
        %2038 = vmatprep.subr.mxu0 0.0
        %2039 = vmatpush1.xpose.msra.mxu0 0.0
        %2040 = vmatprep.subr.mxu0 0.0
        %2041 = vmatpush1.xpose.msra.mxu0 0.0
        %2042 = vmatprep.subr.mxu0 0.0
        %2043 = vmatpush1.xpose.msra.mxu0 0.0
        %2044 = vmatprep.subr.mxu0 0.0
        %2045 = vmatpush1.xpose.msra.mxu0 0.0
        %2046 = vmatprep.subr.mxu0 0.0
        %2047 = vmatpush1.xpose.msra.mxu0 0.0
        %2048 = vmatprep.subr.mxu0 0.0
        %2049 = vmatpush1.xpose.msra.mxu0 0.0
        %2050 = vmatprep.subr.mxu0 0.0
        %2051 = vmatpush1.xpose.msra.mxu0 0.0
        %2052 = vmatprep.subr.mxu0 0.0
        %2053 = vmatpush1.xpose.msra.mxu0 0.0
        %2054 = vmatprep.subr.mxu0 0.0
        %2055 = vmatpush1.xpose.msra.mxu0 0.0
        %2056 = vmatprep.subr.mxu0 0.0
        %2057 = vmatpush1.xpose.msra.mxu0 0.0
        %2058 = vmatprep.subr.mxu0 0.0
        %2059 = vmatpush1.xpose.msra.mxu0 %v1301
        %2060 = vmatprep.subr.mxu0 0.0
        %2061 = vmatpush2.xpose.msra.mxu0 0.0
        %2062 = vmatprep.subr.mxu0 0.0
        %2063 = vmatpush2.xpose.msra.mxu0 0.0
        %2064 = vmatprep.subr.mxu0 0.0
        %2065 = vmatpush2.xpose.msra.mxu0 0.0
        %2066 = vmatprep.subr.mxu0 0.0
        %2067 = vmatpush2.xpose.msra.mxu0 0.0
        %2068 = vmatprep.subr.mxu0 0.0
        %2069 = vmatpush2.xpose.msra.mxu0 0.0
        %2070 = vmatprep.subr.mxu0 0.0
        %2071 = vmatpush2.xpose.msra.mxu0 0.0
        %2072 = vmatprep.subr.mxu0 0.0
        %2073 = vmatpush2.xpose.msra.mxu0 0.0
        %2074 = vmatprep.subr.mxu0 0.0
        %2075 = vmatpush2.xpose.msra.mxu0 0.0
        %2076 = vmatprep.subr.mxu0 0.0
        %2077 = vmatpush2.xpose.msra.mxu0 0.0
        %2078 = vmatprep.subr.mxu0 0.0
        %2079 = vmatpush2.xpose.msra.mxu0 0.0
        %2080 = vmatprep.subr.mxu0 0.0
        %2081 = vmatpush2.xpose.msra.mxu0 0.0
        %2082 = vmatprep.subr.mxu0 0.0
        %2083 = vmatpush2.xpose.msra.mxu0 0.0
        %2084 = vmatprep.subr.mxu0 0.0
        %2085 = vmatpush2.xpose.msra.mxu0 0.0
        %2086 = vmatprep.subr.mxu0 0.0
        %2087 = vmatpush2.xpose.msra.mxu0 0.0
        %2088 = vmatprep.subr.mxu0 0.0
        %2089 = vmatpush2.xpose.msra.mxu0 0.0
        %2090 = vmatprep.subr.mxu0 0.0
        %2091 = vmatpush2.xpose.msra.mxu0 0.0
        %2092 = vmatprep.mubr.f32.mxu0 0.0
        %2093 = vmatmul.mubr.f32.gmra.mxu0 %v2026
        %v2094 = vpop.f32.mrf.mxu0
        %v2095 = vadd.f32 0.0, %v2094
        %v2096 = vpop.f32.mrf.mxu0
        %2097 = vdwg.mxu0
        %v2099 = vsel %vm638, %v1284, 0
        %2101 = vmatprep.subr.mxu0 0.0
        %2102 = vmatpush1.xpose.msra.mxu0 0.0
        %2103 = vmatprep.subr.mxu0 0.0
        %2104 = vmatpush1.xpose.msra.mxu0 0.0
        %2105 = vmatprep.subr.mxu0 0.0
        %2106 = vmatpush1.xpose.msra.mxu0 0.0
        %2107 = vmatprep.subr.mxu0 0.0
        %2108 = vmatpush1.xpose.msra.mxu0 0.0
        %2109 = vmatprep.subr.mxu0 0.0
        %2110 = vmatpush1.xpose.msra.mxu0 0.0
        %2111 = vmatprep.subr.mxu0 0.0
        %2112 = vmatpush1.xpose.msra.mxu0 0.0
        %2113 = vmatprep.subr.mxu0 0.0
        %2114 = vmatpush1.xpose.msra.mxu0 0.0
        %2115 = vmatprep.subr.mxu0 0.0
        %2116 = vmatpush1.xpose.msra.mxu0 0.0
        %2117 = vmatprep.subr.mxu0 0.0
        %2118 = vmatpush1.xpose.msra.mxu0 0.0
        %2119 = vmatprep.subr.mxu0 0.0
        %2120 = vmatpush1.xpose.msra.mxu0 0.0
        %2121 = vmatprep.subr.mxu0 0.0
        %2122 = vmatpush1.xpose.msra.mxu0 0.0
        %2123 = vmatprep.subr.mxu0 0.0
        %2124 = vmatpush1.xpose.msra.mxu0 0.0
        %2125 = vmatprep.subr.mxu0 0.0
        %2126 = vmatpush1.xpose.msra.mxu0 0.0
        %2127 = vmatprep.subr.mxu0 0.0
        %2128 = vmatpush1.xpose.msra.mxu0 0.0
        %2129 = vmatprep.subr.mxu0 0.0
        %2130 = vmatpush1.xpose.msra.mxu0 0.0
        %2131 = vmatprep.subr.mxu0 0.0
        %2132 = vmatpush1.xpose.msra.mxu0 %v1301
        %2133 = vmatprep.subr.mxu0 0.0
        %2134 = vmatpush2.xpose.msra.mxu0 0.0
        %2135 = vmatprep.subr.mxu0 0.0
        %2136 = vmatpush2.xpose.msra.mxu0 0.0
        %2137 = vmatprep.subr.mxu0 0.0
        %2138 = vmatpush2.xpose.msra.mxu0 0.0
        %2139 = vmatprep.subr.mxu0 0.0
        %2140 = vmatpush2.xpose.msra.mxu0 0.0
        %2141 = vmatprep.subr.mxu0 0.0
        %2142 = vmatpush2.xpose.msra.mxu0 0.0
        %2143 = vmatprep.subr.mxu0 0.0
        %2144 = vmatpush2.xpose.msra.mxu0 0.0
        %2145 = vmatprep.subr.mxu0 0.0
        %2146 = vmatpush2.xpose.msra.mxu0 0.0
        %2147 = vmatprep.subr.mxu0 0.0
        %2148 = vmatpush2.xpose.msra.mxu0 0.0
        %2149 = vmatprep.subr.mxu0 0.0
        %2150 = vmatpush2.xpose.msra.mxu0 0.0
        %2151 = vmatprep.subr.mxu0 0.0
        %2152 = vmatpush2.xpose.msra.mxu0 0.0
        %2153 = vmatprep.subr.mxu0 0.0
        %2154 = vmatpush2.xpose.msra.mxu0 0.0
        %2155 = vmatprep.subr.mxu0 0.0
        %2156 = vmatpush2.xpose.msra.mxu0 0.0
        %2157 = vmatprep.subr.mxu0 0.0
        %2158 = vmatpush2.xpose.msra.mxu0 0.0
        %2159 = vmatprep.subr.mxu0 0.0
        %2160 = vmatpush2.xpose.msra.mxu0 0.0
        %2161 = vmatprep.subr.mxu0 0.0
        %2162 = vmatpush2.xpose.msra.mxu0 0.0
        %2163 = vmatprep.subr.mxu0 0.0
        %2164 = vmatpush2.xpose.msra.mxu0 0.0
        %2165 = vmatprep.mubr.f32.mxu0 0.0
        %2166 = vmatmul.mubr.f32.gmra.mxu0 %v2099
        %v2167 = vpop.f32.mrf.mxu0
        %v2168 = vadd.f32 0.0, %v2167
        %v2169 = vpop.f32.mrf.mxu0
        %2170 = vdwg.mxu0
        %2171 = vmatprep.subr.mxu0 0.0
        %2172 = vmatpush1.xpose.msra.mxu0 0.0
        %2173 = vmatprep.subr.mxu0 0.0
        %2174 = vmatpush1.xpose.msra.mxu0 0.0
        %2175 = vmatprep.subr.mxu0 0.0
        %2176 = vmatpush1.xpose.msra.mxu0 0.0
        %2177 = vmatprep.subr.mxu0 0.0
        %2178 = vmatpush1.xpose.msra.mxu0 0.0
        %2179 = vmatprep.subr.mxu0 0.0
        %2180 = vmatpush1.xpose.msra.mxu0 0.0
        %2181 = vmatprep.subr.mxu0 0.0
        %2182 = vmatpush1.xpose.msra.mxu0 0.0
        %2183 = vmatprep.subr.mxu0 0.0
        %2184 = vmatpush1.xpose.msra.mxu0 0.0
        %2185 = vmatprep.subr.mxu0 0.0
        %2186 = vmatpush1.xpose.msra.mxu0 0.0
        %2187 = vmatprep.subr.mxu0 0.0
        %2188 = vmatpush1.xpose.msra.mxu0 0.0
        %2189 = vmatprep.subr.mxu0 0.0
        %2190 = vmatpush1.xpose.msra.mxu0 0.0
        %2191 = vmatprep.subr.mxu0 0.0
        %2192 = vmatpush1.xpose.msra.mxu0 0.0
        %2193 = vmatprep.subr.mxu0 0.0
        %2194 = vmatpush1.xpose.msra.mxu0 0.0
        %2195 = vmatprep.subr.mxu0 0.0
        %2196 = vmatpush1.xpose.msra.mxu0 0.0
        %2197 = vmatprep.subr.mxu0 0.0
        %2198 = vmatpush1.xpose.msra.mxu0 0.0
        %2199 = vmatprep.subr.mxu0 0.0
        %2200 = vmatpush1.xpose.msra.mxu0 0.0
        %2201 = vmatprep.subr.mxu0 0.0
        %2202 = vmatpush1.xpose.msra.mxu0 %v1593
        %2203 = vmatprep.subr.mxu0 0.0
        %2204 = vmatpush2.xpose.msra.mxu0 0.0
        %2205 = vmatprep.subr.mxu0 0.0
        %2206 = vmatpush2.xpose.msra.mxu0 0.0
        %2207 = vmatprep.subr.mxu0 0.0
        %2208 = vmatpush2.xpose.msra.mxu0 0.0
        %2209 = vmatprep.subr.mxu0 0.0
        %2210 = vmatpush2.xpose.msra.mxu0 0.0
        %2211 = vmatprep.subr.mxu0 0.0
        %2212 = vmatpush2.xpose.msra.mxu0 0.0
        %2213 = vmatprep.subr.mxu0 0.0
        %2214 = vmatpush2.xpose.msra.mxu0 0.0
        %2215 = vmatprep.subr.mxu0 0.0
        %2216 = vmatpush2.xpose.msra.mxu0 0.0
        %2217 = vmatprep.subr.mxu0 0.0
        %2218 = vmatpush2.xpose.msra.mxu0 0.0
        %2219 = vmatprep.subr.mxu0 0.0
        %2220 = vmatpush2.xpose.msra.mxu0 0.0
        %2221 = vmatprep.subr.mxu0 0.0
        %2222 = vmatpush2.xpose.msra.mxu0 0.0
        %2223 = vmatprep.subr.mxu0 0.0
        %2224 = vmatpush2.xpose.msra.mxu0 0.0
        %2225 = vmatprep.subr.mxu0 0.0
        %2226 = vmatpush2.xpose.msra.mxu0 0.0
        %2227 = vmatprep.subr.mxu0 0.0
        %2228 = vmatpush2.xpose.msra.mxu0 0.0
        %2229 = vmatprep.subr.mxu0 0.0
        %2230 = vmatpush2.xpose.msra.mxu0 0.0
        %2231 = vmatprep.subr.mxu0 0.0
        %2232 = vmatpush2.xpose.msra.mxu0 0.0
        %2233 = vmatprep.subr.mxu0 0.0
        %2234 = vmatpush2.xpose.msra.mxu0 0.0
        %2235 = vmatprep.mubr.f32.mxu0 0.0
        %2236 = vmatmul.mubr.f32.gmra.mxu0 %v1880
        %v2237 = vpop.f32.mrf.mxu0
        %v2238 = vadd.f32 0.0, %v2237
        %v2239 = vpop.f32.mrf.mxu0
        %2240 = vdwg.mxu0
        %2241 = vmatprep.subr.mxu0 0.0
        %2242 = vmatpush1.xpose.msra.mxu0 0.0
        %2243 = vmatprep.subr.mxu0 0.0
        %2244 = vmatpush1.xpose.msra.mxu0 0.0
        %2245 = vmatprep.subr.mxu0 0.0
        %2246 = vmatpush1.xpose.msra.mxu0 0.0
        %2247 = vmatprep.subr.mxu0 0.0
        %2248 = vmatpush1.xpose.msra.mxu0 0.0
        %2249 = vmatprep.subr.mxu0 0.0
        %2250 = vmatpush1.xpose.msra.mxu0 0.0
        %2251 = vmatprep.subr.mxu0 0.0
        %2252 = vmatpush1.xpose.msra.mxu0 0.0
        %2253 = vmatprep.subr.mxu0 0.0
        %2254 = vmatpush1.xpose.msra.mxu0 0.0
        %2255 = vmatprep.subr.mxu0 0.0
        %2256 = vmatpush1.xpose.msra.mxu0 0.0
        %2257 = vmatprep.subr.mxu0 0.0
        %2258 = vmatpush1.xpose.msra.mxu0 0.0
        %2259 = vmatprep.subr.mxu0 0.0
        %2260 = vmatpush1.xpose.msra.mxu0 0.0
        %2261 = vmatprep.subr.mxu0 0.0
        %2262 = vmatpush1.xpose.msra.mxu0 0.0
        %2263 = vmatprep.subr.mxu0 0.0
        %2264 = vmatpush1.xpose.msra.mxu0 0.0
        %2265 = vmatprep.subr.mxu0 0.0
        %2266 = vmatpush1.xpose.msra.mxu0 0.0
        %2267 = vmatprep.subr.mxu0 0.0
        %2268 = vmatpush1.xpose.msra.mxu0 0.0
        %2269 = vmatprep.subr.mxu0 0.0
        %2270 = vmatpush1.xpose.msra.mxu0 0.0
        %2271 = vmatprep.subr.mxu0 0.0
        %2272 = vmatpush1.xpose.msra.mxu0 %v1593
        %2273 = vmatprep.subr.mxu0 0.0
        %2274 = vmatpush2.xpose.msra.mxu0 0.0
        %2275 = vmatprep.subr.mxu0 0.0
        %2276 = vmatpush2.xpose.msra.mxu0 0.0
        %2277 = vmatprep.subr.mxu0 0.0
        %2278 = vmatpush2.xpose.msra.mxu0 0.0
        %2279 = vmatprep.subr.mxu0 0.0
        %2280 = vmatpush2.xpose.msra.mxu0 0.0
        %2281 = vmatprep.subr.mxu0 0.0
        %2282 = vmatpush2.xpose.msra.mxu0 0.0
        %2283 = vmatprep.subr.mxu0 0.0
        %2284 = vmatpush2.xpose.msra.mxu0 0.0
        %2285 = vmatprep.subr.mxu0 0.0
        %2286 = vmatpush2.xpose.msra.mxu0 0.0
        %2287 = vmatprep.subr.mxu0 0.0
        %2288 = vmatpush2.xpose.msra.mxu0 0.0
        %2289 = vmatprep.subr.mxu0 0.0
        %2290 = vmatpush2.xpose.msra.mxu0 0.0
        %2291 = vmatprep.subr.mxu0 0.0
        %2292 = vmatpush2.xpose.msra.mxu0 0.0
        %2293 = vmatprep.subr.mxu0 0.0
        %2294 = vmatpush2.xpose.msra.mxu0 0.0
        %2295 = vmatprep.subr.mxu0 0.0
        %2296 = vmatpush2.xpose.msra.mxu0 0.0
        %2297 = vmatprep.subr.mxu0 0.0
        %2298 = vmatpush2.xpose.msra.mxu0 0.0
        %2299 = vmatprep.subr.mxu0 0.0
        %2300 = vmatpush2.xpose.msra.mxu0 0.0
        %2301 = vmatprep.subr.mxu0 0.0
        %2302 = vmatpush2.xpose.msra.mxu0 0.0
        %2303 = vmatprep.subr.mxu0 0.0
        %2304 = vmatpush2.xpose.msra.mxu0 0.0
        %2305 = vmatprep.mubr.f32.mxu0 0.0
        %2306 = vmatmul.mubr.f32.gmra.mxu0 %v1953
        %v2307 = vpop.f32.mrf.mxu0
        %v2308 = vadd.f32 0.0, %v2307
        %v2309 = vpop.f32.mrf.mxu0
        %2310 = vdwg.mxu0
        %2311 = vmatprep.subr.mxu0 0.0
        %2312 = vmatpush1.xpose.msra.mxu0 0.0
        %2313 = vmatprep.subr.mxu0 0.0
        %2314 = vmatpush1.xpose.msra.mxu0 0.0
        %2315 = vmatprep.subr.mxu0 0.0
        %2316 = vmatpush1.xpose.msra.mxu0 0.0
        %2317 = vmatprep.subr.mxu0 0.0
        %2318 = vmatpush1.xpose.msra.mxu0 0.0
        %2319 = vmatprep.subr.mxu0 0.0
        %2320 = vmatpush1.xpose.msra.mxu0 0.0
        %2321 = vmatprep.subr.mxu0 0.0
        %2322 = vmatpush1.xpose.msra.mxu0 0.0
        %2323 = vmatprep.subr.mxu0 0.0
        %2324 = vmatpush1.xpose.msra.mxu0 0.0
        %2325 = vmatprep.subr.mxu0 0.0
        %2326 = vmatpush1.xpose.msra.mxu0 0.0
        %2327 = vmatprep.subr.mxu0 0.0
        %2328 = vmatpush1.xpose.msra.mxu0 0.0
        %2329 = vmatprep.subr.mxu0 0.0
        %2330 = vmatpush1.xpose.msra.mxu0 0.0
        %2331 = vmatprep.subr.mxu0 0.0
        %2332 = vmatpush1.xpose.msra.mxu0 0.0
        %2333 = vmatprep.subr.mxu0 0.0
        %2334 = vmatpush1.xpose.msra.mxu0 0.0
        %2335 = vmatprep.subr.mxu0 0.0
        %2336 = vmatpush1.xpose.msra.mxu0 0.0
        %2337 = vmatprep.subr.mxu0 0.0
        %2338 = vmatpush1.xpose.msra.mxu0 0.0
        %2339 = vmatprep.subr.mxu0 0.0
        %2340 = vmatpush1.xpose.msra.mxu0 0.0
        %2341 = vmatprep.subr.mxu0 0.0
        %2342 = vmatpush1.xpose.msra.mxu0 %v1593
        %2343 = vmatprep.subr.mxu0 0.0
        %2344 = vmatpush2.xpose.msra.mxu0 0.0
        %2345 = vmatprep.subr.mxu0 0.0
        %2346 = vmatpush2.xpose.msra.mxu0 0.0
        %2347 = vmatprep.subr.mxu0 0.0
        %2348 = vmatpush2.xpose.msra.mxu0 0.0
        %2349 = vmatprep.subr.mxu0 0.0
        %2350 = vmatpush2.xpose.msra.mxu0 0.0
        %2351 = vmatprep.subr.mxu0 0.0
        %2352 = vmatpush2.xpose.msra.mxu0 0.0
        %2353 = vmatprep.subr.mxu0 0.0
        %2354 = vmatpush2.xpose.msra.mxu0 0.0
        %2355 = vmatprep.subr.mxu0 0.0
        %2356 = vmatpush2.xpose.msra.mxu0 0.0
        %2357 = vmatprep.subr.mxu0 0.0
        %2358 = vmatpush2.xpose.msra.mxu0 0.0
        %2359 = vmatprep.subr.mxu0 0.0
        %2360 = vmatpush2.xpose.msra.mxu0 0.0
        %2361 = vmatprep.subr.mxu0 0.0
        %2362 = vmatpush2.xpose.msra.mxu0 0.0
        %2363 = vmatprep.subr.mxu0 0.0
        %2364 = vmatpush2.xpose.msra.mxu0 0.0
        %2365 = vmatprep.subr.mxu0 0.0
        %2366 = vmatpush2.xpose.msra.mxu0 0.0
        %2367 = vmatprep.subr.mxu0 0.0
        %2368 = vmatpush2.xpose.msra.mxu0 0.0
        %2369 = vmatprep.subr.mxu0 0.0
        %2370 = vmatpush2.xpose.msra.mxu0 0.0
        %2371 = vmatprep.subr.mxu0 0.0
        %2372 = vmatpush2.xpose.msra.mxu0 0.0
        %2373 = vmatprep.subr.mxu0 0.0
        %2374 = vmatpush2.xpose.msra.mxu0 0.0
        %2375 = vmatprep.mubr.f32.mxu0 0.0
        %2376 = vmatmul.mubr.f32.gmra.mxu0 %v2026
        %v2377 = vpop.f32.mrf.mxu0
        %v2378 = vadd.f32 0.0, %v2377
        %v2379 = vpop.f32.mrf.mxu0
        %2380 = vdwg.mxu0
        %2381 = vmatprep.subr.mxu0 0.0
        %2382 = vmatpush1.xpose.msra.mxu0 0.0
        %2383 = vmatprep.subr.mxu0 0.0
        %2384 = vmatpush1.xpose.msra.mxu0 0.0
        %2385 = vmatprep.subr.mxu0 0.0
        %2386 = vmatpush1.xpose.msra.mxu0 0.0
        %2387 = vmatprep.subr.mxu0 0.0
        %2388 = vmatpush1.xpose.msra.mxu0 0.0
        %2389 = vmatprep.subr.mxu0 0.0
        %2390 = vmatpush1.xpose.msra.mxu0 0.0
        %2391 = vmatprep.subr.mxu0 0.0
        %2392 = vmatpush1.xpose.msra.mxu0 0.0
        %2393 = vmatprep.subr.mxu0 0.0
        %2394 = vmatpush1.xpose.msra.mxu0 0.0
        %2395 = vmatprep.subr.mxu0 0.0
        %2396 = vmatpush1.xpose.msra.mxu0 0.0
        %2397 = vmatprep.subr.mxu0 0.0
        %2398 = vmatpush1.xpose.msra.mxu0 0.0
        %2399 = vmatprep.subr.mxu0 0.0
        %2400 = vmatpush1.xpose.msra.mxu0 0.0
        %2401 = vmatprep.subr.mxu0 0.0
        %2402 = vmatpush1.xpose.msra.mxu0 0.0
        %2403 = vmatprep.subr.mxu0 0.0
        %2404 = vmatpush1.xpose.msra.mxu0 0.0
        %2405 = vmatprep.subr.mxu0 0.0
        %2406 = vmatpush1.xpose.msra.mxu0 0.0
        %2407 = vmatprep.subr.mxu0 0.0
        %2408 = vmatpush1.xpose.msra.mxu0 0.0
        %2409 = vmatprep.subr.mxu0 0.0
        %2410 = vmatpush1.xpose.msra.mxu0 0.0
        %2411 = vmatprep.subr.mxu0 0.0
        %2412 = vmatpush1.xpose.msra.mxu0 %v1593
        %2413 = vmatprep.subr.mxu0 0.0
        %2414 = vmatpush2.xpose.msra.mxu0 0.0
        %2415 = vmatprep.subr.mxu0 0.0
        %2416 = vmatpush2.xpose.msra.mxu0 0.0
        %2417 = vmatprep.subr.mxu0 0.0
        %2418 = vmatpush2.xpose.msra.mxu0 0.0
        %2419 = vmatprep.subr.mxu0 0.0
        %2420 = vmatpush2.xpose.msra.mxu0 0.0
        %2421 = vmatprep.subr.mxu0 0.0
        %2422 = vmatpush2.xpose.msra.mxu0 0.0
        %2423 = vmatprep.subr.mxu0 0.0
        %2424 = vmatpush2.xpose.msra.mxu0 0.0
        %2425 = vmatprep.subr.mxu0 0.0
        %2426 = vmatpush2.xpose.msra.mxu0 0.0
        %2427 = vmatprep.subr.mxu0 0.0
        %2428 = vmatpush2.xpose.msra.mxu0 0.0
        %2429 = vmatprep.subr.mxu0 0.0
        %2430 = vmatpush2.xpose.msra.mxu0 0.0
        %2431 = vmatprep.subr.mxu0 0.0
        %2432 = vmatpush2.xpose.msra.mxu0 0.0
        %2433 = vmatprep.subr.mxu0 0.0
        %2434 = vmatpush2.xpose.msra.mxu0 0.0
        %2435 = vmatprep.subr.mxu0 0.0
        %2436 = vmatpush2.xpose.msra.mxu0 0.0
        %2437 = vmatprep.subr.mxu0 0.0
        %2438 = vmatpush2.xpose.msra.mxu0 0.0
        %2439 = vmatprep.subr.mxu0 0.0
        %2440 = vmatpush2.xpose.msra.mxu0 0.0
        %2441 = vmatprep.subr.mxu0 0.0
        %2442 = vmatpush2.xpose.msra.mxu0 0.0
        %2443 = vmatprep.subr.mxu0 0.0
        %2444 = vmatpush2.xpose.msra.mxu0 0.0
        %2445 = vmatprep.mubr.f32.mxu0 0.0
        %2446 = vmatmul.mubr.f32.gmra.mxu0 %v2099
        %v2447 = vpop.f32.mrf.mxu0
        %v2448 = vadd.f32 0.0, %v2447
        %v2449 = vpop.f32.mrf.mxu0
        %2450 = vdwg.mxu0
        %v2451 = vmax.f32 %v1949, %v2238
        %v2452 = vmax.f32 %v2022, %v2308
        %v2453 = vmax.f32 %v2095, %v2378
        %v2454 = vmax.f32 %v2168, %v2448
        %v2455 = vmax.f32 %v1875, %v2451
        %v2456 = vmax.f32 %v1876, %v2452
        %v2457 = vmax.f32 %v1877, %v2453
        %v2458 = vmax.f32 %v1878, %v2454
        %vm2459 = vcmask 27648
        %2460 = vst.msk [vmem:[%s176] sm:$0xf] %vm2459, %v2455
        %2461 = vst.msk [vmem:[%s176 + $0x4] sm:$0xf] %vm2459, %v2456
        %2462 = vst.msk [vmem:[%s176 + $0x8] sm:$0xf] %vm2459, %v2457
        %2463 = vst.msk [vmem:[%s176 + $0xc] sm:$0xf] %vm2459, %v2458
        %v2464 = vrot.slane %v715, 4
        %v2465 = vrot.slane %v572, 4
        %v2466 = vsel %vm638, %v2464, 0
        %v2468 = vsel %vm638, %v2465, 0
        %2470 = vmatprep.subr.mxu0 0.0
        %2471 = vmatpush1.xpose.msra.mxu0 0.0
        %2472 = vmatprep.subr.mxu0 0.0
        %2473 = vmatpush1.xpose.msra.mxu0 0.0
        %2474 = vmatprep.subr.mxu0 0.0
        %2475 = vmatpush1.xpose.msra.mxu0 0.0
        %2476 = vmatprep.subr.mxu0 0.0
        %2477 = vmatpush1.xpose.msra.mxu0 0.0
        %2478 = vmatprep.subr.mxu0 0.0
        %2479 = vmatpush1.xpose.msra.mxu0 0.0
        %2480 = vmatprep.subr.mxu0 0.0
        %2481 = vmatpush1.xpose.msra.mxu0 0.0
        %2482 = vmatprep.subr.mxu0 0.0
        %2483 = vmatpush1.xpose.msra.mxu0 0.0
        %2484 = vmatprep.subr.mxu0 0.0
        %2485 = vmatpush1.xpose.msra.mxu0 0.0
        %2486 = vmatprep.subr.mxu0 0.0
        %2487 = vmatpush1.xpose.msra.mxu0 0.0
        %2488 = vmatprep.subr.mxu0 0.0
        %2489 = vmatpush1.xpose.msra.mxu0 0.0
        %2490 = vmatprep.subr.mxu0 0.0
        %2491 = vmatpush1.xpose.msra.mxu0 0.0
        %2492 = vmatprep.subr.mxu0 0.0
        %2493 = vmatpush1.xpose.msra.mxu0 0.0
        %2494 = vmatprep.subr.mxu0 0.0
        %2495 = vmatpush1.xpose.msra.mxu0 0.0
        %2496 = vmatprep.subr.mxu0 0.0
        %2497 = vmatpush1.xpose.msra.mxu0 0.0
        %2498 = vmatprep.subr.mxu0 0.0
        %2499 = vmatpush1.xpose.msra.mxu0 0.0
        %2500 = vmatprep.subr.mxu0 0.0
        %2501 = vmatpush1.xpose.msra.mxu0 %v2468
        %2502 = vmatprep.subr.mxu0 0.0
        %2503 = vmatpush2.xpose.msra.mxu0 0.0
        %2504 = vmatprep.subr.mxu0 0.0
        %2505 = vmatpush2.xpose.msra.mxu0 0.0
        %2506 = vmatprep.subr.mxu0 0.0
        %2507 = vmatpush2.xpose.msra.mxu0 0.0
        %2508 = vmatprep.subr.mxu0 0.0
        %2509 = vmatpush2.xpose.msra.mxu0 0.0
        %2510 = vmatprep.subr.mxu0 0.0
        %2511 = vmatpush2.xpose.msra.mxu0 0.0
        %2512 = vmatprep.subr.mxu0 0.0
        %2513 = vmatpush2.xpose.msra.mxu0 0.0
        %2514 = vmatprep.subr.mxu0 0.0
        %2515 = vmatpush2.xpose.msra.mxu0 0.0
        %2516 = vmatprep.subr.mxu0 0.0
        %2517 = vmatpush2.xpose.msra.mxu0 0.0
        %2518 = vmatprep.subr.mxu0 0.0
        %2519 = vmatpush2.xpose.msra.mxu0 0.0
        %2520 = vmatprep.subr.mxu0 0.0
        %2521 = vmatpush2.xpose.msra.mxu0 0.0
        %2522 = vmatprep.subr.mxu0 0.0
        %2523 = vmatpush2.xpose.msra.mxu0 0.0
        %2524 = vmatprep.subr.mxu0 0.0
        %2525 = vmatpush2.xpose.msra.mxu0 0.0
        %2526 = vmatprep.subr.mxu0 0.0
        %2527 = vmatpush2.xpose.msra.mxu0 0.0
        %2528 = vmatprep.subr.mxu0 0.0
        %2529 = vmatpush2.xpose.msra.mxu0 0.0
        %2530 = vmatprep.subr.mxu0 0.0
        %2531 = vmatpush2.xpose.msra.mxu0 0.0
        %2532 = vmatprep.subr.mxu0 0.0
        %2533 = vmatpush2.xpose.msra.mxu0 0.0
        %2534 = vmatprep.mubr.f32.mxu0 0.0
        %2535 = vmatmul.mubr.f32.gmra.mxu0 %v2466
        %v2536 = vpop.f32.mrf.mxu0
        %v2537 = vadd.f32 0.0, %v2536
        %v2538 = vpop.f32.mrf.mxu0
        %2539 = vdwg.mxu0
        %v2540 = vrot.slane %v795, 4
        %v2541 = vsel %vm638, %v2540, 0
        %2543 = vmatprep.subr.mxu0 0.0
        %2544 = vmatpush1.xpose.msra.mxu0 0.0
        %2545 = vmatprep.subr.mxu0 0.0
        %2546 = vmatpush1.xpose.msra.mxu0 0.0
        %2547 = vmatprep.subr.mxu0 0.0
        %2548 = vmatpush1.xpose.msra.mxu0 0.0
        %2549 = vmatprep.subr.mxu0 0.0
        %2550 = vmatpush1.xpose.msra.mxu0 0.0
        %2551 = vmatprep.subr.mxu0 0.0
        %2552 = vmatpush1.xpose.msra.mxu0 0.0
        %2553 = vmatprep.subr.mxu0 0.0
        %2554 = vmatpush1.xpose.msra.mxu0 0.0
        %2555 = vmatprep.subr.mxu0 0.0
        %2556 = vmatpush1.xpose.msra.mxu0 0.0
        %2557 = vmatprep.subr.mxu0 0.0
        %2558 = vmatpush1.xpose.msra.mxu0 0.0
        %2559 = vmatprep.subr.mxu0 0.0
        %2560 = vmatpush1.xpose.msra.mxu0 0.0
        %2561 = vmatprep.subr.mxu0 0.0
        %2562 = vmatpush1.xpose.msra.mxu0 0.0
        %2563 = vmatprep.subr.mxu0 0.0
        %2564 = vmatpush1.xpose.msra.mxu0 0.0
        %2565 = vmatprep.subr.mxu0 0.0
        %2566 = vmatpush1.xpose.msra.mxu0 0.0
        %2567 = vmatprep.subr.mxu0 0.0
        %2568 = vmatpush1.xpose.msra.mxu0 0.0
        %2569 = vmatprep.subr.mxu0 0.0
        %2570 = vmatpush1.xpose.msra.mxu0 0.0
        %2571 = vmatprep.subr.mxu0 0.0
        %2572 = vmatpush1.xpose.msra.mxu0 0.0
        %2573 = vmatprep.subr.mxu0 0.0
        %2574 = vmatpush1.xpose.msra.mxu0 %v2468
        %2575 = vmatprep.subr.mxu0 0.0
        %2576 = vmatpush2.xpose.msra.mxu0 0.0
        %2577 = vmatprep.subr.mxu0 0.0
        %2578 = vmatpush2.xpose.msra.mxu0 0.0
        %2579 = vmatprep.subr.mxu0 0.0
        %2580 = vmatpush2.xpose.msra.mxu0 0.0
        %2581 = vmatprep.subr.mxu0 0.0
        %2582 = vmatpush2.xpose.msra.mxu0 0.0
        %2583 = vmatprep.subr.mxu0 0.0
        %2584 = vmatpush2.xpose.msra.mxu0 0.0
        %2585 = vmatprep.subr.mxu0 0.0
        %2586 = vmatpush2.xpose.msra.mxu0 0.0
        %2587 = vmatprep.subr.mxu0 0.0
        %2588 = vmatpush2.xpose.msra.mxu0 0.0
        %2589 = vmatprep.subr.mxu0 0.0
        %2590 = vmatpush2.xpose.msra.mxu0 0.0
        %2591 = vmatprep.subr.mxu0 0.0
        %2592 = vmatpush2.xpose.msra.mxu0 0.0
        %2593 = vmatprep.subr.mxu0 0.0
        %2594 = vmatpush2.xpose.msra.mxu0 0.0
        %2595 = vmatprep.subr.mxu0 0.0
        %2596 = vmatpush2.xpose.msra.mxu0 0.0
        %2597 = vmatprep.subr.mxu0 0.0
        %2598 = vmatpush2.xpose.msra.mxu0 0.0
        %2599 = vmatprep.subr.mxu0 0.0
        %2600 = vmatpush2.xpose.msra.mxu0 0.0
        %2601 = vmatprep.subr.mxu0 0.0
        %2602 = vmatpush2.xpose.msra.mxu0 0.0
        %2603 = vmatprep.subr.mxu0 0.0
        %2604 = vmatpush2.xpose.msra.mxu0 0.0
        %2605 = vmatprep.subr.mxu0 0.0
        %2606 = vmatpush2.xpose.msra.mxu0 0.0
        %2607 = vmatprep.mubr.f32.mxu0 0.0
        %2608 = vmatmul.mubr.f32.gmra.mxu0 %v2541
        %v2609 = vpop.f32.mrf.mxu0
        %v2610 = vadd.f32 0.0, %v2609
        %v2611 = vpop.f32.mrf.mxu0
        %2612 = vdwg.mxu0
        %v2613 = vrot.slane %v875, 4
        %v2614 = vsel %vm638, %v2613, 0
        %2616 = vmatprep.subr.mxu0 0.0
        %2617 = vmatpush1.xpose.msra.mxu0 0.0
        %2618 = vmatprep.subr.mxu0 0.0
        %2619 = vmatpush1.xpose.msra.mxu0 0.0
        %2620 = vmatprep.subr.mxu0 0.0
        %2621 = vmatpush1.xpose.msra.mxu0 0.0
        %2622 = vmatprep.subr.mxu0 0.0
        %2623 = vmatpush1.xpose.msra.mxu0 0.0
        %2624 = vmatprep.subr.mxu0 0.0
        %2625 = vmatpush1.xpose.msra.mxu0 0.0
        %2626 = vmatprep.subr.mxu0 0.0
        %2627 = vmatpush1.xpose.msra.mxu0 0.0
        %2628 = vmatprep.subr.mxu0 0.0
        %2629 = vmatpush1.xpose.msra.mxu0 0.0
        %2630 = vmatprep.subr.mxu0 0.0
        %2631 = vmatpush1.xpose.msra.mxu0 0.0
        %2632 = vmatprep.subr.mxu0 0.0
        %2633 = vmatpush1.xpose.msra.mxu0 0.0
        %2634 = vmatprep.subr.mxu0 0.0
        %2635 = vmatpush1.xpose.msra.mxu0 0.0
        %2636 = vmatprep.subr.mxu0 0.0
        %2637 = vmatpush1.xpose.msra.mxu0 0.0
        %2638 = vmatprep.subr.mxu0 0.0
        %2639 = vmatpush1.xpose.msra.mxu0 0.0
        %2640 = vmatprep.subr.mxu0 0.0
        %2641 = vmatpush1.xpose.msra.mxu0 0.0
        %2642 = vmatprep.subr.mxu0 0.0
        %2643 = vmatpush1.xpose.msra.mxu0 0.0
        %2644 = vmatprep.subr.mxu0 0.0
        %2645 = vmatpush1.xpose.msra.mxu0 0.0
        %2646 = vmatprep.subr.mxu0 0.0
        %2647 = vmatpush1.xpose.msra.mxu0 %v2468
        %2648 = vmatprep.subr.mxu0 0.0
        %2649 = vmatpush2.xpose.msra.mxu0 0.0
        %2650 = vmatprep.subr.mxu0 0.0
        %2651 = vmatpush2.xpose.msra.mxu0 0.0
        %2652 = vmatprep.subr.mxu0 0.0
        %2653 = vmatpush2.xpose.msra.mxu0 0.0
        %2654 = vmatprep.subr.mxu0 0.0
        %2655 = vmatpush2.xpose.msra.mxu0 0.0
        %2656 = vmatprep.subr.mxu0 0.0
        %2657 = vmatpush2.xpose.msra.mxu0 0.0
        %2658 = vmatprep.subr.mxu0 0.0
        %2659 = vmatpush2.xpose.msra.mxu0 0.0
        %2660 = vmatprep.subr.mxu0 0.0
        %2661 = vmatpush2.xpose.msra.mxu0 0.0
        %2662 = vmatprep.subr.mxu0 0.0
        %2663 = vmatpush2.xpose.msra.mxu0 0.0
        %2664 = vmatprep.subr.mxu0 0.0
        %2665 = vmatpush2.xpose.msra.mxu0 0.0
        %2666 = vmatprep.subr.mxu0 0.0
        %2667 = vmatpush2.xpose.msra.mxu0 0.0
        %2668 = vmatprep.subr.mxu0 0.0
        %2669 = vmatpush2.xpose.msra.mxu0 0.0
        %2670 = vmatprep.subr.mxu0 0.0
        %2671 = vmatpush2.xpose.msra.mxu0 0.0
        %2672 = vmatprep.subr.mxu0 0.0
        %2673 = vmatpush2.xpose.msra.mxu0 0.0
        %2674 = vmatprep.subr.mxu0 0.0
        %2675 = vmatpush2.xpose.msra.mxu0 0.0
        %2676 = vmatprep.subr.mxu0 0.0
        %2677 = vmatpush2.xpose.msra.mxu0 0.0
        %2678 = vmatprep.subr.mxu0 0.0
        %2679 = vmatpush2.xpose.msra.mxu0 0.0
        %2680 = vmatprep.mubr.f32.mxu0 0.0
        %2681 = vmatmul.mubr.f32.gmra.mxu0 %v2614
        %v2682 = vpop.f32.mrf.mxu0
        %v2683 = vadd.f32 0.0, %v2682
        %v2684 = vpop.f32.mrf.mxu0
        %2685 = vdwg.mxu0
        %v2686 = vrot.slane %v955, 4
        %v2687 = vsel %vm638, %v2686, 0
        %2689 = vmatprep.subr.mxu0 0.0
        %2690 = vmatpush1.xpose.msra.mxu0 0.0
        %2691 = vmatprep.subr.mxu0 0.0
        %2692 = vmatpush1.xpose.msra.mxu0 0.0
        %2693 = vmatprep.subr.mxu0 0.0
        %2694 = vmatpush1.xpose.msra.mxu0 0.0
        %2695 = vmatprep.subr.mxu0 0.0
        %2696 = vmatpush1.xpose.msra.mxu0 0.0
        %2697 = vmatprep.subr.mxu0 0.0
        %2698 = vmatpush1.xpose.msra.mxu0 0.0
        %2699 = vmatprep.subr.mxu0 0.0
        %2700 = vmatpush1.xpose.msra.mxu0 0.0
        %2701 = vmatprep.subr.mxu0 0.0
        %2702 = vmatpush1.xpose.msra.mxu0 0.0
        %2703 = vmatprep.subr.mxu0 0.0
        %2704 = vmatpush1.xpose.msra.mxu0 0.0
        %2705 = vmatprep.subr.mxu0 0.0
        %2706 = vmatpush1.xpose.msra.mxu0 0.0
        %2707 = vmatprep.subr.mxu0 0.0
        %2708 = vmatpush1.xpose.msra.mxu0 0.0
        %2709 = vmatprep.subr.mxu0 0.0
        %2710 = vmatpush1.xpose.msra.mxu0 0.0
        %2711 = vmatprep.subr.mxu0 0.0
        %2712 = vmatpush1.xpose.msra.mxu0 0.0
        %2713 = vmatprep.subr.mxu0 0.0
        %2714 = vmatpush1.xpose.msra.mxu0 0.0
        %2715 = vmatprep.subr.mxu0 0.0
        %2716 = vmatpush1.xpose.msra.mxu0 0.0
        %2717 = vmatprep.subr.mxu0 0.0
        %2718 = vmatpush1.xpose.msra.mxu0 0.0
        %2719 = vmatprep.subr.mxu0 0.0
        %2720 = vmatpush1.xpose.msra.mxu0 %v2468
        %2721 = vmatprep.subr.mxu0 0.0
        %2722 = vmatpush2.xpose.msra.mxu0 0.0
        %2723 = vmatprep.subr.mxu0 0.0
        %2724 = vmatpush2.xpose.msra.mxu0 0.0
        %2725 = vmatprep.subr.mxu0 0.0
        %2726 = vmatpush2.xpose.msra.mxu0 0.0
        %2727 = vmatprep.subr.mxu0 0.0
        %2728 = vmatpush2.xpose.msra.mxu0 0.0
        %2729 = vmatprep.subr.mxu0 0.0
        %2730 = vmatpush2.xpose.msra.mxu0 0.0
        %2731 = vmatprep.subr.mxu0 0.0
        %2732 = vmatpush2.xpose.msra.mxu0 0.0
        %2733 = vmatprep.subr.mxu0 0.0
        %2734 = vmatpush2.xpose.msra.mxu0 0.0
        %2735 = vmatprep.subr.mxu0 0.0
        %2736 = vmatpush2.xpose.msra.mxu0 0.0
        %2737 = vmatprep.subr.mxu0 0.0
        %2738 = vmatpush2.xpose.msra.mxu0 0.0
        %2739 = vmatprep.subr.mxu0 0.0
        %2740 = vmatpush2.xpose.msra.mxu0 0.0
        %2741 = vmatprep.subr.mxu0 0.0
        %2742 = vmatpush2.xpose.msra.mxu0 0.0
        %2743 = vmatprep.subr.mxu0 0.0
        %2744 = vmatpush2.xpose.msra.mxu0 0.0
        %2745 = vmatprep.subr.mxu0 0.0
        %2746 = vmatpush2.xpose.msra.mxu0 0.0
        %2747 = vmatprep.subr.mxu0 0.0
        %2748 = vmatpush2.xpose.msra.mxu0 0.0
        %2749 = vmatprep.subr.mxu0 0.0
        %2750 = vmatpush2.xpose.msra.mxu0 0.0
        %2751 = vmatprep.subr.mxu0 0.0
        %2752 = vmatpush2.xpose.msra.mxu0 0.0
        %2753 = vmatprep.mubr.f32.mxu0 0.0
        %2754 = vmatmul.mubr.f32.gmra.mxu0 %v2687
        %v2755 = vpop.f32.mrf.mxu0
        %v2756 = vadd.f32 0.0, %v2755
        %v2757 = vpop.f32.mrf.mxu0
        %2758 = vdwg.mxu0
        %v2759 = vrot.slane %v635, 4
        %v2760 = vsel %vm638, %v2759, 0
        %2762 = vmatprep.subr.mxu0 0.0
        %2763 = vmatpush1.xpose.msra.mxu0 0.0
        %2764 = vmatprep.subr.mxu0 0.0
        %2765 = vmatpush1.xpose.msra.mxu0 0.0
        %2766 = vmatprep.subr.mxu0 0.0
        %2767 = vmatpush1.xpose.msra.mxu0 0.0
        %2768 = vmatprep.subr.mxu0 0.0
        %2769 = vmatpush1.xpose.msra.mxu0 0.0
        %2770 = vmatprep.subr.mxu0 0.0
        %2771 = vmatpush1.xpose.msra.mxu0 0.0
        %2772 = vmatprep.subr.mxu0 0.0
        %2773 = vmatpush1.xpose.msra.mxu0 0.0
        %2774 = vmatprep.subr.mxu0 0.0
        %2775 = vmatpush1.xpose.msra.mxu0 0.0
        %2776 = vmatprep.subr.mxu0 0.0
        %2777 = vmatpush1.xpose.msra.mxu0 0.0
        %2778 = vmatprep.subr.mxu0 0.0
        %2779 = vmatpush1.xpose.msra.mxu0 0.0
        %2780 = vmatprep.subr.mxu0 0.0
        %2781 = vmatpush1.xpose.msra.mxu0 0.0
        %2782 = vmatprep.subr.mxu0 0.0
        %2783 = vmatpush1.xpose.msra.mxu0 0.0
        %2784 = vmatprep.subr.mxu0 0.0
        %2785 = vmatpush1.xpose.msra.mxu0 0.0
        %2786 = vmatprep.subr.mxu0 0.0
        %2787 = vmatpush1.xpose.msra.mxu0 0.0
        %2788 = vmatprep.subr.mxu0 0.0
        %2789 = vmatpush1.xpose.msra.mxu0 0.0
        %2790 = vmatprep.subr.mxu0 0.0
        %2791 = vmatpush1.xpose.msra.mxu0 0.0
        %2792 = vmatprep.subr.mxu0 0.0
        %2793 = vmatpush1.xpose.msra.mxu0 %v2760
        %2794 = vmatprep.subr.mxu0 0.0
        %2795 = vmatpush2.xpose.msra.mxu0 0.0
        %2796 = vmatprep.subr.mxu0 0.0
        %2797 = vmatpush2.xpose.msra.mxu0 0.0
        %2798 = vmatprep.subr.mxu0 0.0
        %2799 = vmatpush2.xpose.msra.mxu0 0.0
        %2800 = vmatprep.subr.mxu0 0.0
        %2801 = vmatpush2.xpose.msra.mxu0 0.0
        %2802 = vmatprep.subr.mxu0 0.0
        %2803 = vmatpush2.xpose.msra.mxu0 0.0
        %2804 = vmatprep.subr.mxu0 0.0
        %2805 = vmatpush2.xpose.msra.mxu0 0.0
        %2806 = vmatprep.subr.mxu0 0.0
        %2807 = vmatpush2.xpose.msra.mxu0 0.0
        %2808 = vmatprep.subr.mxu0 0.0
        %2809 = vmatpush2.xpose.msra.mxu0 0.0
        %2810 = vmatprep.subr.mxu0 0.0
        %2811 = vmatpush2.xpose.msra.mxu0 0.0
        %2812 = vmatprep.subr.mxu0 0.0
        %2813 = vmatpush2.xpose.msra.mxu0 0.0
        %2814 = vmatprep.subr.mxu0 0.0
        %2815 = vmatpush2.xpose.msra.mxu0 0.0
        %2816 = vmatprep.subr.mxu0 0.0
        %2817 = vmatpush2.xpose.msra.mxu0 0.0
        %2818 = vmatprep.subr.mxu0 0.0
        %2819 = vmatpush2.xpose.msra.mxu0 0.0
        %2820 = vmatprep.subr.mxu0 0.0
        %2821 = vmatpush2.xpose.msra.mxu0 0.0
        %2822 = vmatprep.subr.mxu0 0.0
        %2823 = vmatpush2.xpose.msra.mxu0 0.0
        %2824 = vmatprep.subr.mxu0 0.0
        %2825 = vmatpush2.xpose.msra.mxu0 0.0
        %2826 = vmatprep.mubr.f32.mxu0 0.0
        %2827 = vmatmul.mubr.f32.gmra.mxu0 %v2466
        %v2828 = vpop.f32.mrf.mxu0
        %v2829 = vadd.f32 0.0, %v2828
        %v2830 = vpop.f32.mrf.mxu0
        %2831 = vdwg.mxu0
        %2832 = vmatprep.subr.mxu0 0.0
        %2833 = vmatpush1.xpose.msra.mxu0 0.0
        %2834 = vmatprep.subr.mxu0 0.0
        %2835 = vmatpush1.xpose.msra.mxu0 0.0
        %2836 = vmatprep.subr.mxu0 0.0
        %2837 = vmatpush1.xpose.msra.mxu0 0.0
        %2838 = vmatprep.subr.mxu0 0.0
        %2839 = vmatpush1.xpose.msra.mxu0 0.0
        %2840 = vmatprep.subr.mxu0 0.0
        %2841 = vmatpush1.xpose.msra.mxu0 0.0
        %2842 = vmatprep.subr.mxu0 0.0
        %2843 = vmatpush1.xpose.msra.mxu0 0.0
        %2844 = vmatprep.subr.mxu0 0.0
        %2845 = vmatpush1.xpose.msra.mxu0 0.0
        %2846 = vmatprep.subr.mxu0 0.0
        %2847 = vmatpush1.xpose.msra.mxu0 0.0
        %2848 = vmatprep.subr.mxu0 0.0
        %2849 = vmatpush1.xpose.msra.mxu0 0.0
        %2850 = vmatprep.subr.mxu0 0.0
        %2851 = vmatpush1.xpose.msra.mxu0 0.0
        %2852 = vmatprep.subr.mxu0 0.0
        %2853 = vmatpush1.xpose.msra.mxu0 0.0
        %2854 = vmatprep.subr.mxu0 0.0
        %2855 = vmatpush1.xpose.msra.mxu0 0.0
        %2856 = vmatprep.subr.mxu0 0.0
        %2857 = vmatpush1.xpose.msra.mxu0 0.0
        %2858 = vmatprep.subr.mxu0 0.0
        %2859 = vmatpush1.xpose.msra.mxu0 0.0
        %2860 = vmatprep.subr.mxu0 0.0
        %2861 = vmatpush1.xpose.msra.mxu0 0.0
        %2862 = vmatprep.subr.mxu0 0.0
        %2863 = vmatpush1.xpose.msra.mxu0 %v2760
        %2864 = vmatprep.subr.mxu0 0.0
        %2865 = vmatpush2.xpose.msra.mxu0 0.0
        %2866 = vmatprep.subr.mxu0 0.0
        %2867 = vmatpush2.xpose.msra.mxu0 0.0
        %2868 = vmatprep.subr.mxu0 0.0
        %2869 = vmatpush2.xpose.msra.mxu0 0.0
        %2870 = vmatprep.subr.mxu0 0.0
        %2871 = vmatpush2.xpose.msra.mxu0 0.0
        %2872 = vmatprep.subr.mxu0 0.0
        %2873 = vmatpush2.xpose.msra.mxu0 0.0
        %2874 = vmatprep.subr.mxu0 0.0
        %2875 = vmatpush2.xpose.msra.mxu0 0.0
        %2876 = vmatprep.subr.mxu0 0.0
        %2877 = vmatpush2.xpose.msra.mxu0 0.0
        %2878 = vmatprep.subr.mxu0 0.0
        %2879 = vmatpush2.xpose.msra.mxu0 0.0
        %2880 = vmatprep.subr.mxu0 0.0
        %2881 = vmatpush2.xpose.msra.mxu0 0.0
        %2882 = vmatprep.subr.mxu0 0.0
        %2883 = vmatpush2.xpose.msra.mxu0 0.0
        %2884 = vmatprep.subr.mxu0 0.0
        %2885 = vmatpush2.xpose.msra.mxu0 0.0
        %2886 = vmatprep.subr.mxu0 0.0
        %2887 = vmatpush2.xpose.msra.mxu0 0.0
        %2888 = vmatprep.subr.mxu0 0.0
        %2889 = vmatpush2.xpose.msra.mxu0 0.0
        %2890 = vmatprep.subr.mxu0 0.0
        %2891 = vmatpush2.xpose.msra.mxu0 0.0
        %2892 = vmatprep.subr.mxu0 0.0
        %2893 = vmatpush2.xpose.msra.mxu0 0.0
        %2894 = vmatprep.subr.mxu0 0.0
        %2895 = vmatpush2.xpose.msra.mxu0 0.0
        %2896 = vmatprep.mubr.f32.mxu0 0.0
        %2897 = vmatmul.mubr.f32.gmra.mxu0 %v2541
        %v2898 = vpop.f32.mrf.mxu0
        %v2899 = vadd.f32 0.0, %v2898
        %v2900 = vpop.f32.mrf.mxu0
        %2901 = vdwg.mxu0
        %2902 = vmatprep.subr.mxu0 0.0
        %2903 = vmatpush1.xpose.msra.mxu0 0.0
        %2904 = vmatprep.subr.mxu0 0.0
        %2905 = vmatpush1.xpose.msra.mxu0 0.0
        %2906 = vmatprep.subr.mxu0 0.0
        %2907 = vmatpush1.xpose.msra.mxu0 0.0
        %2908 = vmatprep.subr.mxu0 0.0
        %2909 = vmatpush1.xpose.msra.mxu0 0.0
        %2910 = vmatprep.subr.mxu0 0.0
        %2911 = vmatpush1.xpose.msra.mxu0 0.0
        %2912 = vmatprep.subr.mxu0 0.0
        %2913 = vmatpush1.xpose.msra.mxu0 0.0
        %2914 = vmatprep.subr.mxu0 0.0
        %2915 = vmatpush1.xpose.msra.mxu0 0.0
        %2916 = vmatprep.subr.mxu0 0.0
        %2917 = vmatpush1.xpose.msra.mxu0 0.0
        %2918 = vmatprep.subr.mxu0 0.0
        %2919 = vmatpush1.xpose.msra.mxu0 0.0
        %2920 = vmatprep.subr.mxu0 0.0
        %2921 = vmatpush1.xpose.msra.mxu0 0.0
        %2922 = vmatprep.subr.mxu0 0.0
        %2923 = vmatpush1.xpose.msra.mxu0 0.0
        %2924 = vmatprep.subr.mxu0 0.0
        %2925 = vmatpush1.xpose.msra.mxu0 0.0
        %2926 = vmatprep.subr.mxu0 0.0
        %2927 = vmatpush1.xpose.msra.mxu0 0.0
        %2928 = vmatprep.subr.mxu0 0.0
        %2929 = vmatpush1.xpose.msra.mxu0 0.0
        %2930 = vmatprep.subr.mxu0 0.0
        %2931 = vmatpush1.xpose.msra.mxu0 0.0
        %2932 = vmatprep.subr.mxu0 0.0
        %2933 = vmatpush1.xpose.msra.mxu0 %v2760
        %2934 = vmatprep.subr.mxu0 0.0
        %2935 = vmatpush2.xpose.msra.mxu0 0.0
        %2936 = vmatprep.subr.mxu0 0.0
        %2937 = vmatpush2.xpose.msra.mxu0 0.0
        %2938 = vmatprep.subr.mxu0 0.0
        %2939 = vmatpush2.xpose.msra.mxu0 0.0
        %2940 = vmatprep.subr.mxu0 0.0
        %2941 = vmatpush2.xpose.msra.mxu0 0.0
        %2942 = vmatprep.subr.mxu0 0.0
        %2943 = vmatpush2.xpose.msra.mxu0 0.0
        %2944 = vmatprep.subr.mxu0 0.0
        %2945 = vmatpush2.xpose.msra.mxu0 0.0
        %2946 = vmatprep.subr.mxu0 0.0
        %2947 = vmatpush2.xpose.msra.mxu0 0.0
        %2948 = vmatprep.subr.mxu0 0.0
        %2949 = vmatpush2.xpose.msra.mxu0 0.0
        %2950 = vmatprep.subr.mxu0 0.0
        %2951 = vmatpush2.xpose.msra.mxu0 0.0
        %2952 = vmatprep.subr.mxu0 0.0
        %2953 = vmatpush2.xpose.msra.mxu0 0.0
        %2954 = vmatprep.subr.mxu0 0.0
        %2955 = vmatpush2.xpose.msra.mxu0 0.0
        %2956 = vmatprep.subr.mxu0 0.0
        %2957 = vmatpush2.xpose.msra.mxu0 0.0
        %2958 = vmatprep.subr.mxu0 0.0
        %2959 = vmatpush2.xpose.msra.mxu0 0.0
        %2960 = vmatprep.subr.mxu0 0.0
        %2961 = vmatpush2.xpose.msra.mxu0 0.0
        %2962 = vmatprep.subr.mxu0 0.0
        %2963 = vmatpush2.xpose.msra.mxu0 0.0
        %2964 = vmatprep.subr.mxu0 0.0
        %2965 = vmatpush2.xpose.msra.mxu0 0.0
        %2966 = vmatprep.mubr.f32.mxu0 0.0
        %2967 = vmatmul.mubr.f32.gmra.mxu0 %v2614
        %v2968 = vpop.f32.mrf.mxu0
        %v2969 = vadd.f32 0.0, %v2968
        %v2970 = vpop.f32.mrf.mxu0
        %2971 = vdwg.mxu0
        %2972 = vmatprep.subr.mxu0 0.0
        %2973 = vmatpush1.xpose.msra.mxu0 0.0
        %2974 = vmatprep.subr.mxu0 0.0
        %2975 = vmatpush1.xpose.msra.mxu0 0.0
        %2976 = vmatprep.subr.mxu0 0.0
        %2977 = vmatpush1.xpose.msra.mxu0 0.0
        %2978 = vmatprep.subr.mxu0 0.0
        %2979 = vmatpush1.xpose.msra.mxu0 0.0
        %2980 = vmatprep.subr.mxu0 0.0
        %2981 = vmatpush1.xpose.msra.mxu0 0.0
        %2982 = vmatprep.subr.mxu0 0.0
        %2983 = vmatpush1.xpose.msra.mxu0 0.0
        %2984 = vmatprep.subr.mxu0 0.0
        %2985 = vmatpush1.xpose.msra.mxu0 0.0
        %2986 = vmatprep.subr.mxu0 0.0
        %2987 = vmatpush1.xpose.msra.mxu0 0.0
        %2988 = vmatprep.subr.mxu0 0.0
        %2989 = vmatpush1.xpose.msra.mxu0 0.0
        %2990 = vmatprep.subr.mxu0 0.0
        %2991 = vmatpush1.xpose.msra.mxu0 0.0
        %2992 = vmatprep.subr.mxu0 0.0
        %2993 = vmatpush1.xpose.msra.mxu0 0.0
        %2994 = vmatprep.subr.mxu0 0.0
        %2995 = vmatpush1.xpose.msra.mxu0 0.0
        %2996 = vmatprep.subr.mxu0 0.0
        %2997 = vmatpush1.xpose.msra.mxu0 0.0
        %2998 = vmatprep.subr.mxu0 0.0
        %2999 = vmatpush1.xpose.msra.mxu0 0.0
        %3000 = vmatprep.subr.mxu0 0.0
        %3001 = vmatpush1.xpose.msra.mxu0 0.0
        %3002 = vmatprep.subr.mxu0 0.0
        %3003 = vmatpush1.xpose.msra.mxu0 %v2760
        %3004 = vmatprep.subr.mxu0 0.0
        %3005 = vmatpush2.xpose.msra.mxu0 0.0
        %3006 = vmatprep.subr.mxu0 0.0
        %3007 = vmatpush2.xpose.msra.mxu0 0.0
        %3008 = vmatprep.subr.mxu0 0.0
        %3009 = vmatpush2.xpose.msra.mxu0 0.0
        %3010 = vmatprep.subr.mxu0 0.0
        %3011 = vmatpush2.xpose.msra.mxu0 0.0
        %3012 = vmatprep.subr.mxu0 0.0
        %3013 = vmatpush2.xpose.msra.mxu0 0.0
        %3014 = vmatprep.subr.mxu0 0.0
        %3015 = vmatpush2.xpose.msra.mxu0 0.0
        %3016 = vmatprep.subr.mxu0 0.0
        %3017 = vmatpush2.xpose.msra.mxu0 0.0
        %3018 = vmatprep.subr.mxu0 0.0
        %3019 = vmatpush2.xpose.msra.mxu0 0.0
        %3020 = vmatprep.subr.mxu0 0.0
        %3021 = vmatpush2.xpose.msra.mxu0 0.0
        %3022 = vmatprep.subr.mxu0 0.0
        %3023 = vmatpush2.xpose.msra.mxu0 0.0
        %3024 = vmatprep.subr.mxu0 0.0
        %3025 = vmatpush2.xpose.msra.mxu0 0.0
        %3026 = vmatprep.subr.mxu0 0.0
        %3027 = vmatpush2.xpose.msra.mxu0 0.0
        %3028 = vmatprep.subr.mxu0 0.0
        %3029 = vmatpush2.xpose.msra.mxu0 0.0
        %3030 = vmatprep.subr.mxu0 0.0
        %3031 = vmatpush2.xpose.msra.mxu0 0.0
        %3032 = vmatprep.subr.mxu0 0.0
        %3033 = vmatpush2.xpose.msra.mxu0 0.0
        %3034 = vmatprep.subr.mxu0 0.0
        %3035 = vmatpush2.xpose.msra.mxu0 0.0
        %3036 = vmatprep.mubr.f32.mxu0 0.0
        %3037 = vmatmul.mubr.f32.gmra.mxu0 %v2687
        %v3038 = vpop.f32.mrf.mxu0
        %v3039 = vadd.f32 0.0, %v3038
        %v3040 = vpop.f32.mrf.mxu0
        %3041 = vdwg.mxu0
        %v3042 = vmax.f32 %v2537, %v2829
        %v3043 = vmax.f32 %v2610, %v2899
        %v3044 = vmax.f32 %v2683, %v2969
        %v3045 = vmax.f32 %v2756, %v3039
        %v3046 = vrot.slane %v1044, 4
        %v3047 = vsel %vm638, %v3046, 0
        %3049 = vmatprep.subr.mxu0 0.0
        %3050 = vmatpush1.xpose.msra.mxu0 0.0
        %3051 = vmatprep.subr.mxu0 0.0
        %3052 = vmatpush1.xpose.msra.mxu0 0.0
        %3053 = vmatprep.subr.mxu0 0.0
        %3054 = vmatpush1.xpose.msra.mxu0 0.0
        %3055 = vmatprep.subr.mxu0 0.0
        %3056 = vmatpush1.xpose.msra.mxu0 0.0
        %3057 = vmatprep.subr.mxu0 0.0
        %3058 = vmatpush1.xpose.msra.mxu0 0.0
        %3059 = vmatprep.subr.mxu0 0.0
        %3060 = vmatpush1.xpose.msra.mxu0 0.0
        %3061 = vmatprep.subr.mxu0 0.0
        %3062 = vmatpush1.xpose.msra.mxu0 0.0
        %3063 = vmatprep.subr.mxu0 0.0
        %3064 = vmatpush1.xpose.msra.mxu0 0.0
        %3065 = vmatprep.subr.mxu0 0.0
        %3066 = vmatpush1.xpose.msra.mxu0 0.0
        %3067 = vmatprep.subr.mxu0 0.0
        %3068 = vmatpush1.xpose.msra.mxu0 0.0
        %3069 = vmatprep.subr.mxu0 0.0
        %3070 = vmatpush1.xpose.msra.mxu0 0.0
        %3071 = vmatprep.subr.mxu0 0.0
        %3072 = vmatpush1.xpose.msra.mxu0 0.0
        %3073 = vmatprep.subr.mxu0 0.0
        %3074 = vmatpush1.xpose.msra.mxu0 0.0
        %3075 = vmatprep.subr.mxu0 0.0
        %3076 = vmatpush1.xpose.msra.mxu0 0.0
        %3077 = vmatprep.subr.mxu0 0.0
        %3078 = vmatpush1.xpose.msra.mxu0 0.0
        %3079 = vmatprep.subr.mxu0 0.0
        %3080 = vmatpush1.xpose.msra.mxu0 %v2468
        %3081 = vmatprep.subr.mxu0 0.0
        %3082 = vmatpush2.xpose.msra.mxu0 0.0
        %3083 = vmatprep.subr.mxu0 0.0
        %3084 = vmatpush2.xpose.msra.mxu0 0.0
        %3085 = vmatprep.subr.mxu0 0.0
        %3086 = vmatpush2.xpose.msra.mxu0 0.0
        %3087 = vmatprep.subr.mxu0 0.0
        %3088 = vmatpush2.xpose.msra.mxu0 0.0
        %3089 = vmatprep.subr.mxu0 0.0
        %3090 = vmatpush2.xpose.msra.mxu0 0.0
        %3091 = vmatprep.subr.mxu0 0.0
        %3092 = vmatpush2.xpose.msra.mxu0 0.0
        %3093 = vmatprep.subr.mxu0 0.0
        %3094 = vmatpush2.xpose.msra.mxu0 0.0
        %3095 = vmatprep.subr.mxu0 0.0
        %3096 = vmatpush2.xpose.msra.mxu0 0.0
        %3097 = vmatprep.subr.mxu0 0.0
        %3098 = vmatpush2.xpose.msra.mxu0 0.0
        %3099 = vmatprep.subr.mxu0 0.0
        %3100 = vmatpush2.xpose.msra.mxu0 0.0
        %3101 = vmatprep.subr.mxu0 0.0
        %3102 = vmatpush2.xpose.msra.mxu0 0.0
        %3103 = vmatprep.subr.mxu0 0.0
        %3104 = vmatpush2.xpose.msra.mxu0 0.0
        %3105 = vmatprep.subr.mxu0 0.0
        %3106 = vmatpush2.xpose.msra.mxu0 0.0
        %3107 = vmatprep.subr.mxu0 0.0
        %3108 = vmatpush2.xpose.msra.mxu0 0.0
        %3109 = vmatprep.subr.mxu0 0.0
        %3110 = vmatpush2.xpose.msra.mxu0 0.0
        %3111 = vmatprep.subr.mxu0 0.0
        %3112 = vmatpush2.xpose.msra.mxu0 0.0
        %3113 = vmatprep.mubr.f32.mxu0 0.0
        %3114 = vmatmul.mubr.f32.gmra.mxu0 %v3047
        %v3115 = vpop.f32.mrf.mxu0
        %v3116 = vadd.f32 0.0, %v3115
        %v3117 = vpop.f32.mrf.mxu0
        %3118 = vdwg.mxu0
        %v3119 = vrot.slane %v1124, 4
        %v3120 = vsel %vm638, %v3119, 0
        %3122 = vmatprep.subr.mxu0 0.0
        %3123 = vmatpush1.xpose.msra.mxu0 0.0
        %3124 = vmatprep.subr.mxu0 0.0
        %3125 = vmatpush1.xpose.msra.mxu0 0.0
        %3126 = vmatprep.subr.mxu0 0.0
        %3127 = vmatpush1.xpose.msra.mxu0 0.0
        %3128 = vmatprep.subr.mxu0 0.0
        %3129 = vmatpush1.xpose.msra.mxu0 0.0
        %3130 = vmatprep.subr.mxu0 0.0
        %3131 = vmatpush1.xpose.msra.mxu0 0.0
        %3132 = vmatprep.subr.mxu0 0.0
        %3133 = vmatpush1.xpose.msra.mxu0 0.0
        %3134 = vmatprep.subr.mxu0 0.0
        %3135 = vmatpush1.xpose.msra.mxu0 0.0
        %3136 = vmatprep.subr.mxu0 0.0
        %3137 = vmatpush1.xpose.msra.mxu0 0.0
        %3138 = vmatprep.subr.mxu0 0.0
        %3139 = vmatpush1.xpose.msra.mxu0 0.0
        %3140 = vmatprep.subr.mxu0 0.0
        %3141 = vmatpush1.xpose.msra.mxu0 0.0
        %3142 = vmatprep.subr.mxu0 0.0
        %3143 = vmatpush1.xpose.msra.mxu0 0.0
        %3144 = vmatprep.subr.mxu0 0.0
        %3145 = vmatpush1.xpose.msra.mxu0 0.0
        %3146 = vmatprep.subr.mxu0 0.0
        %3147 = vmatpush1.xpose.msra.mxu0 0.0
        %3148 = vmatprep.subr.mxu0 0.0
        %3149 = vmatpush1.xpose.msra.mxu0 0.0
        %3150 = vmatprep.subr.mxu0 0.0
        %3151 = vmatpush1.xpose.msra.mxu0 0.0
        %3152 = vmatprep.subr.mxu0 0.0
        %3153 = vmatpush1.xpose.msra.mxu0 %v2468
        %3154 = vmatprep.subr.mxu0 0.0
        %3155 = vmatpush2.xpose.msra.mxu0 0.0
        %3156 = vmatprep.subr.mxu0 0.0
        %3157 = vmatpush2.xpose.msra.mxu0 0.0
        %3158 = vmatprep.subr.mxu0 0.0
        %3159 = vmatpush2.xpose.msra.mxu0 0.0
        %3160 = vmatprep.subr.mxu0 0.0
        %3161 = vmatpush2.xpose.msra.mxu0 0.0
        %3162 = vmatprep.subr.mxu0 0.0
        %3163 = vmatpush2.xpose.msra.mxu0 0.0
        %3164 = vmatprep.subr.mxu0 0.0
        %3165 = vmatpush2.xpose.msra.mxu0 0.0
        %3166 = vmatprep.subr.mxu0 0.0
        %3167 = vmatpush2.xpose.msra.mxu0 0.0
        %3168 = vmatprep.subr.mxu0 0.0
        %3169 = vmatpush2.xpose.msra.mxu0 0.0
        %3170 = vmatprep.subr.mxu0 0.0
        %3171 = vmatpush2.xpose.msra.mxu0 0.0
        %3172 = vmatprep.subr.mxu0 0.0
        %3173 = vmatpush2.xpose.msra.mxu0 0.0
        %3174 = vmatprep.subr.mxu0 0.0
        %3175 = vmatpush2.xpose.msra.mxu0 0.0
        %3176 = vmatprep.subr.mxu0 0.0
        %3177 = vmatpush2.xpose.msra.mxu0 0.0
        %3178 = vmatprep.subr.mxu0 0.0
        %3179 = vmatpush2.xpose.msra.mxu0 0.0
        %3180 = vmatprep.subr.mxu0 0.0
        %3181 = vmatpush2.xpose.msra.mxu0 0.0
        %3182 = vmatprep.subr.mxu0 0.0
        %3183 = vmatpush2.xpose.msra.mxu0 0.0
        %3184 = vmatprep.subr.mxu0 0.0
        %3185 = vmatpush2.xpose.msra.mxu0 0.0
        %3186 = vmatprep.mubr.f32.mxu0 0.0
        %3187 = vmatmul.mubr.f32.gmra.mxu0 %v3120
        %v3188 = vpop.f32.mrf.mxu0
        %v3189 = vadd.f32 0.0, %v3188
        %v3190 = vpop.f32.mrf.mxu0
        %3191 = vdwg.mxu0
        %v3192 = vrot.slane %v1204, 4
        %v3193 = vsel %vm638, %v3192, 0
        %3195 = vmatprep.subr.mxu0 0.0
        %3196 = vmatpush1.xpose.msra.mxu0 0.0
        %3197 = vmatprep.subr.mxu0 0.0
        %3198 = vmatpush1.xpose.msra.mxu0 0.0
        %3199 = vmatprep.subr.mxu0 0.0
        %3200 = vmatpush1.xpose.msra.mxu0 0.0
        %3201 = vmatprep.subr.mxu0 0.0
        %3202 = vmatpush1.xpose.msra.mxu0 0.0
        %3203 = vmatprep.subr.mxu0 0.0
        %3204 = vmatpush1.xpose.msra.mxu0 0.0
        %3205 = vmatprep.subr.mxu0 0.0
        %3206 = vmatpush1.xpose.msra.mxu0 0.0
        %3207 = vmatprep.subr.mxu0 0.0
        %3208 = vmatpush1.xpose.msra.mxu0 0.0
        %3209 = vmatprep.subr.mxu0 0.0
        %3210 = vmatpush1.xpose.msra.mxu0 0.0
        %3211 = vmatprep.subr.mxu0 0.0
        %3212 = vmatpush1.xpose.msra.mxu0 0.0
        %3213 = vmatprep.subr.mxu0 0.0
        %3214 = vmatpush1.xpose.msra.mxu0 0.0
        %3215 = vmatprep.subr.mxu0 0.0
        %3216 = vmatpush1.xpose.msra.mxu0 0.0
        %3217 = vmatprep.subr.mxu0 0.0
        %3218 = vmatpush1.xpose.msra.mxu0 0.0
        %3219 = vmatprep.subr.mxu0 0.0
        %3220 = vmatpush1.xpose.msra.mxu0 0.0
        %3221 = vmatprep.subr.mxu0 0.0
        %3222 = vmatpush1.xpose.msra.mxu0 0.0
        %3223 = vmatprep.subr.mxu0 0.0
        %3224 = vmatpush1.xpose.msra.mxu0 0.0
        %3225 = vmatprep.subr.mxu0 0.0
        %3226 = vmatpush1.xpose.msra.mxu0 %v2468
        %3227 = vmatprep.subr.mxu0 0.0
        %3228 = vmatpush2.xpose.msra.mxu0 0.0
        %3229 = vmatprep.subr.mxu0 0.0
        %3230 = vmatpush2.xpose.msra.mxu0 0.0
        %3231 = vmatprep.subr.mxu0 0.0
        %3232 = vmatpush2.xpose.msra.mxu0 0.0
        %3233 = vmatprep.subr.mxu0 0.0
        %3234 = vmatpush2.xpose.msra.mxu0 0.0
        %3235 = vmatprep.subr.mxu0 0.0
        %3236 = vmatpush2.xpose.msra.mxu0 0.0
        %3237 = vmatprep.subr.mxu0 0.0
        %3238 = vmatpush2.xpose.msra.mxu0 0.0
        %3239 = vmatprep.subr.mxu0 0.0
        %3240 = vmatpush2.xpose.msra.mxu0 0.0
        %3241 = vmatprep.subr.mxu0 0.0
        %3242 = vmatpush2.xpose.msra.mxu0 0.0
        %3243 = vmatprep.subr.mxu0 0.0
        %3244 = vmatpush2.xpose.msra.mxu0 0.0
        %3245 = vmatprep.subr.mxu0 0.0
        %3246 = vmatpush2.xpose.msra.mxu0 0.0
        %3247 = vmatprep.subr.mxu0 0.0
        %3248 = vmatpush2.xpose.msra.mxu0 0.0
        %3249 = vmatprep.subr.mxu0 0.0
        %3250 = vmatpush2.xpose.msra.mxu0 0.0
        %3251 = vmatprep.subr.mxu0 0.0
        %3252 = vmatpush2.xpose.msra.mxu0 0.0
        %3253 = vmatprep.subr.mxu0 0.0
        %3254 = vmatpush2.xpose.msra.mxu0 0.0
        %3255 = vmatprep.subr.mxu0 0.0
        %3256 = vmatpush2.xpose.msra.mxu0 0.0
        %3257 = vmatprep.subr.mxu0 0.0
        %3258 = vmatpush2.xpose.msra.mxu0 0.0
        %3259 = vmatprep.mubr.f32.mxu0 0.0
        %3260 = vmatmul.mubr.f32.gmra.mxu0 %v3193
        %v3261 = vpop.f32.mrf.mxu0
        %v3262 = vadd.f32 0.0, %v3261
        %v3263 = vpop.f32.mrf.mxu0
        %3264 = vdwg.mxu0
        %v3265 = vrot.slane %v1284, 4
        %v3266 = vsel %vm638, %v3265, 0
        %3268 = vmatprep.subr.mxu0 0.0
        %3269 = vmatpush1.xpose.msra.mxu0 0.0
        %3270 = vmatprep.subr.mxu0 0.0
        %3271 = vmatpush1.xpose.msra.mxu0 0.0
        %3272 = vmatprep.subr.mxu0 0.0
        %3273 = vmatpush1.xpose.msra.mxu0 0.0
        %3274 = vmatprep.subr.mxu0 0.0
        %3275 = vmatpush1.xpose.msra.mxu0 0.0
        %3276 = vmatprep.subr.mxu0 0.0
        %3277 = vmatpush1.xpose.msra.mxu0 0.0
        %3278 = vmatprep.subr.mxu0 0.0
        %3279 = vmatpush1.xpose.msra.mxu0 0.0
        %3280 = vmatprep.subr.mxu0 0.0
        %3281 = vmatpush1.xpose.msra.mxu0 0.0
        %3282 = vmatprep.subr.mxu0 0.0
        %3283 = vmatpush1.xpose.msra.mxu0 0.0
        %3284 = vmatprep.subr.mxu0 0.0
        %3285 = vmatpush1.xpose.msra.mxu0 0.0
        %3286 = vmatprep.subr.mxu0 0.0
        %3287 = vmatpush1.xpose.msra.mxu0 0.0
        %3288 = vmatprep.subr.mxu0 0.0
        %3289 = vmatpush1.xpose.msra.mxu0 0.0
        %3290 = vmatprep.subr.mxu0 0.0
        %3291 = vmatpush1.xpose.msra.mxu0 0.0
        %3292 = vmatprep.subr.mxu0 0.0
        %3293 = vmatpush1.xpose.msra.mxu0 0.0
        %3294 = vmatprep.subr.mxu0 0.0
        %3295 = vmatpush1.xpose.msra.mxu0 0.0
        %3296 = vmatprep.subr.mxu0 0.0
        %3297 = vmatpush1.xpose.msra.mxu0 0.0
        %3298 = vmatprep.subr.mxu0 0.0
        %3299 = vmatpush1.xpose.msra.mxu0 %v2468
        %3300 = vmatprep.subr.mxu0 0.0
        %3301 = vmatpush2.xpose.msra.mxu0 0.0
        %3302 = vmatprep.subr.mxu0 0.0
        %3303 = vmatpush2.xpose.msra.mxu0 0.0
        %3304 = vmatprep.subr.mxu0 0.0
        %3305 = vmatpush2.xpose.msra.mxu0 0.0
        %3306 = vmatprep.subr.mxu0 0.0
        %3307 = vmatpush2.xpose.msra.mxu0 0.0
        %3308 = vmatprep.subr.mxu0 0.0
        %3309 = vmatpush2.xpose.msra.mxu0 0.0
        %3310 = vmatprep.subr.mxu0 0.0
        %3311 = vmatpush2.xpose.msra.mxu0 0.0
        %3312 = vmatprep.subr.mxu0 0.0
        %3313 = vmatpush2.xpose.msra.mxu0 0.0
        %3314 = vmatprep.subr.mxu0 0.0
        %3315 = vmatpush2.xpose.msra.mxu0 0.0
        %3316 = vmatprep.subr.mxu0 0.0
        %3317 = vmatpush2.xpose.msra.mxu0 0.0
        %3318 = vmatprep.subr.mxu0 0.0
        %3319 = vmatpush2.xpose.msra.mxu0 0.0
        %3320 = vmatprep.subr.mxu0 0.0
        %3321 = vmatpush2.xpose.msra.mxu0 0.0
        %3322 = vmatprep.subr.mxu0 0.0
        %3323 = vmatpush2.xpose.msra.mxu0 0.0
        %3324 = vmatprep.subr.mxu0 0.0
        %3325 = vmatpush2.xpose.msra.mxu0 0.0
        %3326 = vmatprep.subr.mxu0 0.0
        %3327 = vmatpush2.xpose.msra.mxu0 0.0
        %3328 = vmatprep.subr.mxu0 0.0
        %3329 = vmatpush2.xpose.msra.mxu0 0.0
        %3330 = vmatprep.subr.mxu0 0.0
        %3331 = vmatpush2.xpose.msra.mxu0 0.0
        %3332 = vmatprep.mubr.f32.mxu0 0.0
        %3333 = vmatmul.mubr.f32.gmra.mxu0 %v3266
        %v3334 = vpop.f32.mrf.mxu0
        %v3335 = vadd.f32 0.0, %v3334
        %v3336 = vpop.f32.mrf.mxu0
        %3337 = vdwg.mxu0
        %3338 = vmatprep.subr.mxu0 0.0
        %3339 = vmatpush1.xpose.msra.mxu0 0.0
        %3340 = vmatprep.subr.mxu0 0.0
        %3341 = vmatpush1.xpose.msra.mxu0 0.0
        %3342 = vmatprep.subr.mxu0 0.0
        %3343 = vmatpush1.xpose.msra.mxu0 0.0
        %3344 = vmatprep.subr.mxu0 0.0
        %3345 = vmatpush1.xpose.msra.mxu0 0.0
        %3346 = vmatprep.subr.mxu0 0.0
        %3347 = vmatpush1.xpose.msra.mxu0 0.0
        %3348 = vmatprep.subr.mxu0 0.0
        %3349 = vmatpush1.xpose.msra.mxu0 0.0
        %3350 = vmatprep.subr.mxu0 0.0
        %3351 = vmatpush1.xpose.msra.mxu0 0.0
        %3352 = vmatprep.subr.mxu0 0.0
        %3353 = vmatpush1.xpose.msra.mxu0 0.0
        %3354 = vmatprep.subr.mxu0 0.0
        %3355 = vmatpush1.xpose.msra.mxu0 0.0
        %3356 = vmatprep.subr.mxu0 0.0
        %3357 = vmatpush1.xpose.msra.mxu0 0.0
        %3358 = vmatprep.subr.mxu0 0.0
        %3359 = vmatpush1.xpose.msra.mxu0 0.0
        %3360 = vmatprep.subr.mxu0 0.0
        %3361 = vmatpush1.xpose.msra.mxu0 0.0
        %3362 = vmatprep.subr.mxu0 0.0
        %3363 = vmatpush1.xpose.msra.mxu0 0.0
        %3364 = vmatprep.subr.mxu0 0.0
        %3365 = vmatpush1.xpose.msra.mxu0 0.0
        %3366 = vmatprep.subr.mxu0 0.0
        %3367 = vmatpush1.xpose.msra.mxu0 0.0
        %3368 = vmatprep.subr.mxu0 0.0
        %3369 = vmatpush1.xpose.msra.mxu0 %v2760
        %3370 = vmatprep.subr.mxu0 0.0
        %3371 = vmatpush2.xpose.msra.mxu0 0.0
        %3372 = vmatprep.subr.mxu0 0.0
        %3373 = vmatpush2.xpose.msra.mxu0 0.0
        %3374 = vmatprep.subr.mxu0 0.0
        %3375 = vmatpush2.xpose.msra.mxu0 0.0
        %3376 = vmatprep.subr.mxu0 0.0
        %3377 = vmatpush2.xpose.msra.mxu0 0.0
        %3378 = vmatprep.subr.mxu0 0.0
        %3379 = vmatpush2.xpose.msra.mxu0 0.0
        %3380 = vmatprep.subr.mxu0 0.0
        %3381 = vmatpush2.xpose.msra.mxu0 0.0
        %3382 = vmatprep.subr.mxu0 0.0
        %3383 = vmatpush2.xpose.msra.mxu0 0.0
        %3384 = vmatprep.subr.mxu0 0.0
        %3385 = vmatpush2.xpose.msra.mxu0 0.0
        %3386 = vmatprep.subr.mxu0 0.0
        %3387 = vmatpush2.xpose.msra.mxu0 0.0
        %3388 = vmatprep.subr.mxu0 0.0
        %3389 = vmatpush2.xpose.msra.mxu0 0.0
        %3390 = vmatprep.subr.mxu0 0.0
        %3391 = vmatpush2.xpose.msra.mxu0 0.0
        %3392 = vmatprep.subr.mxu0 0.0
        %3393 = vmatpush2.xpose.msra.mxu0 0.0
        %3394 = vmatprep.subr.mxu0 0.0
        %3395 = vmatpush2.xpose.msra.mxu0 0.0
        %3396 = vmatprep.subr.mxu0 0.0
        %3397 = vmatpush2.xpose.msra.mxu0 0.0
        %3398 = vmatprep.subr.mxu0 0.0
        %3399 = vmatpush2.xpose.msra.mxu0 0.0
        %3400 = vmatprep.subr.mxu0 0.0
        %3401 = vmatpush2.xpose.msra.mxu0 0.0
        %3402 = vmatprep.mubr.f32.mxu0 0.0
        %3403 = vmatmul.mubr.f32.gmra.mxu0 %v3047
        %v3404 = vpop.f32.mrf.mxu0
        %v3405 = vadd.f32 0.0, %v3404
        %v3406 = vpop.f32.mrf.mxu0
        %3407 = vdwg.mxu0
        %3408 = vmatprep.subr.mxu0 0.0
        %3409 = vmatpush1.xpose.msra.mxu0 0.0
        %3410 = vmatprep.subr.mxu0 0.0
        %3411 = vmatpush1.xpose.msra.mxu0 0.0
        %3412 = vmatprep.subr.mxu0 0.0
        %3413 = vmatpush1.xpose.msra.mxu0 0.0
        %3414 = vmatprep.subr.mxu0 0.0
        %3415 = vmatpush1.xpose.msra.mxu0 0.0
        %3416 = vmatprep.subr.mxu0 0.0
        %3417 = vmatpush1.xpose.msra.mxu0 0.0
        %3418 = vmatprep.subr.mxu0 0.0
        %3419 = vmatpush1.xpose.msra.mxu0 0.0
        %3420 = vmatprep.subr.mxu0 0.0
        %3421 = vmatpush1.xpose.msra.mxu0 0.0
        %3422 = vmatprep.subr.mxu0 0.0
        %3423 = vmatpush1.xpose.msra.mxu0 0.0
        %3424 = vmatprep.subr.mxu0 0.0
        %3425 = vmatpush1.xpose.msra.mxu0 0.0
        %3426 = vmatprep.subr.mxu0 0.0
        %3427 = vmatpush1.xpose.msra.mxu0 0.0
        %3428 = vmatprep.subr.mxu0 0.0
        %3429 = vmatpush1.xpose.msra.mxu0 0.0
        %3430 = vmatprep.subr.mxu0 0.0
        %3431 = vmatpush1.xpose.msra.mxu0 0.0
        %3432 = vmatprep.subr.mxu0 0.0
        %3433 = vmatpush1.xpose.msra.mxu0 0.0
        %3434 = vmatprep.subr.mxu0 0.0
        %3435 = vmatpush1.xpose.msra.mxu0 0.0
        %3436 = vmatprep.subr.mxu0 0.0
        %3437 = vmatpush1.xpose.msra.mxu0 0.0
        %3438 = vmatprep.subr.mxu0 0.0
        %3439 = vmatpush1.xpose.msra.mxu0 %v2760
        %3440 = vmatprep.subr.mxu0 0.0
        %3441 = vmatpush2.xpose.msra.mxu0 0.0
        %3442 = vmatprep.subr.mxu0 0.0
        %3443 = vmatpush2.xpose.msra.mxu0 0.0
        %3444 = vmatprep.subr.mxu0 0.0
        %3445 = vmatpush2.xpose.msra.mxu0 0.0
        %3446 = vmatprep.subr.mxu0 0.0
        %3447 = vmatpush2.xpose.msra.mxu0 0.0
        %3448 = vmatprep.subr.mxu0 0.0
        %3449 = vmatpush2.xpose.msra.mxu0 0.0
        %3450 = vmatprep.subr.mxu0 0.0
        %3451 = vmatpush2.xpose.msra.mxu0 0.0
        %3452 = vmatprep.subr.mxu0 0.0
        %3453 = vmatpush2.xpose.msra.mxu0 0.0
        %3454 = vmatprep.subr.mxu0 0.0
        %3455 = vmatpush2.xpose.msra.mxu0 0.0
        %3456 = vmatprep.subr.mxu0 0.0
        %3457 = vmatpush2.xpose.msra.mxu0 0.0
        %3458 = vmatprep.subr.mxu0 0.0
        %3459 = vmatpush2.xpose.msra.mxu0 0.0
        %3460 = vmatprep.subr.mxu0 0.0
        %3461 = vmatpush2.xpose.msra.mxu0 0.0
        %3462 = vmatprep.subr.mxu0 0.0
        %3463 = vmatpush2.xpose.msra.mxu0 0.0
        %3464 = vmatprep.subr.mxu0 0.0
        %3465 = vmatpush2.xpose.msra.mxu0 0.0
        %3466 = vmatprep.subr.mxu0 0.0
        %3467 = vmatpush2.xpose.msra.mxu0 0.0
        %3468 = vmatprep.subr.mxu0 0.0
        %3469 = vmatpush2.xpose.msra.mxu0 0.0
        %3470 = vmatprep.subr.mxu0 0.0
        %3471 = vmatpush2.xpose.msra.mxu0 0.0
        %3472 = vmatprep.mubr.f32.mxu0 0.0
        %3473 = vmatmul.mubr.f32.gmra.mxu0 %v3120
        %v3474 = vpop.f32.mrf.mxu0
        %v3475 = vadd.f32 0.0, %v3474
        %v3476 = vpop.f32.mrf.mxu0
        %3477 = vdwg.mxu0
        %3478 = vmatprep.subr.mxu0 0.0
        %3479 = vmatpush1.xpose.msra.mxu0 0.0
        %3480 = vmatprep.subr.mxu0 0.0
        %3481 = vmatpush1.xpose.msra.mxu0 0.0
        %3482 = vmatprep.subr.mxu0 0.0
        %3483 = vmatpush1.xpose.msra.mxu0 0.0
        %3484 = vmatprep.subr.mxu0 0.0
        %3485 = vmatpush1.xpose.msra.mxu0 0.0
        %3486 = vmatprep.subr.mxu0 0.0
        %3487 = vmatpush1.xpose.msra.mxu0 0.0
        %3488 = vmatprep.subr.mxu0 0.0
        %3489 = vmatpush1.xpose.msra.mxu0 0.0
        %3490 = vmatprep.subr.mxu0 0.0
        %3491 = vmatpush1.xpose.msra.mxu0 0.0
        %3492 = vmatprep.subr.mxu0 0.0
        %3493 = vmatpush1.xpose.msra.mxu0 0.0
        %3494 = vmatprep.subr.mxu0 0.0
        %3495 = vmatpush1.xpose.msra.mxu0 0.0
        %3496 = vmatprep.subr.mxu0 0.0
        %3497 = vmatpush1.xpose.msra.mxu0 0.0
        %3498 = vmatprep.subr.mxu0 0.0
        %3499 = vmatpush1.xpose.msra.mxu0 0.0
        %3500 = vmatprep.subr.mxu0 0.0
        %3501 = vmatpush1.xpose.msra.mxu0 0.0
        %3502 = vmatprep.subr.mxu0 0.0
        %3503 = vmatpush1.xpose.msra.mxu0 0.0
        %3504 = vmatprep.subr.mxu0 0.0
        %3505 = vmatpush1.xpose.msra.mxu0 0.0
        %3506 = vmatprep.subr.mxu0 0.0
        %3507 = vmatpush1.xpose.msra.mxu0 0.0
        %3508 = vmatprep.subr.mxu0 0.0
        %3509 = vmatpush1.xpose.msra.mxu0 %v2760
        %3510 = vmatprep.subr.mxu0 0.0
        %3511 = vmatpush2.xpose.msra.mxu0 0.0
        %3512 = vmatprep.subr.mxu0 0.0
        %3513 = vmatpush2.xpose.msra.mxu0 0.0
        %3514 = vmatprep.subr.mxu0 0.0
        %3515 = vmatpush2.xpose.msra.mxu0 0.0
        %3516 = vmatprep.subr.mxu0 0.0
        %3517 = vmatpush2.xpose.msra.mxu0 0.0
        %3518 = vmatprep.subr.mxu0 0.0
        %3519 = vmatpush2.xpose.msra.mxu0 0.0
        %3520 = vmatprep.subr.mxu0 0.0
        %3521 = vmatpush2.xpose.msra.mxu0 0.0
        %3522 = vmatprep.subr.mxu0 0.0
        %3523 = vmatpush2.xpose.msra.mxu0 0.0
        %3524 = vmatprep.subr.mxu0 0.0
        %3525 = vmatpush2.xpose.msra.mxu0 0.0
        %3526 = vmatprep.subr.mxu0 0.0
        %3527 = vmatpush2.xpose.msra.mxu0 0.0
        %3528 = vmatprep.subr.mxu0 0.0
        %3529 = vmatpush2.xpose.msra.mxu0 0.0
        %3530 = vmatprep.subr.mxu0 0.0
        %3531 = vmatpush2.xpose.msra.mxu0 0.0
        %3532 = vmatprep.subr.mxu0 0.0
        %3533 = vmatpush2.xpose.msra.mxu0 0.0
        %3534 = vmatprep.subr.mxu0 0.0
        %3535 = vmatpush2.xpose.msra.mxu0 0.0
        %3536 = vmatprep.subr.mxu0 0.0
        %3537 = vmatpush2.xpose.msra.mxu0 0.0
        %3538 = vmatprep.subr.mxu0 0.0
        %3539 = vmatpush2.xpose.msra.mxu0 0.0
        %3540 = vmatprep.subr.mxu0 0.0
        %3541 = vmatpush2.xpose.msra.mxu0 0.0
        %3542 = vmatprep.mubr.f32.mxu0 0.0
        %3543 = vmatmul.mubr.f32.gmra.mxu0 %v3193
        %v3544 = vpop.f32.mrf.mxu0
        %v3545 = vadd.f32 0.0, %v3544
        %v3546 = vpop.f32.mrf.mxu0
        %3547 = vdwg.mxu0
        %3548 = vmatprep.subr.mxu0 0.0
        %3549 = vmatpush1.xpose.msra.mxu0 0.0
        %3550 = vmatprep.subr.mxu0 0.0
        %3551 = vmatpush1.xpose.msra.mxu0 0.0
        %3552 = vmatprep.subr.mxu0 0.0
        %3553 = vmatpush1.xpose.msra.mxu0 0.0
        %3554 = vmatprep.subr.mxu0 0.0
        %3555 = vmatpush1.xpose.msra.mxu0 0.0
        %3556 = vmatprep.subr.mxu0 0.0
        %3557 = vmatpush1.xpose.msra.mxu0 0.0
        %3558 = vmatprep.subr.mxu0 0.0
        %3559 = vmatpush1.xpose.msra.mxu0 0.0
        %3560 = vmatprep.subr.mxu0 0.0
        %3561 = vmatpush1.xpose.msra.mxu0 0.0
        %3562 = vmatprep.subr.mxu0 0.0
        %3563 = vmatpush1.xpose.msra.mxu0 0.0
        %3564 = vmatprep.subr.mxu0 0.0
        %3565 = vmatpush1.xpose.msra.mxu0 0.0
        %3566 = vmatprep.subr.mxu0 0.0
        %3567 = vmatpush1.xpose.msra.mxu0 0.0
        %3568 = vmatprep.subr.mxu0 0.0
        %3569 = vmatpush1.xpose.msra.mxu0 0.0
        %3570 = vmatprep.subr.mxu0 0.0
        %3571 = vmatpush1.xpose.msra.mxu0 0.0
        %3572 = vmatprep.subr.mxu0 0.0
        %3573 = vmatpush1.xpose.msra.mxu0 0.0
        %3574 = vmatprep.subr.mxu0 0.0
        %3575 = vmatpush1.xpose.msra.mxu0 0.0
        %3576 = vmatprep.subr.mxu0 0.0
        %3577 = vmatpush1.xpose.msra.mxu0 0.0
        %3578 = vmatprep.subr.mxu0 0.0
        %3579 = vmatpush1.xpose.msra.mxu0 %v2760
        %3580 = vmatprep.subr.mxu0 0.0
        %3581 = vmatpush2.xpose.msra.mxu0 0.0
        %3582 = vmatprep.subr.mxu0 0.0
        %3583 = vmatpush2.xpose.msra.mxu0 0.0
        %3584 = vmatprep.subr.mxu0 0.0
        %3585 = vmatpush2.xpose.msra.mxu0 0.0
        %3586 = vmatprep.subr.mxu0 0.0
        %3587 = vmatpush2.xpose.msra.mxu0 0.0
        %3588 = vmatprep.subr.mxu0 0.0
        %3589 = vmatpush2.xpose.msra.mxu0 0.0
        %3590 = vmatprep.subr.mxu0 0.0
        %3591 = vmatpush2.xpose.msra.mxu0 0.0
        %3592 = vmatprep.subr.mxu0 0.0
        %3593 = vmatpush2.xpose.msra.mxu0 0.0
        %3594 = vmatprep.subr.mxu0 0.0
        %3595 = vmatpush2.xpose.msra.mxu0 0.0
        %3596 = vmatprep.subr.mxu0 0.0
        %3597 = vmatpush2.xpose.msra.mxu0 0.0
        %3598 = vmatprep.subr.mxu0 0.0
        %3599 = vmatpush2.xpose.msra.mxu0 0.0
        %3600 = vmatprep.subr.mxu0 0.0
        %3601 = vmatpush2.xpose.msra.mxu0 0.0
        %3602 = vmatprep.subr.mxu0 0.0
        %3603 = vmatpush2.xpose.msra.mxu0 0.0
        %3604 = vmatprep.subr.mxu0 0.0
        %3605 = vmatpush2.xpose.msra.mxu0 0.0
        %3606 = vmatprep.subr.mxu0 0.0
        %3607 = vmatpush2.xpose.msra.mxu0 0.0
        %3608 = vmatprep.subr.mxu0 0.0
        %3609 = vmatpush2.xpose.msra.mxu0 0.0
        %3610 = vmatprep.subr.mxu0 0.0
        %3611 = vmatpush2.xpose.msra.mxu0 0.0
        %3612 = vmatprep.mubr.f32.mxu0 0.0
        %3613 = vmatmul.mubr.f32.gmra.mxu0 %v3266
        %v3614 = vpop.f32.mrf.mxu0
        %v3615 = vadd.f32 0.0, %v3614
        %v3616 = vpop.f32.mrf.mxu0
        %3617 = vdwg.mxu0
        %v3618 = vmax.f32 %v3116, %v3405
        %v3619 = vmax.f32 %v3189, %v3475
        %v3620 = vmax.f32 %v3262, %v3545
        %v3621 = vmax.f32 %v3335, %v3615
        %v3622 = vmax.f32 %v3042, %v3618
        %v3623 = vmax.f32 %v3043, %v3619
        %v3624 = vmax.f32 %v3044, %v3620
        %v3625 = vmax.f32 %v3045, %v3621
        %3630 = vrot.lane.b32.xlu0 %v3622, 4
        %v3631 = vpop.permute.xlu0 %3630
        %3632 = vrot.lane.b32.xlu0 %v3623, 4
        %v3633 = vpop.permute.xlu0 %3632
        %3634 = vrot.lane.b32.xlu0 %v3624, 4
        %v3635 = vpop.permute.xlu0 %3634
        %3636 = vrot.lane.b32.xlu0 %v3625, 4
        %v3637 = vpop.permute.xlu0 %3636
        %vm3642 = vcmask 60448
        %3643 = vst.msk [vmem:[%s176] sm:$0xf] %vm3642, %v3631
        %3644 = vst.msk [vmem:[%s176 + $0x4] sm:$0xf] %vm3642, %v3633
        %3645 = vst.msk [vmem:[%s176 + $0x8] sm:$0xf] %vm3642, %v3635
        %3646 = vst.msk [vmem:[%s176 + $0xc] sm:$0xf] %vm3642, %v3637
        %v3648 = vsel %vm638, %v720, 0
        %v3651 = vsel %vm638, %v573, 0
        %3653 = vmatprep.subr.mxu0 0.0
        %3654 = vmatpush1.xpose.msra.mxu0 0.0
        %3655 = vmatprep.subr.mxu0 0.0
        %3656 = vmatpush1.xpose.msra.mxu0 0.0
        %3657 = vmatprep.subr.mxu0 0.0
        %3658 = vmatpush1.xpose.msra.mxu0 0.0
        %3659 = vmatprep.subr.mxu0 0.0
        %3660 = vmatpush1.xpose.msra.mxu0 0.0
        %3661 = vmatprep.subr.mxu0 0.0
        %3662 = vmatpush1.xpose.msra.mxu0 0.0
        %3663 = vmatprep.subr.mxu0 0.0
        %3664 = vmatpush1.xpose.msra.mxu0 0.0
        %3665 = vmatprep.subr.mxu0 0.0
        %3666 = vmatpush1.xpose.msra.mxu0 0.0
        %3667 = vmatprep.subr.mxu0 0.0
        %3668 = vmatpush1.xpose.msra.mxu0 0.0
        %3669 = vmatprep.subr.mxu0 0.0
        %3670 = vmatpush1.xpose.msra.mxu0 0.0
        %3671 = vmatprep.subr.mxu0 0.0
        %3672 = vmatpush1.xpose.msra.mxu0 0.0
        %3673 = vmatprep.subr.mxu0 0.0
        %3674 = vmatpush1.xpose.msra.mxu0 0.0
        %3675 = vmatprep.subr.mxu0 0.0
        %3676 = vmatpush1.xpose.msra.mxu0 0.0
        %3677 = vmatprep.subr.mxu0 0.0
        %3678 = vmatpush1.xpose.msra.mxu0 0.0
        %3679 = vmatprep.subr.mxu0 0.0
        %3680 = vmatpush1.xpose.msra.mxu0 0.0
        %3681 = vmatprep.subr.mxu0 0.0
        %3682 = vmatpush1.xpose.msra.mxu0 0.0
        %3683 = vmatprep.subr.mxu0 0.0
        %3684 = vmatpush1.xpose.msra.mxu0 %v3651
        %3685 = vmatprep.subr.mxu0 0.0
        %3686 = vmatpush2.xpose.msra.mxu0 0.0
        %3687 = vmatprep.subr.mxu0 0.0
        %3688 = vmatpush2.xpose.msra.mxu0 0.0
        %3689 = vmatprep.subr.mxu0 0.0
        %3690 = vmatpush2.xpose.msra.mxu0 0.0
        %3691 = vmatprep.subr.mxu0 0.0
        %3692 = vmatpush2.xpose.msra.mxu0 0.0
        %3693 = vmatprep.subr.mxu0 0.0
        %3694 = vmatpush2.xpose.msra.mxu0 0.0
        %3695 = vmatprep.subr.mxu0 0.0
        %3696 = vmatpush2.xpose.msra.mxu0 0.0
        %3697 = vmatprep.subr.mxu0 0.0
        %3698 = vmatpush2.xpose.msra.mxu0 0.0
        %3699 = vmatprep.subr.mxu0 0.0
        %3700 = vmatpush2.xpose.msra.mxu0 0.0
        %3701 = vmatprep.subr.mxu0 0.0
        %3702 = vmatpush2.xpose.msra.mxu0 0.0
        %3703 = vmatprep.subr.mxu0 0.0
        %3704 = vmatpush2.xpose.msra.mxu0 0.0
        %3705 = vmatprep.subr.mxu0 0.0
        %3706 = vmatpush2.xpose.msra.mxu0 0.0
        %3707 = vmatprep.subr.mxu0 0.0
        %3708 = vmatpush2.xpose.msra.mxu0 0.0
        %3709 = vmatprep.subr.mxu0 0.0
        %3710 = vmatpush2.xpose.msra.mxu0 0.0
        %3711 = vmatprep.subr.mxu0 0.0
        %3712 = vmatpush2.xpose.msra.mxu0 0.0
        %3713 = vmatprep.subr.mxu0 0.0
        %3714 = vmatpush2.xpose.msra.mxu0 0.0
        %3715 = vmatprep.subr.mxu0 0.0
        %3716 = vmatpush2.xpose.msra.mxu0 0.0
        %3717 = vmatprep.mubr.f32.mxu0 0.0
        %3718 = vmatmul.mubr.f32.gmra.mxu0 %v3648
        %v3719 = vpop.f32.mrf.mxu0
        %v3720 = vadd.f32 0.0, %v3719
        %v3721 = vpop.f32.mrf.mxu0
        %3722 = vdwg.mxu0
        %v3724 = vsel %vm638, %v800, 0
        %3726 = vmatprep.subr.mxu0 0.0
        %3727 = vmatpush1.xpose.msra.mxu0 0.0
        %3728 = vmatprep.subr.mxu0 0.0
        %3729 = vmatpush1.xpose.msra.mxu0 0.0
        %3730 = vmatprep.subr.mxu0 0.0
        %3731 = vmatpush1.xpose.msra.mxu0 0.0
        %3732 = vmatprep.subr.mxu0 0.0
        %3733 = vmatpush1.xpose.msra.mxu0 0.0
        %3734 = vmatprep.subr.mxu0 0.0
        %3735 = vmatpush1.xpose.msra.mxu0 0.0
        %3736 = vmatprep.subr.mxu0 0.0
        %3737 = vmatpush1.xpose.msra.mxu0 0.0
        %3738 = vmatprep.subr.mxu0 0.0
        %3739 = vmatpush1.xpose.msra.mxu0 0.0
        %3740 = vmatprep.subr.mxu0 0.0
        %3741 = vmatpush1.xpose.msra.mxu0 0.0
        %3742 = vmatprep.subr.mxu0 0.0
        %3743 = vmatpush1.xpose.msra.mxu0 0.0
        %3744 = vmatprep.subr.mxu0 0.0
        %3745 = vmatpush1.xpose.msra.mxu0 0.0
        %3746 = vmatprep.subr.mxu0 0.0
        %3747 = vmatpush1.xpose.msra.mxu0 0.0
        %3748 = vmatprep.subr.mxu0 0.0
        %3749 = vmatpush1.xpose.msra.mxu0 0.0
        %3750 = vmatprep.subr.mxu0 0.0
        %3751 = vmatpush1.xpose.msra.mxu0 0.0
        %3752 = vmatprep.subr.mxu0 0.0
        %3753 = vmatpush1.xpose.msra.mxu0 0.0
        %3754 = vmatprep.subr.mxu0 0.0
        %3755 = vmatpush1.xpose.msra.mxu0 0.0
        %3756 = vmatprep.subr.mxu0 0.0
        %3757 = vmatpush1.xpose.msra.mxu0 %v3651
        %3758 = vmatprep.subr.mxu0 0.0
        %3759 = vmatpush2.xpose.msra.mxu0 0.0
        %3760 = vmatprep.subr.mxu0 0.0
        %3761 = vmatpush2.xpose.msra.mxu0 0.0
        %3762 = vmatprep.subr.mxu0 0.0
        %3763 = vmatpush2.xpose.msra.mxu0 0.0
        %3764 = vmatprep.subr.mxu0 0.0
        %3765 = vmatpush2.xpose.msra.mxu0 0.0
        %3766 = vmatprep.subr.mxu0 0.0
        %3767 = vmatpush2.xpose.msra.mxu0 0.0
        %3768 = vmatprep.subr.mxu0 0.0
        %3769 = vmatpush2.xpose.msra.mxu0 0.0
        %3770 = vmatprep.subr.mxu0 0.0
        %3771 = vmatpush2.xpose.msra.mxu0 0.0
        %3772 = vmatprep.subr.mxu0 0.0
        %3773 = vmatpush2.xpose.msra.mxu0 0.0
        %3774 = vmatprep.subr.mxu0 0.0
        %3775 = vmatpush2.xpose.msra.mxu0 0.0
        %3776 = vmatprep.subr.mxu0 0.0
        %3777 = vmatpush2.xpose.msra.mxu0 0.0
        %3778 = vmatprep.subr.mxu0 0.0
        %3779 = vmatpush2.xpose.msra.mxu0 0.0
        %3780 = vmatprep.subr.mxu0 0.0
        %3781 = vmatpush2.xpose.msra.mxu0 0.0
        %3782 = vmatprep.subr.mxu0 0.0
        %3783 = vmatpush2.xpose.msra.mxu0 0.0
        %3784 = vmatprep.subr.mxu0 0.0
        %3785 = vmatpush2.xpose.msra.mxu0 0.0
        %3786 = vmatprep.subr.mxu0 0.0
        %3787 = vmatpush2.xpose.msra.mxu0 0.0
        %3788 = vmatprep.subr.mxu0 0.0
        %3789 = vmatpush2.xpose.msra.mxu0 0.0
        %3790 = vmatprep.mubr.f32.mxu0 0.0
        %3791 = vmatmul.mubr.f32.gmra.mxu0 %v3724
        %v3792 = vpop.f32.mrf.mxu0
        %v3793 = vadd.f32 0.0, %v3792
        %v3794 = vpop.f32.mrf.mxu0
        %3795 = vdwg.mxu0
        %v3797 = vsel %vm638, %v880, 0
        %3799 = vmatprep.subr.mxu0 0.0
        %3800 = vmatpush1.xpose.msra.mxu0 0.0
        %3801 = vmatprep.subr.mxu0 0.0
        %3802 = vmatpush1.xpose.msra.mxu0 0.0
        %3803 = vmatprep.subr.mxu0 0.0
        %3804 = vmatpush1.xpose.msra.mxu0 0.0
        %3805 = vmatprep.subr.mxu0 0.0
        %3806 = vmatpush1.xpose.msra.mxu0 0.0
        %3807 = vmatprep.subr.mxu0 0.0
        %3808 = vmatpush1.xpose.msra.mxu0 0.0
        %3809 = vmatprep.subr.mxu0 0.0
        %3810 = vmatpush1.xpose.msra.mxu0 0.0
        %3811 = vmatprep.subr.mxu0 0.0
        %3812 = vmatpush1.xpose.msra.mxu0 0.0
        %3813 = vmatprep.subr.mxu0 0.0
        %3814 = vmatpush1.xpose.msra.mxu0 0.0
        %3815 = vmatprep.subr.mxu0 0.0
        %3816 = vmatpush1.xpose.msra.mxu0 0.0
        %3817 = vmatprep.subr.mxu0 0.0
        %3818 = vmatpush1.xpose.msra.mxu0 0.0
        %3819 = vmatprep.subr.mxu0 0.0
        %3820 = vmatpush1.xpose.msra.mxu0 0.0
        %3821 = vmatprep.subr.mxu0 0.0
        %3822 = vmatpush1.xpose.msra.mxu0 0.0
        %3823 = vmatprep.subr.mxu0 0.0
        %3824 = vmatpush1.xpose.msra.mxu0 0.0
        %3825 = vmatprep.subr.mxu0 0.0
        %3826 = vmatpush1.xpose.msra.mxu0 0.0
        %3827 = vmatprep.subr.mxu0 0.0
        %3828 = vmatpush1.xpose.msra.mxu0 0.0
        %3829 = vmatprep.subr.mxu0 0.0
        %3830 = vmatpush1.xpose.msra.mxu0 %v3651
        %3831 = vmatprep.subr.mxu0 0.0
        %3832 = vmatpush2.xpose.msra.mxu0 0.0
        %3833 = vmatprep.subr.mxu0 0.0
        %3834 = vmatpush2.xpose.msra.mxu0 0.0
        %3835 = vmatprep.subr.mxu0 0.0
        %3836 = vmatpush2.xpose.msra.mxu0 0.0
        %3837 = vmatprep.subr.mxu0 0.0
        %3838 = vmatpush2.xpose.msra.mxu0 0.0
        %3839 = vmatprep.subr.mxu0 0.0
        %3840 = vmatpush2.xpose.msra.mxu0 0.0
        %3841 = vmatprep.subr.mxu0 0.0
        %3842 = vmatpush2.xpose.msra.mxu0 0.0
        %3843 = vmatprep.subr.mxu0 0.0
        %3844 = vmatpush2.xpose.msra.mxu0 0.0
        %3845 = vmatprep.subr.mxu0 0.0
        %3846 = vmatpush2.xpose.msra.mxu0 0.0
        %3847 = vmatprep.subr.mxu0 0.0
        %3848 = vmatpush2.xpose.msra.mxu0 0.0
        %3849 = vmatprep.subr.mxu0 0.0
        %3850 = vmatpush2.xpose.msra.mxu0 0.0
        %3851 = vmatprep.subr.mxu0 0.0
        %3852 = vmatpush2.xpose.msra.mxu0 0.0
        %3853 = vmatprep.subr.mxu0 0.0
        %3854 = vmatpush2.xpose.msra.mxu0 0.0
        %3855 = vmatprep.subr.mxu0 0.0
        %3856 = vmatpush2.xpose.msra.mxu0 0.0
        %3857 = vmatprep.subr.mxu0 0.0
        %3858 = vmatpush2.xpose.msra.mxu0 0.0
        %3859 = vmatprep.subr.mxu0 0.0
        %3860 = vmatpush2.xpose.msra.mxu0 0.0
        %3861 = vmatprep.subr.mxu0 0.0
        %3862 = vmatpush2.xpose.msra.mxu0 0.0
        %3863 = vmatprep.mubr.f32.mxu0 0.0
        %3864 = vmatmul.mubr.f32.gmra.mxu0 %v3797
        %v3865 = vpop.f32.mrf.mxu0
        %v3866 = vadd.f32 0.0, %v3865
        %v3867 = vpop.f32.mrf.mxu0
        %3868 = vdwg.mxu0
        %v3870 = vsel %vm638, %v960, 0
        %3872 = vmatprep.subr.mxu0 0.0
        %3873 = vmatpush1.xpose.msra.mxu0 0.0
        %3874 = vmatprep.subr.mxu0 0.0
        %3875 = vmatpush1.xpose.msra.mxu0 0.0
        %3876 = vmatprep.subr.mxu0 0.0
        %3877 = vmatpush1.xpose.msra.mxu0 0.0
        %3878 = vmatprep.subr.mxu0 0.0
        %3879 = vmatpush1.xpose.msra.mxu0 0.0
        %3880 = vmatprep.subr.mxu0 0.0
        %3881 = vmatpush1.xpose.msra.mxu0 0.0
        %3882 = vmatprep.subr.mxu0 0.0
        %3883 = vmatpush1.xpose.msra.mxu0 0.0
        %3884 = vmatprep.subr.mxu0 0.0
        %3885 = vmatpush1.xpose.msra.mxu0 0.0
        %3886 = vmatprep.subr.mxu0 0.0
        %3887 = vmatpush1.xpose.msra.mxu0 0.0
        %3888 = vmatprep.subr.mxu0 0.0
        %3889 = vmatpush1.xpose.msra.mxu0 0.0
        %3890 = vmatprep.subr.mxu0 0.0
        %3891 = vmatpush1.xpose.msra.mxu0 0.0
        %3892 = vmatprep.subr.mxu0 0.0
        %3893 = vmatpush1.xpose.msra.mxu0 0.0
        %3894 = vmatprep.subr.mxu0 0.0
        %3895 = vmatpush1.xpose.msra.mxu0 0.0
        %3896 = vmatprep.subr.mxu0 0.0
        %3897 = vmatpush1.xpose.msra.mxu0 0.0
        %3898 = vmatprep.subr.mxu0 0.0
        %3899 = vmatpush1.xpose.msra.mxu0 0.0
        %3900 = vmatprep.subr.mxu0 0.0
        %3901 = vmatpush1.xpose.msra.mxu0 0.0
        %3902 = vmatprep.subr.mxu0 0.0
        %3903 = vmatpush1.xpose.msra.mxu0 %v3651
        %3904 = vmatprep.subr.mxu0 0.0
        %3905 = vmatpush2.xpose.msra.mxu0 0.0
        %3906 = vmatprep.subr.mxu0 0.0
        %3907 = vmatpush2.xpose.msra.mxu0 0.0
        %3908 = vmatprep.subr.mxu0 0.0
        %3909 = vmatpush2.xpose.msra.mxu0 0.0
        %3910 = vmatprep.subr.mxu0 0.0
        %3911 = vmatpush2.xpose.msra.mxu0 0.0
        %3912 = vmatprep.subr.mxu0 0.0
        %3913 = vmatpush2.xpose.msra.mxu0 0.0
        %3914 = vmatprep.subr.mxu0 0.0
        %3915 = vmatpush2.xpose.msra.mxu0 0.0
        %3916 = vmatprep.subr.mxu0 0.0
        %3917 = vmatpush2.xpose.msra.mxu0 0.0
        %3918 = vmatprep.subr.mxu0 0.0
        %3919 = vmatpush2.xpose.msra.mxu0 0.0
        %3920 = vmatprep.subr.mxu0 0.0
        %3921 = vmatpush2.xpose.msra.mxu0 0.0
        %3922 = vmatprep.subr.mxu0 0.0
        %3923 = vmatpush2.xpose.msra.mxu0 0.0
        %3924 = vmatprep.subr.mxu0 0.0
        %3925 = vmatpush2.xpose.msra.mxu0 0.0
        %3926 = vmatprep.subr.mxu0 0.0
        %3927 = vmatpush2.xpose.msra.mxu0 0.0
        %3928 = vmatprep.subr.mxu0 0.0
        %3929 = vmatpush2.xpose.msra.mxu0 0.0
        %3930 = vmatprep.subr.mxu0 0.0
        %3931 = vmatpush2.xpose.msra.mxu0 0.0
        %3932 = vmatprep.subr.mxu0 0.0
        %3933 = vmatpush2.xpose.msra.mxu0 0.0
        %3934 = vmatprep.subr.mxu0 0.0
        %3935 = vmatpush2.xpose.msra.mxu0 0.0
        %3936 = vmatprep.mubr.f32.mxu0 0.0
        %3937 = vmatmul.mubr.f32.gmra.mxu0 %v3870
        %v3938 = vpop.f32.mrf.mxu0
        %v3939 = vadd.f32 0.0, %v3938
        %v3940 = vpop.f32.mrf.mxu0
        %3941 = vdwg.mxu0
        %v3943 = vsel %vm638, %v636, 0
        %3945 = vmatprep.subr.mxu0 0.0
        %3946 = vmatpush1.xpose.msra.mxu0 0.0
        %3947 = vmatprep.subr.mxu0 0.0
        %3948 = vmatpush1.xpose.msra.mxu0 0.0
        %3949 = vmatprep.subr.mxu0 0.0
        %3950 = vmatpush1.xpose.msra.mxu0 0.0
        %3951 = vmatprep.subr.mxu0 0.0
        %3952 = vmatpush1.xpose.msra.mxu0 0.0
        %3953 = vmatprep.subr.mxu0 0.0
        %3954 = vmatpush1.xpose.msra.mxu0 0.0
        %3955 = vmatprep.subr.mxu0 0.0
        %3956 = vmatpush1.xpose.msra.mxu0 0.0
        %3957 = vmatprep.subr.mxu0 0.0
        %3958 = vmatpush1.xpose.msra.mxu0 0.0
        %3959 = vmatprep.subr.mxu0 0.0
        %3960 = vmatpush1.xpose.msra.mxu0 0.0
        %3961 = vmatprep.subr.mxu0 0.0
        %3962 = vmatpush1.xpose.msra.mxu0 0.0
        %3963 = vmatprep.subr.mxu0 0.0
        %3964 = vmatpush1.xpose.msra.mxu0 0.0
        %3965 = vmatprep.subr.mxu0 0.0
        %3966 = vmatpush1.xpose.msra.mxu0 0.0
        %3967 = vmatprep.subr.mxu0 0.0
        %3968 = vmatpush1.xpose.msra.mxu0 0.0
        %3969 = vmatprep.subr.mxu0 0.0
        %3970 = vmatpush1.xpose.msra.mxu0 0.0
        %3971 = vmatprep.subr.mxu0 0.0
        %3972 = vmatpush1.xpose.msra.mxu0 0.0
        %3973 = vmatprep.subr.mxu0 0.0
        %3974 = vmatpush1.xpose.msra.mxu0 0.0
        %3975 = vmatprep.subr.mxu0 0.0
        %3976 = vmatpush1.xpose.msra.mxu0 %v3943
        %3977 = vmatprep.subr.mxu0 0.0
        %3978 = vmatpush2.xpose.msra.mxu0 0.0
        %3979 = vmatprep.subr.mxu0 0.0
        %3980 = vmatpush2.xpose.msra.mxu0 0.0
        %3981 = vmatprep.subr.mxu0 0.0
        %3982 = vmatpush2.xpose.msra.mxu0 0.0
        %3983 = vmatprep.subr.mxu0 0.0
        %3984 = vmatpush2.xpose.msra.mxu0 0.0
        %3985 = vmatprep.subr.mxu0 0.0
        %3986 = vmatpush2.xpose.msra.mxu0 0.0
        %3987 = vmatprep.subr.mxu0 0.0
        %3988 = vmatpush2.xpose.msra.mxu0 0.0
        %3989 = vmatprep.subr.mxu0 0.0
        %3990 = vmatpush2.xpose.msra.mxu0 0.0
        %3991 = vmatprep.subr.mxu0 0.0
        %3992 = vmatpush2.xpose.msra.mxu0 0.0
        %3993 = vmatprep.subr.mxu0 0.0
        %3994 = vmatpush2.xpose.msra.mxu0 0.0
        %3995 = vmatprep.subr.mxu0 0.0
        %3996 = vmatpush2.xpose.msra.mxu0 0.0
        %3997 = vmatprep.subr.mxu0 0.0
        %3998 = vmatpush2.xpose.msra.mxu0 0.0
        %3999 = vmatprep.subr.mxu0 0.0
        %4000 = vmatpush2.xpose.msra.mxu0 0.0
        %4001 = vmatprep.subr.mxu0 0.0
        %4002 = vmatpush2.xpose.msra.mxu0 0.0
        %4003 = vmatprep.subr.mxu0 0.0
        %4004 = vmatpush2.xpose.msra.mxu0 0.0
        %4005 = vmatprep.subr.mxu0 0.0
        %4006 = vmatpush2.xpose.msra.mxu0 0.0
        %4007 = vmatprep.subr.mxu0 0.0
        %4008 = vmatpush2.xpose.msra.mxu0 0.0
        %4009 = vmatprep.mubr.f32.mxu0 0.0
        %4010 = vmatmul.mubr.f32.gmra.mxu0 %v3648
        %v4011 = vpop.f32.mrf.mxu0
        %v4012 = vadd.f32 0.0, %v4011
        %v4013 = vpop.f32.mrf.mxu0
        %4014 = vdwg.mxu0
        %4015 = vmatprep.subr.mxu0 0.0
        %4016 = vmatpush1.xpose.msra.mxu0 0.0
        %4017 = vmatprep.subr.mxu0 0.0
        %4018 = vmatpush1.xpose.msra.mxu0 0.0
        %4019 = vmatprep.subr.mxu0 0.0
        %4020 = vmatpush1.xpose.msra.mxu0 0.0
        %4021 = vmatprep.subr.mxu0 0.0
        %4022 = vmatpush1.xpose.msra.mxu0 0.0
        %4023 = vmatprep.subr.mxu0 0.0
        %4024 = vmatpush1.xpose.msra.mxu0 0.0
        %4025 = vmatprep.subr.mxu0 0.0
        %4026 = vmatpush1.xpose.msra.mxu0 0.0
        %4027 = vmatprep.subr.mxu0 0.0
        %4028 = vmatpush1.xpose.msra.mxu0 0.0
        %4029 = vmatprep.subr.mxu0 0.0
        %4030 = vmatpush1.xpose.msra.mxu0 0.0
        %4031 = vmatprep.subr.mxu0 0.0
        %4032 = vmatpush1.xpose.msra.mxu0 0.0
        %4033 = vmatprep.subr.mxu0 0.0
        %4034 = vmatpush1.xpose.msra.mxu0 0.0
        %4035 = vmatprep.subr.mxu0 0.0
        %4036 = vmatpush1.xpose.msra.mxu0 0.0
        %4037 = vmatprep.subr.mxu0 0.0
        %4038 = vmatpush1.xpose.msra.mxu0 0.0
        %4039 = vmatprep.subr.mxu0 0.0
        %4040 = vmatpush1.xpose.msra.mxu0 0.0
        %4041 = vmatprep.subr.mxu0 0.0
        %4042 = vmatpush1.xpose.msra.mxu0 0.0
        %4043 = vmatprep.subr.mxu0 0.0
        %4044 = vmatpush1.xpose.msra.mxu0 0.0
        %4045 = vmatprep.subr.mxu0 0.0
        %4046 = vmatpush1.xpose.msra.mxu0 %v3943
        %4047 = vmatprep.subr.mxu0 0.0
        %4048 = vmatpush2.xpose.msra.mxu0 0.0
        %4049 = vmatprep.subr.mxu0 0.0
        %4050 = vmatpush2.xpose.msra.mxu0 0.0
        %4051 = vmatprep.subr.mxu0 0.0
        %4052 = vmatpush2.xpose.msra.mxu0 0.0
        %4053 = vmatprep.subr.mxu0 0.0
        %4054 = vmatpush2.xpose.msra.mxu0 0.0
        %4055 = vmatprep.subr.mxu0 0.0
        %4056 = vmatpush2.xpose.msra.mxu0 0.0
        %4057 = vmatprep.subr.mxu0 0.0
        %4058 = vmatpush2.xpose.msra.mxu0 0.0
        %4059 = vmatprep.subr.mxu0 0.0
        %4060 = vmatpush2.xpose.msra.mxu0 0.0
        %4061 = vmatprep.subr.mxu0 0.0
        %4062 = vmatpush2.xpose.msra.mxu0 0.0
        %4063 = vmatprep.subr.mxu0 0.0
        %4064 = vmatpush2.xpose.msra.mxu0 0.0
        %4065 = vmatprep.subr.mxu0 0.0
        %4066 = vmatpush2.xpose.msra.mxu0 0.0
        %4067 = vmatprep.subr.mxu0 0.0
        %4068 = vmatpush2.xpose.msra.mxu0 0.0
        %4069 = vmatprep.subr.mxu0 0.0
        %4070 = vmatpush2.xpose.msra.mxu0 0.0
        %4071 = vmatprep.subr.mxu0 0.0
        %4072 = vmatpush2.xpose.msra.mxu0 0.0
        %4073 = vmatprep.subr.mxu0 0.0
        %4074 = vmatpush2.xpose.msra.mxu0 0.0
        %4075 = vmatprep.subr.mxu0 0.0
        %4076 = vmatpush2.xpose.msra.mxu0 0.0
        %4077 = vmatprep.subr.mxu0 0.0
        %4078 = vmatpush2.xpose.msra.mxu0 0.0
        %4079 = vmatprep.mubr.f32.mxu0 0.0
        %4080 = vmatmul.mubr.f32.gmra.mxu0 %v3724
        %v4081 = vpop.f32.mrf.mxu0
        %v4082 = vadd.f32 0.0, %v4081
        %v4083 = vpop.f32.mrf.mxu0
        %4084 = vdwg.mxu0
        %4085 = vmatprep.subr.mxu0 0.0
        %4086 = vmatpush1.xpose.msra.mxu0 0.0
        %4087 = vmatprep.subr.mxu0 0.0
        %4088 = vmatpush1.xpose.msra.mxu0 0.0
        %4089 = vmatprep.subr.mxu0 0.0
        %4090 = vmatpush1.xpose.msra.mxu0 0.0
        %4091 = vmatprep.subr.mxu0 0.0
        %4092 = vmatpush1.xpose.msra.mxu0 0.0
        %4093 = vmatprep.subr.mxu0 0.0
        %4094 = vmatpush1.xpose.msra.mxu0 0.0
        %4095 = vmatprep.subr.mxu0 0.0
        %4096 = vmatpush1.xpose.msra.mxu0 0.0
        %4097 = vmatprep.subr.mxu0 0.0
        %4098 = vmatpush1.xpose.msra.mxu0 0.0
        %4099 = vmatprep.subr.mxu0 0.0
        %4100 = vmatpush1.xpose.msra.mxu0 0.0
        %4101 = vmatprep.subr.mxu0 0.0
        %4102 = vmatpush1.xpose.msra.mxu0 0.0
        %4103 = vmatprep.subr.mxu0 0.0
        %4104 = vmatpush1.xpose.msra.mxu0 0.0
        %4105 = vmatprep.subr.mxu0 0.0
        %4106 = vmatpush1.xpose.msra.mxu0 0.0
        %4107 = vmatprep.subr.mxu0 0.0
        %4108 = vmatpush1.xpose.msra.mxu0 0.0
        %4109 = vmatprep.subr.mxu0 0.0
        %4110 = vmatpush1.xpose.msra.mxu0 0.0
        %4111 = vmatprep.subr.mxu0 0.0
        %4112 = vmatpush1.xpose.msra.mxu0 0.0
        %4113 = vmatprep.subr.mxu0 0.0
        %4114 = vmatpush1.xpose.msra.mxu0 0.0
        %4115 = vmatprep.subr.mxu0 0.0
        %4116 = vmatpush1.xpose.msra.mxu0 %v3943
        %4117 = vmatprep.subr.mxu0 0.0
        %4118 = vmatpush2.xpose.msra.mxu0 0.0
        %4119 = vmatprep.subr.mxu0 0.0
        %4120 = vmatpush2.xpose.msra.mxu0 0.0
        %4121 = vmatprep.subr.mxu0 0.0
        %4122 = vmatpush2.xpose.msra.mxu0 0.0
        %4123 = vmatprep.subr.mxu0 0.0
        %4124 = vmatpush2.xpose.msra.mxu0 0.0
        %4125 = vmatprep.subr.mxu0 0.0
        %4126 = vmatpush2.xpose.msra.mxu0 0.0
        %4127 = vmatprep.subr.mxu0 0.0
        %4128 = vmatpush2.xpose.msra.mxu0 0.0
        %4129 = vmatprep.subr.mxu0 0.0
        %4130 = vmatpush2.xpose.msra.mxu0 0.0
        %4131 = vmatprep.subr.mxu0 0.0
        %4132 = vmatpush2.xpose.msra.mxu0 0.0
        %4133 = vmatprep.subr.mxu0 0.0
        %4134 = vmatpush2.xpose.msra.mxu0 0.0
        %4135 = vmatprep.subr.mxu0 0.0
        %4136 = vmatpush2.xpose.msra.mxu0 0.0
        %4137 = vmatprep.subr.mxu0 0.0
        %4138 = vmatpush2.xpose.msra.mxu0 0.0
        %4139 = vmatprep.subr.mxu0 0.0
        %4140 = vmatpush2.xpose.msra.mxu0 0.0
        %4141 = vmatprep.subr.mxu0 0.0
        %4142 = vmatpush2.xpose.msra.mxu0 0.0
        %4143 = vmatprep.subr.mxu0 0.0
        %4144 = vmatpush2.xpose.msra.mxu0 0.0
        %4145 = vmatprep.subr.mxu0 0.0
        %4146 = vmatpush2.xpose.msra.mxu0 0.0
        %4147 = vmatprep.subr.mxu0 0.0
        %4148 = vmatpush2.xpose.msra.mxu0 0.0
        %4149 = vmatprep.mubr.f32.mxu0 0.0
        %4150 = vmatmul.mubr.f32.gmra.mxu0 %v3797
        %v4151 = vpop.f32.mrf.mxu0
        %v4152 = vadd.f32 0.0, %v4151
        %v4153 = vpop.f32.mrf.mxu0
        %4154 = vdwg.mxu0
        %4155 = vmatprep.subr.mxu0 0.0
        %4156 = vmatpush1.xpose.msra.mxu0 0.0
        %4157 = vmatprep.subr.mxu0 0.0
        %4158 = vmatpush1.xpose.msra.mxu0 0.0
        %4159 = vmatprep.subr.mxu0 0.0
        %4160 = vmatpush1.xpose.msra.mxu0 0.0
        %4161 = vmatprep.subr.mxu0 0.0
        %4162 = vmatpush1.xpose.msra.mxu0 0.0
        %4163 = vmatprep.subr.mxu0 0.0
        %4164 = vmatpush1.xpose.msra.mxu0 0.0
        %4165 = vmatprep.subr.mxu0 0.0
        %4166 = vmatpush1.xpose.msra.mxu0 0.0
        %4167 = vmatprep.subr.mxu0 0.0
        %4168 = vmatpush1.xpose.msra.mxu0 0.0
        %4169 = vmatprep.subr.mxu0 0.0
        %4170 = vmatpush1.xpose.msra.mxu0 0.0
        %4171 = vmatprep.subr.mxu0 0.0
        %4172 = vmatpush1.xpose.msra.mxu0 0.0
        %4173 = vmatprep.subr.mxu0 0.0
        %4174 = vmatpush1.xpose.msra.mxu0 0.0
        %4175 = vmatprep.subr.mxu0 0.0
        %4176 = vmatpush1.xpose.msra.mxu0 0.0
        %4177 = vmatprep.subr.mxu0 0.0
        %4178 = vmatpush1.xpose.msra.mxu0 0.0
        %4179 = vmatprep.subr.mxu0 0.0
        %4180 = vmatpush1.xpose.msra.mxu0 0.0
        %4181 = vmatprep.subr.mxu0 0.0
        %4182 = vmatpush1.xpose.msra.mxu0 0.0
        %4183 = vmatprep.subr.mxu0 0.0
        %4184 = vmatpush1.xpose.msra.mxu0 0.0
        %4185 = vmatprep.subr.mxu0 0.0
        %4186 = vmatpush1.xpose.msra.mxu0 %v3943
        %4187 = vmatprep.subr.mxu0 0.0
        %4188 = vmatpush2.xpose.msra.mxu0 0.0
        %4189 = vmatprep.subr.mxu0 0.0
        %4190 = vmatpush2.xpose.msra.mxu0 0.0
        %4191 = vmatprep.subr.mxu0 0.0
        %4192 = vmatpush2.xpose.msra.mxu0 0.0
        %4193 = vmatprep.subr.mxu0 0.0
        %4194 = vmatpush2.xpose.msra.mxu0 0.0
        %4195 = vmatprep.subr.mxu0 0.0
        %4196 = vmatpush2.xpose.msra.mxu0 0.0
        %4197 = vmatprep.subr.mxu0 0.0
        %4198 = vmatpush2.xpose.msra.mxu0 0.0
        %4199 = vmatprep.subr.mxu0 0.0
        %4200 = vmatpush2.xpose.msra.mxu0 0.0
        %4201 = vmatprep.subr.mxu0 0.0
        %4202 = vmatpush2.xpose.msra.mxu0 0.0
        %4203 = vmatprep.subr.mxu0 0.0
        %4204 = vmatpush2.xpose.msra.mxu0 0.0
        %4205 = vmatprep.subr.mxu0 0.0
        %4206 = vmatpush2.xpose.msra.mxu0 0.0
        %4207 = vmatprep.subr.mxu0 0.0
        %4208 = vmatpush2.xpose.msra.mxu0 0.0
        %4209 = vmatprep.subr.mxu0 0.0
        %4210 = vmatpush2.xpose.msra.mxu0 0.0
        %4211 = vmatprep.subr.mxu0 0.0
        %4212 = vmatpush2.xpose.msra.mxu0 0.0
        %4213 = vmatprep.subr.mxu0 0.0
        %4214 = vmatpush2.xpose.msra.mxu0 0.0
        %4215 = vmatprep.subr.mxu0 0.0
        %4216 = vmatpush2.xpose.msra.mxu0 0.0
        %4217 = vmatprep.subr.mxu0 0.0
        %4218 = vmatpush2.xpose.msra.mxu0 0.0
        %4219 = vmatprep.mubr.f32.mxu0 0.0
        %4220 = vmatmul.mubr.f32.gmra.mxu0 %v3870
        %v4221 = vpop.f32.mrf.mxu0
        %v4222 = vadd.f32 0.0, %v4221
        %v4223 = vpop.f32.mrf.mxu0
        %4224 = vdwg.mxu0
        %v4225 = vmax.f32 %v3720, %v4012
        %v4226 = vmax.f32 %v3793, %v4082
        %v4227 = vmax.f32 %v3866, %v4152
        %v4228 = vmax.f32 %v3939, %v4222
        %v4230 = vsel %vm638, %v1049, 0
        %4232 = vmatprep.subr.mxu0 0.0
        %4233 = vmatpush1.xpose.msra.mxu0 0.0
        %4234 = vmatprep.subr.mxu0 0.0
        %4235 = vmatpush1.xpose.msra.mxu0 0.0
        %4236 = vmatprep.subr.mxu0 0.0
        %4237 = vmatpush1.xpose.msra.mxu0 0.0
        %4238 = vmatprep.subr.mxu0 0.0
        %4239 = vmatpush1.xpose.msra.mxu0 0.0
        %4240 = vmatprep.subr.mxu0 0.0
        %4241 = vmatpush1.xpose.msra.mxu0 0.0
        %4242 = vmatprep.subr.mxu0 0.0
        %4243 = vmatpush1.xpose.msra.mxu0 0.0
        %4244 = vmatprep.subr.mxu0 0.0
        %4245 = vmatpush1.xpose.msra.mxu0 0.0
        %4246 = vmatprep.subr.mxu0 0.0
        %4247 = vmatpush1.xpose.msra.mxu0 0.0
        %4248 = vmatprep.subr.mxu0 0.0
        %4249 = vmatpush1.xpose.msra.mxu0 0.0
        %4250 = vmatprep.subr.mxu0 0.0
        %4251 = vmatpush1.xpose.msra.mxu0 0.0
        %4252 = vmatprep.subr.mxu0 0.0
        %4253 = vmatpush1.xpose.msra.mxu0 0.0
        %4254 = vmatprep.subr.mxu0 0.0
        %4255 = vmatpush1.xpose.msra.mxu0 0.0
        %4256 = vmatprep.subr.mxu0 0.0
        %4257 = vmatpush1.xpose.msra.mxu0 0.0
        %4258 = vmatprep.subr.mxu0 0.0
        %4259 = vmatpush1.xpose.msra.mxu0 0.0
        %4260 = vmatprep.subr.mxu0 0.0
        %4261 = vmatpush1.xpose.msra.mxu0 0.0
        %4262 = vmatprep.subr.mxu0 0.0
        %4263 = vmatpush1.xpose.msra.mxu0 %v3651
        %4264 = vmatprep.subr.mxu0 0.0
        %4265 = vmatpush2.xpose.msra.mxu0 0.0
        %4266 = vmatprep.subr.mxu0 0.0
        %4267 = vmatpush2.xpose.msra.mxu0 0.0
        %4268 = vmatprep.subr.mxu0 0.0
        %4269 = vmatpush2.xpose.msra.mxu0 0.0
        %4270 = vmatprep.subr.mxu0 0.0
        %4271 = vmatpush2.xpose.msra.mxu0 0.0
        %4272 = vmatprep.subr.mxu0 0.0
        %4273 = vmatpush2.xpose.msra.mxu0 0.0
        %4274 = vmatprep.subr.mxu0 0.0
        %4275 = vmatpush2.xpose.msra.mxu0 0.0
        %4276 = vmatprep.subr.mxu0 0.0
        %4277 = vmatpush2.xpose.msra.mxu0 0.0
        %4278 = vmatprep.subr.mxu0 0.0
        %4279 = vmatpush2.xpose.msra.mxu0 0.0
        %4280 = vmatprep.subr.mxu0 0.0
        %4281 = vmatpush2.xpose.msra.mxu0 0.0
        %4282 = vmatprep.subr.mxu0 0.0
        %4283 = vmatpush2.xpose.msra.mxu0 0.0
        %4284 = vmatprep.subr.mxu0 0.0
        %4285 = vmatpush2.xpose.msra.mxu0 0.0
        %4286 = vmatprep.subr.mxu0 0.0
        %4287 = vmatpush2.xpose.msra.mxu0 0.0
        %4288 = vmatprep.subr.mxu0 0.0
        %4289 = vmatpush2.xpose.msra.mxu0 0.0
        %4290 = vmatprep.subr.mxu0 0.0
        %4291 = vmatpush2.xpose.msra.mxu0 0.0
        %4292 = vmatprep.subr.mxu0 0.0
        %4293 = vmatpush2.xpose.msra.mxu0 0.0
        %4294 = vmatprep.subr.mxu0 0.0
        %4295 = vmatpush2.xpose.msra.mxu0 0.0
        %4296 = vmatprep.mubr.f32.mxu0 0.0
        %4297 = vmatmul.mubr.f32.gmra.mxu0 %v4230
        %v4298 = vpop.f32.mrf.mxu0
        %v4299 = vadd.f32 0.0, %v4298
        %v4300 = vpop.f32.mrf.mxu0
        %4301 = vdwg.mxu0
        %v4303 = vsel %vm638, %v1129, 0
        %4305 = vmatprep.subr.mxu0 0.0
        %4306 = vmatpush1.xpose.msra.mxu0 0.0
        %4307 = vmatprep.subr.mxu0 0.0
        %4308 = vmatpush1.xpose.msra.mxu0 0.0
        %4309 = vmatprep.subr.mxu0 0.0
        %4310 = vmatpush1.xpose.msra.mxu0 0.0
        %4311 = vmatprep.subr.mxu0 0.0
        %4312 = vmatpush1.xpose.msra.mxu0 0.0
        %4313 = vmatprep.subr.mxu0 0.0
        %4314 = vmatpush1.xpose.msra.mxu0 0.0
        %4315 = vmatprep.subr.mxu0 0.0
        %4316 = vmatpush1.xpose.msra.mxu0 0.0
        %4317 = vmatprep.subr.mxu0 0.0
        %4318 = vmatpush1.xpose.msra.mxu0 0.0
        %4319 = vmatprep.subr.mxu0 0.0
        %4320 = vmatpush1.xpose.msra.mxu0 0.0
        %4321 = vmatprep.subr.mxu0 0.0
        %4322 = vmatpush1.xpose.msra.mxu0 0.0
        %4323 = vmatprep.subr.mxu0 0.0
        %4324 = vmatpush1.xpose.msra.mxu0 0.0
        %4325 = vmatprep.subr.mxu0 0.0
        %4326 = vmatpush1.xpose.msra.mxu0 0.0
        %4327 = vmatprep.subr.mxu0 0.0
        %4328 = vmatpush1.xpose.msra.mxu0 0.0
        %4329 = vmatprep.subr.mxu0 0.0
        %4330 = vmatpush1.xpose.msra.mxu0 0.0
        %4331 = vmatprep.subr.mxu0 0.0
        %4332 = vmatpush1.xpose.msra.mxu0 0.0
        %4333 = vmatprep.subr.mxu0 0.0
        %4334 = vmatpush1.xpose.msra.mxu0 0.0
        %4335 = vmatprep.subr.mxu0 0.0
        %4336 = vmatpush1.xpose.msra.mxu0 %v3651
        %4337 = vmatprep.subr.mxu0 0.0
        %4338 = vmatpush2.xpose.msra.mxu0 0.0
        %4339 = vmatprep.subr.mxu0 0.0
        %4340 = vmatpush2.xpose.msra.mxu0 0.0
        %4341 = vmatprep.subr.mxu0 0.0
        %4342 = vmatpush2.xpose.msra.mxu0 0.0
        %4343 = vmatprep.subr.mxu0 0.0
        %4344 = vmatpush2.xpose.msra.mxu0 0.0
        %4345 = vmatprep.subr.mxu0 0.0
        %4346 = vmatpush2.xpose.msra.mxu0 0.0
        %4347 = vmatprep.subr.mxu0 0.0
        %4348 = vmatpush2.xpose.msra.mxu0 0.0
        %4349 = vmatprep.subr.mxu0 0.0
        %4350 = vmatpush2.xpose.msra.mxu0 0.0
        %4351 = vmatprep.subr.mxu0 0.0
        %4352 = vmatpush2.xpose.msra.mxu0 0.0
        %4353 = vmatprep.subr.mxu0 0.0
        %4354 = vmatpush2.xpose.msra.mxu0 0.0
        %4355 = vmatprep.subr.mxu0 0.0
        %4356 = vmatpush2.xpose.msra.mxu0 0.0
        %4357 = vmatprep.subr.mxu0 0.0
        %4358 = vmatpush2.xpose.msra.mxu0 0.0
        %4359 = vmatprep.subr.mxu0 0.0
        %4360 = vmatpush2.xpose.msra.mxu0 0.0
        %4361 = vmatprep.subr.mxu0 0.0
        %4362 = vmatpush2.xpose.msra.mxu0 0.0
        %4363 = vmatprep.subr.mxu0 0.0
        %4364 = vmatpush2.xpose.msra.mxu0 0.0
        %4365 = vmatprep.subr.mxu0 0.0
        %4366 = vmatpush2.xpose.msra.mxu0 0.0
        %4367 = vmatprep.subr.mxu0 0.0
        %4368 = vmatpush2.xpose.msra.mxu0 0.0
        %4369 = vmatprep.mubr.f32.mxu0 0.0
        %4370 = vmatmul.mubr.f32.gmra.mxu0 %v4303
        %v4371 = vpop.f32.mrf.mxu0
        %v4372 = vadd.f32 0.0, %v4371
        %v4373 = vpop.f32.mrf.mxu0
        %4374 = vdwg.mxu0
        %v4376 = vsel %vm638, %v1209, 0
        %4378 = vmatprep.subr.mxu0 0.0
        %4379 = vmatpush1.xpose.msra.mxu0 0.0
        %4380 = vmatprep.subr.mxu0 0.0
        %4381 = vmatpush1.xpose.msra.mxu0 0.0
        %4382 = vmatprep.subr.mxu0 0.0
        %4383 = vmatpush1.xpose.msra.mxu0 0.0
        %4384 = vmatprep.subr.mxu0 0.0
        %4385 = vmatpush1.xpose.msra.mxu0 0.0
        %4386 = vmatprep.subr.mxu0 0.0
        %4387 = vmatpush1.xpose.msra.mxu0 0.0
        %4388 = vmatprep.subr.mxu0 0.0
        %4389 = vmatpush1.xpose.msra.mxu0 0.0
        %4390 = vmatprep.subr.mxu0 0.0
        %4391 = vmatpush1.xpose.msra.mxu0 0.0
        %4392 = vmatprep.subr.mxu0 0.0
        %4393 = vmatpush1.xpose.msra.mxu0 0.0
        %4394 = vmatprep.subr.mxu0 0.0
        %4395 = vmatpush1.xpose.msra.mxu0 0.0
        %4396 = vmatprep.subr.mxu0 0.0
        %4397 = vmatpush1.xpose.msra.mxu0 0.0
        %4398 = vmatprep.subr.mxu0 0.0
        %4399 = vmatpush1.xpose.msra.mxu0 0.0
        %4400 = vmatprep.subr.mxu0 0.0
        %4401 = vmatpush1.xpose.msra.mxu0 0.0
        %4402 = vmatprep.subr.mxu0 0.0
        %4403 = vmatpush1.xpose.msra.mxu0 0.0
        %4404 = vmatprep.subr.mxu0 0.0
        %4405 = vmatpush1.xpose.msra.mxu0 0.0
        %4406 = vmatprep.subr.mxu0 0.0
        %4407 = vmatpush1.xpose.msra.mxu0 0.0
        %4408 = vmatprep.subr.mxu0 0.0
        %4409 = vmatpush1.xpose.msra.mxu0 %v3651
        %4410 = vmatprep.subr.mxu0 0.0
        %4411 = vmatpush2.xpose.msra.mxu0 0.0
        %4412 = vmatprep.subr.mxu0 0.0
        %4413 = vmatpush2.xpose.msra.mxu0 0.0
        %4414 = vmatprep.subr.mxu0 0.0
        %4415 = vmatpush2.xpose.msra.mxu0 0.0
        %4416 = vmatprep.subr.mxu0 0.0
        %4417 = vmatpush2.xpose.msra.mxu0 0.0
        %4418 = vmatprep.subr.mxu0 0.0
        %4419 = vmatpush2.xpose.msra.mxu0 0.0
        %4420 = vmatprep.subr.mxu0 0.0
        %4421 = vmatpush2.xpose.msra.mxu0 0.0
        %4422 = vmatprep.subr.mxu0 0.0
        %4423 = vmatpush2.xpose.msra.mxu0 0.0
        %4424 = vmatprep.subr.mxu0 0.0
        %4425 = vmatpush2.xpose.msra.mxu0 0.0
        %4426 = vmatprep.subr.mxu0 0.0
        %4427 = vmatpush2.xpose.msra.mxu0 0.0
        %4428 = vmatprep.subr.mxu0 0.0
        %4429 = vmatpush2.xpose.msra.mxu0 0.0
        %4430 = vmatprep.subr.mxu0 0.0
        %4431 = vmatpush2.xpose.msra.mxu0 0.0
        %4432 = vmatprep.subr.mxu0 0.0
        %4433 = vmatpush2.xpose.msra.mxu0 0.0
        %4434 = vmatprep.subr.mxu0 0.0
        %4435 = vmatpush2.xpose.msra.mxu0 0.0
        %4436 = vmatprep.subr.mxu0 0.0
        %4437 = vmatpush2.xpose.msra.mxu0 0.0
        %4438 = vmatprep.subr.mxu0 0.0
        %4439 = vmatpush2.xpose.msra.mxu0 0.0
        %4440 = vmatprep.subr.mxu0 0.0
        %4441 = vmatpush2.xpose.msra.mxu0 0.0
        %4442 = vmatprep.mubr.f32.mxu0 0.0
        %4443 = vmatmul.mubr.f32.gmra.mxu0 %v4376
        %v4444 = vpop.f32.mrf.mxu0
        %v4445 = vadd.f32 0.0, %v4444
        %v4446 = vpop.f32.mrf.mxu0
        %4447 = vdwg.mxu0
        %v4449 = vsel %vm638, %v1289, 0
        %4451 = vmatprep.subr.mxu0 0.0
        %4452 = vmatpush1.xpose.msra.mxu0 0.0
        %4453 = vmatprep.subr.mxu0 0.0
        %4454 = vmatpush1.xpose.msra.mxu0 0.0
        %4455 = vmatprep.subr.mxu0 0.0
        %4456 = vmatpush1.xpose.msra.mxu0 0.0
        %4457 = vmatprep.subr.mxu0 0.0
        %4458 = vmatpush1.xpose.msra.mxu0 0.0
        %4459 = vmatprep.subr.mxu0 0.0
        %4460 = vmatpush1.xpose.msra.mxu0 0.0
        %4461 = vmatprep.subr.mxu0 0.0
        %4462 = vmatpush1.xpose.msra.mxu0 0.0
        %4463 = vmatprep.subr.mxu0 0.0
        %4464 = vmatpush1.xpose.msra.mxu0 0.0
        %4465 = vmatprep.subr.mxu0 0.0
        %4466 = vmatpush1.xpose.msra.mxu0 0.0
        %4467 = vmatprep.subr.mxu0 0.0
        %4468 = vmatpush1.xpose.msra.mxu0 0.0
        %4469 = vmatprep.subr.mxu0 0.0
        %4470 = vmatpush1.xpose.msra.mxu0 0.0
        %4471 = vmatprep.subr.mxu0 0.0
        %4472 = vmatpush1.xpose.msra.mxu0 0.0
        %4473 = vmatprep.subr.mxu0 0.0
        %4474 = vmatpush1.xpose.msra.mxu0 0.0
        %4475 = vmatprep.subr.mxu0 0.0
        %4476 = vmatpush1.xpose.msra.mxu0 0.0
        %4477 = vmatprep.subr.mxu0 0.0
        %4478 = vmatpush1.xpose.msra.mxu0 0.0
        %4479 = vmatprep.subr.mxu0 0.0
        %4480 = vmatpush1.xpose.msra.mxu0 0.0
        %4481 = vmatprep.subr.mxu0 0.0
        %4482 = vmatpush1.xpose.msra.mxu0 %v3651
        %4483 = vmatprep.subr.mxu0 0.0
        %4484 = vmatpush2.xpose.msra.mxu0 0.0
        %4485 = vmatprep.subr.mxu0 0.0
        %4486 = vmatpush2.xpose.msra.mxu0 0.0
        %4487 = vmatprep.subr.mxu0 0.0
        %4488 = vmatpush2.xpose.msra.mxu0 0.0
        %4489 = vmatprep.subr.mxu0 0.0
        %4490 = vmatpush2.xpose.msra.mxu0 0.0
        %4491 = vmatprep.subr.mxu0 0.0
        %4492 = vmatpush2.xpose.msra.mxu0 0.0
        %4493 = vmatprep.subr.mxu0 0.0
        %4494 = vmatpush2.xpose.msra.mxu0 0.0
        %4495 = vmatprep.subr.mxu0 0.0
        %4496 = vmatpush2.xpose.msra.mxu0 0.0
        %4497 = vmatprep.subr.mxu0 0.0
        %4498 = vmatpush2.xpose.msra.mxu0 0.0
        %4499 = vmatprep.subr.mxu0 0.0
        %4500 = vmatpush2.xpose.msra.mxu0 0.0
        %4501 = vmatprep.subr.mxu0 0.0
        %4502 = vmatpush2.xpose.msra.mxu0 0.0
        %4503 = vmatprep.subr.mxu0 0.0
        %4504 = vmatpush2.xpose.msra.mxu0 0.0
        %4505 = vmatprep.subr.mxu0 0.0
        %4506 = vmatpush2.xpose.msra.mxu0 0.0
        %4507 = vmatprep.subr.mxu0 0.0
        %4508 = vmatpush2.xpose.msra.mxu0 0.0
        %4509 = vmatprep.subr.mxu0 0.0
        %4510 = vmatpush2.xpose.msra.mxu0 0.0
        %4511 = vmatprep.subr.mxu0 0.0
        %4512 = vmatpush2.xpose.msra.mxu0 0.0
        %4513 = vmatprep.subr.mxu0 0.0
        %4514 = vmatpush2.xpose.msra.mxu0 0.0
        %4515 = vmatprep.mubr.f32.mxu0 0.0
        %4516 = vmatmul.mubr.f32.gmra.mxu0 %v4449
        %v4517 = vpop.f32.mrf.mxu0
        %v4518 = vadd.f32 0.0, %v4517
        %v4519 = vpop.f32.mrf.mxu0
        %4520 = vdwg.mxu0
        %4521 = vmatprep.subr.mxu0 0.0
        %4522 = vmatpush1.xpose.msra.mxu0 0.0
        %4523 = vmatprep.subr.mxu0 0.0
        %4524 = vmatpush1.xpose.msra.mxu0 0.0
        %4525 = vmatprep.subr.mxu0 0.0
        %4526 = vmatpush1.xpose.msra.mxu0 0.0
        %4527 = vmatprep.subr.mxu0 0.0
        %4528 = vmatpush1.xpose.msra.mxu0 0.0
        %4529 = vmatprep.subr.mxu0 0.0
        %4530 = vmatpush1.xpose.msra.mxu0 0.0
        %4531 = vmatprep.subr.mxu0 0.0
        %4532 = vmatpush1.xpose.msra.mxu0 0.0
        %4533 = vmatprep.subr.mxu0 0.0
        %4534 = vmatpush1.xpose.msra.mxu0 0.0
        %4535 = vmatprep.subr.mxu0 0.0
        %4536 = vmatpush1.xpose.msra.mxu0 0.0
        %4537 = vmatprep.subr.mxu0 0.0
        %4538 = vmatpush1.xpose.msra.mxu0 0.0
        %4539 = vmatprep.subr.mxu0 0.0
        %4540 = vmatpush1.xpose.msra.mxu0 0.0
        %4541 = vmatprep.subr.mxu0 0.0
        %4542 = vmatpush1.xpose.msra.mxu0 0.0
        %4543 = vmatprep.subr.mxu0 0.0
        %4544 = vmatpush1.xpose.msra.mxu0 0.0
        %4545 = vmatprep.subr.mxu0 0.0
        %4546 = vmatpush1.xpose.msra.mxu0 0.0
        %4547 = vmatprep.subr.mxu0 0.0
        %4548 = vmatpush1.xpose.msra.mxu0 0.0
        %4549 = vmatprep.subr.mxu0 0.0
        %4550 = vmatpush1.xpose.msra.mxu0 0.0
        %4551 = vmatprep.subr.mxu0 0.0
        %4552 = vmatpush1.xpose.msra.mxu0 %v3943
        %4553 = vmatprep.subr.mxu0 0.0
        %4554 = vmatpush2.xpose.msra.mxu0 0.0
        %4555 = vmatprep.subr.mxu0 0.0
        %4556 = vmatpush2.xpose.msra.mxu0 0.0
        %4557 = vmatprep.subr.mxu0 0.0
        %4558 = vmatpush2.xpose.msra.mxu0 0.0
        %4559 = vmatprep.subr.mxu0 0.0
        %4560 = vmatpush2.xpose.msra.mxu0 0.0
        %4561 = vmatprep.subr.mxu0 0.0
        %4562 = vmatpush2.xpose.msra.mxu0 0.0
        %4563 = vmatprep.subr.mxu0 0.0
        %4564 = vmatpush2.xpose.msra.mxu0 0.0
        %4565 = vmatprep.subr.mxu0 0.0
        %4566 = vmatpush2.xpose.msra.mxu0 0.0
        %4567 = vmatprep.subr.mxu0 0.0
        %4568 = vmatpush2.xpose.msra.mxu0 0.0
        %4569 = vmatprep.subr.mxu0 0.0
        %4570 = vmatpush2.xpose.msra.mxu0 0.0
        %4571 = vmatprep.subr.mxu0 0.0
        %4572 = vmatpush2.xpose.msra.mxu0 0.0
        %4573 = vmatprep.subr.mxu0 0.0
        %4574 = vmatpush2.xpose.msra.mxu0 0.0
        %4575 = vmatprep.subr.mxu0 0.0
        %4576 = vmatpush2.xpose.msra.mxu0 0.0
        %4577 = vmatprep.subr.mxu0 0.0
        %4578 = vmatpush2.xpose.msra.mxu0 0.0
        %4579 = vmatprep.subr.mxu0 0.0
        %4580 = vmatpush2.xpose.msra.mxu0 0.0
        %4581 = vmatprep.subr.mxu0 0.0
        %4582 = vmatpush2.xpose.msra.mxu0 0.0
        %4583 = vmatprep.subr.mxu0 0.0
        %4584 = vmatpush2.xpose.msra.mxu0 0.0
        %4585 = vmatprep.mubr.f32.mxu0 0.0
        %4586 = vmatmul.mubr.f32.gmra.mxu0 %v4230
        %v4587 = vpop.f32.mrf.mxu0
        %v4588 = vadd.f32 0.0, %v4587
        %v4589 = vpop.f32.mrf.mxu0
        %4590 = vdwg.mxu0
        %4591 = vmatprep.subr.mxu0 0.0
        %4592 = vmatpush1.xpose.msra.mxu0 0.0
        %4593 = vmatprep.subr.mxu0 0.0
        %4594 = vmatpush1.xpose.msra.mxu0 0.0
        %4595 = vmatprep.subr.mxu0 0.0
        %4596 = vmatpush1.xpose.msra.mxu0 0.0
        %4597 = vmatprep.subr.mxu0 0.0
        %4598 = vmatpush1.xpose.msra.mxu0 0.0
        %4599 = vmatprep.subr.mxu0 0.0
        %4600 = vmatpush1.xpose.msra.mxu0 0.0
        %4601 = vmatprep.subr.mxu0 0.0
        %4602 = vmatpush1.xpose.msra.mxu0 0.0
        %4603 = vmatprep.subr.mxu0 0.0
        %4604 = vmatpush1.xpose.msra.mxu0 0.0
        %4605 = vmatprep.subr.mxu0 0.0
        %4606 = vmatpush1.xpose.msra.mxu0 0.0
        %4607 = vmatprep.subr.mxu0 0.0
        %4608 = vmatpush1.xpose.msra.mxu0 0.0
        %4609 = vmatprep.subr.mxu0 0.0
        %4610 = vmatpush1.xpose.msra.mxu0 0.0
        %4611 = vmatprep.subr.mxu0 0.0
        %4612 = vmatpush1.xpose.msra.mxu0 0.0
        %4613 = vmatprep.subr.mxu0 0.0
        %4614 = vmatpush1.xpose.msra.mxu0 0.0
        %4615 = vmatprep.subr.mxu0 0.0
        %4616 = vmatpush1.xpose.msra.mxu0 0.0
        %4617 = vmatprep.subr.mxu0 0.0
        %4618 = vmatpush1.xpose.msra.mxu0 0.0
        %4619 = vmatprep.subr.mxu0 0.0
        %4620 = vmatpush1.xpose.msra.mxu0 0.0
        %4621 = vmatprep.subr.mxu0 0.0
        %4622 = vmatpush1.xpose.msra.mxu0 %v3943
        %4623 = vmatprep.subr.mxu0 0.0
        %4624 = vmatpush2.xpose.msra.mxu0 0.0
        %4625 = vmatprep.subr.mxu0 0.0
        %4626 = vmatpush2.xpose.msra.mxu0 0.0
        %4627 = vmatprep.subr.mxu0 0.0
        %4628 = vmatpush2.xpose.msra.mxu0 0.0
        %4629 = vmatprep.subr.mxu0 0.0
        %4630 = vmatpush2.xpose.msra.mxu0 0.0
        %4631 = vmatprep.subr.mxu0 0.0
        %4632 = vmatpush2.xpose.msra.mxu0 0.0
        %4633 = vmatprep.subr.mxu0 0.0
        %4634 = vmatpush2.xpose.msra.mxu0 0.0
        %4635 = vmatprep.subr.mxu0 0.0
        %4636 = vmatpush2.xpose.msra.mxu0 0.0
        %4637 = vmatprep.subr.mxu0 0.0
        %4638 = vmatpush2.xpose.msra.mxu0 0.0
        %4639 = vmatprep.subr.mxu0 0.0
        %4640 = vmatpush2.xpose.msra.mxu0 0.0
        %4641 = vmatprep.subr.mxu0 0.0
        %4642 = vmatpush2.xpose.msra.mxu0 0.0
        %4643 = vmatprep.subr.mxu0 0.0
        %4644 = vmatpush2.xpose.msra.mxu0 0.0
        %4645 = vmatprep.subr.mxu0 0.0
        %4646 = vmatpush2.xpose.msra.mxu0 0.0
        %4647 = vmatprep.subr.mxu0 0.0
        %4648 = vmatpush2.xpose.msra.mxu0 0.0
        %4649 = vmatprep.subr.mxu0 0.0
        %4650 = vmatpush2.xpose.msra.mxu0 0.0
        %4651 = vmatprep.subr.mxu0 0.0
        %4652 = vmatpush2.xpose.msra.mxu0 0.0
        %4653 = vmatprep.subr.mxu0 0.0
        %4654 = vmatpush2.xpose.msra.mxu0 0.0
        %4655 = vmatprep.mubr.f32.mxu0 0.0
        %4656 = vmatmul.mubr.f32.gmra.mxu0 %v4303
        %v4657 = vpop.f32.mrf.mxu0
        %v4658 = vadd.f32 0.0, %v4657
        %v4659 = vpop.f32.mrf.mxu0
        %4660 = vdwg.mxu0
        %4661 = vmatprep.subr.mxu0 0.0
        %4662 = vmatpush1.xpose.msra.mxu0 0.0
        %4663 = vmatprep.subr.mxu0 0.0
        %4664 = vmatpush1.xpose.msra.mxu0 0.0
        %4665 = vmatprep.subr.mxu0 0.0
        %4666 = vmatpush1.xpose.msra.mxu0 0.0
        %4667 = vmatprep.subr.mxu0 0.0
        %4668 = vmatpush1.xpose.msra.mxu0 0.0
        %4669 = vmatprep.subr.mxu0 0.0
        %4670 = vmatpush1.xpose.msra.mxu0 0.0
        %4671 = vmatprep.subr.mxu0 0.0
        %4672 = vmatpush1.xpose.msra.mxu0 0.0
        %4673 = vmatprep.subr.mxu0 0.0
        %4674 = vmatpush1.xpose.msra.mxu0 0.0
        %4675 = vmatprep.subr.mxu0 0.0
        %4676 = vmatpush1.xpose.msra.mxu0 0.0
        %4677 = vmatprep.subr.mxu0 0.0
        %4678 = vmatpush1.xpose.msra.mxu0 0.0
        %4679 = vmatprep.subr.mxu0 0.0
        %4680 = vmatpush1.xpose.msra.mxu0 0.0
        %4681 = vmatprep.subr.mxu0 0.0
        %4682 = vmatpush1.xpose.msra.mxu0 0.0
        %4683 = vmatprep.subr.mxu0 0.0
        %4684 = vmatpush1.xpose.msra.mxu0 0.0
        %4685 = vmatprep.subr.mxu0 0.0
        %4686 = vmatpush1.xpose.msra.mxu0 0.0
        %4687 = vmatprep.subr.mxu0 0.0
        %4688 = vmatpush1.xpose.msra.mxu0 0.0
        %4689 = vmatprep.subr.mxu0 0.0
        %4690 = vmatpush1.xpose.msra.mxu0 0.0
        %4691 = vmatprep.subr.mxu0 0.0
        %4692 = vmatpush1.xpose.msra.mxu0 %v3943
        %4693 = vmatprep.subr.mxu0 0.0
        %4694 = vmatpush2.xpose.msra.mxu0 0.0
        %4695 = vmatprep.subr.mxu0 0.0
        %4696 = vmatpush2.xpose.msra.mxu0 0.0
        %4697 = vmatprep.subr.mxu0 0.0
        %4698 = vmatpush2.xpose.msra.mxu0 0.0
        %4699 = vmatprep.subr.mxu0 0.0
        %4700 = vmatpush2.xpose.msra.mxu0 0.0
        %4701 = vmatprep.subr.mxu0 0.0
        %4702 = vmatpush2.xpose.msra.mxu0 0.0
        %4703 = vmatprep.subr.mxu0 0.0
        %4704 = vmatpush2.xpose.msra.mxu0 0.0
        %4705 = vmatprep.subr.mxu0 0.0
        %4706 = vmatpush2.xpose.msra.mxu0 0.0
        %4707 = vmatprep.subr.mxu0 0.0
        %4708 = vmatpush2.xpose.msra.mxu0 0.0
        %4709 = vmatprep.subr.mxu0 0.0
        %4710 = vmatpush2.xpose.msra.mxu0 0.0
        %4711 = vmatprep.subr.mxu0 0.0
        %4712 = vmatpush2.xpose.msra.mxu0 0.0
        %4713 = vmatprep.subr.mxu0 0.0
        %4714 = vmatpush2.xpose.msra.mxu0 0.0
        %4715 = vmatprep.subr.mxu0 0.0
        %4716 = vmatpush2.xpose.msra.mxu0 0.0
        %4717 = vmatprep.subr.mxu0 0.0
        %4718 = vmatpush2.xpose.msra.mxu0 0.0
        %4719 = vmatprep.subr.mxu0 0.0
        %4720 = vmatpush2.xpose.msra.mxu0 0.0
        %4721 = vmatprep.subr.mxu0 0.0
        %4722 = vmatpush2.xpose.msra.mxu0 0.0
        %4723 = vmatprep.subr.mxu0 0.0
        %4724 = vmatpush2.xpose.msra.mxu0 0.0
        %4725 = vmatprep.mubr.f32.mxu0 0.0
        %4726 = vmatmul.mubr.f32.gmra.mxu0 %v4376
        %v4727 = vpop.f32.mrf.mxu0
        %v4728 = vadd.f32 0.0, %v4727
        %v4729 = vpop.f32.mrf.mxu0
        %4730 = vdwg.mxu0
        %4731 = vmatprep.subr.mxu0 0.0
        %4732 = vmatpush1.xpose.msra.mxu0 0.0
        %4733 = vmatprep.subr.mxu0 0.0
        %4734 = vmatpush1.xpose.msra.mxu0 0.0
        %4735 = vmatprep.subr.mxu0 0.0
        %4736 = vmatpush1.xpose.msra.mxu0 0.0
        %4737 = vmatprep.subr.mxu0 0.0
        %4738 = vmatpush1.xpose.msra.mxu0 0.0
        %4739 = vmatprep.subr.mxu0 0.0
        %4740 = vmatpush1.xpose.msra.mxu0 0.0
        %4741 = vmatprep.subr.mxu0 0.0
        %4742 = vmatpush1.xpose.msra.mxu0 0.0
        %4743 = vmatprep.subr.mxu0 0.0
        %4744 = vmatpush1.xpose.msra.mxu0 0.0
        %4745 = vmatprep.subr.mxu0 0.0
        %4746 = vmatpush1.xpose.msra.mxu0 0.0
        %4747 = vmatprep.subr.mxu0 0.0
        %4748 = vmatpush1.xpose.msra.mxu0 0.0
        %4749 = vmatprep.subr.mxu0 0.0
        %4750 = vmatpush1.xpose.msra.mxu0 0.0
        %4751 = vmatprep.subr.mxu0 0.0
        %4752 = vmatpush1.xpose.msra.mxu0 0.0
        %4753 = vmatprep.subr.mxu0 0.0
        %4754 = vmatpush1.xpose.msra.mxu0 0.0
        %4755 = vmatprep.subr.mxu0 0.0
        %4756 = vmatpush1.xpose.msra.mxu0 0.0
        %4757 = vmatprep.subr.mxu0 0.0
        %4758 = vmatpush1.xpose.msra.mxu0 0.0
        %4759 = vmatprep.subr.mxu0 0.0
        %4760 = vmatpush1.xpose.msra.mxu0 0.0
        %4761 = vmatprep.subr.mxu0 0.0
        %4762 = vmatpush1.xpose.msra.mxu0 %v3943
        %4763 = vmatprep.subr.mxu0 0.0
        %4764 = vmatpush2.xpose.msra.mxu0 0.0
        %4765 = vmatprep.subr.mxu0 0.0
        %4766 = vmatpush2.xpose.msra.mxu0 0.0
        %4767 = vmatprep.subr.mxu0 0.0
        %4768 = vmatpush2.xpose.msra.mxu0 0.0
        %4769 = vmatprep.subr.mxu0 0.0
        %4770 = vmatpush2.xpose.msra.mxu0 0.0
        %4771 = vmatprep.subr.mxu0 0.0
        %4772 = vmatpush2.xpose.msra.mxu0 0.0
        %4773 = vmatprep.subr.mxu0 0.0
        %4774 = vmatpush2.xpose.msra.mxu0 0.0
        %4775 = vmatprep.subr.mxu0 0.0
        %4776 = vmatpush2.xpose.msra.mxu0 0.0
        %4777 = vmatprep.subr.mxu0 0.0
        %4778 = vmatpush2.xpose.msra.mxu0 0.0
        %4779 = vmatprep.subr.mxu0 0.0
        %4780 = vmatpush2.xpose.msra.mxu0 0.0
        %4781 = vmatprep.subr.mxu0 0.0
        %4782 = vmatpush2.xpose.msra.mxu0 0.0
        %4783 = vmatprep.subr.mxu0 0.0
        %4784 = vmatpush2.xpose.msra.mxu0 0.0
        %4785 = vmatprep.subr.mxu0 0.0
        %4786 = vmatpush2.xpose.msra.mxu0 0.0
        %4787 = vmatprep.subr.mxu0 0.0
        %4788 = vmatpush2.xpose.msra.mxu0 0.0
        %4789 = vmatprep.subr.mxu0 0.0
        %4790 = vmatpush2.xpose.msra.mxu0 0.0
        %4791 = vmatprep.subr.mxu0 0.0
        %4792 = vmatpush2.xpose.msra.mxu0 0.0
        %4793 = vmatprep.subr.mxu0 0.0
        %4794 = vmatpush2.xpose.msra.mxu0 0.0
        %4795 = vmatprep.mubr.f32.mxu0 0.0
        %4796 = vmatmul.mubr.f32.gmra.mxu0 %v4449
        %v4797 = vpop.f32.mrf.mxu0
        %v4798 = vadd.f32 0.0, %v4797
        %v4799 = vpop.f32.mrf.mxu0
        %4800 = vdwg.mxu0
        %v4801 = vmax.f32 %v4299, %v4588
        %v4802 = vmax.f32 %v4372, %v4658
        %v4803 = vmax.f32 %v4445, %v4728
        %v4804 = vmax.f32 %v4518, %v4798
        %v4805 = vmax.f32 %v4225, %v4801
        %v4806 = vmax.f32 %v4226, %v4802
        %v4807 = vmax.f32 %v4227, %v4803
        %v4808 = vmax.f32 %v4228, %v4804
        %4813 = vrot.lane.b32.xlu0 %v4805, 8
        %v4814 = vpop.permute.xlu0 %4813
        %4815 = vrot.lane.b32.xlu0 %v4806, 8
        %v4816 = vpop.permute.xlu0 %4815
        %4817 = vrot.lane.b32.xlu0 %v4807, 8
        %v4818 = vpop.permute.xlu0 %4817
        %4819 = vrot.lane.b32.xlu0 %v4808, 8
        %v4820 = vpop.permute.xlu0 %4819
        %vm4825 = vcmask 93248
        %4826 = vst.msk [vmem:[%s176] sm:$0xf] %vm4825, %v4814
        %4827 = vst.msk [vmem:[%s176 + $0x4] sm:$0xf] %vm4825, %v4816
        %4828 = vst.msk [vmem:[%s176 + $0x8] sm:$0xf] %vm4825, %v4818
        %4829 = vst.msk [vmem:[%s176 + $0xc] sm:$0xf] %vm4825, %v4820
        %v4830 = vrot.slane %v720, 4
        %v4831 = vrot.slane %v573, 4
        %v4832 = vsel %vm638, %v4830, 0
        %v4834 = vsel %vm638, %v4831, 0
        %4836 = vmatprep.subr.mxu0 0.0
        %4837 = vmatpush1.xpose.msra.mxu0 0.0
        %4838 = vmatprep.subr.mxu0 0.0
        %4839 = vmatpush1.xpose.msra.mxu0 0.0
        %4840 = vmatprep.subr.mxu0 0.0
        %4841 = vmatpush1.xpose.msra.mxu0 0.0
        %4842 = vmatprep.subr.mxu0 0.0
        %4843 = vmatpush1.xpose.msra.mxu0 0.0
        %4844 = vmatprep.subr.mxu0 0.0
        %4845 = vmatpush1.xpose.msra.mxu0 0.0
        %4846 = vmatprep.subr.mxu0 0.0
        %4847 = vmatpush1.xpose.msra.mxu0 0.0
        %4848 = vmatprep.subr.mxu0 0.0
        %4849 = vmatpush1.xpose.msra.mxu0 0.0
        %4850 = vmatprep.subr.mxu0 0.0
        %4851 = vmatpush1.xpose.msra.mxu0 0.0
        %4852 = vmatprep.subr.mxu0 0.0
        %4853 = vmatpush1.xpose.msra.mxu0 0.0
        %4854 = vmatprep.subr.mxu0 0.0
        %4855 = vmatpush1.xpose.msra.mxu0 0.0
        %4856 = vmatprep.subr.mxu0 0.0
        %4857 = vmatpush1.xpose.msra.mxu0 0.0
        %4858 = vmatprep.subr.mxu0 0.0
        %4859 = vmatpush1.xpose.msra.mxu0 0.0
        %4860 = vmatprep.subr.mxu0 0.0
        %4861 = vmatpush1.xpose.msra.mxu0 0.0
        %4862 = vmatprep.subr.mxu0 0.0
        %4863 = vmatpush1.xpose.msra.mxu0 0.0
        %4864 = vmatprep.subr.mxu0 0.0
        %4865 = vmatpush1.xpose.msra.mxu0 0.0
        %4866 = vmatprep.subr.mxu0 0.0
        %4867 = vmatpush1.xpose.msra.mxu0 %v4834
        %4868 = vmatprep.subr.mxu0 0.0
        %4869 = vmatpush2.xpose.msra.mxu0 0.0
        %4870 = vmatprep.subr.mxu0 0.0
        %4871 = vmatpush2.xpose.msra.mxu0 0.0
        %4872 = vmatprep.subr.mxu0 0.0
        %4873 = vmatpush2.xpose.msra.mxu0 0.0
        %4874 = vmatprep.subr.mxu0 0.0
        %4875 = vmatpush2.xpose.msra.mxu0 0.0
        %4876 = vmatprep.subr.mxu0 0.0
        %4877 = vmatpush2.xpose.msra.mxu0 0.0
        %4878 = vmatprep.subr.mxu0 0.0
        %4879 = vmatpush2.xpose.msra.mxu0 0.0
        %4880 = vmatprep.subr.mxu0 0.0
        %4881 = vmatpush2.xpose.msra.mxu0 0.0
        %4882 = vmatprep.subr.mxu0 0.0
        %4883 = vmatpush2.xpose.msra.mxu0 0.0
        %4884 = vmatprep.subr.mxu0 0.0
        %4885 = vmatpush2.xpose.msra.mxu0 0.0
        %4886 = vmatprep.subr.mxu0 0.0
        %4887 = vmatpush2.xpose.msra.mxu0 0.0
        %4888 = vmatprep.subr.mxu0 0.0
        %4889 = vmatpush2.xpose.msra.mxu0 0.0
        %4890 = vmatprep.subr.mxu0 0.0
        %4891 = vmatpush2.xpose.msra.mxu0 0.0
        %4892 = vmatprep.subr.mxu0 0.0
        %4893 = vmatpush2.xpose.msra.mxu0 0.0
        %4894 = vmatprep.subr.mxu0 0.0
        %4895 = vmatpush2.xpose.msra.mxu0 0.0
        %4896 = vmatprep.subr.mxu0 0.0
        %4897 = vmatpush2.xpose.msra.mxu0 0.0
        %4898 = vmatprep.subr.mxu0 0.0
        %4899 = vmatpush2.xpose.msra.mxu0 0.0
        %4900 = vmatprep.mubr.f32.mxu0 0.0
        %4901 = vmatmul.mubr.f32.gmra.mxu0 %v4832
        %v4902 = vpop.f32.mrf.mxu0
        %v4903 = vadd.f32 0.0, %v4902
        %v4904 = vpop.f32.mrf.mxu0
        %4905 = vdwg.mxu0
        %v4906 = vrot.slane %v800, 4
        %v4907 = vsel %vm638, %v4906, 0
        %4909 = vmatprep.subr.mxu0 0.0
        %4910 = vmatpush1.xpose.msra.mxu0 0.0
        %4911 = vmatprep.subr.mxu0 0.0
        %4912 = vmatpush1.xpose.msra.mxu0 0.0
        %4913 = vmatprep.subr.mxu0 0.0
        %4914 = vmatpush1.xpose.msra.mxu0 0.0
        %4915 = vmatprep.subr.mxu0 0.0
        %4916 = vmatpush1.xpose.msra.mxu0 0.0
        %4917 = vmatprep.subr.mxu0 0.0
        %4918 = vmatpush1.xpose.msra.mxu0 0.0
        %4919 = vmatprep.subr.mxu0 0.0
        %4920 = vmatpush1.xpose.msra.mxu0 0.0
        %4921 = vmatprep.subr.mxu0 0.0
        %4922 = vmatpush1.xpose.msra.mxu0 0.0
        %4923 = vmatprep.subr.mxu0 0.0
        %4924 = vmatpush1.xpose.msra.mxu0 0.0
        %4925 = vmatprep.subr.mxu0 0.0
        %4926 = vmatpush1.xpose.msra.mxu0 0.0
        %4927 = vmatprep.subr.mxu0 0.0
        %4928 = vmatpush1.xpose.msra.mxu0 0.0
        %4929 = vmatprep.subr.mxu0 0.0
        %4930 = vmatpush1.xpose.msra.mxu0 0.0
        %4931 = vmatprep.subr.mxu0 0.0
        %4932 = vmatpush1.xpose.msra.mxu0 0.0
        %4933 = vmatprep.subr.mxu0 0.0
        %4934 = vmatpush1.xpose.msra.mxu0 0.0
        %4935 = vmatprep.subr.mxu0 0.0
        %4936 = vmatpush1.xpose.msra.mxu0 0.0
        %4937 = vmatprep.subr.mxu0 0.0
        %4938 = vmatpush1.xpose.msra.mxu0 0.0
        %4939 = vmatprep.subr.mxu0 0.0
        %4940 = vmatpush1.xpose.msra.mxu0 %v4834
        %4941 = vmatprep.subr.mxu0 0.0
        %4942 = vmatpush2.xpose.msra.mxu0 0.0
        %4943 = vmatprep.subr.mxu0 0.0
        %4944 = vmatpush2.xpose.msra.mxu0 0.0
        %4945 = vmatprep.subr.mxu0 0.0
        %4946 = vmatpush2.xpose.msra.mxu0 0.0
        %4947 = vmatprep.subr.mxu0 0.0
        %4948 = vmatpush2.xpose.msra.mxu0 0.0
        %4949 = vmatprep.subr.mxu0 0.0
        %4950 = vmatpush2.xpose.msra.mxu0 0.0
        %4951 = vmatprep.subr.mxu0 0.0
        %4952 = vmatpush2.xpose.msra.mxu0 0.0
        %4953 = vmatprep.subr.mxu0 0.0
        %4954 = vmatpush2.xpose.msra.mxu0 0.0
        %4955 = vmatprep.subr.mxu0 0.0
        %4956 = vmatpush2.xpose.msra.mxu0 0.0
        %4957 = vmatprep.subr.mxu0 0.0
        %4958 = vmatpush2.xpose.msra.mxu0 0.0
        %4959 = vmatprep.subr.mxu0 0.0
        %4960 = vmatpush2.xpose.msra.mxu0 0.0
        %4961 = vmatprep.subr.mxu0 0.0
        %4962 = vmatpush2.xpose.msra.mxu0 0.0
        %4963 = vmatprep.subr.mxu0 0.0
        %4964 = vmatpush2.xpose.msra.mxu0 0.0
        %4965 = vmatprep.subr.mxu0 0.0
        %4966 = vmatpush2.xpose.msra.mxu0 0.0
        %4967 = vmatprep.subr.mxu0 0.0
        %4968 = vmatpush2.xpose.msra.mxu0 0.0
        %4969 = vmatprep.subr.mxu0 0.0
        %4970 = vmatpush2.xpose.msra.mxu0 0.0
        %4971 = vmatprep.subr.mxu0 0.0
        %4972 = vmatpush2.xpose.msra.mxu0 0.0
        %4973 = vmatprep.mubr.f32.mxu0 0.0
        %4974 = vmatmul.mubr.f32.gmra.mxu0 %v4907
        %v4975 = vpop.f32.mrf.mxu0
        %v4976 = vadd.f32 0.0, %v4975
        %v4977 = vpop.f32.mrf.mxu0
        %4978 = vdwg.mxu0
        %v4979 = vrot.slane %v880, 4
        %v4980 = vsel %vm638, %v4979, 0
        %4982 = vmatprep.subr.mxu0 0.0
        %4983 = vmatpush1.xpose.msra.mxu0 0.0
        %4984 = vmatprep.subr.mxu0 0.0
        %4985 = vmatpush1.xpose.msra.mxu0 0.0
        %4986 = vmatprep.subr.mxu0 0.0
        %4987 = vmatpush1.xpose.msra.mxu0 0.0
        %4988 = vmatprep.subr.mxu0 0.0
        %4989 = vmatpush1.xpose.msra.mxu0 0.0
        %4990 = vmatprep.subr.mxu0 0.0
        %4991 = vmatpush1.xpose.msra.mxu0 0.0
        %4992 = vmatprep.subr.mxu0 0.0
        %4993 = vmatpush1.xpose.msra.mxu0 0.0
        %4994 = vmatprep.subr.mxu0 0.0
        %4995 = vmatpush1.xpose.msra.mxu0 0.0
        %4996 = vmatprep.subr.mxu0 0.0
        %4997 = vmatpush1.xpose.msra.mxu0 0.0
        %4998 = vmatprep.subr.mxu0 0.0
        %4999 = vmatpush1.xpose.msra.mxu0 0.0
        %5000 = vmatprep.subr.mxu0 0.0
        %5001 = vmatpush1.xpose.msra.mxu0 0.0
        %5002 = vmatprep.subr.mxu0 0.0
        %5003 = vmatpush1.xpose.msra.mxu0 0.0
        %5004 = vmatprep.subr.mxu0 0.0
        %5005 = vmatpush1.xpose.msra.mxu0 0.0
        %5006 = vmatprep.subr.mxu0 0.0
        %5007 = vmatpush1.xpose.msra.mxu0 0.0
        %5008 = vmatprep.subr.mxu0 0.0
        %5009 = vmatpush1.xpose.msra.mxu0 0.0
        %5010 = vmatprep.subr.mxu0 0.0
        %5011 = vmatpush1.xpose.msra.mxu0 0.0
        %5012 = vmatprep.subr.mxu0 0.0
        %5013 = vmatpush1.xpose.msra.mxu0 %v4834
        %5014 = vmatprep.subr.mxu0 0.0
        %5015 = vmatpush2.xpose.msra.mxu0 0.0
        %5016 = vmatprep.subr.mxu0 0.0
        %5017 = vmatpush2.xpose.msra.mxu0 0.0
        %5018 = vmatprep.subr.mxu0 0.0
        %5019 = vmatpush2.xpose.msra.mxu0 0.0
        %5020 = vmatprep.subr.mxu0 0.0
        %5021 = vmatpush2.xpose.msra.mxu0 0.0
        %5022 = vmatprep.subr.mxu0 0.0
        %5023 = vmatpush2.xpose.msra.mxu0 0.0
        %5024 = vmatprep.subr.mxu0 0.0
        %5025 = vmatpush2.xpose.msra.mxu0 0.0
        %5026 = vmatprep.subr.mxu0 0.0
        %5027 = vmatpush2.xpose.msra.mxu0 0.0
        %5028 = vmatprep.subr.mxu0 0.0
        %5029 = vmatpush2.xpose.msra.mxu0 0.0
        %5030 = vmatprep.subr.mxu0 0.0
        %5031 = vmatpush2.xpose.msra.mxu0 0.0
        %5032 = vmatprep.subr.mxu0 0.0
        %5033 = vmatpush2.xpose.msra.mxu0 0.0
        %5034 = vmatprep.subr.mxu0 0.0
        %5035 = vmatpush2.xpose.msra.mxu0 0.0
        %5036 = vmatprep.subr.mxu0 0.0
        %5037 = vmatpush2.xpose.msra.mxu0 0.0
        %5038 = vmatprep.subr.mxu0 0.0
        %5039 = vmatpush2.xpose.msra.mxu0 0.0
        %5040 = vmatprep.subr.mxu0 0.0
        %5041 = vmatpush2.xpose.msra.mxu0 0.0
        %5042 = vmatprep.subr.mxu0 0.0
        %5043 = vmatpush2.xpose.msra.mxu0 0.0
        %5044 = vmatprep.subr.mxu0 0.0
        %5045 = vmatpush2.xpose.msra.mxu0 0.0
        %5046 = vmatprep.mubr.f32.mxu0 0.0
        %5047 = vmatmul.mubr.f32.gmra.mxu0 %v4980
        %v5048 = vpop.f32.mrf.mxu0
        %v5049 = vadd.f32 0.0, %v5048
        %v5050 = vpop.f32.mrf.mxu0
        %5051 = vdwg.mxu0
        %v5052 = vrot.slane %v960, 4
        %v5053 = vsel %vm638, %v5052, 0
        %5055 = vmatprep.subr.mxu0 0.0
        %5056 = vmatpush1.xpose.msra.mxu0 0.0
        %5057 = vmatprep.subr.mxu0 0.0
        %5058 = vmatpush1.xpose.msra.mxu0 0.0
        %5059 = vmatprep.subr.mxu0 0.0
        %5060 = vmatpush1.xpose.msra.mxu0 0.0
        %5061 = vmatprep.subr.mxu0 0.0
        %5062 = vmatpush1.xpose.msra.mxu0 0.0
        %5063 = vmatprep.subr.mxu0 0.0
        %5064 = vmatpush1.xpose.msra.mxu0 0.0
        %5065 = vmatprep.subr.mxu0 0.0
        %5066 = vmatpush1.xpose.msra.mxu0 0.0
        %5067 = vmatprep.subr.mxu0 0.0
        %5068 = vmatpush1.xpose.msra.mxu0 0.0
        %5069 = vmatprep.subr.mxu0 0.0
        %5070 = vmatpush1.xpose.msra.mxu0 0.0
        %5071 = vmatprep.subr.mxu0 0.0
        %5072 = vmatpush1.xpose.msra.mxu0 0.0
        %5073 = vmatprep.subr.mxu0 0.0
        %5074 = vmatpush1.xpose.msra.mxu0 0.0
        %5075 = vmatprep.subr.mxu0 0.0
        %5076 = vmatpush1.xpose.msra.mxu0 0.0
        %5077 = vmatprep.subr.mxu0 0.0
        %5078 = vmatpush1.xpose.msra.mxu0 0.0
        %5079 = vmatprep.subr.mxu0 0.0
        %5080 = vmatpush1.xpose.msra.mxu0 0.0
        %5081 = vmatprep.subr.mxu0 0.0
        %5082 = vmatpush1.xpose.msra.mxu0 0.0
        %5083 = vmatprep.subr.mxu0 0.0
        %5084 = vmatpush1.xpose.msra.mxu0 0.0
        %5085 = vmatprep.subr.mxu0 0.0
        %5086 = vmatpush1.xpose.msra.mxu0 %v4834
        %5087 = vmatprep.subr.mxu0 0.0
        %5088 = vmatpush2.xpose.msra.mxu0 0.0
        %5089 = vmatprep.subr.mxu0 0.0
        %5090 = vmatpush2.xpose.msra.mxu0 0.0
        %5091 = vmatprep.subr.mxu0 0.0
        %5092 = vmatpush2.xpose.msra.mxu0 0.0
        %5093 = vmatprep.subr.mxu0 0.0
        %5094 = vmatpush2.xpose.msra.mxu0 0.0
        %5095 = vmatprep.subr.mxu0 0.0
        %5096 = vmatpush2.xpose.msra.mxu0 0.0
        %5097 = vmatprep.subr.mxu0 0.0
        %5098 = vmatpush2.xpose.msra.mxu0 0.0
        %5099 = vmatprep.subr.mxu0 0.0
        %5100 = vmatpush2.xpose.msra.mxu0 0.0
        %5101 = vmatprep.subr.mxu0 0.0
        %5102 = vmatpush2.xpose.msra.mxu0 0.0
        %5103 = vmatprep.subr.mxu0 0.0
        %5104 = vmatpush2.xpose.msra.mxu0 0.0
        %5105 = vmatprep.subr.mxu0 0.0
        %5106 = vmatpush2.xpose.msra.mxu0 0.0
        %5107 = vmatprep.subr.mxu0 0.0
        %5108 = vmatpush2.xpose.msra.mxu0 0.0
        %5109 = vmatprep.subr.mxu0 0.0
        %5110 = vmatpush2.xpose.msra.mxu0 0.0
        %5111 = vmatprep.subr.mxu0 0.0
        %5112 = vmatpush2.xpose.msra.mxu0 0.0
        %5113 = vmatprep.subr.mxu0 0.0
        %5114 = vmatpush2.xpose.msra.mxu0 0.0
        %5115 = vmatprep.subr.mxu0 0.0
        %5116 = vmatpush2.xpose.msra.mxu0 0.0
        %5117 = vmatprep.subr.mxu0 0.0
        %5118 = vmatpush2.xpose.msra.mxu0 0.0
        %5119 = vmatprep.mubr.f32.mxu0 0.0
        %5120 = vmatmul.mubr.f32.gmra.mxu0 %v5053
        %v5121 = vpop.f32.mrf.mxu0
        %v5122 = vadd.f32 0.0, %v5121
        %v5123 = vpop.f32.mrf.mxu0
        %5124 = vdwg.mxu0
        %v5125 = vrot.slane %v636, 4
        %v5126 = vsel %vm638, %v5125, 0
        %5128 = vmatprep.subr.mxu0 0.0
        %5129 = vmatpush1.xpose.msra.mxu0 0.0
        %5130 = vmatprep.subr.mxu0 0.0
        %5131 = vmatpush1.xpose.msra.mxu0 0.0
        %5132 = vmatprep.subr.mxu0 0.0
        %5133 = vmatpush1.xpose.msra.mxu0 0.0
        %5134 = vmatprep.subr.mxu0 0.0
        %5135 = vmatpush1.xpose.msra.mxu0 0.0
        %5136 = vmatprep.subr.mxu0 0.0
        %5137 = vmatpush1.xpose.msra.mxu0 0.0
        %5138 = vmatprep.subr.mxu0 0.0
        %5139 = vmatpush1.xpose.msra.mxu0 0.0
        %5140 = vmatprep.subr.mxu0 0.0
        %5141 = vmatpush1.xpose.msra.mxu0 0.0
        %5142 = vmatprep.subr.mxu0 0.0
        %5143 = vmatpush1.xpose.msra.mxu0 0.0
        %5144 = vmatprep.subr.mxu0 0.0
        %5145 = vmatpush1.xpose.msra.mxu0 0.0
        %5146 = vmatprep.subr.mxu0 0.0
        %5147 = vmatpush1.xpose.msra.mxu0 0.0
        %5148 = vmatprep.subr.mxu0 0.0
        %5149 = vmatpush1.xpose.msra.mxu0 0.0
        %5150 = vmatprep.subr.mxu0 0.0
        %5151 = vmatpush1.xpose.msra.mxu0 0.0
        %5152 = vmatprep.subr.mxu0 0.0
        %5153 = vmatpush1.xpose.msra.mxu0 0.0
        %5154 = vmatprep.subr.mxu0 0.0
        %5155 = vmatpush1.xpose.msra.mxu0 0.0
        %5156 = vmatprep.subr.mxu0 0.0
        %5157 = vmatpush1.xpose.msra.mxu0 0.0
        %5158 = vmatprep.subr.mxu0 0.0
        %5159 = vmatpush1.xpose.msra.mxu0 %v5126
        %5160 = vmatprep.subr.mxu0 0.0
        %5161 = vmatpush2.xpose.msra.mxu0 0.0
        %5162 = vmatprep.subr.mxu0 0.0
        %5163 = vmatpush2.xpose.msra.mxu0 0.0
        %5164 = vmatprep.subr.mxu0 0.0
        %5165 = vmatpush2.xpose.msra.mxu0 0.0
        %5166 = vmatprep.subr.mxu0 0.0
        %5167 = vmatpush2.xpose.msra.mxu0 0.0
        %5168 = vmatprep.subr.mxu0 0.0
        %5169 = vmatpush2.xpose.msra.mxu0 0.0
        %5170 = vmatprep.subr.mxu0 0.0
        %5171 = vmatpush2.xpose.msra.mxu0 0.0
        %5172 = vmatprep.subr.mxu0 0.0
        %5173 = vmatpush2.xpose.msra.mxu0 0.0
        %5174 = vmatprep.subr.mxu0 0.0
        %5175 = vmatpush2.xpose.msra.mxu0 0.0
        %5176 = vmatprep.subr.mxu0 0.0
        %5177 = vmatpush2.xpose.msra.mxu0 0.0
        %5178 = vmatprep.subr.mxu0 0.0
        %5179 = vmatpush2.xpose.msra.mxu0 0.0
        %5180 = vmatprep.subr.mxu0 0.0
        %5181 = vmatpush2.xpose.msra.mxu0 0.0
        %5182 = vmatprep.subr.mxu0 0.0
        %5183 = vmatpush2.xpose.msra.mxu0 0.0
        %5184 = vmatprep.subr.mxu0 0.0
        %5185 = vmatpush2.xpose.msra.mxu0 0.0
        %5186 = vmatprep.subr.mxu0 0.0
        %5187 = vmatpush2.xpose.msra.mxu0 0.0
        %5188 = vmatprep.subr.mxu0 0.0
        %5189 = vmatpush2.xpose.msra.mxu0 0.0
        %5190 = vmatprep.subr.mxu0 0.0
        %5191 = vmatpush2.xpose.msra.mxu0 0.0
        %5192 = vmatprep.mubr.f32.mxu0 0.0
        %5193 = vmatmul.mubr.f32.gmra.mxu0 %v4832
        %v5194 = vpop.f32.mrf.mxu0
        %v5195 = vadd.f32 0.0, %v5194
        %v5196 = vpop.f32.mrf.mxu0
        %5197 = vdwg.mxu0
        %5198 = vmatprep.subr.mxu0 0.0
        %5199 = vmatpush1.xpose.msra.mxu0 0.0
        %5200 = vmatprep.subr.mxu0 0.0
        %5201 = vmatpush1.xpose.msra.mxu0 0.0
        %5202 = vmatprep.subr.mxu0 0.0
        %5203 = vmatpush1.xpose.msra.mxu0 0.0
        %5204 = vmatprep.subr.mxu0 0.0
        %5205 = vmatpush1.xpose.msra.mxu0 0.0
        %5206 = vmatprep.subr.mxu0 0.0
        %5207 = vmatpush1.xpose.msra.mxu0 0.0
        %5208 = vmatprep.subr.mxu0 0.0
        %5209 = vmatpush1.xpose.msra.mxu0 0.0
        %5210 = vmatprep.subr.mxu0 0.0
        %5211 = vmatpush1.xpose.msra.mxu0 0.0
        %5212 = vmatprep.subr.mxu0 0.0
        %5213 = vmatpush1.xpose.msra.mxu0 0.0
        %5214 = vmatprep.subr.mxu0 0.0
        %5215 = vmatpush1.xpose.msra.mxu0 0.0
        %5216 = vmatprep.subr.mxu0 0.0
        %5217 = vmatpush1.xpose.msra.mxu0 0.0
        %5218 = vmatprep.subr.mxu0 0.0
        %5219 = vmatpush1.xpose.msra.mxu0 0.0
        %5220 = vmatprep.subr.mxu0 0.0
        %5221 = vmatpush1.xpose.msra.mxu0 0.0
        %5222 = vmatprep.subr.mxu0 0.0
        %5223 = vmatpush1.xpose.msra.mxu0 0.0
        %5224 = vmatprep.subr.mxu0 0.0
        %5225 = vmatpush1.xpose.msra.mxu0 0.0
        %5226 = vmatprep.subr.mxu0 0.0
        %5227 = vmatpush1.xpose.msra.mxu0 0.0
        %5228 = vmatprep.subr.mxu0 0.0
        %5229 = vmatpush1.xpose.msra.mxu0 %v5126
        %5230 = vmatprep.subr.mxu0 0.0
        %5231 = vmatpush2.xpose.msra.mxu0 0.0
        %5232 = vmatprep.subr.mxu0 0.0
        %5233 = vmatpush2.xpose.msra.mxu0 0.0
        %5234 = vmatprep.subr.mxu0 0.0
        %5235 = vmatpush2.xpose.msra.mxu0 0.0
        %5236 = vmatprep.subr.mxu0 0.0
        %5237 = vmatpush2.xpose.msra.mxu0 0.0
        %5238 = vmatprep.subr.mxu0 0.0
        %5239 = vmatpush2.xpose.msra.mxu0 0.0
        %5240 = vmatprep.subr.mxu0 0.0
        %5241 = vmatpush2.xpose.msra.mxu0 0.0
        %5242 = vmatprep.subr.mxu0 0.0
        %5243 = vmatpush2.xpose.msra.mxu0 0.0
        %5244 = vmatprep.subr.mxu0 0.0
        %5245 = vmatpush2.xpose.msra.mxu0 0.0
        %5246 = vmatprep.subr.mxu0 0.0
        %5247 = vmatpush2.xpose.msra.mxu0 0.0
        %5248 = vmatprep.subr.mxu0 0.0
        %5249 = vmatpush2.xpose.msra.mxu0 0.0
        %5250 = vmatprep.subr.mxu0 0.0
        %5251 = vmatpush2.xpose.msra.mxu0 0.0
        %5252 = vmatprep.subr.mxu0 0.0
        %5253 = vmatpush2.xpose.msra.mxu0 0.0
        %5254 = vmatprep.subr.mxu0 0.0
        %5255 = vmatpush2.xpose.msra.mxu0 0.0
        %5256 = vmatprep.subr.mxu0 0.0
        %5257 = vmatpush2.xpose.msra.mxu0 0.0
        %5258 = vmatprep.subr.mxu0 0.0
        %5259 = vmatpush2.xpose.msra.mxu0 0.0
        %5260 = vmatprep.subr.mxu0 0.0
        %5261 = vmatpush2.xpose.msra.mxu0 0.0
        %5262 = vmatprep.mubr.f32.mxu0 0.0
        %5263 = vmatmul.mubr.f32.gmra.mxu0 %v4907
        %v5264 = vpop.f32.mrf.mxu0
        %v5265 = vadd.f32 0.0, %v5264
        %v5266 = vpop.f32.mrf.mxu0
        %5267 = vdwg.mxu0
        %5268 = vmatprep.subr.mxu0 0.0
        %5269 = vmatpush1.xpose.msra.mxu0 0.0
        %5270 = vmatprep.subr.mxu0 0.0
        %5271 = vmatpush1.xpose.msra.mxu0 0.0
        %5272 = vmatprep.subr.mxu0 0.0
        %5273 = vmatpush1.xpose.msra.mxu0 0.0
        %5274 = vmatprep.subr.mxu0 0.0
        %5275 = vmatpush1.xpose.msra.mxu0 0.0
        %5276 = vmatprep.subr.mxu0 0.0
        %5277 = vmatpush1.xpose.msra.mxu0 0.0
        %5278 = vmatprep.subr.mxu0 0.0
        %5279 = vmatpush1.xpose.msra.mxu0 0.0
        %5280 = vmatprep.subr.mxu0 0.0
        %5281 = vmatpush1.xpose.msra.mxu0 0.0
        %5282 = vmatprep.subr.mxu0 0.0
        %5283 = vmatpush1.xpose.msra.mxu0 0.0
        %5284 = vmatprep.subr.mxu0 0.0
        %5285 = vmatpush1.xpose.msra.mxu0 0.0
        %5286 = vmatprep.subr.mxu0 0.0
        %5287 = vmatpush1.xpose.msra.mxu0 0.0
        %5288 = vmatprep.subr.mxu0 0.0
        %5289 = vmatpush1.xpose.msra.mxu0 0.0
        %5290 = vmatprep.subr.mxu0 0.0
        %5291 = vmatpush1.xpose.msra.mxu0 0.0
        %5292 = vmatprep.subr.mxu0 0.0
        %5293 = vmatpush1.xpose.msra.mxu0 0.0
        %5294 = vmatprep.subr.mxu0 0.0
        %5295 = vmatpush1.xpose.msra.mxu0 0.0
        %5296 = vmatprep.subr.mxu0 0.0
        %5297 = vmatpush1.xpose.msra.mxu0 0.0
        %5298 = vmatprep.subr.mxu0 0.0
        %5299 = vmatpush1.xpose.msra.mxu0 %v5126
        %5300 = vmatprep.subr.mxu0 0.0
        %5301 = vmatpush2.xpose.msra.mxu0 0.0
        %5302 = vmatprep.subr.mxu0 0.0
        %5303 = vmatpush2.xpose.msra.mxu0 0.0
        %5304 = vmatprep.subr.mxu0 0.0
        %5305 = vmatpush2.xpose.msra.mxu0 0.0
        %5306 = vmatprep.subr.mxu0 0.0
        %5307 = vmatpush2.xpose.msra.mxu0 0.0
        %5308 = vmatprep.subr.mxu0 0.0
        %5309 = vmatpush2.xpose.msra.mxu0 0.0
        %5310 = vmatprep.subr.mxu0 0.0
        %5311 = vmatpush2.xpose.msra.mxu0 0.0
        %5312 = vmatprep.subr.mxu0 0.0
        %5313 = vmatpush2.xpose.msra.mxu0 0.0
        %5314 = vmatprep.subr.mxu0 0.0
        %5315 = vmatpush2.xpose.msra.mxu0 0.0
        %5316 = vmatprep.subr.mxu0 0.0
        %5317 = vmatpush2.xpose.msra.mxu0 0.0
        %5318 = vmatprep.subr.mxu0 0.0
        %5319 = vmatpush2.xpose.msra.mxu0 0.0
        %5320 = vmatprep.subr.mxu0 0.0
        %5321 = vmatpush2.xpose.msra.mxu0 0.0
        %5322 = vmatprep.subr.mxu0 0.0
        %5323 = vmatpush2.xpose.msra.mxu0 0.0
        %5324 = vmatprep.subr.mxu0 0.0
        %5325 = vmatpush2.xpose.msra.mxu0 0.0
        %5326 = vmatprep.subr.mxu0 0.0
        %5327 = vmatpush2.xpose.msra.mxu0 0.0
        %5328 = vmatprep.subr.mxu0 0.0
        %5329 = vmatpush2.xpose.msra.mxu0 0.0
        %5330 = vmatprep.subr.mxu0 0.0
        %5331 = vmatpush2.xpose.msra.mxu0 0.0
        %5332 = vmatprep.mubr.f32.mxu0 0.0
        %5333 = vmatmul.mubr.f32.gmra.mxu0 %v4980
        %v5334 = vpop.f32.mrf.mxu0
        %v5335 = vadd.f32 0.0, %v5334
        %v5336 = vpop.f32.mrf.mxu0
        %5337 = vdwg.mxu0
        %5338 = vmatprep.subr.mxu0 0.0
        %5339 = vmatpush1.xpose.msra.mxu0 0.0
        %5340 = vmatprep.subr.mxu0 0.0
        %5341 = vmatpush1.xpose.msra.mxu0 0.0
        %5342 = vmatprep.subr.mxu0 0.0
        %5343 = vmatpush1.xpose.msra.mxu0 0.0
        %5344 = vmatprep.subr.mxu0 0.0
        %5345 = vmatpush1.xpose.msra.mxu0 0.0
        %5346 = vmatprep.subr.mxu0 0.0
        %5347 = vmatpush1.xpose.msra.mxu0 0.0
        %5348 = vmatprep.subr.mxu0 0.0
        %5349 = vmatpush1.xpose.msra.mxu0 0.0
        %5350 = vmatprep.subr.mxu0 0.0
        %5351 = vmatpush1.xpose.msra.mxu0 0.0
        %5352 = vmatprep.subr.mxu0 0.0
        %5353 = vmatpush1.xpose.msra.mxu0 0.0
        %5354 = vmatprep.subr.mxu0 0.0
        %5355 = vmatpush1.xpose.msra.mxu0 0.0
        %5356 = vmatprep.subr.mxu0 0.0
        %5357 = vmatpush1.xpose.msra.mxu0 0.0
        %5358 = vmatprep.subr.mxu0 0.0
        %5359 = vmatpush1.xpose.msra.mxu0 0.0
        %5360 = vmatprep.subr.mxu0 0.0
        %5361 = vmatpush1.xpose.msra.mxu0 0.0
        %5362 = vmatprep.subr.mxu0 0.0
        %5363 = vmatpush1.xpose.msra.mxu0 0.0
        %5364 = vmatprep.subr.mxu0 0.0
        %5365 = vmatpush1.xpose.msra.mxu0 0.0
        %5366 = vmatprep.subr.mxu0 0.0
        %5367 = vmatpush1.xpose.msra.mxu0 0.0
        %5368 = vmatprep.subr.mxu0 0.0
        %5369 = vmatpush1.xpose.msra.mxu0 %v5126
        %5370 = vmatprep.subr.mxu0 0.0
        %5371 = vmatpush2.xpose.msra.mxu0 0.0
        %5372 = vmatprep.subr.mxu0 0.0
        %5373 = vmatpush2.xpose.msra.mxu0 0.0
        %5374 = vmatprep.subr.mxu0 0.0
        %5375 = vmatpush2.xpose.msra.mxu0 0.0
        %5376 = vmatprep.subr.mxu0 0.0
        %5377 = vmatpush2.xpose.msra.mxu0 0.0
        %5378 = vmatprep.subr.mxu0 0.0
        %5379 = vmatpush2.xpose.msra.mxu0 0.0
        %5380 = vmatprep.subr.mxu0 0.0
        %5381 = vmatpush2.xpose.msra.mxu0 0.0
        %5382 = vmatprep.subr.mxu0 0.0
        %5383 = vmatpush2.xpose.msra.mxu0 0.0
        %5384 = vmatprep.subr.mxu0 0.0
        %5385 = vmatpush2.xpose.msra.mxu0 0.0
        %5386 = vmatprep.subr.mxu0 0.0
        %5387 = vmatpush2.xpose.msra.mxu0 0.0
        %5388 = vmatprep.subr.mxu0 0.0
        %5389 = vmatpush2.xpose.msra.mxu0 0.0
        %5390 = vmatprep.subr.mxu0 0.0
        %5391 = vmatpush2.xpose.msra.mxu0 0.0
        %5392 = vmatprep.subr.mxu0 0.0
        %5393 = vmatpush2.xpose.msra.mxu0 0.0
        %5394 = vmatprep.subr.mxu0 0.0
        %5395 = vmatpush2.xpose.msra.mxu0 0.0
        %5396 = vmatprep.subr.mxu0 0.0
        %5397 = vmatpush2.xpose.msra.mxu0 0.0
        %5398 = vmatprep.subr.mxu0 0.0
        %5399 = vmatpush2.xpose.msra.mxu0 0.0
        %5400 = vmatprep.subr.mxu0 0.0
        %5401 = vmatpush2.xpose.msra.mxu0 0.0
        %5402 = vmatprep.mubr.f32.mxu0 0.0
        %5403 = vmatmul.mubr.f32.gmra.mxu0 %v5053
        %v5404 = vpop.f32.mrf.mxu0
        %v5405 = vadd.f32 0.0, %v5404
        %v5406 = vpop.f32.mrf.mxu0
        %5407 = vdwg.mxu0
        %v5408 = vmax.f32 %v4903, %v5195
        %v5409 = vmax.f32 %v4976, %v5265
        %v5410 = vmax.f32 %v5049, %v5335
        %v5411 = vmax.f32 %v5122, %v5405
        %v5412 = vrot.slane %v1049, 4
        %v5413 = vsel %vm638, %v5412, 0
        %5415 = vmatprep.subr.mxu0 0.0
        %5416 = vmatpush1.xpose.msra.mxu0 0.0
        %5417 = vmatprep.subr.mxu0 0.0
        %5418 = vmatpush1.xpose.msra.mxu0 0.0
        %5419 = vmatprep.subr.mxu0 0.0
        %5420 = vmatpush1.xpose.msra.mxu0 0.0
        %5421 = vmatprep.subr.mxu0 0.0
        %5422 = vmatpush1.xpose.msra.mxu0 0.0
        %5423 = vmatprep.subr.mxu0 0.0
        %5424 = vmatpush1.xpose.msra.mxu0 0.0
        %5425 = vmatprep.subr.mxu0 0.0
        %5426 = vmatpush1.xpose.msra.mxu0 0.0
        %5427 = vmatprep.subr.mxu0 0.0
        %5428 = vmatpush1.xpose.msra.mxu0 0.0
        %5429 = vmatprep.subr.mxu0 0.0
        %5430 = vmatpush1.xpose.msra.mxu0 0.0
        %5431 = vmatprep.subr.mxu0 0.0
        %5432 = vmatpush1.xpose.msra.mxu0 0.0
        %5433 = vmatprep.subr.mxu0 0.0
        %5434 = vmatpush1.xpose.msra.mxu0 0.0
        %5435 = vmatprep.subr.mxu0 0.0
        %5436 = vmatpush1.xpose.msra.mxu0 0.0
        %5437 = vmatprep.subr.mxu0 0.0
        %5438 = vmatpush1.xpose.msra.mxu0 0.0
        %5439 = vmatprep.subr.mxu0 0.0
        %5440 = vmatpush1.xpose.msra.mxu0 0.0
        %5441 = vmatprep.subr.mxu0 0.0
        %5442 = vmatpush1.xpose.msra.mxu0 0.0
        %5443 = vmatprep.subr.mxu0 0.0
        %5444 = vmatpush1.xpose.msra.mxu0 0.0
        %5445 = vmatprep.subr.mxu0 0.0
        %5446 = vmatpush1.xpose.msra.mxu0 %v4834
        %5447 = vmatprep.subr.mxu0 0.0
        %5448 = vmatpush2.xpose.msra.mxu0 0.0
        %5449 = vmatprep.subr.mxu0 0.0
        %5450 = vmatpush2.xpose.msra.mxu0 0.0
        %5451 = vmatprep.subr.mxu0 0.0
        %5452 = vmatpush2.xpose.msra.mxu0 0.0
        %5453 = vmatprep.subr.mxu0 0.0
        %5454 = vmatpush2.xpose.msra.mxu0 0.0
        %5455 = vmatprep.subr.mxu0 0.0
        %5456 = vmatpush2.xpose.msra.mxu0 0.0
        %5457 = vmatprep.subr.mxu0 0.0
        %5458 = vmatpush2.xpose.msra.mxu0 0.0
        %5459 = vmatprep.subr.mxu0 0.0
        %5460 = vmatpush2.xpose.msra.mxu0 0.0
        %5461 = vmatprep.subr.mxu0 0.0
        %5462 = vmatpush2.xpose.msra.mxu0 0.0
        %5463 = vmatprep.subr.mxu0 0.0
        %5464 = vmatpush2.xpose.msra.mxu0 0.0
        %5465 = vmatprep.subr.mxu0 0.0
        %5466 = vmatpush2.xpose.msra.mxu0 0.0
        %5467 = vmatprep.subr.mxu0 0.0
        %5468 = vmatpush2.xpose.msra.mxu0 0.0
        %5469 = vmatprep.subr.mxu0 0.0
        %5470 = vmatpush2.xpose.msra.mxu0 0.0
        %5471 = vmatprep.subr.mxu0 0.0
        %5472 = vmatpush2.xpose.msra.mxu0 0.0
        %5473 = vmatprep.subr.mxu0 0.0
        %5474 = vmatpush2.xpose.msra.mxu0 0.0
        %5475 = vmatprep.subr.mxu0 0.0
        %5476 = vmatpush2.xpose.msra.mxu0 0.0
        %5477 = vmatprep.subr.mxu0 0.0
        %5478 = vmatpush2.xpose.msra.mxu0 0.0
        %5479 = vmatprep.mubr.f32.mxu0 0.0
        %5480 = vmatmul.mubr.f32.gmra.mxu0 %v5413
        %v5481 = vpop.f32.mrf.mxu0
        %v5482 = vadd.f32 0.0, %v5481
        %v5483 = vpop.f32.mrf.mxu0
        %5484 = vdwg.mxu0
        %v5485 = vrot.slane %v1129, 4
        %v5486 = vsel %vm638, %v5485, 0
        %5488 = vmatprep.subr.mxu0 0.0
        %5489 = vmatpush1.xpose.msra.mxu0 0.0
        %5490 = vmatprep.subr.mxu0 0.0
        %5491 = vmatpush1.xpose.msra.mxu0 0.0
        %5492 = vmatprep.subr.mxu0 0.0
        %5493 = vmatpush1.xpose.msra.mxu0 0.0
        %5494 = vmatprep.subr.mxu0 0.0
        %5495 = vmatpush1.xpose.msra.mxu0 0.0
        %5496 = vmatprep.subr.mxu0 0.0
        %5497 = vmatpush1.xpose.msra.mxu0 0.0
        %5498 = vmatprep.subr.mxu0 0.0
        %5499 = vmatpush1.xpose.msra.mxu0 0.0
        %5500 = vmatprep.subr.mxu0 0.0
        %5501 = vmatpush1.xpose.msra.mxu0 0.0
        %5502 = vmatprep.subr.mxu0 0.0
        %5503 = vmatpush1.xpose.msra.mxu0 0.0
        %5504 = vmatprep.subr.mxu0 0.0
        %5505 = vmatpush1.xpose.msra.mxu0 0.0
        %5506 = vmatprep.subr.mxu0 0.0
        %5507 = vmatpush1.xpose.msra.mxu0 0.0
        %5508 = vmatprep.subr.mxu0 0.0
        %5509 = vmatpush1.xpose.msra.mxu0 0.0
        %5510 = vmatprep.subr.mxu0 0.0
        %5511 = vmatpush1.xpose.msra.mxu0 0.0
        %5512 = vmatprep.subr.mxu0 0.0
        %5513 = vmatpush1.xpose.msra.mxu0 0.0
        %5514 = vmatprep.subr.mxu0 0.0
        %5515 = vmatpush1.xpose.msra.mxu0 0.0
        %5516 = vmatprep.subr.mxu0 0.0
        %5517 = vmatpush1.xpose.msra.mxu0 0.0
        %5518 = vmatprep.subr.mxu0 0.0
        %5519 = vmatpush1.xpose.msra.mxu0 %v4834
        %5520 = vmatprep.subr.mxu0 0.0
        %5521 = vmatpush2.xpose.msra.mxu0 0.0
        %5522 = vmatprep.subr.mxu0 0.0
        %5523 = vmatpush2.xpose.msra.mxu0 0.0
        %5524 = vmatprep.subr.mxu0 0.0
        %5525 = vmatpush2.xpose.msra.mxu0 0.0
        %5526 = vmatprep.subr.mxu0 0.0
        %5527 = vmatpush2.xpose.msra.mxu0 0.0
        %5528 = vmatprep.subr.mxu0 0.0
        %5529 = vmatpush2.xpose.msra.mxu0 0.0
        %5530 = vmatprep.subr.mxu0 0.0
        %5531 = vmatpush2.xpose.msra.mxu0 0.0
        %5532 = vmatprep.subr.mxu0 0.0
        %5533 = vmatpush2.xpose.msra.mxu0 0.0
        %5534 = vmatprep.subr.mxu0 0.0
        %5535 = vmatpush2.xpose.msra.mxu0 0.0
        %5536 = vmatprep.subr.mxu0 0.0
        %5537 = vmatpush2.xpose.msra.mxu0 0.0
        %5538 = vmatprep.subr.mxu0 0.0
        %5539 = vmatpush2.xpose.msra.mxu0 0.0
        %5540 = vmatprep.subr.mxu0 0.0
        %5541 = vmatpush2.xpose.msra.mxu0 0.0
        %5542 = vmatprep.subr.mxu0 0.0
        %5543 = vmatpush2.xpose.msra.mxu0 0.0
        %5544 = vmatprep.subr.mxu0 0.0
        %5545 = vmatpush2.xpose.msra.mxu0 0.0
        %5546 = vmatprep.subr.mxu0 0.0
        %5547 = vmatpush2.xpose.msra.mxu0 0.0
        %5548 = vmatprep.subr.mxu0 0.0
        %5549 = vmatpush2.xpose.msra.mxu0 0.0
        %5550 = vmatprep.subr.mxu0 0.0
        %5551 = vmatpush2.xpose.msra.mxu0 0.0
        %5552 = vmatprep.mubr.f32.mxu0 0.0
        %5553 = vmatmul.mubr.f32.gmra.mxu0 %v5486
        %v5554 = vpop.f32.mrf.mxu0
        %v5555 = vadd.f32 0.0, %v5554
        %v5556 = vpop.f32.mrf.mxu0
        %5557 = vdwg.mxu0
        %v5558 = vrot.slane %v1209, 4
        %v5559 = vsel %vm638, %v5558, 0
        %5561 = vmatprep.subr.mxu0 0.0
        %5562 = vmatpush1.xpose.msra.mxu0 0.0
        %5563 = vmatprep.subr.mxu0 0.0
        %5564 = vmatpush1.xpose.msra.mxu0 0.0
        %5565 = vmatprep.subr.mxu0 0.0
        %5566 = vmatpush1.xpose.msra.mxu0 0.0
        %5567 = vmatprep.subr.mxu0 0.0
        %5568 = vmatpush1.xpose.msra.mxu0 0.0
        %5569 = vmatprep.subr.mxu0 0.0
        %5570 = vmatpush1.xpose.msra.mxu0 0.0
        %5571 = vmatprep.subr.mxu0 0.0
        %5572 = vmatpush1.xpose.msra.mxu0 0.0
        %5573 = vmatprep.subr.mxu0 0.0
        %5574 = vmatpush1.xpose.msra.mxu0 0.0
        %5575 = vmatprep.subr.mxu0 0.0
        %5576 = vmatpush1.xpose.msra.mxu0 0.0
        %5577 = vmatprep.subr.mxu0 0.0
        %5578 = vmatpush1.xpose.msra.mxu0 0.0
        %5579 = vmatprep.subr.mxu0 0.0
        %5580 = vmatpush1.xpose.msra.mxu0 0.0
        %5581 = vmatprep.subr.mxu0 0.0
        %5582 = vmatpush1.xpose.msra.mxu0 0.0
        %5583 = vmatprep.subr.mxu0 0.0
        %5584 = vmatpush1.xpose.msra.mxu0 0.0
        %5585 = vmatprep.subr.mxu0 0.0
        %5586 = vmatpush1.xpose.msra.mxu0 0.0
        %5587 = vmatprep.subr.mxu0 0.0
        %5588 = vmatpush1.xpose.msra.mxu0 0.0
        %5589 = vmatprep.subr.mxu0 0.0
        %5590 = vmatpush1.xpose.msra.mxu0 0.0
        %5591 = vmatprep.subr.mxu0 0.0
        %5592 = vmatpush1.xpose.msra.mxu0 %v4834
        %5593 = vmatprep.subr.mxu0 0.0
        %5594 = vmatpush2.xpose.msra.mxu0 0.0
        %5595 = vmatprep.subr.mxu0 0.0
        %5596 = vmatpush2.xpose.msra.mxu0 0.0
        %5597 = vmatprep.subr.mxu0 0.0
        %5598 = vmatpush2.xpose.msra.mxu0 0.0
        %5599 = vmatprep.subr.mxu0 0.0
        %5600 = vmatpush2.xpose.msra.mxu0 0.0
        %5601 = vmatprep.subr.mxu0 0.0
        %5602 = vmatpush2.xpose.msra.mxu0 0.0
        %5603 = vmatprep.subr.mxu0 0.0
        %5604 = vmatpush2.xpose.msra.mxu0 0.0
        %5605 = vmatprep.subr.mxu0 0.0
        %5606 = vmatpush2.xpose.msra.mxu0 0.0
        %5607 = vmatprep.subr.mxu0 0.0
        %5608 = vmatpush2.xpose.msra.mxu0 0.0
        %5609 = vmatprep.subr.mxu0 0.0
        %5610 = vmatpush2.xpose.msra.mxu0 0.0
        %5611 = vmatprep.subr.mxu0 0.0
        %5612 = vmatpush2.xpose.msra.mxu0 0.0
        %5613 = vmatprep.subr.mxu0 0.0
        %5614 = vmatpush2.xpose.msra.mxu0 0.0
        %5615 = vmatprep.subr.mxu0 0.0
        %5616 = vmatpush2.xpose.msra.mxu0 0.0
        %5617 = vmatprep.subr.mxu0 0.0
        %5618 = vmatpush2.xpose.msra.mxu0 0.0
        %5619 = vmatprep.subr.mxu0 0.0
        %5620 = vmatpush2.xpose.msra.mxu0 0.0
        %5621 = vmatprep.subr.mxu0 0.0
        %5622 = vmatpush2.xpose.msra.mxu0 0.0
        %5623 = vmatprep.subr.mxu0 0.0
        %5624 = vmatpush2.xpose.msra.mxu0 0.0
        %5625 = vmatprep.mubr.f32.mxu0 0.0
        %5626 = vmatmul.mubr.f32.gmra.mxu0 %v5559
        %v5627 = vpop.f32.mrf.mxu0
        %v5628 = vadd.f32 0.0, %v5627
        %v5629 = vpop.f32.mrf.mxu0
        %5630 = vdwg.mxu0
        %v5631 = vrot.slane %v1289, 4
        %v5632 = vsel %vm638, %v5631, 0
        %5634 = vmatprep.subr.mxu0 0.0
        %5635 = vmatpush1.xpose.msra.mxu0 0.0
        %5636 = vmatprep.subr.mxu0 0.0
        %5637 = vmatpush1.xpose.msra.mxu0 0.0
        %5638 = vmatprep.subr.mxu0 0.0
        %5639 = vmatpush1.xpose.msra.mxu0 0.0
        %5640 = vmatprep.subr.mxu0 0.0
        %5641 = vmatpush1.xpose.msra.mxu0 0.0
        %5642 = vmatprep.subr.mxu0 0.0
        %5643 = vmatpush1.xpose.msra.mxu0 0.0
        %5644 = vmatprep.subr.mxu0 0.0
        %5645 = vmatpush1.xpose.msra.mxu0 0.0
        %5646 = vmatprep.subr.mxu0 0.0
        %5647 = vmatpush1.xpose.msra.mxu0 0.0
        %5648 = vmatprep.subr.mxu0 0.0
        %5649 = vmatpush1.xpose.msra.mxu0 0.0
        %5650 = vmatprep.subr.mxu0 0.0
        %5651 = vmatpush1.xpose.msra.mxu0 0.0
        %5652 = vmatprep.subr.mxu0 0.0
        %5653 = vmatpush1.xpose.msra.mxu0 0.0
        %5654 = vmatprep.subr.mxu0 0.0
        %5655 = vmatpush1.xpose.msra.mxu0 0.0
        %5656 = vmatprep.subr.mxu0 0.0
        %5657 = vmatpush1.xpose.msra.mxu0 0.0
        %5658 = vmatprep.subr.mxu0 0.0
        %5659 = vmatpush1.xpose.msra.mxu0 0.0
        %5660 = vmatprep.subr.mxu0 0.0
        %5661 = vmatpush1.xpose.msra.mxu0 0.0
        %5662 = vmatprep.subr.mxu0 0.0
        %5663 = vmatpush1.xpose.msra.mxu0 0.0
        %5664 = vmatprep.subr.mxu0 0.0
        %5665 = vmatpush1.xpose.msra.mxu0 %v4834
        %5666 = vmatprep.subr.mxu0 0.0
        %5667 = vmatpush2.xpose.msra.mxu0 0.0
        %5668 = vmatprep.subr.mxu0 0.0
        %5669 = vmatpush2.xpose.msra.mxu0 0.0
        %5670 = vmatprep.subr.mxu0 0.0
        %5671 = vmatpush2.xpose.msra.mxu0 0.0
        %5672 = vmatprep.subr.mxu0 0.0
        %5673 = vmatpush2.xpose.msra.mxu0 0.0
        %5674 = vmatprep.subr.mxu0 0.0
        %5675 = vmatpush2.xpose.msra.mxu0 0.0
        %5676 = vmatprep.subr.mxu0 0.0
        %5677 = vmatpush2.xpose.msra.mxu0 0.0
        %5678 = vmatprep.subr.mxu0 0.0
        %5679 = vmatpush2.xpose.msra.mxu0 0.0
        %5680 = vmatprep.subr.mxu0 0.0
        %5681 = vmatpush2.xpose.msra.mxu0 0.0
        %5682 = vmatprep.subr.mxu0 0.0
        %5683 = vmatpush2.xpose.msra.mxu0 0.0
        %5684 = vmatprep.subr.mxu0 0.0
        %5685 = vmatpush2.xpose.msra.mxu0 0.0
        %5686 = vmatprep.subr.mxu0 0.0
        %5687 = vmatpush2.xpose.msra.mxu0 0.0
        %5688 = vmatprep.subr.mxu0 0.0
        %5689 = vmatpush2.xpose.msra.mxu0 0.0
        %5690 = vmatprep.subr.mxu0 0.0
        %5691 = vmatpush2.xpose.msra.mxu0 0.0
        %5692 = vmatprep.subr.mxu0 0.0
        %5693 = vmatpush2.xpose.msra.mxu0 0.0
        %5694 = vmatprep.subr.mxu0 0.0
        %5695 = vmatpush2.xpose.msra.mxu0 0.0
        %5696 = vmatprep.subr.mxu0 0.0
        %5697 = vmatpush2.xpose.msra.mxu0 0.0
        %5698 = vmatprep.mubr.f32.mxu0 0.0
        %5699 = vmatmul.mubr.f32.gmra.mxu0 %v5632
        %v5700 = vpop.f32.mrf.mxu0
        %v5701 = vadd.f32 0.0, %v5700
        %v5702 = vpop.f32.mrf.mxu0
        %5703 = vdwg.mxu0
        %5704 = vmatprep.subr.mxu0 0.0
        %5705 = vmatpush1.xpose.msra.mxu0 0.0
        %5706 = vmatprep.subr.mxu0 0.0
        %5707 = vmatpush1.xpose.msra.mxu0 0.0
        %5708 = vmatprep.subr.mxu0 0.0
        %5709 = vmatpush1.xpose.msra.mxu0 0.0
        %5710 = vmatprep.subr.mxu0 0.0
        %5711 = vmatpush1.xpose.msra.mxu0 0.0
        %5712 = vmatprep.subr.mxu0 0.0
        %5713 = vmatpush1.xpose.msra.mxu0 0.0
        %5714 = vmatprep.subr.mxu0 0.0
        %5715 = vmatpush1.xpose.msra.mxu0 0.0
        %5716 = vmatprep.subr.mxu0 0.0
        %5717 = vmatpush1.xpose.msra.mxu0 0.0
        %5718 = vmatprep.subr.mxu0 0.0
        %5719 = vmatpush1.xpose.msra.mxu0 0.0
        %5720 = vmatprep.subr.mxu0 0.0
        %5721 = vmatpush1.xpose.msra.mxu0 0.0
        %5722 = vmatprep.subr.mxu0 0.0
        %5723 = vmatpush1.xpose.msra.mxu0 0.0
        %5724 = vmatprep.subr.mxu0 0.0
        %5725 = vmatpush1.xpose.msra.mxu0 0.0
        %5726 = vmatprep.subr.mxu0 0.0
        %5727 = vmatpush1.xpose.msra.mxu0 0.0
        %5728 = vmatprep.subr.mxu0 0.0
        %5729 = vmatpush1.xpose.msra.mxu0 0.0
        %5730 = vmatprep.subr.mxu0 0.0
        %5731 = vmatpush1.xpose.msra.mxu0 0.0
        %5732 = vmatprep.subr.mxu0 0.0
        %5733 = vmatpush1.xpose.msra.mxu0 0.0
        %5734 = vmatprep.subr.mxu0 0.0
        %5735 = vmatpush1.xpose.msra.mxu0 %v5126
        %5736 = vmatprep.subr.mxu0 0.0
        %5737 = vmatpush2.xpose.msra.mxu0 0.0
        %5738 = vmatprep.subr.mxu0 0.0
        %5739 = vmatpush2.xpose.msra.mxu0 0.0
        %5740 = vmatprep.subr.mxu0 0.0
        %5741 = vmatpush2.xpose.msra.mxu0 0.0
        %5742 = vmatprep.subr.mxu0 0.0
        %5743 = vmatpush2.xpose.msra.mxu0 0.0
        %5744 = vmatprep.subr.mxu0 0.0
        %5745 = vmatpush2.xpose.msra.mxu0 0.0
        %5746 = vmatprep.subr.mxu0 0.0
        %5747 = vmatpush2.xpose.msra.mxu0 0.0
        %5748 = vmatprep.subr.mxu0 0.0
        %5749 = vmatpush2.xpose.msra.mxu0 0.0
        %5750 = vmatprep.subr.mxu0 0.0
        %5751 = vmatpush2.xpose.msra.mxu0 0.0
        %5752 = vmatprep.subr.mxu0 0.0
        %5753 = vmatpush2.xpose.msra.mxu0 0.0
        %5754 = vmatprep.subr.mxu0 0.0
        %5755 = vmatpush2.xpose.msra.mxu0 0.0
        %5756 = vmatprep.subr.mxu0 0.0
        %5757 = vmatpush2.xpose.msra.mxu0 0.0
        %5758 = vmatprep.subr.mxu0 0.0
        %5759 = vmatpush2.xpose.msra.mxu0 0.0
        %5760 = vmatprep.subr.mxu0 0.0
        %5761 = vmatpush2.xpose.msra.mxu0 0.0
        %5762 = vmatprep.subr.mxu0 0.0
        %5763 = vmatpush2.xpose.msra.mxu0 0.0
        %5764 = vmatprep.subr.mxu0 0.0
        %5765 = vmatpush2.xpose.msra.mxu0 0.0
        %5766 = vmatprep.subr.mxu0 0.0
        %5767 = vmatpush2.xpose.msra.mxu0 0.0
        %5768 = vmatprep.mubr.f32.mxu0 0.0
        %5769 = vmatmul.mubr.f32.gmra.mxu0 %v5413
        %v5770 = vpop.f32.mrf.mxu0
        %v5771 = vadd.f32 0.0, %v5770
        %v5772 = vpop.f32.mrf.mxu0
        %5773 = vdwg.mxu0
        %5774 = vmatprep.subr.mxu0 0.0
        %5775 = vmatpush1.xpose.msra.mxu0 0.0
        %5776 = vmatprep.subr.mxu0 0.0
        %5777 = vmatpush1.xpose.msra.mxu0 0.0
        %5778 = vmatprep.subr.mxu0 0.0
        %5779 = vmatpush1.xpose.msra.mxu0 0.0
        %5780 = vmatprep.subr.mxu0 0.0
        %5781 = vmatpush1.xpose.msra.mxu0 0.0
        %5782 = vmatprep.subr.mxu0 0.0
        %5783 = vmatpush1.xpose.msra.mxu0 0.0
        %5784 = vmatprep.subr.mxu0 0.0
        %5785 = vmatpush1.xpose.msra.mxu0 0.0
        %5786 = vmatprep.subr.mxu0 0.0
        %5787 = vmatpush1.xpose.msra.mxu0 0.0
        %5788 = vmatprep.subr.mxu0 0.0
        %5789 = vmatpush1.xpose.msra.mxu0 0.0
        %5790 = vmatprep.subr.mxu0 0.0
        %5791 = vmatpush1.xpose.msra.mxu0 0.0
        %5792 = vmatprep.subr.mxu0 0.0
        %5793 = vmatpush1.xpose.msra.mxu0 0.0
        %5794 = vmatprep.subr.mxu0 0.0
        %5795 = vmatpush1.xpose.msra.mxu0 0.0
        %5796 = vmatprep.subr.mxu0 0.0
        %5797 = vmatpush1.xpose.msra.mxu0 0.0
        %5798 = vmatprep.subr.mxu0 0.0
        %5799 = vmatpush1.xpose.msra.mxu0 0.0
        %5800 = vmatprep.subr.mxu0 0.0
        %5801 = vmatpush1.xpose.msra.mxu0 0.0
        %5802 = vmatprep.subr.mxu0 0.0
        %5803 = vmatpush1.xpose.msra.mxu0 0.0
        %5804 = vmatprep.subr.mxu0 0.0
        %5805 = vmatpush1.xpose.msra.mxu0 %v5126
        %5806 = vmatprep.subr.mxu0 0.0
        %5807 = vmatpush2.xpose.msra.mxu0 0.0
        %5808 = vmatprep.subr.mxu0 0.0
        %5809 = vmatpush2.xpose.msra.mxu0 0.0
        %5810 = vmatprep.subr.mxu0 0.0
        %5811 = vmatpush2.xpose.msra.mxu0 0.0
        %5812 = vmatprep.subr.mxu0 0.0
        %5813 = vmatpush2.xpose.msra.mxu0 0.0
        %5814 = vmatprep.subr.mxu0 0.0
        %5815 = vmatpush2.xpose.msra.mxu0 0.0
        %5816 = vmatprep.subr.mxu0 0.0
        %5817 = vmatpush2.xpose.msra.mxu0 0.0
        %5818 = vmatprep.subr.mxu0 0.0
        %5819 = vmatpush2.xpose.msra.mxu0 0.0
        %5820 = vmatprep.subr.mxu0 0.0
        %5821 = vmatpush2.xpose.msra.mxu0 0.0
        %5822 = vmatprep.subr.mxu0 0.0
        %5823 = vmatpush2.xpose.msra.mxu0 0.0
        %5824 = vmatprep.subr.mxu0 0.0
        %5825 = vmatpush2.xpose.msra.mxu0 0.0
        %5826 = vmatprep.subr.mxu0 0.0
        %5827 = vmatpush2.xpose.msra.mxu0 0.0
        %5828 = vmatprep.subr.mxu0 0.0
        %5829 = vmatpush2.xpose.msra.mxu0 0.0
        %5830 = vmatprep.subr.mxu0 0.0
        %5831 = vmatpush2.xpose.msra.mxu0 0.0
        %5832 = vmatprep.subr.mxu0 0.0
        %5833 = vmatpush2.xpose.msra.mxu0 0.0
        %5834 = vmatprep.subr.mxu0 0.0
        %5835 = vmatpush2.xpose.msra.mxu0 0.0
        %5836 = vmatprep.subr.mxu0 0.0
        %5837 = vmatpush2.xpose.msra.mxu0 0.0
        %5838 = vmatprep.mubr.f32.mxu0 0.0
        %5839 = vmatmul.mubr.f32.gmra.mxu0 %v5486
        %v5840 = vpop.f32.mrf.mxu0
        %v5841 = vadd.f32 0.0, %v5840
        %v5842 = vpop.f32.mrf.mxu0
        %5843 = vdwg.mxu0
        %5844 = vmatprep.subr.mxu0 0.0
        %5845 = vmatpush1.xpose.msra.mxu0 0.0
        %5846 = vmatprep.subr.mxu0 0.0
        %5847 = vmatpush1.xpose.msra.mxu0 0.0
        %5848 = vmatprep.subr.mxu0 0.0
        %5849 = vmatpush1.xpose.msra.mxu0 0.0
        %5850 = vmatprep.subr.mxu0 0.0
        %5851 = vmatpush1.xpose.msra.mxu0 0.0
        %5852 = vmatprep.subr.mxu0 0.0
        %5853 = vmatpush1.xpose.msra.mxu0 0.0
        %5854 = vmatprep.subr.mxu0 0.0
        %5855 = vmatpush1.xpose.msra.mxu0 0.0
        %5856 = vmatprep.subr.mxu0 0.0
        %5857 = vmatpush1.xpose.msra.mxu0 0.0
        %5858 = vmatprep.subr.mxu0 0.0
        %5859 = vmatpush1.xpose.msra.mxu0 0.0
        %5860 = vmatprep.subr.mxu0 0.0
        %5861 = vmatpush1.xpose.msra.mxu0 0.0
        %5862 = vmatprep.subr.mxu0 0.0
        %5863 = vmatpush1.xpose.msra.mxu0 0.0
        %5864 = vmatprep.subr.mxu0 0.0
        %5865 = vmatpush1.xpose.msra.mxu0 0.0
        %5866 = vmatprep.subr.mxu0 0.0
        %5867 = vmatpush1.xpose.msra.mxu0 0.0
        %5868 = vmatprep.subr.mxu0 0.0
        %5869 = vmatpush1.xpose.msra.mxu0 0.0
        %5870 = vmatprep.subr.mxu0 0.0
        %5871 = vmatpush1.xpose.msra.mxu0 0.0
        %5872 = vmatprep.subr.mxu0 0.0
        %5873 = vmatpush1.xpose.msra.mxu0 0.0
        %5874 = vmatprep.subr.mxu0 0.0
        %5875 = vmatpush1.xpose.msra.mxu0 %v5126
        %5876 = vmatprep.subr.mxu0 0.0
        %5877 = vmatpush2.xpose.msra.mxu0 0.0
        %5878 = vmatprep.subr.mxu0 0.0
        %5879 = vmatpush2.xpose.msra.mxu0 0.0
        %5880 = vmatprep.subr.mxu0 0.0
        %5881 = vmatpush2.xpose.msra.mxu0 0.0
        %5882 = vmatprep.subr.mxu0 0.0
        %5883 = vmatpush2.xpose.msra.mxu0 0.0
        %5884 = vmatprep.subr.mxu0 0.0
        %5885 = vmatpush2.xpose.msra.mxu0 0.0
        %5886 = vmatprep.subr.mxu0 0.0
        %5887 = vmatpush2.xpose.msra.mxu0 0.0
        %5888 = vmatprep.subr.mxu0 0.0
        %5889 = vmatpush2.xpose.msra.mxu0 0.0
        %5890 = vmatprep.subr.mxu0 0.0
        %5891 = vmatpush2.xpose.msra.mxu0 0.0
        %5892 = vmatprep.subr.mxu0 0.0
        %5893 = vmatpush2.xpose.msra.mxu0 0.0
        %5894 = vmatprep.subr.mxu0 0.0
        %5895 = vmatpush2.xpose.msra.mxu0 0.0
        %5896 = vmatprep.subr.mxu0 0.0
        %5897 = vmatpush2.xpose.msra.mxu0 0.0
        %5898 = vmatprep.subr.mxu0 0.0
        %5899 = vmatpush2.xpose.msra.mxu0 0.0
        %5900 = vmatprep.subr.mxu0 0.0
        %5901 = vmatpush2.xpose.msra.mxu0 0.0
        %5902 = vmatprep.subr.mxu0 0.0
        %5903 = vmatpush2.xpose.msra.mxu0 0.0
        %5904 = vmatprep.subr.mxu0 0.0
        %5905 = vmatpush2.xpose.msra.mxu0 0.0
        %5906 = vmatprep.subr.mxu0 0.0
        %5907 = vmatpush2.xpose.msra.mxu0 0.0
        %5908 = vmatprep.mubr.f32.mxu0 0.0
        %5909 = vmatmul.mubr.f32.gmra.mxu0 %v5559
        %v5910 = vpop.f32.mrf.mxu0
        %v5911 = vadd.f32 0.0, %v5910
        %v5912 = vpop.f32.mrf.mxu0
        %5913 = vdwg.mxu0
        %5914 = vmatprep.subr.mxu0 0.0
        %5915 = vmatpush1.xpose.msra.mxu0 0.0
        %5916 = vmatprep.subr.mxu0 0.0
        %5917 = vmatpush1.xpose.msra.mxu0 0.0
        %5918 = vmatprep.subr.mxu0 0.0
        %5919 = vmatpush1.xpose.msra.mxu0 0.0
        %5920 = vmatprep.subr.mxu0 0.0
        %5921 = vmatpush1.xpose.msra.mxu0 0.0
        %5922 = vmatprep.subr.mxu0 0.0
        %5923 = vmatpush1.xpose.msra.mxu0 0.0
        %5924 = vmatprep.subr.mxu0 0.0
        %5925 = vmatpush1.xpose.msra.mxu0 0.0
        %5926 = vmatprep.subr.mxu0 0.0
        %5927 = vmatpush1.xpose.msra.mxu0 0.0
        %5928 = vmatprep.subr.mxu0 0.0
        %5929 = vmatpush1.xpose.msra.mxu0 0.0
        %5930 = vmatprep.subr.mxu0 0.0
        %5931 = vmatpush1.xpose.msra.mxu0 0.0
        %5932 = vmatprep.subr.mxu0 0.0
        %5933 = vmatpush1.xpose.msra.mxu0 0.0
        %5934 = vmatprep.subr.mxu0 0.0
        %5935 = vmatpush1.xpose.msra.mxu0 0.0
        %5936 = vmatprep.subr.mxu0 0.0
        %5937 = vmatpush1.xpose.msra.mxu0 0.0
        %5938 = vmatprep.subr.mxu0 0.0
        %5939 = vmatpush1.xpose.msra.mxu0 0.0
        %5940 = vmatprep.subr.mxu0 0.0
        %5941 = vmatpush1.xpose.msra.mxu0 0.0
        %5942 = vmatprep.subr.mxu0 0.0
        %5943 = vmatpush1.xpose.msra.mxu0 0.0
        %5944 = vmatprep.subr.mxu0 0.0
        %5945 = vmatpush1.xpose.msra.mxu0 %v5126
        %5946 = vmatprep.subr.mxu0 0.0
        %5947 = vmatpush2.xpose.msra.mxu0 0.0
        %5948 = vmatprep.subr.mxu0 0.0
        %5949 = vmatpush2.xpose.msra.mxu0 0.0
        %5950 = vmatprep.subr.mxu0 0.0
        %5951 = vmatpush2.xpose.msra.mxu0 0.0
        %5952 = vmatprep.subr.mxu0 0.0
        %5953 = vmatpush2.xpose.msra.mxu0 0.0
        %5954 = vmatprep.subr.mxu0 0.0
        %5955 = vmatpush2.xpose.msra.mxu0 0.0
        %5956 = vmatprep.subr.mxu0 0.0
        %5957 = vmatpush2.xpose.msra.mxu0 0.0
        %5958 = vmatprep.subr.mxu0 0.0
        %5959 = vmatpush2.xpose.msra.mxu0 0.0
        %5960 = vmatprep.subr.mxu0 0.0
        %5961 = vmatpush2.xpose.msra.mxu0 0.0
        %5962 = vmatprep.subr.mxu0 0.0
        %5963 = vmatpush2.xpose.msra.mxu0 0.0
        %5964 = vmatprep.subr.mxu0 0.0
        %5965 = vmatpush2.xpose.msra.mxu0 0.0
        %5966 = vmatprep.subr.mxu0 0.0
        %5967 = vmatpush2.xpose.msra.mxu0 0.0
        %5968 = vmatprep.subr.mxu0 0.0
        %5969 = vmatpush2.xpose.msra.mxu0 0.0
        %5970 = vmatprep.subr.mxu0 0.0
        %5971 = vmatpush2.xpose.msra.mxu0 0.0
        %5972 = vmatprep.subr.mxu0 0.0
        %5973 = vmatpush2.xpose.msra.mxu0 0.0
        %5974 = vmatprep.subr.mxu0 0.0
        %5975 = vmatpush2.xpose.msra.mxu0 0.0
        %5976 = vmatprep.subr.mxu0 0.0
        %5977 = vmatpush2.xpose.msra.mxu0 0.0
        %5978 = vmatprep.mubr.f32.mxu0 0.0
        %5979 = vmatmul.mubr.f32.gmra.mxu0 %v5632
        %v5980 = vpop.f32.mrf.mxu0
        %v5981 = vadd.f32 0.0, %v5980
        %v5982 = vpop.f32.mrf.mxu0
        %5983 = vdwg.mxu0
        %v5984 = vmax.f32 %v5482, %v5771
        %v5985 = vmax.f32 %v5555, %v5841
        %v5986 = vmax.f32 %v5628, %v5911
        %v5987 = vmax.f32 %v5701, %v5981
        %v5988 = vmax.f32 %v5408, %v5984
        %v5989 = vmax.f32 %v5409, %v5985
        %v5990 = vmax.f32 %v5410, %v5986
        %v5991 = vmax.f32 %v5411, %v5987
        %5996 = vrot.lane.b32.xlu0 %v5988, 12
        %v5997 = vpop.permute.xlu0 %5996
        %5998 = vrot.lane.b32.xlu0 %v5989, 12
        %v5999 = vpop.permute.xlu0 %5998
        %6000 = vrot.lane.b32.xlu0 %v5990, 12
        %v6001 = vpop.permute.xlu0 %6000
        %6002 = vrot.lane.b32.xlu0 %v5991, 12
        %v6003 = vpop.permute.xlu0 %6002
        %vm6008 = vcmask 126048
        %6009 = vst.msk [vmem:[%s176] sm:$0xf] %vm6008, %v5997
        %6010 = vst.msk [vmem:[%s176 + $0x4] sm:$0xf] %vm6008, %v5999
        %6011 = vst.msk [vmem:[%s176 + $0x8] sm:$0xf] %vm6008, %v6001
        %6012 = vst.msk [vmem:[%s176 + $0xc] sm:$0xf] %vm6008, %v6003
        %v6014 = vsel %vm638, %v725, 0
        %v6017 = vsel %vm638, %v574, 0
        %6019 = vmatprep.subr.mxu0 0.0
        %6020 = vmatpush1.xpose.msra.mxu0 0.0
        %6021 = vmatprep.subr.mxu0 0.0
        %6022 = vmatpush1.xpose.msra.mxu0 0.0
        %6023 = vmatprep.subr.mxu0 0.0
        %6024 = vmatpush1.xpose.msra.mxu0 0.0
        %6025 = vmatprep.subr.mxu0 0.0
        %6026 = vmatpush1.xpose.msra.mxu0 0.0
        %6027 = vmatprep.subr.mxu0 0.0
        %6028 = vmatpush1.xpose.msra.mxu0 0.0
        %6029 = vmatprep.subr.mxu0 0.0
        %6030 = vmatpush1.xpose.msra.mxu0 0.0
        %6031 = vmatprep.subr.mxu0 0.0
        %6032 = vmatpush1.xpose.msra.mxu0 0.0
        %6033 = vmatprep.subr.mxu0 0.0
        %6034 = vmatpush1.xpose.msra.mxu0 0.0
        %6035 = vmatprep.subr.mxu0 0.0
        %6036 = vmatpush1.xpose.msra.mxu0 0.0
        %6037 = vmatprep.subr.mxu0 0.0
        %6038 = vmatpush1.xpose.msra.mxu0 0.0
        %6039 = vmatprep.subr.mxu0 0.0
        %6040 = vmatpush1.xpose.msra.mxu0 0.0
        %6041 = vmatprep.subr.mxu0 0.0
        %6042 = vmatpush1.xpose.msra.mxu0 0.0
        %6043 = vmatprep.subr.mxu0 0.0
        %6044 = vmatpush1.xpose.msra.mxu0 0.0
        %6045 = vmatprep.subr.mxu0 0.0
        %6046 = vmatpush1.xpose.msra.mxu0 0.0
        %6047 = vmatprep.subr.mxu0 0.0
        %6048 = vmatpush1.xpose.msra.mxu0 0.0
        %6049 = vmatprep.subr.mxu0 0.0
        %6050 = vmatpush1.xpose.msra.mxu0 %v6017
        %6051 = vmatprep.subr.mxu0 0.0
        %6052 = vmatpush2.xpose.msra.mxu0 0.0
        %6053 = vmatprep.subr.mxu0 0.0
        %6054 = vmatpush2.xpose.msra.mxu0 0.0
        %6055 = vmatprep.subr.mxu0 0.0
        %6056 = vmatpush2.xpose.msra.mxu0 0.0
        %6057 = vmatprep.subr.mxu0 0.0
        %6058 = vmatpush2.xpose.msra.mxu0 0.0
        %6059 = vmatprep.subr.mxu0 0.0
        %6060 = vmatpush2.xpose.msra.mxu0 0.0
        %6061 = vmatprep.subr.mxu0 0.0
        %6062 = vmatpush2.xpose.msra.mxu0 0.0
        %6063 = vmatprep.subr.mxu0 0.0
        %6064 = vmatpush2.xpose.msra.mxu0 0.0
        %6065 = vmatprep.subr.mxu0 0.0
        %6066 = vmatpush2.xpose.msra.mxu0 0.0
        %6067 = vmatprep.subr.mxu0 0.0
        %6068 = vmatpush2.xpose.msra.mxu0 0.0
        %6069 = vmatprep.subr.mxu0 0.0
        %6070 = vmatpush2.xpose.msra.mxu0 0.0
        %6071 = vmatprep.subr.mxu0 0.0
        %6072 = vmatpush2.xpose.msra.mxu0 0.0
        %6073 = vmatprep.subr.mxu0 0.0
        %6074 = vmatpush2.xpose.msra.mxu0 0.0
        %6075 = vmatprep.subr.mxu0 0.0
        %6076 = vmatpush2.xpose.msra.mxu0 0.0
        %6077 = vmatprep.subr.mxu0 0.0
        %6078 = vmatpush2.xpose.msra.mxu0 0.0
        %6079 = vmatprep.subr.mxu0 0.0
        %6080 = vmatpush2.xpose.msra.mxu0 0.0
        %6081 = vmatprep.subr.mxu0 0.0
        %6082 = vmatpush2.xpose.msra.mxu0 0.0
        %6083 = vmatprep.mubr.f32.mxu0 0.0
        %6084 = vmatmul.mubr.f32.gmra.mxu0 %v6014
        %v6085 = vpop.f32.mrf.mxu0
        %v6086 = vadd.f32 0.0, %v6085
        %v6087 = vpop.f32.mrf.mxu0
        %6088 = vdwg.mxu0
        %v6090 = vsel %vm638, %v805, 0
        %6092 = vmatprep.subr.mxu0 0.0
        %6093 = vmatpush1.xpose.msra.mxu0 0.0
        %6094 = vmatprep.subr.mxu0 0.0
        %6095 = vmatpush1.xpose.msra.mxu0 0.0
        %6096 = vmatprep.subr.mxu0 0.0
        %6097 = vmatpush1.xpose.msra.mxu0 0.0
        %6098 = vmatprep.subr.mxu0 0.0
        %6099 = vmatpush1.xpose.msra.mxu0 0.0
        %6100 = vmatprep.subr.mxu0 0.0
        %6101 = vmatpush1.xpose.msra.mxu0 0.0
        %6102 = vmatprep.subr.mxu0 0.0
        %6103 = vmatpush1.xpose.msra.mxu0 0.0
        %6104 = vmatprep.subr.mxu0 0.0
        %6105 = vmatpush1.xpose.msra.mxu0 0.0
        %6106 = vmatprep.subr.mxu0 0.0
        %6107 = vmatpush1.xpose.msra.mxu0 0.0
        %6108 = vmatprep.subr.mxu0 0.0
        %6109 = vmatpush1.xpose.msra.mxu0 0.0
        %6110 = vmatprep.subr.mxu0 0.0
        %6111 = vmatpush1.xpose.msra.mxu0 0.0
        %6112 = vmatprep.subr.mxu0 0.0
        %6113 = vmatpush1.xpose.msra.mxu0 0.0
        %6114 = vmatprep.subr.mxu0 0.0
        %6115 = vmatpush1.xpose.msra.mxu0 0.0
        %6116 = vmatprep.subr.mxu0 0.0
        %6117 = vmatpush1.xpose.msra.mxu0 0.0
        %6118 = vmatprep.subr.mxu0 0.0
        %6119 = vmatpush1.xpose.msra.mxu0 0.0
        %6120 = vmatprep.subr.mxu0 0.0
        %6121 = vmatpush1.xpose.msra.mxu0 0.0
        %6122 = vmatprep.subr.mxu0 0.0
        %6123 = vmatpush1.xpose.msra.mxu0 %v6017
        %6124 = vmatprep.subr.mxu0 0.0
        %6125 = vmatpush2.xpose.msra.mxu0 0.0
        %6126 = vmatprep.subr.mxu0 0.0
        %6127 = vmatpush2.xpose.msra.mxu0 0.0
        %6128 = vmatprep.subr.mxu0 0.0
        %6129 = vmatpush2.xpose.msra.mxu0 0.0
        %6130 = vmatprep.subr.mxu0 0.0
        %6131 = vmatpush2.xpose.msra.mxu0 0.0
        %6132 = vmatprep.subr.mxu0 0.0
        %6133 = vmatpush2.xpose.msra.mxu0 0.0
        %6134 = vmatprep.subr.mxu0 0.0
        %6135 = vmatpush2.xpose.msra.mxu0 0.0
        %6136 = vmatprep.subr.mxu0 0.0
        %6137 = vmatpush2.xpose.msra.mxu0 0.0
        %6138 = vmatprep.subr.mxu0 0.0
        %6139 = vmatpush2.xpose.msra.mxu0 0.0
        %6140 = vmatprep.subr.mxu0 0.0
        %6141 = vmatpush2.xpose.msra.mxu0 0.0
        %6142 = vmatprep.subr.mxu0 0.0
        %6143 = vmatpush2.xpose.msra.mxu0 0.0
        %6144 = vmatprep.subr.mxu0 0.0
        %6145 = vmatpush2.xpose.msra.mxu0 0.0
        %6146 = vmatprep.subr.mxu0 0.0
        %6147 = vmatpush2.xpose.msra.mxu0 0.0
        %6148 = vmatprep.subr.mxu0 0.0
        %6149 = vmatpush2.xpose.msra.mxu0 0.0
        %6150 = vmatprep.subr.mxu0 0.0
        %6151 = vmatpush2.xpose.msra.mxu0 0.0
        %6152 = vmatprep.subr.mxu0 0.0
        %6153 = vmatpush2.xpose.msra.mxu0 0.0
        %6154 = vmatprep.subr.mxu0 0.0
        %6155 = vmatpush2.xpose.msra.mxu0 0.0
        %6156 = vmatprep.mubr.f32.mxu0 0.0
        %6157 = vmatmul.mubr.f32.gmra.mxu0 %v6090
        %v6158 = vpop.f32.mrf.mxu0
        %v6159 = vadd.f32 0.0, %v6158
        %v6160 = vpop.f32.mrf.mxu0
        %6161 = vdwg.mxu0
        %v6163 = vsel %vm638, %v885, 0
        %6165 = vmatprep.subr.mxu0 0.0
        %6166 = vmatpush1.xpose.msra.mxu0 0.0
        %6167 = vmatprep.subr.mxu0 0.0
        %6168 = vmatpush1.xpose.msra.mxu0 0.0
        %6169 = vmatprep.subr.mxu0 0.0
        %6170 = vmatpush1.xpose.msra.mxu0 0.0
        %6171 = vmatprep.subr.mxu0 0.0
        %6172 = vmatpush1.xpose.msra.mxu0 0.0
        %6173 = vmatprep.subr.mxu0 0.0
        %6174 = vmatpush1.xpose.msra.mxu0 0.0
        %6175 = vmatprep.subr.mxu0 0.0
        %6176 = vmatpush1.xpose.msra.mxu0 0.0
        %6177 = vmatprep.subr.mxu0 0.0
        %6178 = vmatpush1.xpose.msra.mxu0 0.0
        %6179 = vmatprep.subr.mxu0 0.0
        %6180 = vmatpush1.xpose.msra.mxu0 0.0
        %6181 = vmatprep.subr.mxu0 0.0
        %6182 = vmatpush1.xpose.msra.mxu0 0.0
        %6183 = vmatprep.subr.mxu0 0.0
        %6184 = vmatpush1.xpose.msra.mxu0 0.0
        %6185 = vmatprep.subr.mxu0 0.0
        %6186 = vmatpush1.xpose.msra.mxu0 0.0
        %6187 = vmatprep.subr.mxu0 0.0
        %6188 = vmatpush1.xpose.msra.mxu0 0.0
        %6189 = vmatprep.subr.mxu0 0.0
        %6190 = vmatpush1.xpose.msra.mxu0 0.0
        %6191 = vmatprep.subr.mxu0 0.0
        %6192 = vmatpush1.xpose.msra.mxu0 0.0
        %6193 = vmatprep.subr.mxu0 0.0
        %6194 = vmatpush1.xpose.msra.mxu0 0.0
        %6195 = vmatprep.subr.mxu0 0.0
        %6196 = vmatpush1.xpose.msra.mxu0 %v6017
        %6197 = vmatprep.subr.mxu0 0.0
        %6198 = vmatpush2.xpose.msra.mxu0 0.0
        %6199 = vmatprep.subr.mxu0 0.0
        %6200 = vmatpush2.xpose.msra.mxu0 0.0
        %6201 = vmatprep.subr.mxu0 0.0
        %6202 = vmatpush2.xpose.msra.mxu0 0.0
        %6203 = vmatprep.subr.mxu0 0.0
        %6204 = vmatpush2.xpose.msra.mxu0 0.0
        %6205 = vmatprep.subr.mxu0 0.0
        %6206 = vmatpush2.xpose.msra.mxu0 0.0
        %6207 = vmatprep.subr.mxu0 0.0
        %6208 = vmatpush2.xpose.msra.mxu0 0.0
        %6209 = vmatprep.subr.mxu0 0.0
        %6210 = vmatpush2.xpose.msra.mxu0 0.0
        %6211 = vmatprep.subr.mxu0 0.0
        %6212 = vmatpush2.xpose.msra.mxu0 0.0
        %6213 = vmatprep.subr.mxu0 0.0
        %6214 = vmatpush2.xpose.msra.mxu0 0.0
        %6215 = vmatprep.subr.mxu0 0.0
        %6216 = vmatpush2.xpose.msra.mxu0 0.0
        %6217 = vmatprep.subr.mxu0 0.0
        %6218 = vmatpush2.xpose.msra.mxu0 0.0
        %6219 = vmatprep.subr.mxu0 0.0
        %6220 = vmatpush2.xpose.msra.mxu0 0.0
        %6221 = vmatprep.subr.mxu0 0.0
        %6222 = vmatpush2.xpose.msra.mxu0 0.0
        %6223 = vmatprep.subr.mxu0 0.0
        %6224 = vmatpush2.xpose.msra.mxu0 0.0
        %6225 = vmatprep.subr.mxu0 0.0
        %6226 = vmatpush2.xpose.msra.mxu0 0.0
        %6227 = vmatprep.subr.mxu0 0.0
        %6228 = vmatpush2.xpose.msra.mxu0 0.0
        %6229 = vmatprep.mubr.f32.mxu0 0.0
        %6230 = vmatmul.mubr.f32.gmra.mxu0 %v6163
        %v6231 = vpop.f32.mrf.mxu0
        %v6232 = vadd.f32 0.0, %v6231
        %v6233 = vpop.f32.mrf.mxu0
        %6234 = vdwg.mxu0
        %v6236 = vsel %vm638, %v965, 0
        %6238 = vmatprep.subr.mxu0 0.0
        %6239 = vmatpush1.xpose.msra.mxu0 0.0
        %6240 = vmatprep.subr.mxu0 0.0
        %6241 = vmatpush1.xpose.msra.mxu0 0.0
        %6242 = vmatprep.subr.mxu0 0.0
        %6243 = vmatpush1.xpose.msra.mxu0 0.0
        %6244 = vmatprep.subr.mxu0 0.0
        %6245 = vmatpush1.xpose.msra.mxu0 0.0
        %6246 = vmatprep.subr.mxu0 0.0
        %6247 = vmatpush1.xpose.msra.mxu0 0.0
        %6248 = vmatprep.subr.mxu0 0.0
        %6249 = vmatpush1.xpose.msra.mxu0 0.0
        %6250 = vmatprep.subr.mxu0 0.0
        %6251 = vmatpush1.xpose.msra.mxu0 0.0
        %6252 = vmatprep.subr.mxu0 0.0
        %6253 = vmatpush1.xpose.msra.mxu0 0.0
        %6254 = vmatprep.subr.mxu0 0.0
        %6255 = vmatpush1.xpose.msra.mxu0 0.0
        %6256 = vmatprep.subr.mxu0 0.0
        %6257 = vmatpush1.xpose.msra.mxu0 0.0
        %6258 = vmatprep.subr.mxu0 0.0
        %6259 = vmatpush1.xpose.msra.mxu0 0.0
        %6260 = vmatprep.subr.mxu0 0.0
        %6261 = vmatpush1.xpose.msra.mxu0 0.0
        %6262 = vmatprep.subr.mxu0 0.0
        %6263 = vmatpush1.xpose.msra.mxu0 0.0
        %6264 = vmatprep.subr.mxu0 0.0
        %6265 = vmatpush1.xpose.msra.mxu0 0.0
        %6266 = vmatprep.subr.mxu0 0.0
        %6267 = vmatpush1.xpose.msra.mxu0 0.0
        %6268 = vmatprep.subr.mxu0 0.0
        %6269 = vmatpush1.xpose.msra.mxu0 %v6017
        %6270 = vmatprep.subr.mxu0 0.0
        %6271 = vmatpush2.xpose.msra.mxu0 0.0
        %6272 = vmatprep.subr.mxu0 0.0
        %6273 = vmatpush2.xpose.msra.mxu0 0.0
        %6274 = vmatprep.subr.mxu0 0.0
        %6275 = vmatpush2.xpose.msra.mxu0 0.0
        %6276 = vmatprep.subr.mxu0 0.0
        %6277 = vmatpush2.xpose.msra.mxu0 0.0
        %6278 = vmatprep.subr.mxu0 0.0
        %6279 = vmatpush2.xpose.msra.mxu0 0.0
        %6280 = vmatprep.subr.mxu0 0.0
        %6281 = vmatpush2.xpose.msra.mxu0 0.0
        %6282 = vmatprep.subr.mxu0 0.0
        %6283 = vmatpush2.xpose.msra.mxu0 0.0
        %6284 = vmatprep.subr.mxu0 0.0
        %6285 = vmatpush2.xpose.msra.mxu0 0.0
        %6286 = vmatprep.subr.mxu0 0.0
        %6287 = vmatpush2.xpose.msra.mxu0 0.0
        %6288 = vmatprep.subr.mxu0 0.0
        %6289 = vmatpush2.xpose.msra.mxu0 0.0
        %6290 = vmatprep.subr.mxu0 0.0
        %6291 = vmatpush2.xpose.msra.mxu0 0.0
        %6292 = vmatprep.subr.mxu0 0.0
        %6293 = vmatpush2.xpose.msra.mxu0 0.0
        %6294 = vmatprep.subr.mxu0 0.0
        %6295 = vmatpush2.xpose.msra.mxu0 0.0
        %6296 = vmatprep.subr.mxu0 0.0
        %6297 = vmatpush2.xpose.msra.mxu0 0.0
        %6298 = vmatprep.subr.mxu0 0.0
        %6299 = vmatpush2.xpose.msra.mxu0 0.0
        %6300 = vmatprep.subr.mxu0 0.0
        %6301 = vmatpush2.xpose.msra.mxu0 0.0
        %6302 = vmatprep.mubr.f32.mxu0 0.0
        %6303 = vmatmul.mubr.f32.gmra.mxu0 %v6236
        %v6304 = vpop.f32.mrf.mxu0
        %v6305 = vadd.f32 0.0, %v6304
        %v6306 = vpop.f32.mrf.mxu0
        %6307 = vdwg.mxu0
        %v6309 = vsel %vm638, %v637, 0
        %6311 = vmatprep.subr.mxu0 0.0
        %6312 = vmatpush1.xpose.msra.mxu0 0.0
        %6313 = vmatprep.subr.mxu0 0.0
        %6314 = vmatpush1.xpose.msra.mxu0 0.0
        %6315 = vmatprep.subr.mxu0 0.0
        %6316 = vmatpush1.xpose.msra.mxu0 0.0
        %6317 = vmatprep.subr.mxu0 0.0
        %6318 = vmatpush1.xpose.msra.mxu0 0.0
        %6319 = vmatprep.subr.mxu0 0.0
        %6320 = vmatpush1.xpose.msra.mxu0 0.0
        %6321 = vmatprep.subr.mxu0 0.0
        %6322 = vmatpush1.xpose.msra.mxu0 0.0
        %6323 = vmatprep.subr.mxu0 0.0
        %6324 = vmatpush1.xpose.msra.mxu0 0.0
        %6325 = vmatprep.subr.mxu0 0.0
        %6326 = vmatpush1.xpose.msra.mxu0 0.0
        %6327 = vmatprep.subr.mxu0 0.0
        %6328 = vmatpush1.xpose.msra.mxu0 0.0
        %6329 = vmatprep.subr.mxu0 0.0
        %6330 = vmatpush1.xpose.msra.mxu0 0.0
        %6331 = vmatprep.subr.mxu0 0.0
        %6332 = vmatpush1.xpose.msra.mxu0 0.0
        %6333 = vmatprep.subr.mxu0 0.0
        %6334 = vmatpush1.xpose.msra.mxu0 0.0
        %6335 = vmatprep.subr.mxu0 0.0
        %6336 = vmatpush1.xpose.msra.mxu0 0.0
        %6337 = vmatprep.subr.mxu0 0.0
        %6338 = vmatpush1.xpose.msra.mxu0 0.0
        %6339 = vmatprep.subr.mxu0 0.0
        %6340 = vmatpush1.xpose.msra.mxu0 0.0
        %6341 = vmatprep.subr.mxu0 0.0
        %6342 = vmatpush1.xpose.msra.mxu0 %v6309
        %6343 = vmatprep.subr.mxu0 0.0
        %6344 = vmatpush2.xpose.msra.mxu0 0.0
        %6345 = vmatprep.subr.mxu0 0.0
        %6346 = vmatpush2.xpose.msra.mxu0 0.0
        %6347 = vmatprep.subr.mxu0 0.0
        %6348 = vmatpush2.xpose.msra.mxu0 0.0
        %6349 = vmatprep.subr.mxu0 0.0
        %6350 = vmatpush2.xpose.msra.mxu0 0.0
        %6351 = vmatprep.subr.mxu0 0.0
        %6352 = vmatpush2.xpose.msra.mxu0 0.0
        %6353 = vmatprep.subr.mxu0 0.0
        %6354 = vmatpush2.xpose.msra.mxu0 0.0
        %6355 = vmatprep.subr.mxu0 0.0
        %6356 = vmatpush2.xpose.msra.mxu0 0.0
        %6357 = vmatprep.subr.mxu0 0.0
        %6358 = vmatpush2.xpose.msra.mxu0 0.0
        %6359 = vmatprep.subr.mxu0 0.0
        %6360 = vmatpush2.xpose.msra.mxu0 0.0
        %6361 = vmatprep.subr.mxu0 0.0
        %6362 = vmatpush2.xpose.msra.mxu0 0.0
        %6363 = vmatprep.subr.mxu0 0.0
        %6364 = vmatpush2.xpose.msra.mxu0 0.0
        %6365 = vmatprep.subr.mxu0 0.0
        %6366 = vmatpush2.xpose.msra.mxu0 0.0
        %6367 = vmatprep.subr.mxu0 0.0
        %6368 = vmatpush2.xpose.msra.mxu0 0.0
        %6369 = vmatprep.subr.mxu0 0.0
        %6370 = vmatpush2.xpose.msra.mxu0 0.0
        %6371 = vmatprep.subr.mxu0 0.0
        %6372 = vmatpush2.xpose.msra.mxu0 0.0
        %6373 = vmatprep.subr.mxu0 0.0
        %6374 = vmatpush2.xpose.msra.mxu0 0.0
        %6375 = vmatprep.mubr.f32.mxu0 0.0
        %6376 = vmatmul.mubr.f32.gmra.mxu0 %v6014
        %v6377 = vpop.f32.mrf.mxu0
        %v6378 = vadd.f32 0.0, %v6377
        %v6379 = vpop.f32.mrf.mxu0
        %6380 = vdwg.mxu0
        %6381 = vmatprep.subr.mxu0 0.0
        %6382 = vmatpush1.xpose.msra.mxu0 0.0
        %6383 = vmatprep.subr.mxu0 0.0
        %6384 = vmatpush1.xpose.msra.mxu0 0.0
        %6385 = vmatprep.subr.mxu0 0.0
        %6386 = vmatpush1.xpose.msra.mxu0 0.0
        %6387 = vmatprep.subr.mxu0 0.0
        %6388 = vmatpush1.xpose.msra.mxu0 0.0
        %6389 = vmatprep.subr.mxu0 0.0
        %6390 = vmatpush1.xpose.msra.mxu0 0.0
        %6391 = vmatprep.subr.mxu0 0.0
        %6392 = vmatpush1.xpose.msra.mxu0 0.0
        %6393 = vmatprep.subr.mxu0 0.0
        %6394 = vmatpush1.xpose.msra.mxu0 0.0
        %6395 = vmatprep.subr.mxu0 0.0
        %6396 = vmatpush1.xpose.msra.mxu0 0.0
        %6397 = vmatprep.subr.mxu0 0.0
        %6398 = vmatpush1.xpose.msra.mxu0 0.0
        %6399 = vmatprep.subr.mxu0 0.0
        %6400 = vmatpush1.xpose.msra.mxu0 0.0
        %6401 = vmatprep.subr.mxu0 0.0
        %6402 = vmatpush1.xpose.msra.mxu0 0.0
        %6403 = vmatprep.subr.mxu0 0.0
        %6404 = vmatpush1.xpose.msra.mxu0 0.0
        %6405 = vmatprep.subr.mxu0 0.0
        %6406 = vmatpush1.xpose.msra.mxu0 0.0
        %6407 = vmatprep.subr.mxu0 0.0
        %6408 = vmatpush1.xpose.msra.mxu0 0.0
        %6409 = vmatprep.subr.mxu0 0.0
        %6410 = vmatpush1.xpose.msra.mxu0 0.0
        %6411 = vmatprep.subr.mxu0 0.0
        %6412 = vmatpush1.xpose.msra.mxu0 %v6309
        %6413 = vmatprep.subr.mxu0 0.0
        %6414 = vmatpush2.xpose.msra.mxu0 0.0
        %6415 = vmatprep.subr.mxu0 0.0
        %6416 = vmatpush2.xpose.msra.mxu0 0.0
        %6417 = vmatprep.subr.mxu0 0.0
        %6418 = vmatpush2.xpose.msra.mxu0 0.0
        %6419 = vmatprep.subr.mxu0 0.0
        %6420 = vmatpush2.xpose.msra.mxu0 0.0
        %6421 = vmatprep.subr.mxu0 0.0
        %6422 = vmatpush2.xpose.msra.mxu0 0.0
        %6423 = vmatprep.subr.mxu0 0.0
        %6424 = vmatpush2.xpose.msra.mxu0 0.0
        %6425 = vmatprep.subr.mxu0 0.0
        %6426 = vmatpush2.xpose.msra.mxu0 0.0
        %6427 = vmatprep.subr.mxu0 0.0
        %6428 = vmatpush2.xpose.msra.mxu0 0.0
        %6429 = vmatprep.subr.mxu0 0.0
        %6430 = vmatpush2.xpose.msra.mxu0 0.0
        %6431 = vmatprep.subr.mxu0 0.0
        %6432 = vmatpush2.xpose.msra.mxu0 0.0
        %6433 = vmatprep.subr.mxu0 0.0
        %6434 = vmatpush2.xpose.msra.mxu0 0.0
        %6435 = vmatprep.subr.mxu0 0.0
        %6436 = vmatpush2.xpose.msra.mxu0 0.0
        %6437 = vmatprep.subr.mxu0 0.0
        %6438 = vmatpush2.xpose.msra.mxu0 0.0
        %6439 = vmatprep.subr.mxu0 0.0
        %6440 = vmatpush2.xpose.msra.mxu0 0.0
        %6441 = vmatprep.subr.mxu0 0.0
        %6442 = vmatpush2.xpose.msra.mxu0 0.0
        %6443 = vmatprep.subr.mxu0 0.0
        %6444 = vmatpush2.xpose.msra.mxu0 0.0
        %6445 = vmatprep.mubr.f32.mxu0 0.0
        %6446 = vmatmul.mubr.f32.gmra.mxu0 %v6090
        %v6447 = vpop.f32.mrf.mxu0
        %v6448 = vadd.f32 0.0, %v6447
        %v6449 = vpop.f32.mrf.mxu0
        %6450 = vdwg.mxu0
        %6451 = vmatprep.subr.mxu0 0.0
        %6452 = vmatpush1.xpose.msra.mxu0 0.0
        %6453 = vmatprep.subr.mxu0 0.0
        %6454 = vmatpush1.xpose.msra.mxu0 0.0
        %6455 = vmatprep.subr.mxu0 0.0
        %6456 = vmatpush1.xpose.msra.mxu0 0.0
        %6457 = vmatprep.subr.mxu0 0.0
        %6458 = vmatpush1.xpose.msra.mxu0 0.0
        %6459 = vmatprep.subr.mxu0 0.0
        %6460 = vmatpush1.xpose.msra.mxu0 0.0
        %6461 = vmatprep.subr.mxu0 0.0
        %6462 = vmatpush1.xpose.msra.mxu0 0.0
        %6463 = vmatprep.subr.mxu0 0.0
        %6464 = vmatpush1.xpose.msra.mxu0 0.0
        %6465 = vmatprep.subr.mxu0 0.0
        %6466 = vmatpush1.xpose.msra.mxu0 0.0
        %6467 = vmatprep.subr.mxu0 0.0
        %6468 = vmatpush1.xpose.msra.mxu0 0.0
        %6469 = vmatprep.subr.mxu0 0.0
        %6470 = vmatpush1.xpose.msra.mxu0 0.0
        %6471 = vmatprep.subr.mxu0 0.0
        %6472 = vmatpush1.xpose.msra.mxu0 0.0
        %6473 = vmatprep.subr.mxu0 0.0
        %6474 = vmatpush1.xpose.msra.mxu0 0.0
        %6475 = vmatprep.subr.mxu0 0.0
        %6476 = vmatpush1.xpose.msra.mxu0 0.0
        %6477 = vmatprep.subr.mxu0 0.0
        %6478 = vmatpush1.xpose.msra.mxu0 0.0
        %6479 = vmatprep.subr.mxu0 0.0
        %6480 = vmatpush1.xpose.msra.mxu0 0.0
        %6481 = vmatprep.subr.mxu0 0.0
        %6482 = vmatpush1.xpose.msra.mxu0 %v6309
        %6483 = vmatprep.subr.mxu0 0.0
        %6484 = vmatpush2.xpose.msra.mxu0 0.0
        %6485 = vmatprep.subr.mxu0 0.0
        %6486 = vmatpush2.xpose.msra.mxu0 0.0
        %6487 = vmatprep.subr.mxu0 0.0
        %6488 = vmatpush2.xpose.msra.mxu0 0.0
        %6489 = vmatprep.subr.mxu0 0.0
        %6490 = vmatpush2.xpose.msra.mxu0 0.0
        %6491 = vmatprep.subr.mxu0 0.0
        %6492 = vmatpush2.xpose.msra.mxu0 0.0
        %6493 = vmatprep.subr.mxu0 0.0
        %6494 = vmatpush2.xpose.msra.mxu0 0.0
        %6495 = vmatprep.subr.mxu0 0.0
        %6496 = vmatpush2.xpose.msra.mxu0 0.0
        %6497 = vmatprep.subr.mxu0 0.0
        %6498 = vmatpush2.xpose.msra.mxu0 0.0
        %6499 = vmatprep.subr.mxu0 0.0
        %6500 = vmatpush2.xpose.msra.mxu0 0.0
        %6501 = vmatprep.subr.mxu0 0.0
        %6502 = vmatpush2.xpose.msra.mxu0 0.0
        %6503 = vmatprep.subr.mxu0 0.0
        %6504 = vmatpush2.xpose.msra.mxu0 0.0
        %6505 = vmatprep.subr.mxu0 0.0
        %6506 = vmatpush2.xpose.msra.mxu0 0.0
        %6507 = vmatprep.subr.mxu0 0.0
        %6508 = vmatpush2.xpose.msra.mxu0 0.0
        %6509 = vmatprep.subr.mxu0 0.0
        %6510 = vmatpush2.xpose.msra.mxu0 0.0
        %6511 = vmatprep.subr.mxu0 0.0
        %6512 = vmatpush2.xpose.msra.mxu0 0.0
        %6513 = vmatprep.subr.mxu0 0.0
        %6514 = vmatpush2.xpose.msra.mxu0 0.0
        %6515 = vmatprep.mubr.f32.mxu0 0.0
        %6516 = vmatmul.mubr.f32.gmra.mxu0 %v6163
        %v6517 = vpop.f32.mrf.mxu0
        %v6518 = vadd.f32 0.0, %v6517
        %v6519 = vpop.f32.mrf.mxu0
        %6520 = vdwg.mxu0
        %6521 = vmatprep.subr.mxu0 0.0
        %6522 = vmatpush1.xpose.msra.mxu0 0.0
        %6523 = vmatprep.subr.mxu0 0.0
        %6524 = vmatpush1.xpose.msra.mxu0 0.0
        %6525 = vmatprep.subr.mxu0 0.0
        %6526 = vmatpush1.xpose.msra.mxu0 0.0
        %6527 = vmatprep.subr.mxu0 0.0
        %6528 = vmatpush1.xpose.msra.mxu0 0.0
        %6529 = vmatprep.subr.mxu0 0.0
        %6530 = vmatpush1.xpose.msra.mxu0 0.0
        %6531 = vmatprep.subr.mxu0 0.0
        %6532 = vmatpush1.xpose.msra.mxu0 0.0
        %6533 = vmatprep.subr.mxu0 0.0
        %6534 = vmatpush1.xpose.msra.mxu0 0.0
        %6535 = vmatprep.subr.mxu0 0.0
        %6536 = vmatpush1.xpose.msra.mxu0 0.0
        %6537 = vmatprep.subr.mxu0 0.0
        %6538 = vmatpush1.xpose.msra.mxu0 0.0
        %6539 = vmatprep.subr.mxu0 0.0
        %6540 = vmatpush1.xpose.msra.mxu0 0.0
        %6541 = vmatprep.subr.mxu0 0.0
        %6542 = vmatpush1.xpose.msra.mxu0 0.0
        %6543 = vmatprep.subr.mxu0 0.0
        %6544 = vmatpush1.xpose.msra.mxu0 0.0
        %6545 = vmatprep.subr.mxu0 0.0
        %6546 = vmatpush1.xpose.msra.mxu0 0.0
        %6547 = vmatprep.subr.mxu0 0.0
        %6548 = vmatpush1.xpose.msra.mxu0 0.0
        %6549 = vmatprep.subr.mxu0 0.0
        %6550 = vmatpush1.xpose.msra.mxu0 0.0
        %6551 = vmatprep.subr.mxu0 0.0
        %6552 = vmatpush1.xpose.msra.mxu0 %v6309
        %6553 = vmatprep.subr.mxu0 0.0
        %6554 = vmatpush2.xpose.msra.mxu0 0.0
        %6555 = vmatprep.subr.mxu0 0.0
        %6556 = vmatpush2.xpose.msra.mxu0 0.0
        %6557 = vmatprep.subr.mxu0 0.0
        %6558 = vmatpush2.xpose.msra.mxu0 0.0
        %6559 = vmatprep.subr.mxu0 0.0
        %6560 = vmatpush2.xpose.msra.mxu0 0.0
        %6561 = vmatprep.subr.mxu0 0.0
        %6562 = vmatpush2.xpose.msra.mxu0 0.0
        %6563 = vmatprep.subr.mxu0 0.0
        %6564 = vmatpush2.xpose.msra.mxu0 0.0
        %6565 = vmatprep.subr.mxu0 0.0
        %6566 = vmatpush2.xpose.msra.mxu0 0.0
        %6567 = vmatprep.subr.mxu0 0.0
        %6568 = vmatpush2.xpose.msra.mxu0 0.0
        %6569 = vmatprep.subr.mxu0 0.0
        %6570 = vmatpush2.xpose.msra.mxu0 0.0
        %6571 = vmatprep.subr.mxu0 0.0
        %6572 = vmatpush2.xpose.msra.mxu0 0.0
        %6573 = vmatprep.subr.mxu0 0.0
        %6574 = vmatpush2.xpose.msra.mxu0 0.0
        %6575 = vmatprep.subr.mxu0 0.0
        %6576 = vmatpush2.xpose.msra.mxu0 0.0
        %6577 = vmatprep.subr.mxu0 0.0
        %6578 = vmatpush2.xpose.msra.mxu0 0.0
        %6579 = vmatprep.subr.mxu0 0.0
        %6580 = vmatpush2.xpose.msra.mxu0 0.0
        %6581 = vmatprep.subr.mxu0 0.0
        %6582 = vmatpush2.xpose.msra.mxu0 0.0
        %6583 = vmatprep.subr.mxu0 0.0
        %6584 = vmatpush2.xpose.msra.mxu0 0.0
        %6585 = vmatprep.mubr.f32.mxu0 0.0
        %6586 = vmatmul.mubr.f32.gmra.mxu0 %v6236
        %v6587 = vpop.f32.mrf.mxu0
        %v6588 = vadd.f32 0.0, %v6587
        %v6589 = vpop.f32.mrf.mxu0
        %6590 = vdwg.mxu0
        %v6591 = vmax.f32 %v6086, %v6378
        %v6592 = vmax.f32 %v6159, %v6448
        %v6593 = vmax.f32 %v6232, %v6518
        %v6594 = vmax.f32 %v6305, %v6588
        %v6596 = vsel %vm638, %v1054, 0
        %6598 = vmatprep.subr.mxu0 0.0
        %6599 = vmatpush1.xpose.msra.mxu0 0.0
        %6600 = vmatprep.subr.mxu0 0.0
        %6601 = vmatpush1.xpose.msra.mxu0 0.0
        %6602 = vmatprep.subr.mxu0 0.0
        %6603 = vmatpush1.xpose.msra.mxu0 0.0
        %6604 = vmatprep.subr.mxu0 0.0
        %6605 = vmatpush1.xpose.msra.mxu0 0.0
        %6606 = vmatprep.subr.mxu0 0.0
        %6607 = vmatpush1.xpose.msra.mxu0 0.0
        %6608 = vmatprep.subr.mxu0 0.0
        %6609 = vmatpush1.xpose.msra.mxu0 0.0
        %6610 = vmatprep.subr.mxu0 0.0
        %6611 = vmatpush1.xpose.msra.mxu0 0.0
        %6612 = vmatprep.subr.mxu0 0.0
        %6613 = vmatpush1.xpose.msra.mxu0 0.0
        %6614 = vmatprep.subr.mxu0 0.0
        %6615 = vmatpush1.xpose.msra.mxu0 0.0
        %6616 = vmatprep.subr.mxu0 0.0
        %6617 = vmatpush1.xpose.msra.mxu0 0.0
        %6618 = vmatprep.subr.mxu0 0.0
        %6619 = vmatpush1.xpose.msra.mxu0 0.0
        %6620 = vmatprep.subr.mxu0 0.0
        %6621 = vmatpush1.xpose.msra.mxu0 0.0
        %6622 = vmatprep.subr.mxu0 0.0
        %6623 = vmatpush1.xpose.msra.mxu0 0.0
        %6624 = vmatprep.subr.mxu0 0.0
        %6625 = vmatpush1.xpose.msra.mxu0 0.0
        %6626 = vmatprep.subr.mxu0 0.0
        %6627 = vmatpush1.xpose.msra.mxu0 0.0
        %6628 = vmatprep.subr.mxu0 0.0
        %6629 = vmatpush1.xpose.msra.mxu0 %v6017
        %6630 = vmatprep.subr.mxu0 0.0
        %6631 = vmatpush2.xpose.msra.mxu0 0.0
        %6632 = vmatprep.subr.mxu0 0.0
        %6633 = vmatpush2.xpose.msra.mxu0 0.0
        %6634 = vmatprep.subr.mxu0 0.0
        %6635 = vmatpush2.xpose.msra.mxu0 0.0
        %6636 = vmatprep.subr.mxu0 0.0
        %6637 = vmatpush2.xpose.msra.mxu0 0.0
        %6638 = vmatprep.subr.mxu0 0.0
        %6639 = vmatpush2.xpose.msra.mxu0 0.0
        %6640 = vmatprep.subr.mxu0 0.0
        %6641 = vmatpush2.xpose.msra.mxu0 0.0
        %6642 = vmatprep.subr.mxu0 0.0
        %6643 = vmatpush2.xpose.msra.mxu0 0.0
        %6644 = vmatprep.subr.mxu0 0.0
        %6645 = vmatpush2.xpose.msra.mxu0 0.0
        %6646 = vmatprep.subr.mxu0 0.0
        %6647 = vmatpush2.xpose.msra.mxu0 0.0
        %6648 = vmatprep.subr.mxu0 0.0
        %6649 = vmatpush2.xpose.msra.mxu0 0.0
        %6650 = vmatprep.subr.mxu0 0.0
        %6651 = vmatpush2.xpose.msra.mxu0 0.0
        %6652 = vmatprep.subr.mxu0 0.0
        %6653 = vmatpush2.xpose.msra.mxu0 0.0
        %6654 = vmatprep.subr.mxu0 0.0
        %6655 = vmatpush2.xpose.msra.mxu0 0.0
        %6656 = vmatprep.subr.mxu0 0.0
        %6657 = vmatpush2.xpose.msra.mxu0 0.0
        %6658 = vmatprep.subr.mxu0 0.0
        %6659 = vmatpush2.xpose.msra.mxu0 0.0
        %6660 = vmatprep.subr.mxu0 0.0
        %6661 = vmatpush2.xpose.msra.mxu0 0.0
        %6662 = vmatprep.mubr.f32.mxu0 0.0
        %6663 = vmatmul.mubr.f32.gmra.mxu0 %v6596
        %v6664 = vpop.f32.mrf.mxu0
        %v6665 = vadd.f32 0.0, %v6664
        %v6666 = vpop.f32.mrf.mxu0
        %6667 = vdwg.mxu0
        %v6669 = vsel %vm638, %v1134, 0
        %6671 = vmatprep.subr.mxu0 0.0
        %6672 = vmatpush1.xpose.msra.mxu0 0.0
        %6673 = vmatprep.subr.mxu0 0.0
        %6674 = vmatpush1.xpose.msra.mxu0 0.0
        %6675 = vmatprep.subr.mxu0 0.0
        %6676 = vmatpush1.xpose.msra.mxu0 0.0
        %6677 = vmatprep.subr.mxu0 0.0
        %6678 = vmatpush1.xpose.msra.mxu0 0.0
        %6679 = vmatprep.subr.mxu0 0.0
        %6680 = vmatpush1.xpose.msra.mxu0 0.0
        %6681 = vmatprep.subr.mxu0 0.0
        %6682 = vmatpush1.xpose.msra.mxu0 0.0
        %6683 = vmatprep.subr.mxu0 0.0
        %6684 = vmatpush1.xpose.msra.mxu0 0.0
        %6685 = vmatprep.subr.mxu0 0.0
        %6686 = vmatpush1.xpose.msra.mxu0 0.0
        %6687 = vmatprep.subr.mxu0 0.0
        %6688 = vmatpush1.xpose.msra.mxu0 0.0
        %6689 = vmatprep.subr.mxu0 0.0
        %6690 = vmatpush1.xpose.msra.mxu0 0.0
        %6691 = vmatprep.subr.mxu0 0.0
        %6692 = vmatpush1.xpose.msra.mxu0 0.0
        %6693 = vmatprep.subr.mxu0 0.0
        %6694 = vmatpush1.xpose.msra.mxu0 0.0
        %6695 = vmatprep.subr.mxu0 0.0
        %6696 = vmatpush1.xpose.msra.mxu0 0.0
        %6697 = vmatprep.subr.mxu0 0.0
        %6698 = vmatpush1.xpose.msra.mxu0 0.0
        %6699 = vmatprep.subr.mxu0 0.0
        %6700 = vmatpush1.xpose.msra.mxu0 0.0
        %6701 = vmatprep.subr.mxu0 0.0
        %6702 = vmatpush1.xpose.msra.mxu0 %v6017
        %6703 = vmatprep.subr.mxu0 0.0
        %6704 = vmatpush2.xpose.msra.mxu0 0.0
        %6705 = vmatprep.subr.mxu0 0.0
        %6706 = vmatpush2.xpose.msra.mxu0 0.0
        %6707 = vmatprep.subr.mxu0 0.0
        %6708 = vmatpush2.xpose.msra.mxu0 0.0
        %6709 = vmatprep.subr.mxu0 0.0
        %6710 = vmatpush2.xpose.msra.mxu0 0.0
        %6711 = vmatprep.subr.mxu0 0.0
        %6712 = vmatpush2.xpose.msra.mxu0 0.0
        %6713 = vmatprep.subr.mxu0 0.0
        %6714 = vmatpush2.xpose.msra.mxu0 0.0
        %6715 = vmatprep.subr.mxu0 0.0
        %6716 = vmatpush2.xpose.msra.mxu0 0.0
        %6717 = vmatprep.subr.mxu0 0.0
        %6718 = vmatpush2.xpose.msra.mxu0 0.0
        %6719 = vmatprep.subr.mxu0 0.0
        %6720 = vmatpush2.xpose.msra.mxu0 0.0
        %6721 = vmatprep.subr.mxu0 0.0
        %6722 = vmatpush2.xpose.msra.mxu0 0.0
        %6723 = vmatprep.subr.mxu0 0.0
        %6724 = vmatpush2.xpose.msra.mxu0 0.0
        %6725 = vmatprep.subr.mxu0 0.0
        %6726 = vmatpush2.xpose.msra.mxu0 0.0
        %6727 = vmatprep.subr.mxu0 0.0
        %6728 = vmatpush2.xpose.msra.mxu0 0.0
        %6729 = vmatprep.subr.mxu0 0.0
        %6730 = vmatpush2.xpose.msra.mxu0 0.0
        %6731 = vmatprep.subr.mxu0 0.0
        %6732 = vmatpush2.xpose.msra.mxu0 0.0
        %6733 = vmatprep.subr.mxu0 0.0
        %6734 = vmatpush2.xpose.msra.mxu0 0.0
        %6735 = vmatprep.mubr.f32.mxu0 0.0
        %6736 = vmatmul.mubr.f32.gmra.mxu0 %v6669
        %v6737 = vpop.f32.mrf.mxu0
        %v6738 = vadd.f32 0.0, %v6737
        %v6739 = vpop.f32.mrf.mxu0
        %6740 = vdwg.mxu0
        %v6742 = vsel %vm638, %v1214, 0
        %6744 = vmatprep.subr.mxu0 0.0
        %6745 = vmatpush1.xpose.msra.mxu0 0.0
        %6746 = vmatprep.subr.mxu0 0.0
        %6747 = vmatpush1.xpose.msra.mxu0 0.0
        %6748 = vmatprep.subr.mxu0 0.0
        %6749 = vmatpush1.xpose.msra.mxu0 0.0
        %6750 = vmatprep.subr.mxu0 0.0
        %6751 = vmatpush1.xpose.msra.mxu0 0.0
        %6752 = vmatprep.subr.mxu0 0.0
        %6753 = vmatpush1.xpose.msra.mxu0 0.0
        %6754 = vmatprep.subr.mxu0 0.0
        %6755 = vmatpush1.xpose.msra.mxu0 0.0
        %6756 = vmatprep.subr.mxu0 0.0
        %6757 = vmatpush1.xpose.msra.mxu0 0.0
        %6758 = vmatprep.subr.mxu0 0.0
        %6759 = vmatpush1.xpose.msra.mxu0 0.0
        %6760 = vmatprep.subr.mxu0 0.0
        %6761 = vmatpush1.xpose.msra.mxu0 0.0
        %6762 = vmatprep.subr.mxu0 0.0
        %6763 = vmatpush1.xpose.msra.mxu0 0.0
        %6764 = vmatprep.subr.mxu0 0.0
        %6765 = vmatpush1.xpose.msra.mxu0 0.0
        %6766 = vmatprep.subr.mxu0 0.0
        %6767 = vmatpush1.xpose.msra.mxu0 0.0
        %6768 = vmatprep.subr.mxu0 0.0
        %6769 = vmatpush1.xpose.msra.mxu0 0.0
        %6770 = vmatprep.subr.mxu0 0.0
        %6771 = vmatpush1.xpose.msra.mxu0 0.0
        %6772 = vmatprep.subr.mxu0 0.0
        %6773 = vmatpush1.xpose.msra.mxu0 0.0
        %6774 = vmatprep.subr.mxu0 0.0
        %6775 = vmatpush1.xpose.msra.mxu0 %v6017
        %6776 = vmatprep.subr.mxu0 0.0
        %6777 = vmatpush2.xpose.msra.mxu0 0.0
        %6778 = vmatprep.subr.mxu0 0.0
        %6779 = vmatpush2.xpose.msra.mxu0 0.0
        %6780 = vmatprep.subr.mxu0 0.0
        %6781 = vmatpush2.xpose.msra.mxu0 0.0
        %6782 = vmatprep.subr.mxu0 0.0
        %6783 = vmatpush2.xpose.msra.mxu0 0.0
        %6784 = vmatprep.subr.mxu0 0.0
        %6785 = vmatpush2.xpose.msra.mxu0 0.0
        %6786 = vmatprep.subr.mxu0 0.0
        %6787 = vmatpush2.xpose.msra.mxu0 0.0
        %6788 = vmatprep.subr.mxu0 0.0
        %6789 = vmatpush2.xpose.msra.mxu0 0.0
        %6790 = vmatprep.subr.mxu0 0.0
        %6791 = vmatpush2.xpose.msra.mxu0 0.0
        %6792 = vmatprep.subr.mxu0 0.0
        %6793 = vmatpush2.xpose.msra.mxu0 0.0
        %6794 = vmatprep.subr.mxu0 0.0
        %6795 = vmatpush2.xpose.msra.mxu0 0.0
        %6796 = vmatprep.subr.mxu0 0.0
        %6797 = vmatpush2.xpose.msra.mxu0 0.0
        %6798 = vmatprep.subr.mxu0 0.0
        %6799 = vmatpush2.xpose.msra.mxu0 0.0
        %6800 = vmatprep.subr.mxu0 0.0
        %6801 = vmatpush2.xpose.msra.mxu0 0.0
        %6802 = vmatprep.subr.mxu0 0.0
        %6803 = vmatpush2.xpose.msra.mxu0 0.0
        %6804 = vmatprep.subr.mxu0 0.0
        %6805 = vmatpush2.xpose.msra.mxu0 0.0
        %6806 = vmatprep.subr.mxu0 0.0
        %6807 = vmatpush2.xpose.msra.mxu0 0.0
        %6808 = vmatprep.mubr.f32.mxu0 0.0
        %6809 = vmatmul.mubr.f32.gmra.mxu0 %v6742
        %v6810 = vpop.f32.mrf.mxu0
        %v6811 = vadd.f32 0.0, %v6810
        %v6812 = vpop.f32.mrf.mxu0
        %6813 = vdwg.mxu0
        %v6815 = vsel %vm638, %v1294, 0
        %6817 = vmatprep.subr.mxu0 0.0
        %6818 = vmatpush1.xpose.msra.mxu0 0.0
        %6819 = vmatprep.subr.mxu0 0.0
        %6820 = vmatpush1.xpose.msra.mxu0 0.0
        %6821 = vmatprep.subr.mxu0 0.0
        %6822 = vmatpush1.xpose.msra.mxu0 0.0
        %6823 = vmatprep.subr.mxu0 0.0
        %6824 = vmatpush1.xpose.msra.mxu0 0.0
        %6825 = vmatprep.subr.mxu0 0.0
        %6826 = vmatpush1.xpose.msra.mxu0 0.0
        %6827 = vmatprep.subr.mxu0 0.0
        %6828 = vmatpush1.xpose.msra.mxu0 0.0
        %6829 = vmatprep.subr.mxu0 0.0
        %6830 = vmatpush1.xpose.msra.mxu0 0.0
        %6831 = vmatprep.subr.mxu0 0.0
        %6832 = vmatpush1.xpose.msra.mxu0 0.0
        %6833 = vmatprep.subr.mxu0 0.0
        %6834 = vmatpush1.xpose.msra.mxu0 0.0
        %6835 = vmatprep.subr.mxu0 0.0
        %6836 = vmatpush1.xpose.msra.mxu0 0.0
        %6837 = vmatprep.subr.mxu0 0.0
        %6838 = vmatpush1.xpose.msra.mxu0 0.0
        %6839 = vmatprep.subr.mxu0 0.0
        %6840 = vmatpush1.xpose.msra.mxu0 0.0
        %6841 = vmatprep.subr.mxu0 0.0
        %6842 = vmatpush1.xpose.msra.mxu0 0.0
        %6843 = vmatprep.subr.mxu0 0.0
        %6844 = vmatpush1.xpose.msra.mxu0 0.0
        %6845 = vmatprep.subr.mxu0 0.0
        %6846 = vmatpush1.xpose.msra.mxu0 0.0
        %6847 = vmatprep.subr.mxu0 0.0
        %6848 = vmatpush1.xpose.msra.mxu0 %v6017
        %6849 = vmatprep.subr.mxu0 0.0
        %6850 = vmatpush2.xpose.msra.mxu0 0.0
        %6851 = vmatprep.subr.mxu0 0.0
        %6852 = vmatpush2.xpose.msra.mxu0 0.0
        %6853 = vmatprep.subr.mxu0 0.0
        %6854 = vmatpush2.xpose.msra.mxu0 0.0
        %6855 = vmatprep.subr.mxu0 0.0
        %6856 = vmatpush2.xpose.msra.mxu0 0.0
        %6857 = vmatprep.subr.mxu0 0.0
        %6858 = vmatpush2.xpose.msra.mxu0 0.0
        %6859 = vmatprep.subr.mxu0 0.0
        %6860 = vmatpush2.xpose.msra.mxu0 0.0
        %6861 = vmatprep.subr.mxu0 0.0
        %6862 = vmatpush2.xpose.msra.mxu0 0.0
        %6863 = vmatprep.subr.mxu0 0.0
        %6864 = vmatpush2.xpose.msra.mxu0 0.0
        %6865 = vmatprep.subr.mxu0 0.0
        %6866 = vmatpush2.xpose.msra.mxu0 0.0
        %6867 = vmatprep.subr.mxu0 0.0
        %6868 = vmatpush2.xpose.msra.mxu0 0.0
        %6869 = vmatprep.subr.mxu0 0.0
        %6870 = vmatpush2.xpose.msra.mxu0 0.0
        %6871 = vmatprep.subr.mxu0 0.0
        %6872 = vmatpush2.xpose.msra.mxu0 0.0
        %6873 = vmatprep.subr.mxu0 0.0
        %6874 = vmatpush2.xpose.msra.mxu0 0.0
        %6875 = vmatprep.subr.mxu0 0.0
        %6876 = vmatpush2.xpose.msra.mxu0 0.0
        %6877 = vmatprep.subr.mxu0 0.0
        %6878 = vmatpush2.xpose.msra.mxu0 0.0
        %6879 = vmatprep.subr.mxu0 0.0
        %6880 = vmatpush2.xpose.msra.mxu0 0.0
        %6881 = vmatprep.mubr.f32.mxu0 0.0
        %6882 = vmatmul.mubr.f32.gmra.mxu0 %v6815
        %v6883 = vpop.f32.mrf.mxu0
        %v6884 = vadd.f32 0.0, %v6883
        %v6885 = vpop.f32.mrf.mxu0
        %6886 = vdwg.mxu0
        %6887 = vmatprep.subr.mxu0 0.0
        %6888 = vmatpush1.xpose.msra.mxu0 0.0
        %6889 = vmatprep.subr.mxu0 0.0
        %6890 = vmatpush1.xpose.msra.mxu0 0.0
        %6891 = vmatprep.subr.mxu0 0.0
        %6892 = vmatpush1.xpose.msra.mxu0 0.0
        %6893 = vmatprep.subr.mxu0 0.0
        %6894 = vmatpush1.xpose.msra.mxu0 0.0
        %6895 = vmatprep.subr.mxu0 0.0
        %6896 = vmatpush1.xpose.msra.mxu0 0.0
        %6897 = vmatprep.subr.mxu0 0.0
        %6898 = vmatpush1.xpose.msra.mxu0 0.0
        %6899 = vmatprep.subr.mxu0 0.0
        %6900 = vmatpush1.xpose.msra.mxu0 0.0
        %6901 = vmatprep.subr.mxu0 0.0
        %6902 = vmatpush1.xpose.msra.mxu0 0.0
        %6903 = vmatprep.subr.mxu0 0.0
        %6904 = vmatpush1.xpose.msra.mxu0 0.0
        %6905 = vmatprep.subr.mxu0 0.0
        %6906 = vmatpush1.xpose.msra.mxu0 0.0
        %6907 = vmatprep.subr.mxu0 0.0
        %6908 = vmatpush1.xpose.msra.mxu0 0.0
        %6909 = vmatprep.subr.mxu0 0.0
        %6910 = vmatpush1.xpose.msra.mxu0 0.0
        %6911 = vmatprep.subr.mxu0 0.0
        %6912 = vmatpush1.xpose.msra.mxu0 0.0
        %6913 = vmatprep.subr.mxu0 0.0
        %6914 = vmatpush1.xpose.msra.mxu0 0.0
        %6915 = vmatprep.subr.mxu0 0.0
        %6916 = vmatpush1.xpose.msra.mxu0 0.0
        %6917 = vmatprep.subr.mxu0 0.0
        %6918 = vmatpush1.xpose.msra.mxu0 %v6309
        %6919 = vmatprep.subr.mxu0 0.0
        %6920 = vmatpush2.xpose.msra.mxu0 0.0
        %6921 = vmatprep.subr.mxu0 0.0
        %6922 = vmatpush2.xpose.msra.mxu0 0.0
        %6923 = vmatprep.subr.mxu0 0.0
        %6924 = vmatpush2.xpose.msra.mxu0 0.0
        %6925 = vmatprep.subr.mxu0 0.0
        %6926 = vmatpush2.xpose.msra.mxu0 0.0
        %6927 = vmatprep.subr.mxu0 0.0
        %6928 = vmatpush2.xpose.msra.mxu0 0.0
        %6929 = vmatprep.subr.mxu0 0.0
        %6930 = vmatpush2.xpose.msra.mxu0 0.0
        %6931 = vmatprep.subr.mxu0 0.0
        %6932 = vmatpush2.xpose.msra.mxu0 0.0
        %6933 = vmatprep.subr.mxu0 0.0
        %6934 = vmatpush2.xpose.msra.mxu0 0.0
        %6935 = vmatprep.subr.mxu0 0.0
        %6936 = vmatpush2.xpose.msra.mxu0 0.0
        %6937 = vmatprep.subr.mxu0 0.0
        %6938 = vmatpush2.xpose.msra.mxu0 0.0
        %6939 = vmatprep.subr.mxu0 0.0
        %6940 = vmatpush2.xpose.msra.mxu0 0.0
        %6941 = vmatprep.subr.mxu0 0.0
        %6942 = vmatpush2.xpose.msra.mxu0 0.0
        %6943 = vmatprep.subr.mxu0 0.0
        %6944 = vmatpush2.xpose.msra.mxu0 0.0
        %6945 = vmatprep.subr.mxu0 0.0
        %6946 = vmatpush2.xpose.msra.mxu0 0.0
        %6947 = vmatprep.subr.mxu0 0.0
        %6948 = vmatpush2.xpose.msra.mxu0 0.0
        %6949 = vmatprep.subr.mxu0 0.0
        %6950 = vmatpush2.xpose.msra.mxu0 0.0
        %6951 = vmatprep.mubr.f32.mxu0 0.0
        %6952 = vmatmul.mubr.f32.gmra.mxu0 %v6596
        %v6953 = vpop.f32.mrf.mxu0
        %v6954 = vadd.f32 0.0, %v6953
        %v6955 = vpop.f32.mrf.mxu0
        %6956 = vdwg.mxu0
        %6957 = vmatprep.subr.mxu0 0.0
        %6958 = vmatpush1.xpose.msra.mxu0 0.0
        %6959 = vmatprep.subr.mxu0 0.0
        %6960 = vmatpush1.xpose.msra.mxu0 0.0
        %6961 = vmatprep.subr.mxu0 0.0
        %6962 = vmatpush1.xpose.msra.mxu0 0.0
        %6963 = vmatprep.subr.mxu0 0.0
        %6964 = vmatpush1.xpose.msra.mxu0 0.0
        %6965 = vmatprep.subr.mxu0 0.0
        %6966 = vmatpush1.xpose.msra.mxu0 0.0
        %6967 = vmatprep.subr.mxu0 0.0
        %6968 = vmatpush1.xpose.msra.mxu0 0.0
        %6969 = vmatprep.subr.mxu0 0.0
        %6970 = vmatpush1.xpose.msra.mxu0 0.0
        %6971 = vmatprep.subr.mxu0 0.0
        %6972 = vmatpush1.xpose.msra.mxu0 0.0
        %6973 = vmatprep.subr.mxu0 0.0
        %6974 = vmatpush1.xpose.msra.mxu0 0.0
        %6975 = vmatprep.subr.mxu0 0.0
        %6976 = vmatpush1.xpose.msra.mxu0 0.0
        %6977 = vmatprep.subr.mxu0 0.0
        %6978 = vmatpush1.xpose.msra.mxu0 0.0
        %6979 = vmatprep.subr.mxu0 0.0
        %6980 = vmatpush1.xpose.msra.mxu0 0.0
        %6981 = vmatprep.subr.mxu0 0.0
        %6982 = vmatpush1.xpose.msra.mxu0 0.0
        %6983 = vmatprep.subr.mxu0 0.0
        %6984 = vmatpush1.xpose.msra.mxu0 0.0
        %6985 = vmatprep.subr.mxu0 0.0
        %6986 = vmatpush1.xpose.msra.mxu0 0.0
        %6987 = vmatprep.subr.mxu0 0.0
        %6988 = vmatpush1.xpose.msra.mxu0 %v6309
        %6989 = vmatprep.subr.mxu0 0.0
        %6990 = vmatpush2.xpose.msra.mxu0 0.0
        %6991 = vmatprep.subr.mxu0 0.0
        %6992 = vmatpush2.xpose.msra.mxu0 0.0
        %6993 = vmatprep.subr.mxu0 0.0
        %6994 = vmatpush2.xpose.msra.mxu0 0.0
        %6995 = vmatprep.subr.mxu0 0.0
        %6996 = vmatpush2.xpose.msra.mxu0 0.0
        %6997 = vmatprep.subr.mxu0 0.0
        %6998 = vmatpush2.xpose.msra.mxu0 0.0
        %6999 = vmatprep.subr.mxu0 0.0
        %7000 = vmatpush2.xpose.msra.mxu0 0.0
        %7001 = vmatprep.subr.mxu0 0.0
        %7002 = vmatpush2.xpose.msra.mxu0 0.0
        %7003 = vmatprep.subr.mxu0 0.0
        %7004 = vmatpush2.xpose.msra.mxu0 0.0
        %7005 = vmatprep.subr.mxu0 0.0
        %7006 = vmatpush2.xpose.msra.mxu0 0.0
        %7007 = vmatprep.subr.mxu0 0.0
        %7008 = vmatpush2.xpose.msra.mxu0 0.0
        %7009 = vmatprep.subr.mxu0 0.0
        %7010 = vmatpush2.xpose.msra.mxu0 0.0
        %7011 = vmatprep.subr.mxu0 0.0
        %7012 = vmatpush2.xpose.msra.mxu0 0.0
        %7013 = vmatprep.subr.mxu0 0.0
        %7014 = vmatpush2.xpose.msra.mxu0 0.0
        %7015 = vmatprep.subr.mxu0 0.0
        %7016 = vmatpush2.xpose.msra.mxu0 0.0
        %7017 = vmatprep.subr.mxu0 0.0
        %7018 = vmatpush2.xpose.msra.mxu0 0.0
        %7019 = vmatprep.subr.mxu0 0.0
        %7020 = vmatpush2.xpose.msra.mxu0 0.0
        %7021 = vmatprep.mubr.f32.mxu0 0.0
        %7022 = vmatmul.mubr.f32.gmra.mxu0 %v6669
        %v7023 = vpop.f32.mrf.mxu0
        %v7024 = vadd.f32 0.0, %v7023
        %v7025 = vpop.f32.mrf.mxu0
        %7026 = vdwg.mxu0
        %7027 = vmatprep.subr.mxu0 0.0
        %7028 = vmatpush1.xpose.msra.mxu0 0.0
        %7029 = vmatprep.subr.mxu0 0.0
        %7030 = vmatpush1.xpose.msra.mxu0 0.0
        %7031 = vmatprep.subr.mxu0 0.0
        %7032 = vmatpush1.xpose.msra.mxu0 0.0
        %7033 = vmatprep.subr.mxu0 0.0
        %7034 = vmatpush1.xpose.msra.mxu0 0.0
        %7035 = vmatprep.subr.mxu0 0.0
        %7036 = vmatpush1.xpose.msra.mxu0 0.0
        %7037 = vmatprep.subr.mxu0 0.0
        %7038 = vmatpush1.xpose.msra.mxu0 0.0
        %7039 = vmatprep.subr.mxu0 0.0
        %7040 = vmatpush1.xpose.msra.mxu0 0.0
        %7041 = vmatprep.subr.mxu0 0.0
        %7042 = vmatpush1.xpose.msra.mxu0 0.0
        %7043 = vmatprep.subr.mxu0 0.0
        %7044 = vmatpush1.xpose.msra.mxu0 0.0
        %7045 = vmatprep.subr.mxu0 0.0
        %7046 = vmatpush1.xpose.msra.mxu0 0.0
        %7047 = vmatprep.subr.mxu0 0.0
        %7048 = vmatpush1.xpose.msra.mxu0 0.0
        %7049 = vmatprep.subr.mxu0 0.0
        %7050 = vmatpush1.xpose.msra.mxu0 0.0
        %7051 = vmatprep.subr.mxu0 0.0
        %7052 = vmatpush1.xpose.msra.mxu0 0.0
        %7053 = vmatprep.subr.mxu0 0.0
        %7054 = vmatpush1.xpose.msra.mxu0 0.0
        %7055 = vmatprep.subr.mxu0 0.0
        %7056 = vmatpush1.xpose.msra.mxu0 0.0
        %7057 = vmatprep.subr.mxu0 0.0
        %7058 = vmatpush1.xpose.msra.mxu0 %v6309
        %7059 = vmatprep.subr.mxu0 0.0
        %7060 = vmatpush2.xpose.msra.mxu0 0.0
        %7061 = vmatprep.subr.mxu0 0.0
        %7062 = vmatpush2.xpose.msra.mxu0 0.0
        %7063 = vmatprep.subr.mxu0 0.0
        %7064 = vmatpush2.xpose.msra.mxu0 0.0
        %7065 = vmatprep.subr.mxu0 0.0
        %7066 = vmatpush2.xpose.msra.mxu0 0.0
        %7067 = vmatprep.subr.mxu0 0.0
        %7068 = vmatpush2.xpose.msra.mxu0 0.0
        %7069 = vmatprep.subr.mxu0 0.0
        %7070 = vmatpush2.xpose.msra.mxu0 0.0
        %7071 = vmatprep.subr.mxu0 0.0
        %7072 = vmatpush2.xpose.msra.mxu0 0.0
        %7073 = vmatprep.subr.mxu0 0.0
        %7074 = vmatpush2.xpose.msra.mxu0 0.0
        %7075 = vmatprep.subr.mxu0 0.0
        %7076 = vmatpush2.xpose.msra.mxu0 0.0
        %7077 = vmatprep.subr.mxu0 0.0
        %7078 = vmatpush2.xpose.msra.mxu0 0.0
        %7079 = vmatprep.subr.mxu0 0.0
        %7080 = vmatpush2.xpose.msra.mxu0 0.0
        %7081 = vmatprep.subr.mxu0 0.0
        %7082 = vmatpush2.xpose.msra.mxu0 0.0
        %7083 = vmatprep.subr.mxu0 0.0
        %7084 = vmatpush2.xpose.msra.mxu0 0.0
        %7085 = vmatprep.subr.mxu0 0.0
        %7086 = vmatpush2.xpose.msra.mxu0 0.0
        %7087 = vmatprep.subr.mxu0 0.0
        %7088 = vmatpush2.xpose.msra.mxu0 0.0
        %7089 = vmatprep.subr.mxu0 0.0
        %7090 = vmatpush2.xpose.msra.mxu0 0.0
        %7091 = vmatprep.mubr.f32.mxu0 0.0
        %7092 = vmatmul.mubr.f32.gmra.mxu0 %v6742
        %v7093 = vpop.f32.mrf.mxu0
        %v7094 = vadd.f32 0.0, %v7093
        %v7095 = vpop.f32.mrf.mxu0
        %7096 = vdwg.mxu0
        %7097 = vmatprep.subr.mxu0 0.0
        %7098 = vmatpush1.xpose.msra.mxu0 0.0
        %7099 = vmatprep.subr.mxu0 0.0
        %7100 = vmatpush1.xpose.msra.mxu0 0.0
        %7101 = vmatprep.subr.mxu0 0.0
        %7102 = vmatpush1.xpose.msra.mxu0 0.0
        %7103 = vmatprep.subr.mxu0 0.0
        %7104 = vmatpush1.xpose.msra.mxu0 0.0
        %7105 = vmatprep.subr.mxu0 0.0
        %7106 = vmatpush1.xpose.msra.mxu0 0.0
        %7107 = vmatprep.subr.mxu0 0.0
        %7108 = vmatpush1.xpose.msra.mxu0 0.0
        %7109 = vmatprep.subr.mxu0 0.0
        %7110 = vmatpush1.xpose.msra.mxu0 0.0
        %7111 = vmatprep.subr.mxu0 0.0
        %7112 = vmatpush1.xpose.msra.mxu0 0.0
        %7113 = vmatprep.subr.mxu0 0.0
        %7114 = vmatpush1.xpose.msra.mxu0 0.0
        %7115 = vmatprep.subr.mxu0 0.0
        %7116 = vmatpush1.xpose.msra.mxu0 0.0
        %7117 = vmatprep.subr.mxu0 0.0
        %7118 = vmatpush1.xpose.msra.mxu0 0.0
        %7119 = vmatprep.subr.mxu0 0.0
        %7120 = vmatpush1.xpose.msra.mxu0 0.0
        %7121 = vmatprep.subr.mxu0 0.0
        %7122 = vmatpush1.xpose.msra.mxu0 0.0
        %7123 = vmatprep.subr.mxu0 0.0
        %7124 = vmatpush1.xpose.msra.mxu0 0.0
        %7125 = vmatprep.subr.mxu0 0.0
        %7126 = vmatpush1.xpose.msra.mxu0 0.0
        %7127 = vmatprep.subr.mxu0 0.0
        %7128 = vmatpush1.xpose.msra.mxu0 %v6309
        %7129 = vmatprep.subr.mxu0 0.0
        %7130 = vmatpush2.xpose.msra.mxu0 0.0
        %7131 = vmatprep.subr.mxu0 0.0
        %7132 = vmatpush2.xpose.msra.mxu0 0.0
        %7133 = vmatprep.subr.mxu0 0.0
        %7134 = vmatpush2.xpose.msra.mxu0 0.0
        %7135 = vmatprep.subr.mxu0 0.0
        %7136 = vmatpush2.xpose.msra.mxu0 0.0
        %7137 = vmatprep.subr.mxu0 0.0
        %7138 = vmatpush2.xpose.msra.mxu0 0.0
        %7139 = vmatprep.subr.mxu0 0.0
        %7140 = vmatpush2.xpose.msra.mxu0 0.0
        %7141 = vmatprep.subr.mxu0 0.0
        %7142 = vmatpush2.xpose.msra.mxu0 0.0
        %7143 = vmatprep.subr.mxu0 0.0
        %7144 = vmatpush2.xpose.msra.mxu0 0.0
        %7145 = vmatprep.subr.mxu0 0.0
        %7146 = vmatpush2.xpose.msra.mxu0 0.0
        %7147 = vmatprep.subr.mxu0 0.0
        %7148 = vmatpush2.xpose.msra.mxu0 0.0
        %7149 = vmatprep.subr.mxu0 0.0
        %7150 = vmatpush2.xpose.msra.mxu0 0.0
        %7151 = vmatprep.subr.mxu0 0.0
        %7152 = vmatpush2.xpose.msra.mxu0 0.0
        %7153 = vmatprep.subr.mxu0 0.0
        %7154 = vmatpush2.xpose.msra.mxu0 0.0
        %7155 = vmatprep.subr.mxu0 0.0
        %7156 = vmatpush2.xpose.msra.mxu0 0.0
        %7157 = vmatprep.subr.mxu0 0.0
        %7158 = vmatpush2.xpose.msra.mxu0 0.0
        %7159 = vmatprep.subr.mxu0 0.0
        %7160 = vmatpush2.xpose.msra.mxu0 0.0
        %7161 = vmatprep.mubr.f32.mxu0 0.0
        %7162 = vmatmul.mubr.f32.gmra.mxu0 %v6815
        %v7163 = vpop.f32.mrf.mxu0
        %v7164 = vadd.f32 0.0, %v7163
        %v7165 = vpop.f32.mrf.mxu0
        %7166 = vdwg.mxu0
        %v7167 = vmax.f32 %v6665, %v6954
        %v7168 = vmax.f32 %v6738, %v7024
        %v7169 = vmax.f32 %v6811, %v7094
        %v7170 = vmax.f32 %v6884, %v7164
        %v7171 = vmax.f32 %v6591, %v7167
        %v7172 = vmax.f32 %v6592, %v7168
        %v7173 = vmax.f32 %v6593, %v7169
        %v7174 = vmax.f32 %v6594, %v7170
        %7179 = vrot.lane.b32.xlu0 %v7171, 16
        %v7180 = vpop.permute.xlu0 %7179
        %7181 = vrot.lane.b32.xlu0 %v7172, 16
        %v7182 = vpop.permute.xlu0 %7181
        %7183 = vrot.lane.b32.xlu0 %v7173, 16
        %v7184 = vpop.permute.xlu0 %7183
        %7185 = vrot.lane.b32.xlu0 %v7174, 16
        %v7186 = vpop.permute.xlu0 %7185
        %vm7191 = vcmask 158848
        %7192 = vst.msk [vmem:[%s176] sm:$0xf] %vm7191, %v7180
        %7193 = vst.msk [vmem:[%s176 + $0x4] sm:$0xf] %vm7191, %v7182
        %7194 = vst.msk [vmem:[%s176 + $0x8] sm:$0xf] %vm7191, %v7184
        %7195 = vst.msk [vmem:[%s176 + $0xc] sm:$0xf] %vm7191, %v7186
        %s7196 = sand.u32 %s79, 1
        %s7197 = scalar_lea.sflag [#allocation4], %s7196
        %s7198 = sand.u32 %s79, 1
        %s7199 = smul.addr %s7198, 16
        %s7200 = scalar_lea.vmem [#allocation5], %s7199
        // Predicated region
        $region33: #{tpu_custom_call.1} parent=27 // pred_check
          %p7201 = pneg %p89
        $region34: #{tpu_custom_call.1} parent=27 // pred_check_branch
          %7203 = sbr.rel (%p7201) target = $region36
        $region35: #{tpu_custom_call.1} parent=27 // pred_region
          %s7205 = ssub.s32 256, 256
          %7206 = vsyncadd %s7197, %s7205
          %s7207 = smul.addr %s19, 4
          %s7208 = smul.addr %s7207, 64
          %s7209 = scalar_lea.hbm %s2, %s7208
          %s7210 = sshll.u32 %s7200, 4
          %s7211 = int_to_ptr.vmem [resolvable:$true] %s7210
          %7216 = dma.vmem_to_hbm [thread:$0]  %s7211, 256, %s7209, %s7197, 64, 64, 4
        $region36: #{tpu_custom_call.1} parent=27 // pred_fallthru
          _
      $region28: #{tpu_custom_call.1} parent=5 // pred_fallthru
        _
      %p7217 = scmp.le.s32.totalorder 2, %s14
      // Predicated region
      $region37: #{tpu_custom_call.1} parent=5 // pred_check
        %p7218 = pneg %p7217
      $region38: #{tpu_custom_call.1} parent=5 // pred_check_branch
        %7220 = sbr.rel (%p7218) target = $region40
      $region39: #{tpu_custom_call.1} parent=5 // pred_region
        %s7221 = ssub.s32 %s14, 2
        // Predicated region
        $region41: #{tpu_custom_call.1} parent=39 // pred_check
          %p7222 = pneg %p95
        $region42: #{tpu_custom_call.1} parent=39 // pred_check_branch
          %7224 = sbr.rel (%p7222) target = $region44
        $region43: #{tpu_custom_call.1} parent=39 // pred_region
          %s7225 = sand.u32 %s80, 1
          %s7226 = scalar_lea.sflag [#allocation4], %s7225
          %s7227 = sand.u32 %s80, 1
          %s7228 = smul.addr %s7227, 16
          %s7229 = scalar_lea.vmem [#allocation5], %s7228
          %7230 = dma.done %s7226, 256
        $region44: #{tpu_custom_call.1} parent=39 // pred_fallthru
          _
      $region40: #{tpu_custom_call.1} parent=5 // pred_fallthru
        _
    $region6: #{tpu_custom_call.1} parent=1 // loop_footer
      %s18 = sadd.s32 1, %s14
    $region7: #{tpu_custom_call.1} parent=1 // loop_footer_branch
      %13 = sbr.rel target = $region3
    $region8: #{tpu_custom_call.1} parent=1 // loop_exit
      _
    %7231 = vsyncpa [#allocation3], 1
    %s7232 = scalar_lea.sflag [#allocation3], 1
    %7233 = vsyncpa %s7232, 1
    %7234 = vsyncpa [#allocation4], 1
    %s7235 = scalar_lea.sflag [#allocation4], 1
    %7236 = vsyncpa %s7235, 1

</llo_original>
